<compile_context>
chip_gen: v7x
topology: tpu7x:2x2x1
jax: 0.10.0
libtpu: 0.0.40
codegen_flags: <defaults>
</compile_context>

<pallas_src>
import functools

import jax
import jax.numpy as jnp
import numpy as np
from jax.experimental import pallas as pl
from jax.experimental.pallas import tpu as pltpu


# ----------------------------------------------------------------------------
# Fused ResidualGroup kernel (one batch element per grid step)
# ----------------------------------------------------------------------------
def _residual_group_kernel(x_ref, w0_ref, b0_ref, w1_ref, b1_ref,
                           cw1_ref, cb1_ref, cw2_ref, cb2_ref,
                           tw_ref, tb_ref, o_ref,
                           xp_ref, pat_ref, *, H, W, C, Cr, n_resblocks):
    """Inputs:
      x_ref   : (1, H*W, C)          group input (flattened spatial)
      w0/w1   : (nb, 9*C, C)         im2col-flattened 3x3 conv weights per RCAB
      b0/b1   : (nb, 1, C)           conv biases
      cw1     : (nb, Cr, C)          CA squeeze weight, pre-transposed
      cb1     : (nb, Cr, 1)          CA squeeze bias (column)
      cw2     : (nb, Cr, C)          CA excite weight
      cb2     : (nb, 1, C)           CA excite bias
      tw, tb  : (9*C, C), (1, C)     group tail conv
      o_ref   : (1, H*W, C)          group output
    Scratch:
      xp_ref  : (H+2, W+2, C) f32    zero-padded activation buffer
      pat_ref : (H*W, 9*C)   f32     im2col patch matrix
    """
    HW = H * W
    x0 = x_ref[0].astype(jnp.float32)                      # (HW, C) group input

    # Zero the padded buffer once; only its interior is rewritten per conv,
    # so the 1-pixel halo stays zero (SAME padding) for every conv below.
    xp_ref[...] = jnp.zeros((H + 2, W + 2, C), jnp.float32)

    def conv3x3(h, w_flat, b_row, relu):
        """h: (HW, C) f32 -> (HW, C) f32 via one im2col matmul."""
        xp_ref[1:H + 1, 1:W + 1, :] = h.reshape(H, W, C)
        xpv = xp_ref[...]                                   # (H+2, W+2, C)
        # Build the (HW, 9C) patch matrix in VMEM (9 shifted views of xpv).
        for kh in range(3):
            for kw in range(3):
                t = kh * 3 + kw
                tap = xpv[kh:kh + H, kw:kw + W, :].reshape(HW, C)
                pat_ref[:, t * C:(t + 1) * C] = tap
        y = jnp.dot(pat_ref[...], w_flat,
                    preferred_element_type=jnp.float32) + b_row
        if relu:
            y = jnp.maximum(y, 0.0)
        return y

    h = x0
    for i in range(n_resblocks):
        # RCAB body: conv -> ReLU -> conv
        r = conv3x3(h, w0_ref[i].astype(jnp.float32),
                    b0_ref[i].astype(jnp.float32), relu=True)
        r = conv3x3(r, w1_ref[i].astype(jnp.float32),
                    b1_ref[i].astype(jnp.float32), relu=False)
        # Channel attention on VPU/XLU: global avg-pool -> 1x1 -> ReLU -> 1x1
        # -> sigmoid, as broadcast-mul + axis reductions (no MXU, no reshape).
        m = jnp.mean(r, axis=0, keepdims=True)              # (1, C)
        z = jnp.sum(cw1_ref[i].astype(jnp.float32) * m,
                    axis=1, keepdims=True)                  # (Cr, 1)
        z = jnp.maximum(z + cb1_ref[i].astype(jnp.float32), 0.0)
        s = jnp.sum(cw2_ref[i].astype(jnp.float32) * z,
                    axis=0, keepdims=True)                  # (1, C)
        s = jax.nn.sigmoid(s + cb2_ref[i].astype(jnp.float32))
        # CA scaling + RCAB residual
        h = r * s + h
    # Group tail conv + outer residual
    t = conv3x3(h, tw_ref[...].astype(jnp.float32),
                tb_ref[...].astype(jnp.float32), relu=False)
    o_ref[0] = (t + x0).astype(o_ref.dtype)


# ----------------------------------------------------------------------------
# Wrapper: parameter repacking + pallas_call plumbing
# ----------------------------------------------------------------------------
def residual_group_forward(x, gp):
    """x: (N, H, W, C) NHWC. gp: params dict from init_params."""
    N, H, W, C = x.shape
    blocks = gp["blocks"]
    nb = len(blocks)
    Cr = blocks[0]["ca_w1"].shape[1]
    HW = H * W

    # Repack weights (free at trace time): im2col-flatten convs, transpose CA.
    w0 = jnp.stack([p["w0"].reshape(9 * C, C) for p in blocks])      # (nb,9C,C)
    b0 = jnp.stack([p["b0"].reshape(1, C) for p in blocks])          # (nb,1,C)
    w1 = jnp.stack([p["w1"].reshape(9 * C, C) for p in blocks])
    b1 = jnp.stack([p["b1"].reshape(1, C) for p in blocks])
    cw1 = jnp.stack([p["ca_w1"].T for p in blocks])                  # (nb,Cr,C)
    cb1 = jnp.stack([p["ca_b1"].reshape(Cr, 1) for p in blocks])     # (nb,Cr,1)
    cw2 = jnp.stack([p["ca_w2"] for p in blocks])                    # (nb,Cr,C)
    cb2 = jnp.stack([p["ca_b2"].reshape(1, C) for p in blocks])      # (nb,1,C)
    tw = gp["tail_w"].reshape(9 * C, C)
    tb = gp["tail_b"].reshape(1, C)

    x_flat = x.reshape(N, HW, C)

    kernel = functools.partial(_residual_group_kernel, H=H, W=W, C=C, Cr=Cr,
                               n_resblocks=nb)
    full3 = lambda n: (0, 0, 0)
    full2 = lambda n: (0, 0)

    out = pl.pallas_call(
        kernel,
        out_shape=jax.ShapeDtypeStruct((N, HW, C), x.dtype),
        grid=(N,),
        in_specs=[
            pl.BlockSpec((1, HW, C), lambda n: (n, 0, 0)),   # x
            pl.BlockSpec((nb, 9 * C, C), full3),             # w0
            pl.BlockSpec((nb, 1, C), full3),                 # b0
            pl.BlockSpec((nb, 9 * C, C), full3),             # w1
            pl.BlockSpec((nb, 1, C), full3),                 # b1
            pl.BlockSpec((nb, Cr, C), full3),                # ca_w1^T
            pl.BlockSpec((nb, Cr, 1), full3),                # ca_b1
            pl.BlockSpec((nb, Cr, C), full3),                # ca_w2
            pl.BlockSpec((nb, 1, C), full3),                 # ca_b2
            pl.BlockSpec((9 * C, C), full2),                 # tail w
            pl.BlockSpec((1, C), full2),                     # tail b
        ],
        out_specs=pl.BlockSpec((1, HW, C), lambda n: (n, 0, 0)),
        scratch_shapes=[
            pltpu.VMEM((H + 2, W + 2, C), jnp.float32),      # padded activation
            pltpu.VMEM((HW, 9 * C), jnp.float32),            # im2col patches
        ],
        compiler_params=pltpu.CompilerParams(
            dimension_semantics=("parallel",)),              # batch -> 2 TCs on v7x
    )(x_flat, w0, b0, w1, b1, cw1, cb1, cw2, cb2, tw, tb)

    return out.reshape(N, H, W, C)


# ----------------------------------------------------------------------------
# Pure-JAX reference (for correctness check)
# ----------------------------------------------------------------------------
def _conv3x3_ref(x, w, b):
    y = jax.lax.conv_general_dilated(
        x, w, window_strides=(1, 1), padding="SAME",
        dimension_numbers=("NHWC", "HWIO", "NHWC"))
    return y + b


def residual_group_ref(x, gp):
    h = x
    for p in gp["blocks"]:
        r = jax.nn.relu(_conv3x3_ref(h, p["w0"], p["b0"]))
        r = _conv3x3_ref(r, p["w1"], p["b1"])
        m = jnp.mean(r, axis=(1, 2), keepdims=True)            # (N,1,1,C)
        y = jax.nn.relu(jnp.einsum("nijc,cd->nijd", m, p["ca_w1"]) + p["ca_b1"])
        y = jax.nn.sigmoid(jnp.einsum("nijd,dc->nijc", y, p["ca_w2"]) + p["ca_b2"])
        h = r * y + h
    return _conv3x3_ref(h, gp["tail_w"], gp["tail_b"]) + x


# ----------------------------------------------------------------------------
# Deterministic parameter initialization
# ----------------------------------------------------------------------------
def init_params(key, n_feat, reduction, n_resblocks):
    cr = n_feat // reduction
    blocks = []
    for _ in range(n_resblocks):
        key, *ks = jax.random.split(key, 9)
        blocks.append({
            "w0": 0.1 * jax.random.normal(ks[0], (3, 3, n_feat, n_feat), jnp.float32),
            "b0": 0.1 * jax.random.normal(ks[1], (n_feat,), jnp.float32),
            "w1": 0.1 * jax.random.normal(ks[2], (3, 3, n_feat, n_feat), jnp.float32),
            "b1": 0.1 * jax.random.normal(ks[3], (n_feat,), jnp.float32),
            "ca_w1": 0.1 * jax.random.normal(ks[4], (n_feat, cr), jnp.float32),
            "ca_b1": 0.1 * jax.random.normal(ks[5], (cr,), jnp.float32),
            "ca_w2": 0.1 * jax.random.normal(ks[6], (cr, n_feat), jnp.float32),
            "ca_b2": 0.1 * jax.random.normal(ks[7], (n_feat,), jnp.float32),
        })
    key, k1, k2 = jax.random.split(key, 3)
    return {
        "blocks": blocks,
        "tail_w": 0.1 * jax.random.normal(k1, (3, 3, n_feat, n_feat), jnp.float32),
        "tail_b": 0.1 * jax.random.normal(k2, (n_feat,), jnp.float32),
    }


# ----------------------------------------------------------------------------
if __name__ == "__main__":
    # Small shapes consistent with the module: n_feat=16, reduction=4,
    # kernel_size=3, n_resblocks=2, input (N,H,W,C) = (2,16,16,16).
    N, H, W, C = 2, 16, 16, 16
    reduction = 4
    n_resblocks = 2

    key = jax.random.PRNGKey(0)
    key, kx = jax.random.split(key)
    x = jax.random.normal(kx, (N, H, W, C), jnp.float32)
    params = init_params(key, C, reduction, n_resblocks)

    fwd = jax.jit(residual_group_forward)
    out = jax.block_until_ready(fwd(x, params))

    ref = jax.block_until_ready(residual_group_ref(x, params))
    np.testing.assert_allclose(np.asarray(out), np.asarray(ref),
                               rtol=1e-4, atol=1e-4)
    print("KERNEL_OK")
</pallas_src>

<mosaic_0001>
module attributes {stable_mosaic.version = 11 : i64} {
  func.func @_residual_group_kernel(%arg0: i32, %arg1: memref<1x256x16xf32, #tpu.memory_space<vmem>>, %arg2: memref<2x144x16xf32, #tpu.memory_space<vmem>>, %arg3: memref<2x1x16xf32, #tpu.memory_space<vmem>>, %arg4: memref<2x144x16xf32, #tpu.memory_space<vmem>>, %arg5: memref<2x1x16xf32, #tpu.memory_space<vmem>>, %arg6: memref<2x4x16xf32, #tpu.memory_space<vmem>>, %arg7: memref<2x4x1xf32, #tpu.memory_space<vmem>>, %arg8: memref<2x4x16xf32, #tpu.memory_space<vmem>>, %arg9: memref<2x1x16xf32, #tpu.memory_space<vmem>>, %arg10: memref<144x16xf32, #tpu.memory_space<vmem>>, %arg11: memref<1x16xf32, #tpu.memory_space<vmem>>, %arg12: memref<1x256x16xf32, #tpu.memory_space<vmem>>, %arg13: memref<18x18x16xf32, #tpu.memory_space<vmem>>, %arg14: memref<256x144xf32, #tpu.memory_space<vmem>>) attributes {dimension_semantics = [#tpu.dimension_semantics<parallel>], iteration_bounds = array<i64: 2>, scalar_prefetch = 0 : i64, scratch_operands = 2 : i64, tpu.core_type = #tpu.core_type<tc>, window_params = [{transform_indices = @transform_0, window_bounds = array<i64: 1, 256, 16>}, {pipeline_mode = #tpu.pipeline_mode<synchronous>, transform_indices = @transform_1, window_bounds = array<i64: 2, 144, 16>}, {pipeline_mode = #tpu.pipeline_mode<synchronous>, transform_indices = @transform_2, window_bounds = array<i64: 2, 1, 16>}, {pipeline_mode = #tpu.pipeline_mode<synchronous>, transform_indices = @transform_3, window_bounds = array<i64: 2, 144, 16>}, {pipeline_mode = #tpu.pipeline_mode<synchronous>, transform_indices = @transform_4, window_bounds = array<i64: 2, 1, 16>}, {pipeline_mode = #tpu.pipeline_mode<synchronous>, transform_indices = @transform_5, window_bounds = array<i64: 2, 4, 16>}, {pipeline_mode = #tpu.pipeline_mode<synchronous>, transform_indices = @transform_6, window_bounds = array<i64: 2, 4, 1>}, {pipeline_mode = #tpu.pipeline_mode<synchronous>, transform_indices = @transform_7, window_bounds = array<i64: 2, 4, 16>}, {pipeline_mode = #tpu.pipeline_mode<synchronous>, transform_indices = @transform_8, window_bounds = array<i64: 2, 1, 16>}, {pipeline_mode = #tpu.pipeline_mode<synchronous>, transform_indices = @transform_9, window_bounds = array<i64: 144, 16>}, {pipeline_mode = #tpu.pipeline_mode<synchronous>, transform_indices = @transform_10, window_bounds = array<i64: 1, 16>}, {transform_indices = @transform_11, window_bounds = array<i64: 1, 256, 16>}]} {
    %c0 = arith.constant 0 : index
    %c0_0 = arith.constant 0 : index
    %c0_1 = arith.constant 0 : index
    %0 = vector.load %arg1[%c0, %c0_0, %c0_1] : memref<1x256x16xf32, #tpu.memory_space<vmem>>, vector<1x256x16xf32>
    %1 = vector.shape_cast %0 : vector<1x256x16xf32> to vector<256x16xf32>
    %cst = arith.constant 0.000000e+00 : f32
    %2 = vector.broadcast %cst : f32 to vector<18x18x16xf32>
    %c0_2 = arith.constant 0 : index
    %c0_3 = arith.constant 0 : index
    %c0_4 = arith.constant 0 : index
    %3 = vector.load %arg13[%c0_2, %c0_3, %c0_4] : memref<18x18x16xf32, #tpu.memory_space<vmem>>, vector<18x18x16xf32>
    tpu.vector_store %arg13[%c0_2, %c0_3, %c0_4], %2 {strides = array<i32>} : memref<18x18x16xf32, #tpu.memory_space<vmem>>, vector<18x18x16xf32>,
    %c0_5 = arith.constant 0 : index
    %c0_6 = arith.constant 0 : index
    %c0_7 = arith.constant 0 : index
    %4 = vector.load %arg2[%c0_5, %c0_6, %c0_7] : memref<2x144x16xf32, #tpu.memory_space<vmem>>, vector<1x144x16xf32>
    %5 = vector.shape_cast %4 : vector<1x144x16xf32> to vector<144x16xf32>
    %c0_8 = arith.constant 0 : index
    %c0_9 = arith.constant 0 : index
    %c0_10 = arith.constant 0 : index
    %6 = vector.load %arg3[%c0_8, %c0_9, %c0_10] : memref<2x1x16xf32, #tpu.memory_space<vmem>>, vector<1x1x16xf32>
    %7 = vector.shape_cast %6 : vector<1x1x16xf32> to vector<1x16xf32>
    %8 = vector.shape_cast %1 : vector<256x16xf32> to vector<16x16x16xf32>
    %c1 = arith.constant 1 : index
    %c1_11 = arith.constant 1 : index
    %c0_12 = arith.constant 0 : index
    %9 = vector.load %arg13[%c1, %c1_11, %c0_12] : memref<18x18x16xf32, #tpu.memory_space<vmem>>, vector<16x16x16xf32>
    tpu.vector_store %arg13[%c1, %c1_11, %c0_12], %8 {strides = array<i32>} : memref<18x18x16xf32, #tpu.memory_space<vmem>>, vector<16x16x16xf32>,
    %c0_13 = arith.constant 0 : index
    %c0_14 = arith.constant 0 : index
    %c0_15 = arith.constant 0 : index
    %10 = vector.load %arg13[%c0_13, %c0_14, %c0_15] : memref<18x18x16xf32, #tpu.memory_space<vmem>>, vector<18x18x16xf32>
    %11 = vector.extract_strided_slice %10 {offsets = [0, 0, 0], sizes = [16, 16, 16], strides = [1, 1, 1]} : vector<18x18x16xf32> to vector<16x16x16xf32>
    %12 = vector.shape_cast %11 : vector<16x16x16xf32> to vector<256x16xf32>
    %c0_16 = arith.constant 0 : index
    %c0_17 = arith.constant 0 : index
    %13 = vector.load %arg14[%c0_16, %c0_17] : memref<256x144xf32, #tpu.memory_space<vmem>>, vector<256x16xf32>
    tpu.vector_store %arg14[%c0_16, %c0_17], %12 {strides = array<i32>} : memref<256x144xf32, #tpu.memory_space<vmem>>, vector<256x16xf32>,
    %14 = vector.extract_strided_slice %10 {offsets = [0, 1, 0], sizes = [16, 16, 16], strides = [1, 1, 1]} : vector<18x18x16xf32> to vector<16x16x16xf32>
    %15 = vector.shape_cast %14 : vector<16x16x16xf32> to vector<256x16xf32>
    %c0_18 = arith.constant 0 : index
    %c16 = arith.constant 16 : index
    %16 = vector.load %arg14[%c0_18, %c16] : memref<256x144xf32, #tpu.memory_space<vmem>>, vector<256x16xf32>
    tpu.vector_store %arg14[%c0_18, %c16], %15 {strides = array<i32>} : memref<256x144xf32, #tpu.memory_space<vmem>>, vector<256x16xf32>,
    %17 = vector.extract_strided_slice %10 {offsets = [0, 2, 0], sizes = [16, 16, 16], strides = [1, 1, 1]} : vector<18x18x16xf32> to vector<16x16x16xf32>
    %18 = vector.shape_cast %17 : vector<16x16x16xf32> to vector<256x16xf32>
    %c0_19 = arith.constant 0 : index
    %c32 = arith.constant 32 : index
    %19 = vector.load %arg14[%c0_19, %c32] : memref<256x144xf32, #tpu.memory_space<vmem>>, vector<256x16xf32>
    tpu.vector_store %arg14[%c0_19, %c32], %18 {strides = array<i32>} : memref<256x144xf32, #tpu.memory_space<vmem>>, vector<256x16xf32>,
    %20 = vector.extract_strided_slice %10 {offsets = [1, 0, 0], sizes = [16, 16, 16], strides = [1, 1, 1]} : vector<18x18x16xf32> to vector<16x16x16xf32>
    %21 = vector.shape_cast %20 : vector<16x16x16xf32> to vector<256x16xf32>
    %c0_20 = arith.constant 0 : index
    %c48 = arith.constant 48 : index
    %22 = vector.load %arg14[%c0_20, %c48] : memref<256x144xf32, #tpu.memory_space<vmem>>, vector<256x16xf32>
    tpu.vector_store %arg14[%c0_20, %c48], %21 {strides = array<i32>} : memref<256x144xf32, #tpu.memory_space<vmem>>, vector<256x16xf32>,
    %23 = vector.extract_strided_slice %10 {offsets = [1, 1, 0], sizes = [16, 16, 16], strides = [1, 1, 1]} : vector<18x18x16xf32> to vector<16x16x16xf32>
    %24 = vector.shape_cast %23 : vector<16x16x16xf32> to vector<256x16xf32>
    %c0_21 = arith.constant 0 : index
    %c64 = arith.constant 64 : index
    %25 = vector.load %arg14[%c0_21, %c64] : memref<256x144xf32, #tpu.memory_space<vmem>>, vector<256x16xf32>
    tpu.vector_store %arg14[%c0_21, %c64], %24 {strides = array<i32>} : memref<256x144xf32, #tpu.memory_space<vmem>>, vector<256x16xf32>,
    %26 = vector.extract_strided_slice %10 {offsets = [1, 2, 0], sizes = [16, 16, 16], strides = [1, 1, 1]} : vector<18x18x16xf32> to vector<16x16x16xf32>
    %27 = vector.shape_cast %26 : vector<16x16x16xf32> to vector<256x16xf32>
    %c0_22 = arith.constant 0 : index
    %c80 = arith.constant 80 : index
    %28 = vector.load %arg14[%c0_22, %c80] : memref<256x144xf32, #tpu.memory_space<vmem>>, vector<256x16xf32>
    tpu.vector_store %arg14[%c0_22, %c80], %27 {strides = array<i32>} : memref<256x144xf32, #tpu.memory_space<vmem>>, vector<256x16xf32>,
    %29 = vector.extract_strided_slice %10 {offsets = [2, 0, 0], sizes = [16, 16, 16], strides = [1, 1, 1]} : vector<18x18x16xf32> to vector<16x16x16xf32>
    %30 = vector.shape_cast %29 : vector<16x16x16xf32> to vector<256x16xf32>
    %c0_23 = arith.constant 0 : index
    %c96 = arith.constant 96 : index
    %31 = vector.load %arg14[%c0_23, %c96] : memref<256x144xf32, #tpu.memory_space<vmem>>, vector<256x16xf32>
    tpu.vector_store %arg14[%c0_23, %c96], %30 {strides = array<i32>} : memref<256x144xf32, #tpu.memory_space<vmem>>, vector<256x16xf32>,
    %32 = vector.extract_strided_slice %10 {offsets = [2, 1, 0], sizes = [16, 16, 16], strides = [1, 1, 1]} : vector<18x18x16xf32> to vector<16x16x16xf32>
    %33 = vector.shape_cast %32 : vector<16x16x16xf32> to vector<256x16xf32>
    %c0_24 = arith.constant 0 : index
    %c112 = arith.constant 112 : index
    %34 = vector.load %arg14[%c0_24, %c112] : memref<256x144xf32, #tpu.memory_space<vmem>>, vector<256x16xf32>
    tpu.vector_store %arg14[%c0_24, %c112], %33 {strides = array<i32>} : memref<256x144xf32, #tpu.memory_space<vmem>>, vector<256x16xf32>,
    %35 = vector.extract_strided_slice %10 {offsets = [2, 2, 0], sizes = [16, 16, 16], strides = [1, 1, 1]} : vector<18x18x16xf32> to vector<16x16x16xf32>
    %36 = vector.shape_cast %35 : vector<16x16x16xf32> to vector<256x16xf32>
    %c0_25 = arith.constant 0 : index
    %c128 = arith.constant 128 : index
    %37 = vector.load %arg14[%c0_25, %c128] : memref<256x144xf32, #tpu.memory_space<vmem>>, vector<256x16xf32>
    tpu.vector_store %arg14[%c0_25, %c128], %36 {strides = array<i32>} : memref<256x144xf32, #tpu.memory_space<vmem>>, vector<256x16xf32>,
    %c0_26 = arith.constant 0 : index
    %c0_27 = arith.constant 0 : index
    %38 = vector.load %arg14[%c0_26, %c0_27] : memref<256x144xf32, #tpu.memory_space<vmem>>, vector<256x144xf32>
    %cst_28 = arith.constant dense<0.000000e+00> : vector<256x16xf32>
    %39 = tpu.matmul %38, %5, %cst_28 {dimension_numbers = #tpu.dot_dimension_numbers<[1], [0], [0], [1], [0, 0, 1, 1], [], []>} : vector<256x144xf32>, vector<144x16xf32>, vector<256x16xf32> -> vector<256x16xf32>
    %40 = vector.broadcast %7 : vector<1x16xf32> to vector<256x16xf32>
    %41 = arith.addf %39, %40 : vector<256x16xf32>
    %cst_29 = arith.constant 0.000000e+00 : f32
    %42 = vector.broadcast %cst_29 : f32 to vector<256x16xf32>
    %43 = arith.maximumf %41, %42 : vector<256x16xf32>
    %c0_30 = arith.constant 0 : index
    %c0_31 = arith.constant 0 : index
    %c0_32 = arith.constant 0 : index
    %44 = vector.load %arg4[%c0_30, %c0_31, %c0_32] : memref<2x144x16xf32, #tpu.memory_space<vmem>>, vector<1x144x16xf32>
    %45 = vector.shape_cast %44 : vector<1x144x16xf32> to vector<144x16xf32>
    %c0_33 = arith.constant 0 : index
    %c0_34 = arith.constant 0 : index
    %c0_35 = arith.constant 0 : index
    %46 = vector.load %arg5[%c0_33, %c0_34, %c0_35] : memref<2x1x16xf32, #tpu.memory_space<vmem>>, vector<1x1x16xf32>
    %47 = vector.shape_cast %46 : vector<1x1x16xf32> to vector<1x16xf32>
    %48 = vector.shape_cast %43 : vector<256x16xf32> to vector<16x16x16xf32>
    %c1_36 = arith.constant 1 : index
    %c1_37 = arith.constant 1 : index
    %c0_38 = arith.constant 0 : index
    %49 = vector.load %arg13[%c1_36, %c1_37, %c0_38] : memref<18x18x16xf32, #tpu.memory_space<vmem>>, vector<16x16x16xf32>
    tpu.vector_store %arg13[%c1_36, %c1_37, %c0_38], %48 {strides = array<i32>} : memref<18x18x16xf32, #tpu.memory_space<vmem>>, vector<16x16x16xf32>,
    %c0_39 = arith.constant 0 : index
    %c0_40 = arith.constant 0 : index
    %c0_41 = arith.constant 0 : index
    %50 = vector.load %arg13[%c0_39, %c0_40, %c0_41] : memref<18x18x16xf32, #tpu.memory_space<vmem>>, vector<18x18x16xf32>
    %51 = vector.extract_strided_slice %50 {offsets = [0, 0, 0], sizes = [16, 16, 16], strides = [1, 1, 1]} : vector<18x18x16xf32> to vector<16x16x16xf32>
    %52 = vector.shape_cast %51 : vector<16x16x16xf32> to vector<256x16xf32>
    %c0_42 = arith.constant 0 : index
    %c0_43 = arith.constant 0 : index
    %53 = vector.load %arg14[%c0_42, %c0_43] : memref<256x144xf32, #tpu.memory_space<vmem>>, vector<256x16xf32>
    tpu.vector_store %arg14[%c0_42, %c0_43], %52 {strides = array<i32>} : memref<256x144xf32, #tpu.memory_space<vmem>>, vector<256x16xf32>,
    %54 = vector.extract_strided_slice %50 {offsets = [0, 1, 0], sizes = [16, 16, 16], strides = [1, 1, 1]} : vector<18x18x16xf32> to vector<16x16x16xf32>
    %55 = vector.shape_cast %54 : vector<16x16x16xf32> to vector<256x16xf32>
    %c0_44 = arith.constant 0 : index
    %c16_45 = arith.constant 16 : index
    %56 = vector.load %arg14[%c0_44, %c16_45] : memref<256x144xf32, #tpu.memory_space<vmem>>, vector<256x16xf32>
    tpu.vector_store %arg14[%c0_44, %c16_45], %55 {strides = array<i32>} : memref<256x144xf32, #tpu.memory_space<vmem>>, vector<256x16xf32>,
    %57 = vector.extract_strided_slice %50 {offsets = [0, 2, 0], sizes = [16, 16, 16], strides = [1, 1, 1]} : vector<18x18x16xf32> to vector<16x16x16xf32>
    %58 = vector.shape_cast %57 : vector<16x16x16xf32> to vector<256x16xf32>
    %c0_46 = arith.constant 0 : index
    %c32_47 = arith.constant 32 : index
    %59 = vector.load %arg14[%c0_46, %c32_47] : memref<256x144xf32, #tpu.memory_space<vmem>>, vector<256x16xf32>
    tpu.vector_store %arg14[%c0_46, %c32_47], %58 {strides = array<i32>} : memref<256x144xf32, #tpu.memory_space<vmem>>, vector<256x16xf32>,
    %60 = vector.extract_strided_slice %50 {offsets = [1, 0, 0], sizes = [16, 16, 16], strides = [1, 1, 1]} : vector<18x18x16xf32> to vector<16x16x16xf32>
    %61 = vector.shape_cast %60 : vector<16x16x16xf32> to vector<256x16xf32>
    %c0_48 = arith.constant 0 : index
    %c48_49 = arith.constant 48 : index
    %62 = vector.load %arg14[%c0_48, %c48_49] : memref<256x144xf32, #tpu.memory_space<vmem>>, vector<256x16xf32>
    tpu.vector_store %arg14[%c0_48, %c48_49], %61 {strides = array<i32>} : memref<256x144xf32, #tpu.memory_space<vmem>>, vector<256x16xf32>,
    %63 = vector.extract_strided_slice %50 {offsets = [1, 1, 0], sizes = [16, 16, 16], strides = [1, 1, 1]} : vector<18x18x16xf32> to vector<16x16x16xf32>
    %64 = vector.shape_cast %63 : vector<16x16x16xf32> to vector<256x16xf32>
    %c0_50 = arith.constant 0 : index
    %c64_51 = arith.constant 64 : index
    %65 = vector.load %arg14[%c0_50, %c64_51] : memref<256x144xf32, #tpu.memory_space<vmem>>, vector<256x16xf32>
    tpu.vector_store %arg14[%c0_50, %c64_51], %64 {strides = array<i32>} : memref<256x144xf32, #tpu.memory_space<vmem>>, vector<256x16xf32>,
    %66 = vector.extract_strided_slice %50 {offsets = [1, 2, 0], sizes = [16, 16, 16], strides = [1, 1, 1]} : vector<18x18x16xf32> to vector<16x16x16xf32>
    %67 = vector.shape_cast %66 : vector<16x16x16xf32> to vector<256x16xf32>
    %c0_52 = arith.constant 0 : index
    %c80_53 = arith.constant 80 : index
    %68 = vector.load %arg14[%c0_52, %c80_53] : memref<256x144xf32, #tpu.memory_space<vmem>>, vector<256x16xf32>
    tpu.vector_store %arg14[%c0_52, %c80_53], %67 {strides = array<i32>} : memref<256x144xf32, #tpu.memory_space<vmem>>, vector<256x16xf32>,
    %69 = vector.extract_strided_slice %50 {offsets = [2, 0, 0], sizes = [16, 16, 16], strides = [1, 1, 1]} : vector<18x18x16xf32> to vector<16x16x16xf32>
    %70 = vector.shape_cast %69 : vector<16x16x16xf32> to vector<256x16xf32>
    %c0_54 = arith.constant 0 : index
    %c96_55 = arith.constant 96 : index
    %71 = vector.load %arg14[%c0_54, %c96_55] : memref<256x144xf32, #tpu.memory_space<vmem>>, vector<256x16xf32>
    tpu.vector_store %arg14[%c0_54, %c96_55], %70 {strides = array<i32>} : memref<256x144xf32, #tpu.memory_space<vmem>>, vector<256x16xf32>,
    %72 = vector.extract_strided_slice %50 {offsets = [2, 1, 0], sizes = [16, 16, 16], strides = [1, 1, 1]} : vector<18x18x16xf32> to vector<16x16x16xf32>
    %73 = vector.shape_cast %72 : vector<16x16x16xf32> to vector<256x16xf32>
    %c0_56 = arith.constant 0 : index
    %c112_57 = arith.constant 112 : index
    %74 = vector.load %arg14[%c0_56, %c112_57] : memref<256x144xf32, #tpu.memory_space<vmem>>, vector<256x16xf32>
    tpu.vector_store %arg14[%c0_56, %c112_57], %73 {strides = array<i32>} : memref<256x144xf32, #tpu.memory_space<vmem>>, vector<256x16xf32>,
    %75 = vector.extract_strided_slice %50 {offsets = [2, 2, 0], sizes = [16, 16, 16], strides = [1, 1, 1]} : vector<18x18x16xf32> to vector<16x16x16xf32>
    %76 = vector.shape_cast %75 : vector<16x16x16xf32> to vector<256x16xf32>
    %c0_58 = arith.constant 0 : index
    %c128_59 = arith.constant 128 : index
    %77 = vector.load %arg14[%c0_58, %c128_59] : memref<256x144xf32, #tpu.memory_space<vmem>>, vector<256x16xf32>
    tpu.vector_store %arg14[%c0_58, %c128_59], %76 {strides = array<i32>} : memref<256x144xf32, #tpu.memory_space<vmem>>, vector<256x16xf32>,
    %c0_60 = arith.constant 0 : index
    %c0_61 = arith.constant 0 : index
    %78 = vector.load %arg14[%c0_60, %c0_61] : memref<256x144xf32, #tpu.memory_space<vmem>>, vector<256x144xf32>
    %cst_62 = arith.constant dense<0.000000e+00> : vector<256x16xf32>
    %79 = tpu.matmul %78, %45, %cst_62 {dimension_numbers = #tpu.dot_dimension_numbers<[1], [0], [0], [1], [0, 0, 1, 1], [], []>} : vector<256x144xf32>, vector<144x16xf32>, vector<256x16xf32> -> vector<256x16xf32>
    %80 = vector.broadcast %47 : vector<1x16xf32> to vector<256x16xf32>
    %81 = arith.addf %79, %80 : vector<256x16xf32>
    %cst_63 = arith.constant dense<0.000000e+00> : vector<16xf32>
    %82 = vector.multi_reduction <add>, %81, %cst_63 [0] : vector<256x16xf32> to vector<16xf32>
    %83 = vector.shape_cast %82 : vector<16xf32> to vector<1x16xf32>
    %cst_64 = arith.constant 2.560000e+02 : f32
    %84 = vector.broadcast %cst_64 : f32 to vector<1x16xf32>
    %85 = arith.divf %83, %84 : vector<1x16xf32>
    %c0_65 = arith.constant 0 : index
    %c0_66 = arith.constant 0 : index
    %c0_67 = arith.constant 0 : index
    %86 = vector.load %arg6[%c0_65, %c0_66, %c0_67] : memref<2x4x16xf32, #tpu.memory_space<vmem>>, vector<1x4x16xf32>
    %87 = vector.shape_cast %86 : vector<1x4x16xf32> to vector<4x16xf32>
    %88 = vector.broadcast %85 : vector<1x16xf32> to vector<4x16xf32>
    %89 = arith.mulf %87, %88 : vector<4x16xf32>
    %cst_68 = arith.constant dense<0.000000e+00> : vector<4xf32>
    %90 = vector.multi_reduction <add>, %89, %cst_68 [1] : vector<4x16xf32> to vector<4xf32>
    %91 = vector.shape_cast %90 : vector<4xf32> to vector<4x1xf32>
    %c0_69 = arith.constant 0 : index
    %c0_70 = arith.constant 0 : index
    %c0_71 = arith.constant 0 : index
    %92 = vector.load %arg7[%c0_69, %c0_70, %c0_71] : memref<2x4x1xf32, #tpu.memory_space<vmem>>, vector<1x4x1xf32>
    %93 = vector.shape_cast %92 : vector<1x4x1xf32> to vector<4x1xf32>
    %94 = arith.addf %91, %93 : vector<4x1xf32>
    %cst_72 = arith.constant 0.000000e+00 : f32
    %95 = vector.broadcast %cst_72 : f32 to vector<4x1xf32>
    %96 = arith.maximumf %94, %95 : vector<4x1xf32>
    %c0_73 = arith.constant 0 : index
    %c0_74 = arith.constant 0 : index
    %c0_75 = arith.constant 0 : index
    %97 = vector.load %arg8[%c0_73, %c0_74, %c0_75] : memref<2x4x16xf32, #tpu.memory_space<vmem>>, vector<1x4x16xf32>
    %98 = vector.shape_cast %97 : vector<1x4x16xf32> to vector<4x16xf32>
    %99 = vector.broadcast %96 : vector<4x1xf32> to vector<4x16xf32>
    %100 = arith.mulf %98, %99 : vector<4x16xf32>
    %cst_76 = arith.constant dense<0.000000e+00> : vector<16xf32>
    %101 = vector.multi_reduction <add>, %100, %cst_76 [0] : vector<4x16xf32> to vector<16xf32>
    %102 = vector.shape_cast %101 : vector<16xf32> to vector<1x16xf32>
    %c0_77 = arith.constant 0 : index
    %c0_78 = arith.constant 0 : index
    %c0_79 = arith.constant 0 : index
    %103 = vector.load %arg9[%c0_77, %c0_78, %c0_79] : memref<2x1x16xf32, #tpu.memory_space<vmem>>, vector<1x1x16xf32>
    %104 = vector.shape_cast %103 : vector<1x1x16xf32> to vector<1x16xf32>
    %105 = arith.addf %102, %104 : vector<1x16xf32>
    %106 = arith.negf %105 : vector<1x16xf32>
    %107 = math.exp %106 : vector<1x16xf32>
    %cst_80 = arith.constant 1.000000e+00 : f32
    %108 = vector.broadcast %cst_80 : f32 to vector<1x16xf32>
    %109 = arith.addf %108, %107 : vector<1x16xf32>
    %110 = arith.divf %108, %109 : vector<1x16xf32>
    %111 = vector.broadcast %110 : vector<1x16xf32> to vector<256x16xf32>
    %112 = arith.mulf %81, %111 : vector<256x16xf32>
    %113 = arith.addf %112, %1 : vector<256x16xf32>
    %c1_81 = arith.constant 1 : index
    %c0_82 = arith.constant 0 : index
    %c0_83 = arith.constant 0 : index
    %114 = vector.load %arg2[%c1_81, %c0_82, %c0_83] : memref<2x144x16xf32, #tpu.memory_space<vmem>>, vector<1x144x16xf32>
    %115 = vector.shape_cast %114 : vector<1x144x16xf32> to vector<144x16xf32>
    %c1_84 = arith.constant 1 : index
    %c0_85 = arith.constant 0 : index
    %c0_86 = arith.constant 0 : index
    %116 = vector.load %arg3[%c1_84, %c0_85, %c0_86] : memref<2x1x16xf32, #tpu.memory_space<vmem>>, vector<1x1x16xf32>
    %117 = vector.shape_cast %116 : vector<1x1x16xf32> to vector<1x16xf32>
    %118 = vector.shape_cast %113 : vector<256x16xf32> to vector<16x16x16xf32>
    %c1_87 = arith.constant 1 : index
    %c1_88 = arith.constant 1 : index
    %c0_89 = arith.constant 0 : index
    %119 = vector.load %arg13[%c1_87, %c1_88, %c0_89] : memref<18x18x16xf32, #tpu.memory_space<vmem>>, vector<16x16x16xf32>
    tpu.vector_store %arg13[%c1_87, %c1_88, %c0_89], %118 {strides = array<i32>} : memref<18x18x16xf32, #tpu.memory_space<vmem>>, vector<16x16x16xf32>,
    %c0_90 = arith.constant 0 : index
    %c0_91 = arith.constant 0 : index
    %c0_92 = arith.constant 0 : index
    %120 = vector.load %arg13[%c0_90, %c0_91, %c0_92] : memref<18x18x16xf32, #tpu.memory_space<vmem>>, vector<18x18x16xf32>
    %121 = vector.extract_strided_slice %120 {offsets = [0, 0, 0], sizes = [16, 16, 16], strides = [1, 1, 1]} : vector<18x18x16xf32> to vector<16x16x16xf32>
    %122 = vector.shape_cast %121 : vector<16x16x16xf32> to vector<256x16xf32>
    %c0_93 = arith.constant 0 : index
    %c0_94 = arith.constant 0 : index
    %123 = vector.load %arg14[%c0_93, %c0_94] : memref<256x144xf32, #tpu.memory_space<vmem>>, vector<256x16xf32>
    tpu.vector_store %arg14[%c0_93, %c0_94], %122 {strides = array<i32>} : memref<256x144xf32, #tpu.memory_space<vmem>>, vector<256x16xf32>,
    %124 = vector.extract_strided_slice %120 {offsets = [0, 1, 0], sizes = [16, 16, 16], strides = [1, 1, 1]} : vector<18x18x16xf32> to vector<16x16x16xf32>
    %125 = vector.shape_cast %124 : vector<16x16x16xf32> to vector<256x16xf32>
    %c0_95 = arith.constant 0 : index
    %c16_96 = arith.constant 16 : index
    %126 = vector.load %arg14[%c0_95, %c16_96] : memref<256x144xf32, #tpu.memory_space<vmem>>, vector<256x16xf32>
    tpu.vector_store %arg14[%c0_95, %c16_96], %125 {strides = array<i32>} : memref<256x144xf32, #tpu.memory_space<vmem>>, vector<256x16xf32>,
    %127 = vector.extract_strided_slice %120 {offsets = [0, 2, 0], sizes = [16, 16, 16], strides = [1, 1, 1]} : vector<18x18x16xf32> to vector<16x16x16xf32>
    %128 = vector.shape_cast %127 : vector<16x16x16xf32> to vector<256x16xf32>
    %c0_97 = arith.constant 0 : index
    %c32_98 = arith.constant 32 : index
    %129 = vector.load %arg14[%c0_97, %c32_98] : memref<256x144xf32, #tpu.memory_space<vmem>>, vector<256x16xf32>
    tpu.vector_store %arg14[%c0_97, %c32_98], %128 {strides = array<i32>} : memref<256x144xf32, #tpu.memory_space<vmem>>, vector<256x16xf32>,
    %130 = vector.extract_strided_slice %120 {offsets = [1, 0, 0], sizes = [16, 16, 16], strides = [1, 1, 1]} : vector<18x18x16xf32> to vector<16x16x16xf32>
    %131 = vector.shape_cast %130 : vector<16x16x16xf32> to vector<256x16xf32>
    %c0_99 = arith.constant 0 : index
    %c48_100 = arith.constant 48 : index
    %132 = vector.load %arg14[%c0_99, %c48_100] : memref<256x144xf32, #tpu.memory_space<vmem>>, vector<256x16xf32>
    tpu.vector_store %arg14[%c0_99, %c48_100], %131 {strides = array<i32>} : memref<256x144xf32, #tpu.memory_space<vmem>>, vector<256x16xf32>,
    %133 = vector.extract_strided_slice %120 {offsets = [1, 1, 0], sizes = [16, 16, 16], strides = [1, 1, 1]} : vector<18x18x16xf32> to vector<16x16x16xf32>
    %134 = vector.shape_cast %133 : vector<16x16x16xf32> to vector<256x16xf32>
    %c0_101 = arith.constant 0 : index
    %c64_102 = arith.constant 64 : index
    %135 = vector.load %arg14[%c0_101, %c64_102] : memref<256x144xf32, #tpu.memory_space<vmem>>, vector<256x16xf32>
    tpu.vector_store %arg14[%c0_101, %c64_102], %134 {strides = array<i32>} : memref<256x144xf32, #tpu.memory_space<vmem>>, vector<256x16xf32>,
    %136 = vector.extract_strided_slice %120 {offsets = [1, 2, 0], sizes = [16, 16, 16], strides = [1, 1, 1]} : vector<18x18x16xf32> to vector<16x16x16xf32>
    %137 = vector.shape_cast %136 : vector<16x16x16xf32> to vector<256x16xf32>
    %c0_103 = arith.constant 0 : index
    %c80_104 = arith.constant 80 : index
    %138 = vector.load %arg14[%c0_103, %c80_104] : memref<256x144xf32, #tpu.memory_space<vmem>>, vector<256x16xf32>
    tpu.vector_store %arg14[%c0_103, %c80_104], %137 {strides = array<i32>} : memref<256x144xf32, #tpu.memory_space<vmem>>, vector<256x16xf32>,
    %139 = vector.extract_strided_slice %120 {offsets = [2, 0, 0], sizes = [16, 16, 16], strides = [1, 1, 1]} : vector<18x18x16xf32> to vector<16x16x16xf32>
    %140 = vector.shape_cast %139 : vector<16x16x16xf32> to vector<256x16xf32>
    %c0_105 = arith.constant 0 : index
    %c96_106 = arith.constant 96 : index
    %141 = vector.load %arg14[%c0_105, %c96_106] : memref<256x144xf32, #tpu.memory_space<vmem>>, vector<256x16xf32>
    tpu.vector_store %arg14[%c0_105, %c96_106], %140 {strides = array<i32>} : memref<256x144xf32, #tpu.memory_space<vmem>>, vector<256x16xf32>,
    %142 = vector.extract_strided_slice %120 {offsets = [2, 1, 0], sizes = [16, 16, 16], strides = [1, 1, 1]} : vector<18x18x16xf32> to vector<16x16x16xf32>
    %143 = vector.shape_cast %142 : vector<16x16x16xf32> to vector<256x16xf32>
    %c0_107 = arith.constant 0 : index
    %c112_108 = arith.constant 112 : index
    %144 = vector.load %arg14[%c0_107, %c112_108] : memref<256x144xf32, #tpu.memory_space<vmem>>, vector<256x16xf32>
    tpu.vector_store %arg14[%c0_107, %c112_108], %143 {strides = array<i32>} : memref<256x144xf32, #tpu.memory_space<vmem>>, vector<256x16xf32>,
    %145 = vector.extract_strided_slice %120 {offsets = [2, 2, 0], sizes = [16, 16, 16], strides = [1, 1, 1]} : vector<18x18x16xf32> to vector<16x16x16xf32>
    %146 = vector.shape_cast %145 : vector<16x16x16xf32> to vector<256x16xf32>
    %c0_109 = arith.constant 0 : index
    %c128_110 = arith.constant 128 : index
    %147 = vector.load %arg14[%c0_109, %c128_110] : memref<256x144xf32, #tpu.memory_space<vmem>>, vector<256x16xf32>
    tpu.vector_store %arg14[%c0_109, %c128_110], %146 {strides = array<i32>} : memref<256x144xf32, #tpu.memory_space<vmem>>, vector<256x16xf32>,
    %c0_111 = arith.constant 0 : index
    %c0_112 = arith.constant 0 : index
    %148 = vector.load %arg14[%c0_111, %c0_112] : memref<256x144xf32, #tpu.memory_space<vmem>>, vector<256x144xf32>
    %cst_113 = arith.constant dense<0.000000e+00> : vector<256x16xf32>
    %149 = tpu.matmul %148, %115, %cst_113 {dimension_numbers = #tpu.dot_dimension_numbers<[1], [0], [0], [1], [0, 0, 1, 1], [], []>} : vector<256x144xf32>, vector<144x16xf32>, vector<256x16xf32> -> vector<256x16xf32>
    %150 = vector.broadcast %117 : vector<1x16xf32> to vector<256x16xf32>
    %151 = arith.addf %149, %150 : vector<256x16xf32>
    %cst_114 = arith.constant 0.000000e+00 : f32
    %152 = vector.broadcast %cst_114 : f32 to vector<256x16xf32>
    %153 = arith.maximumf %151, %152 : vector<256x16xf32>
    %c1_115 = arith.constant 1 : index
    %c0_116 = arith.constant 0 : index
    %c0_117 = arith.constant 0 : index
    %154 = vector.load %arg4[%c1_115, %c0_116, %c0_117] : memref<2x144x16xf32, #tpu.memory_space<vmem>>, vector<1x144x16xf32>
    %155 = vector.shape_cast %154 : vector<1x144x16xf32> to vector<144x16xf32>
    %c1_118 = arith.constant 1 : index
    %c0_119 = arith.constant 0 : index
    %c0_120 = arith.constant 0 : index
    %156 = vector.load %arg5[%c1_118, %c0_119, %c0_120] : memref<2x1x16xf32, #tpu.memory_space<vmem>>, vector<1x1x16xf32>
    %157 = vector.shape_cast %156 : vector<1x1x16xf32> to vector<1x16xf32>
    %158 = vector.shape_cast %153 : vector<256x16xf32> to vector<16x16x16xf32>
    %c1_121 = arith.constant 1 : index
    %c1_122 = arith.constant 1 : index
    %c0_123 = arith.constant 0 : index
    %159 = vector.load %arg13[%c1_121, %c1_122, %c0_123] : memref<18x18x16xf32, #tpu.memory_space<vmem>>, vector<16x16x16xf32>
    tpu.vector_store %arg13[%c1_121, %c1_122, %c0_123], %158 {strides = array<i32>} : memref<18x18x16xf32, #tpu.memory_space<vmem>>, vector<16x16x16xf32>,
    %c0_124 = arith.constant 0 : index
    %c0_125 = arith.constant 0 : index
    %c0_126 = arith.constant 0 : index
    %160 = vector.load %arg13[%c0_124, %c0_125, %c0_126] : memref<18x18x16xf32, #tpu.memory_space<vmem>>, vector<18x18x16xf32>
    %161 = vector.extract_strided_slice %160 {offsets = [0, 0, 0], sizes = [16, 16, 16], strides = [1, 1, 1]} : vector<18x18x16xf32> to vector<16x16x16xf32>
    %162 = vector.shape_cast %161 : vector<16x16x16xf32> to vector<256x16xf32>
    %c0_127 = arith.constant 0 : index
    %c0_128 = arith.constant 0 : index
    %163 = vector.load %arg14[%c0_127, %c0_128] : memref<256x144xf32, #tpu.memory_space<vmem>>, vector<256x16xf32>
    tpu.vector_store %arg14[%c0_127, %c0_128], %162 {strides = array<i32>} : memref<256x144xf32, #tpu.memory_space<vmem>>, vector<256x16xf32>,
    %164 = vector.extract_strided_slice %160 {offsets = [0, 1, 0], sizes = [16, 16, 16], strides = [1, 1, 1]} : vector<18x18x16xf32> to vector<16x16x16xf32>
    %165 = vector.shape_cast %164 : vector<16x16x16xf32> to vector<256x16xf32>
    %c0_129 = arith.constant 0 : index
    %c16_130 = arith.constant 16 : index
    %166 = vector.load %arg14[%c0_129, %c16_130] : memref<256x144xf32, #tpu.memory_space<vmem>>, vector<256x16xf32>
    tpu.vector_store %arg14[%c0_129, %c16_130], %165 {strides = array<i32>} : memref<256x144xf32, #tpu.memory_space<vmem>>, vector<256x16xf32>,
    %167 = vector.extract_strided_slice %160 {offsets = [0, 2, 0], sizes = [16, 16, 16], strides = [1, 1, 1]} : vector<18x18x16xf32> to vector<16x16x16xf32>
    %168 = vector.shape_cast %167 : vector<16x16x16xf32> to vector<256x16xf32>
    %c0_131 = arith.constant 0 : index
    %c32_132 = arith.constant 32 : index
    %169 = vector.load %arg14[%c0_131, %c32_132] : memref<256x144xf32, #tpu.memory_space<vmem>>, vector<256x16xf32>
    tpu.vector_store %arg14[%c0_131, %c32_132], %168 {strides = array<i32>} : memref<256x144xf32, #tpu.memory_space<vmem>>, vector<256x16xf32>,
    %170 = vector.extract_strided_slice %160 {offsets = [1, 0, 0], sizes = [16, 16, 16], strides = [1, 1, 1]} : vector<18x18x16xf32> to vector<16x16x16xf32>
    %171 = vector.shape_cast %170 : vector<16x16x16xf32> to vector<256x16xf32>
    %c0_133 = arith.constant 0 : index
    %c48_134 = arith.constant 48 : index
    %172 = vector.load %arg14[%c0_133, %c48_134] : memref<256x144xf32, #tpu.memory_space<vmem>>, vector<256x16xf32>
    tpu.vector_store %arg14[%c0_133, %c48_134], %171 {strides = array<i32>} : memref<256x144xf32, #tpu.memory_space<vmem>>, vector<256x16xf32>,
    %173 = vector.extract_strided_slice %160 {offsets = [1, 1, 0], sizes = [16, 16, 16], strides = [1, 1, 1]} : vector<18x18x16xf32> to vector<16x16x16xf32>
    %174 = vector.shape_cast %173 : vector<16x16x16xf32> to vector<256x16xf32>
    %c0_135 = arith.constant 0 : index
    %c64_136 = arith.constant 64 : index
    %175 = vector.load %arg14[%c0_135, %c64_136] : memref<256x144xf32, #tpu.memory_space<vmem>>, vector<256x16xf32>
    tpu.vector_store %arg14[%c0_135, %c64_136], %174 {strides = array<i32>} : memref<256x144xf32, #tpu.memory_space<vmem>>, vector<256x16xf32>,
    %176 = vector.extract_strided_slice %160 {offsets = [1, 2, 0], sizes = [16, 16, 16], strides = [1, 1, 1]} : vector<18x18x16xf32> to vector<16x16x16xf32>
    %177 = vector.shape_cast %176 : vector<16x16x16xf32> to vector<256x16xf32>
    %c0_137 = arith.constant 0 : index
    %c80_138 = arith.constant 80 : index
    %178 = vector.load %arg14[%c0_137, %c80_138] : memref<256x144xf32, #tpu.memory_space<vmem>>, vector<256x16xf32>
    tpu.vector_store %arg14[%c0_137, %c80_138], %177 {strides = array<i32>} : memref<256x144xf32, #tpu.memory_space<vmem>>, vector<256x16xf32>,
    %179 = vector.extract_strided_slice %160 {offsets = [2, 0, 0], sizes = [16, 16, 16], strides = [1, 1, 1]} : vector<18x18x16xf32> to vector<16x16x16xf32>
    %180 = vector.shape_cast %179 : vector<16x16x16xf32> to vector<256x16xf32>
    %c0_139 = arith.constant 0 : index
    %c96_140 = arith.constant 96 : index
    %181 = vector.load %arg14[%c0_139, %c96_140] : memref<256x144xf32, #tpu.memory_space<vmem>>, vector<256x16xf32>
    tpu.vector_store %arg14[%c0_139, %c96_140], %180 {strides = array<i32>} : memref<256x144xf32, #tpu.memory_space<vmem>>, vector<256x16xf32>,
    %182 = vector.extract_strided_slice %160 {offsets = [2, 1, 0], sizes = [16, 16, 16], strides = [1, 1, 1]} : vector<18x18x16xf32> to vector<16x16x16xf32>
    %183 = vector.shape_cast %182 : vector<16x16x16xf32> to vector<256x16xf32>
    %c0_141 = arith.constant 0 : index
    %c112_142 = arith.constant 112 : index
    %184 = vector.load %arg14[%c0_141, %c112_142] : memref<256x144xf32, #tpu.memory_space<vmem>>, vector<256x16xf32>
    tpu.vector_store %arg14[%c0_141, %c112_142], %183 {strides = array<i32>} : memref<256x144xf32, #tpu.memory_space<vmem>>, vector<256x16xf32>,
    %185 = vector.extract_strided_slice %160 {offsets = [2, 2, 0], sizes = [16, 16, 16], strides = [1, 1, 1]} : vector<18x18x16xf32> to vector<16x16x16xf32>
    %186 = vector.shape_cast %185 : vector<16x16x16xf32> to vector<256x16xf32>
    %c0_143 = arith.constant 0 : index
    %c128_144 = arith.constant 128 : index
    %187 = vector.load %arg14[%c0_143, %c128_144] : memref<256x144xf32, #tpu.memory_space<vmem>>, vector<256x16xf32>
    tpu.vector_store %arg14[%c0_143, %c128_144], %186 {strides = array<i32>} : memref<256x144xf32, #tpu.memory_space<vmem>>, vector<256x16xf32>,
    %c0_145 = arith.constant 0 : index
    %c0_146 = arith.constant 0 : index
    %188 = vector.load %arg14[%c0_145, %c0_146] : memref<256x144xf32, #tpu.memory_space<vmem>>, vector<256x144xf32>
    %cst_147 = arith.constant dense<0.000000e+00> : vector<256x16xf32>
    %189 = tpu.matmul %188, %155, %cst_147 {dimension_numbers = #tpu.dot_dimension_numbers<[1], [0], [0], [1], [0, 0, 1, 1], [], []>} : vector<256x144xf32>, vector<144x16xf32>, vector<256x16xf32> -> vector<256x16xf32>
    %190 = vector.broadcast %157 : vector<1x16xf32> to vector<256x16xf32>
    %191 = arith.addf %189, %190 : vector<256x16xf32>
    %cst_148 = arith.constant dense<0.000000e+00> : vector<16xf32>
    %192 = vector.multi_reduction <add>, %191, %cst_148 [0] : vector<256x16xf32> to vector<16xf32>
    %193 = vector.shape_cast %192 : vector<16xf32> to vector<1x16xf32>
    %cst_149 = arith.constant 2.560000e+02 : f32
    %194 = vector.broadcast %cst_149 : f32 to vector<1x16xf32>
    %195 = arith.divf %193, %194 : vector<1x16xf32>
    %c1_150 = arith.constant 1 : index
    %c0_151 = arith.constant 0 : index
    %c0_152 = arith.constant 0 : index
    %196 = vector.load %arg6[%c1_150, %c0_151, %c0_152] : memref<2x4x16xf32, #tpu.memory_space<vmem>>, vector<1x4x16xf32>
    %197 = vector.shape_cast %196 : vector<1x4x16xf32> to vector<4x16xf32>
    %198 = vector.broadcast %195 : vector<1x16xf32> to vector<4x16xf32>
    %199 = arith.mulf %197, %198 : vector<4x16xf32>
    %cst_153 = arith.constant dense<0.000000e+00> : vector<4xf32>
    %200 = vector.multi_reduction <add>, %199, %cst_153 [1] : vector<4x16xf32> to vector<4xf32>
    %201 = vector.shape_cast %200 : vector<4xf32> to vector<4x1xf32>
    %c1_154 = arith.constant 1 : index
    %c0_155 = arith.constant 0 : index
    %c0_156 = arith.constant 0 : index
    %202 = vector.load %arg7[%c1_154, %c0_155, %c0_156] : memref<2x4x1xf32, #tpu.memory_space<vmem>>, vector<1x4x1xf32>
    %203 = vector.shape_cast %202 : vector<1x4x1xf32> to vector<4x1xf32>
    %204 = arith.addf %201, %203 : vector<4x1xf32>
    %cst_157 = arith.constant 0.000000e+00 : f32
    %205 = vector.broadcast %cst_157 : f32 to vector<4x1xf32>
    %206 = arith.maximumf %204, %205 : vector<4x1xf32>
    %c1_158 = arith.constant 1 : index
    %c0_159 = arith.constant 0 : index
    %c0_160 = arith.constant 0 : index
    %207 = vector.load %arg8[%c1_158, %c0_159, %c0_160] : memref<2x4x16xf32, #tpu.memory_space<vmem>>, vector<1x4x16xf32>
    %208 = vector.shape_cast %207 : vector<1x4x16xf32> to vector<4x16xf32>
    %209 = vector.broadcast %206 : vector<4x1xf32> to vector<4x16xf32>
    %210 = arith.mulf %208, %209 : vector<4x16xf32>
    %cst_161 = arith.constant dense<0.000000e+00> : vector<16xf32>
    %211 = vector.multi_reduction <add>, %210, %cst_161 [0] : vector<4x16xf32> to vector<16xf32>
    %212 = vector.shape_cast %211 : vector<16xf32> to vector<1x16xf32>
    %c1_162 = arith.constant 1 : index
    %c0_163 = arith.constant 0 : index
    %c0_164 = arith.constant 0 : index
    %213 = vector.load %arg9[%c1_162, %c0_163, %c0_164] : memref<2x1x16xf32, #tpu.memory_space<vmem>>, vector<1x1x16xf32>
    %214 = vector.shape_cast %213 : vector<1x1x16xf32> to vector<1x16xf32>
    %215 = arith.addf %212, %214 : vector<1x16xf32>
    %216 = arith.negf %215 : vector<1x16xf32>
    %217 = math.exp %216 : vector<1x16xf32>
    %cst_165 = arith.constant 1.000000e+00 : f32
    %218 = vector.broadcast %cst_165 : f32 to vector<1x16xf32>
    %219 = arith.addf %218, %217 : vector<1x16xf32>
    %220 = arith.divf %218, %219 : vector<1x16xf32>
    %221 = vector.broadcast %220 : vector<1x16xf32> to vector<256x16xf32>
    %222 = arith.mulf %191, %221 : vector<256x16xf32>
    %223 = arith.addf %222, %113 : vector<256x16xf32>
    %c0_166 = arith.constant 0 : index
    %c0_167 = arith.constant 0 : index
    %224 = vector.load %arg10[%c0_166, %c0_167] : memref<144x16xf32, #tpu.memory_space<vmem>>, vector<144x16xf32>
    %c0_168 = arith.constant 0 : index
    %c0_169 = arith.constant 0 : index
    %225 = vector.load %arg11[%c0_168, %c0_169] : memref<1x16xf32, #tpu.memory_space<vmem>>, vector<1x16xf32>
    %226 = vector.shape_cast %223 : vector<256x16xf32> to vector<16x16x16xf32>
    %c1_170 = arith.constant 1 : index
    %c1_171 = arith.constant 1 : index
    %c0_172 = arith.constant 0 : index
    %227 = vector.load %arg13[%c1_170, %c1_171, %c0_172] : memref<18x18x16xf32, #tpu.memory_space<vmem>>, vector<16x16x16xf32>
    tpu.vector_store %arg13[%c1_170, %c1_171, %c0_172], %226 {strides = array<i32>} : memref<18x18x16xf32, #tpu.memory_space<vmem>>, vector<16x16x16xf32>,
    %c0_173 = arith.constant 0 : index
    %c0_174 = arith.constant 0 : index
    %c0_175 = arith.constant 0 : index
    %228 = vector.load %arg13[%c0_173, %c0_174, %c0_175] : memref<18x18x16xf32, #tpu.memory_space<vmem>>, vector<18x18x16xf32>
    %229 = vector.extract_strided_slice %228 {offsets = [0, 0, 0], sizes = [16, 16, 16], strides = [1, 1, 1]} : vector<18x18x16xf32> to vector<16x16x16xf32>
    %230 = vector.shape_cast %229 : vector<16x16x16xf32> to vector<256x16xf32>
    %c0_176 = arith.constant 0 : index
    %c0_177 = arith.constant 0 : index
    %231 = vector.load %arg14[%c0_176, %c0_177] : memref<256x144xf32, #tpu.memory_space<vmem>>, vector<256x16xf32>
    tpu.vector_store %arg14[%c0_176, %c0_177], %230 {strides = array<i32>} : memref<256x144xf32, #tpu.memory_space<vmem>>, vector<256x16xf32>,
    %232 = vector.extract_strided_slice %228 {offsets = [0, 1, 0], sizes = [16, 16, 16], strides = [1, 1, 1]} : vector<18x18x16xf32> to vector<16x16x16xf32>
    %233 = vector.shape_cast %232 : vector<16x16x16xf32> to vector<256x16xf32>
    %c0_178 = arith.constant 0 : index
    %c16_179 = arith.constant 16 : index
    %234 = vector.load %arg14[%c0_178, %c16_179] : memref<256x144xf32, #tpu.memory_space<vmem>>, vector<256x16xf32>
    tpu.vector_store %arg14[%c0_178, %c16_179], %233 {strides = array<i32>} : memref<256x144xf32, #tpu.memory_space<vmem>>, vector<256x16xf32>,
    %235 = vector.extract_strided_slice %228 {offsets = [0, 2, 0], sizes = [16, 16, 16], strides = [1, 1, 1]} : vector<18x18x16xf32> to vector<16x16x16xf32>
    %236 = vector.shape_cast %235 : vector<16x16x16xf32> to vector<256x16xf32>
    %c0_180 = arith.constant 0 : index
    %c32_181 = arith.constant 32 : index
    %237 = vector.load %arg14[%c0_180, %c32_181] : memref<256x144xf32, #tpu.memory_space<vmem>>, vector<256x16xf32>
    tpu.vector_store %arg14[%c0_180, %c32_181], %236 {strides = array<i32>} : memref<256x144xf32, #tpu.memory_space<vmem>>, vector<256x16xf32>,
    %238 = vector.extract_strided_slice %228 {offsets = [1, 0, 0], sizes = [16, 16, 16], strides = [1, 1, 1]} : vector<18x18x16xf32> to vector<16x16x16xf32>
    %239 = vector.shape_cast %238 : vector<16x16x16xf32> to vector<256x16xf32>
    %c0_182 = arith.constant 0 : index
    %c48_183 = arith.constant 48 : index
    %240 = vector.load %arg14[%c0_182, %c48_183] : memref<256x144xf32, #tpu.memory_space<vmem>>, vector<256x16xf32>
    tpu.vector_store %arg14[%c0_182, %c48_183], %239 {strides = array<i32>} : memref<256x144xf32, #tpu.memory_space<vmem>>, vector<256x16xf32>,
    %241 = vector.extract_strided_slice %228 {offsets = [1, 1, 0], sizes = [16, 16, 16], strides = [1, 1, 1]} : vector<18x18x16xf32> to vector<16x16x16xf32>
    %242 = vector.shape_cast %241 : vector<16x16x16xf32> to vector<256x16xf32>
    %c0_184 = arith.constant 0 : index
    %c64_185 = arith.constant 64 : index
    %243 = vector.load %arg14[%c0_184, %c64_185] : memref<256x144xf32, #tpu.memory_space<vmem>>, vector<256x16xf32>
    tpu.vector_store %arg14[%c0_184, %c64_185], %242 {strides = array<i32>} : memref<256x144xf32, #tpu.memory_space<vmem>>, vector<256x16xf32>,
    %244 = vector.extract_strided_slice %228 {offsets = [1, 2, 0], sizes = [16, 16, 16], strides = [1, 1, 1]} : vector<18x18x16xf32> to vector<16x16x16xf32>
    %245 = vector.shape_cast %244 : vector<16x16x16xf32> to vector<256x16xf32>
    %c0_186 = arith.constant 0 : index
    %c80_187 = arith.constant 80 : index
    %246 = vector.load %arg14[%c0_186, %c80_187] : memref<256x144xf32, #tpu.memory_space<vmem>>, vector<256x16xf32>
    tpu.vector_store %arg14[%c0_186, %c80_187], %245 {strides = array<i32>} : memref<256x144xf32, #tpu.memory_space<vmem>>, vector<256x16xf32>,
    %247 = vector.extract_strided_slice %228 {offsets = [2, 0, 0], sizes = [16, 16, 16], strides = [1, 1, 1]} : vector<18x18x16xf32> to vector<16x16x16xf32>
    %248 = vector.shape_cast %247 : vector<16x16x16xf32> to vector<256x16xf32>
    %c0_188 = arith.constant 0 : index
    %c96_189 = arith.constant 96 : index
    %249 = vector.load %arg14[%c0_188, %c96_189] : memref<256x144xf32, #tpu.memory_space<vmem>>, vector<256x16xf32>
    tpu.vector_store %arg14[%c0_188, %c96_189], %248 {strides = array<i32>} : memref<256x144xf32, #tpu.memory_space<vmem>>, vector<256x16xf32>,
    %250 = vector.extract_strided_slice %228 {offsets = [2, 1, 0], sizes = [16, 16, 16], strides = [1, 1, 1]} : vector<18x18x16xf32> to vector<16x16x16xf32>
    %251 = vector.shape_cast %250 : vector<16x16x16xf32> to vector<256x16xf32>
    %c0_190 = arith.constant 0 : index
    %c112_191 = arith.constant 112 : index
    %252 = vector.load %arg14[%c0_190, %c112_191] : memref<256x144xf32, #tpu.memory_space<vmem>>, vector<256x16xf32>
    tpu.vector_store %arg14[%c0_190, %c112_191], %251 {strides = array<i32>} : memref<256x144xf32, #tpu.memory_space<vmem>>, vector<256x16xf32>,
    %253 = vector.extract_strided_slice %228 {offsets = [2, 2, 0], sizes = [16, 16, 16], strides = [1, 1, 1]} : vector<18x18x16xf32> to vector<16x16x16xf32>
    %254 = vector.shape_cast %253 : vector<16x16x16xf32> to vector<256x16xf32>
    %c0_192 = arith.constant 0 : index
    %c128_193 = arith.constant 128 : index
    %255 = vector.load %arg14[%c0_192, %c128_193] : memref<256x144xf32, #tpu.memory_space<vmem>>, vector<256x16xf32>
    tpu.vector_store %arg14[%c0_192, %c128_193], %254 {strides = array<i32>} : memref<256x144xf32, #tpu.memory_space<vmem>>, vector<256x16xf32>,
    %c0_194 = arith.constant 0 : index
    %c0_195 = arith.constant 0 : index
    %256 = vector.load %arg14[%c0_194, %c0_195] : memref<256x144xf32, #tpu.memory_space<vmem>>, vector<256x144xf32>
    %cst_196 = arith.constant dense<0.000000e+00> : vector<256x16xf32>
    %257 = tpu.matmul %256, %224, %cst_196 {dimension_numbers = #tpu.dot_dimension_numbers<[1], [0], [0], [1], [0, 0, 1, 1], [], []>} : vector<256x144xf32>, vector<144x16xf32>, vector<256x16xf32> -> vector<256x16xf32>
    %258 = vector.broadcast %225 : vector<1x16xf32> to vector<256x16xf32>
    %259 = arith.addf %257, %258 : vector<256x16xf32>
    %260 = arith.addf %259, %1 : vector<256x16xf32>
    %c0_197 = arith.constant 0 : index
    %c0_198 = arith.constant 0 : index
    %c0_199 = arith.constant 0 : index
    %261 = vector.load %arg12[%c0_197, %c0_198, %c0_199] : memref<1x256x16xf32, #tpu.memory_space<vmem>>, vector<1x256x16xf32>
    %262 = vector.shape_cast %261 : vector<1x256x16xf32> to vector<256x16xf32>
    %263 = vector.shape_cast %260 : vector<256x16xf32> to vector<1x256x16xf32>
    tpu.vector_store %arg12[%c0_197, %c0_198, %c0_199], %263 {strides = array<i32>} : memref<1x256x16xf32, #tpu.memory_space<vmem>>, vector<1x256x16xf32>,
    return
  }
  func.func @transform_0(%arg0: i32) -> (i32, i32, i32) {
    %c0_i32 = arith.constant 0 : i32
    %c0_i32_0 = arith.constant 0 : i32
    %c0_i32_1 = arith.constant 0 : i32
    return %arg0, %c0_i32, %c0_i32_0 : i32, i32, i32
  }
  func.func @transform_1(%arg0: i32) -> (i32, i32, i32) {
    %c0_i32 = arith.constant 0 : i32
    %c0_i32_0 = arith.constant 0 : i32
    %c0_i32_1 = arith.constant 0 : i32
    %c0_i32_2 = arith.constant 0 : i32
    return %c0_i32, %c0_i32_0, %c0_i32_1 : i32, i32, i32
  }
  func.func @transform_2(%arg0: i32) -> (i32, i32, i32) {
    %c0_i32 = arith.constant 0 : i32
    %c0_i32_0 = arith.constant 0 : i32
    %c0_i32_1 = arith.constant 0 : i32
    %c0_i32_2 = arith.constant 0 : i32
    return %c0_i32, %c0_i32_0, %c0_i32_1 : i32, i32, i32
  }
  func.func @transform_3(%arg0: i32) -> (i32, i32, i32) {
    %c0_i32 = arith.constant 0 : i32
    %c0_i32_0 = arith.constant 0 : i32
    %c0_i32_1 = arith.constant 0 : i32
    %c0_i32_2 = arith.constant 0 : i32
    return %c0_i32, %c0_i32_0, %c0_i32_1 : i32, i32, i32
  }
  func.func @transform_4(%arg0: i32) -> (i32, i32, i32) {
    %c0_i32 = arith.constant 0 : i32
    %c0_i32_0 = arith.constant 0 : i32
    %c0_i32_1 = arith.constant 0 : i32
    %c0_i32_2 = arith.constant 0 : i32
    return %c0_i32, %c0_i32_0, %c0_i32_1 : i32, i32, i32
  }
  func.func @transform_5(%arg0: i32) -> (i32, i32, i32) {
    %c0_i32 = arith.constant 0 : i32
    %c0_i32_0 = arith.constant 0 : i32
    %c0_i32_1 = arith.constant 0 : i32
    %c0_i32_2 = arith.constant 0 : i32
    return %c0_i32, %c0_i32_0, %c0_i32_1 : i32, i32, i32
  }
  func.func @transform_6(%arg0: i32) -> (i32, i32, i32) {
    %c0_i32 = arith.constant 0 : i32
    %c0_i32_0 = arith.constant 0 : i32
    %c0_i32_1 = arith.constant 0 : i32
    %c0_i32_2 = arith.constant 0 : i32
    return %c0_i32, %c0_i32_0, %c0_i32_1 : i32, i32, i32
  }
  func.func @transform_7(%arg0: i32) -> (i32, i32, i32) {
    %c0_i32 = arith.constant 0 : i32
    %c0_i32_0 = arith.constant 0 : i32
    %c0_i32_1 = arith.constant 0 : i32
    %c0_i32_2 = arith.constant 0 : i32
    return %c0_i32, %c0_i32_0, %c0_i32_1 : i32, i32, i32
  }
  func.func @transform_8(%arg0: i32) -> (i32, i32, i32) {
    %c0_i32 = arith.constant 0 : i32
    %c0_i32_0 = arith.constant 0 : i32
    %c0_i32_1 = arith.constant 0 : i32
    %c0_i32_2 = arith.constant 0 : i32
    return %c0_i32, %c0_i32_0, %c0_i32_1 : i32, i32, i32
  }
  func.func @transform_9(%arg0: i32) -> (i32, i32) {
    %c0_i32 = arith.constant 0 : i32
    %c0_i32_0 = arith.constant 0 : i32
    %c0_i32_1 = arith.constant 0 : i32
    return %c0_i32, %c0_i32_0 : i32, i32
  }
  func.func @transform_10(%arg0: i32) -> (i32, i32) {
    %c0_i32 = arith.constant 0 : i32
    %c0_i32_0 = arith.constant 0 : i32
    %c0_i32_1 = arith.constant 0 : i32
    return %c0_i32, %c0_i32_0 : i32, i32
  }
  func.func @transform_11(%arg0: i32) -> (i32, i32, i32) {
    %c0_i32 = arith.constant 0 : i32
    %c0_i32_0 = arith.constant 0 : i32
    %c0_i32_1 = arith.constant 0 : i32
    return %arg0, %c0_i32, %c0_i32_0 : i32, i32, i32
  }
}

</mosaic_0001>

<llo_original>
// kernel: residual_group_forward.1
$region0: #{residual_group_forward.1}
  #allocation0 [shape = 'u32[]', space=smem, size = 0x4, offset = 0x4, fixed_abs, tag = 'smem constant byte address 0x4 - core index']
  #allocation1 [shape = 'u32[144,128]{1,0:T(1,128)}', space=vmem, size = 0x12000, scoped, tag = 'internal scratch']
  #allocation2 [shape = 'f32[18,18,16]{2,1,0:T(8,128)}', space=vmem, size = 0x36000, scoped, tag = 'scratch operand']
  #allocation3 [shape = 'f32[256,144]{1,0:T(8,128)}', space=vmem, size = 0x40000, scoped, tag = 'scratch operand']
  %s0 = inlined_call_operand.vmem [shape: f32[2,256,16], index: 0, kind: input, shape index: {}]
  %s1 = inlined_call_operand.vmem [shape: f32[2,144,16], index: 1, kind: input, shape index: {}]
  %s2 = inlined_call_operand.vmem [shape: f32[2,1,16], index: 2, kind: input, shape index: {}]
  %s3 = inlined_call_operand.vmem [shape: f32[2,144,16], index: 3, kind: input, shape index: {}]
  %s4 = inlined_call_operand.vmem [shape: f32[2,1,16], index: 4, kind: input, shape index: {}]
  %s5 = inlined_call_operand.vmem [shape: f32[2,4,16], index: 5, kind: input, shape index: {}]
  %s6 = inlined_call_operand.vmem [shape: f32[2,4,1], index: 6, kind: input, shape index: {}]
  %s7 = inlined_call_operand.vmem [shape: f32[2,4,16], index: 7, kind: input, shape index: {}]
  %s8 = inlined_call_operand.vmem [shape: f32[2,1,16], index: 8, kind: input, shape index: {}]
  %s9 = inlined_call_operand.vmem [shape: f32[144,16], index: 9, kind: input, shape index: {}]
  %s10 = inlined_call_operand.vmem [shape: f32[1,16], index: 10, kind: input, shape index: {}]
  %s11 = inlined_call_operand.hbm [shape: f32[2,256,16], index: 11, kind: output, shape index: {}]
  %s12 = sld [smem:[#allocation0]]
  $region77: #{residual_group_forward.1} parent=0
    _
  %s14 = ssub.s32 1, %s12
  %s15 = scalar_select 0, %s14, %s12
  $region1: #{residual_group_forward.1} parent=0
    #allocation4 [shape = 'u8[262144]{0}', space=vmem, size = 0x40000, scoped, tag = 'output window, operand 0']
    #allocation5 [shape = 's32[2]{0}', space=sflag, size = 0x8, scoped, tag = 'scoped memory for residual_group_forward.1']
    %16 = vsyncpa [#allocation5], 0
    %s17 = scalar_lea.sflag [#allocation5], 1
    %18 = vsyncpa %s17, 0
    loop: start=0, step=1, limit=4
    $region2: #{residual_group_forward.1} parent=1 // loop_pre_header
      _
    $region3: #{residual_group_forward.1} parent=1 // loop_header
      %s20 = sphi 0, %s24
      %p21 = scmp.ge.s32.totalorder %s20, 4
      %s30 = sphi 0, %s32
      %s33 = sphi 0, %s30
      %s34 = sphi 0, %s33
      %s50 = sphi 0, %s34
      %s54 = sphi 0, %s54
      %s56 = sphi 0, %s54
      %s57 = sphi 0, %s56
      %s71 = sphi 0, %s57
      %s75 = sphi 0, %s75
      %s77 = sphi 0, %s75
      %s78 = sphi 0, %s77
      %s92 = sphi 0, %s78
      %s96 = sphi 0, %s96
      %s98 = sphi 0, %s96
      %s99 = sphi 0, %s98
      %s113 = sphi 0, %s99
      %s117 = sphi 0, %s117
      %s119 = sphi 0, %s117
      %s120 = sphi 0, %s119
      %s134 = sphi 0, %s120
      %s138 = sphi 0, %s138
      %s140 = sphi 0, %s138
      %s141 = sphi 0, %s140
      %s155 = sphi 0, %s141
      %s159 = sphi 0, %s159
      %s161 = sphi 0, %s159
      %s162 = sphi 0, %s161
      %s176 = sphi 0, %s162
      %s180 = sphi 0, %s180
      %s182 = sphi 0, %s180
      %s183 = sphi 0, %s182
      %s197 = sphi 0, %s183
      %s201 = sphi 0, %s201
      %s203 = sphi 0, %s201
      %s204 = sphi 0, %s203
      %s218 = sphi 0, %s204
      %s222 = sphi 0, %s222
      %s224 = sphi 0, %s222
      %s225 = sphi 0, %s224
      %s239 = sphi 0, %s225
      %s243 = sphi 0, %s243
      %s245 = sphi 0, %s243
      %s246 = sphi 0, %s245
      %s260 = sphi 0, %s246
      %s266 = sphi 0, %s268
      %s269 = sphi 0, %s266
      %s270 = sphi 0, %s269
      %s286 = sphi 0, %s270
    $region4: #{residual_group_forward.1} parent=1 // loop_header_branch
      %23 = sbr.rel (%p21) target = $region8
    $region5: #{residual_group_forward.1} parent=1 // loop_body
      %s25 = ssub.s32 %s20, 1
      %s26 = ssub.s32 %s20, 2
      %s27 = sadd.s32 %s20, 1
      %s28 = ssub.s32 %s20, %s27
      %p29 = scmp.eq.s32.totalorder %s28, 0
      %s31 = sadd.s32 %s30, 1
      %s32 = scalar_select %p29, %s30, %s31
      %p35 = pneg %p29
      %p36 = scmp.eq.s32.totalorder %s20, 1
      %p37 = por %p35, %p36
      %p38 = scmp.ne.s32.totalorder %s30, %s33
      %p39 = scmp.eq.s32.totalorder %s20, 0
      %p40 = por %p38, %p39
      %p41 = scmp.ne.s32.totalorder %s30, %s33
      %p42 = scmp.eq.s32.totalorder %s25, 1
      %p43 = por %p41, %p42
      %p44 = scmp.ne.s32.totalorder %s33, %s34
      %p45 = scmp.eq.s32.totalorder %s25, 0
      %p46 = por %p44, %p45
      %p47 = scmp.ne.s32.totalorder %s33, %s34
      %p48 = scmp.eq.s32.totalorder %s26, 1
      %p49 = por %p47, %p48
      %p51 = scmp.ne.s32.totalorder %s34, %s50
      %p52 = scmp.eq.s32.totalorder %s26, 0
      %p53 = por %p51, %p52
      %s55 = sadd.s32 %s54, 1
      %p58 = scmp.eq.s32.totalorder %s20, 1
      %p59 = scmp.ne.s32.totalorder %s54, %s56
      %p60 = scmp.eq.s32.totalorder %s20, 0
      %p61 = por %p59, %p60
      %p62 = scmp.ne.s32.totalorder %s54, %s56
      %p63 = scmp.eq.s32.totalorder %s25, 1
      %p64 = por %p62, %p63
      %p65 = scmp.ne.s32.totalorder %s56, %s57
      %p66 = scmp.eq.s32.totalorder %s25, 0
      %p67 = por %p65, %p66
      %p68 = scmp.ne.s32.totalorder %s56, %s57
      %p69 = scmp.eq.s32.totalorder %s26, 1
      %p70 = por %p68, %p69
      %p72 = scmp.ne.s32.totalorder %s57, %s71
      %p73 = scmp.eq.s32.totalorder %s26, 0
      %p74 = por %p72, %p73
      %s76 = sadd.s32 %s75, 1
      %p79 = scmp.eq.s32.totalorder %s20, 1
      %p80 = scmp.ne.s32.totalorder %s75, %s77
      %p81 = scmp.eq.s32.totalorder %s20, 0
      %p82 = por %p80, %p81
      %p83 = scmp.ne.s32.totalorder %s75, %s77
      %p84 = scmp.eq.s32.totalorder %s25, 1
      %p85 = por %p83, %p84
      %p86 = scmp.ne.s32.totalorder %s77, %s78
      %p87 = scmp.eq.s32.totalorder %s25, 0
      %p88 = por %p86, %p87
      %p89 = scmp.ne.s32.totalorder %s77, %s78
      %p90 = scmp.eq.s32.totalorder %s26, 1
      %p91 = por %p89, %p90
      %p93 = scmp.ne.s32.totalorder %s78, %s92
      %p94 = scmp.eq.s32.totalorder %s26, 0
      %p95 = por %p93, %p94
      %s97 = sadd.s32 %s96, 1
      %p100 = scmp.eq.s32.totalorder %s20, 1
      %p101 = scmp.ne.s32.totalorder %s96, %s98
      %p102 = scmp.eq.s32.totalorder %s20, 0
      %p103 = por %p101, %p102
      %p104 = scmp.ne.s32.totalorder %s96, %s98
      %p105 = scmp.eq.s32.totalorder %s25, 1
      %p106 = por %p104, %p105
      %p107 = scmp.ne.s32.totalorder %s98, %s99
      %p108 = scmp.eq.s32.totalorder %s25, 0
      %p109 = por %p107, %p108
      %p110 = scmp.ne.s32.totalorder %s98, %s99
      %p111 = scmp.eq.s32.totalorder %s26, 1
      %p112 = por %p110, %p111
      %p114 = scmp.ne.s32.totalorder %s99, %s113
      %p115 = scmp.eq.s32.totalorder %s26, 0
      %p116 = por %p114, %p115
      %s118 = sadd.s32 %s117, 1
      %p121 = scmp.eq.s32.totalorder %s20, 1
      %p122 = scmp.ne.s32.totalorder %s117, %s119
      %p123 = scmp.eq.s32.totalorder %s20, 0
      %p124 = por %p122, %p123
      %p125 = scmp.ne.s32.totalorder %s117, %s119
      %p126 = scmp.eq.s32.totalorder %s25, 1
      %p127 = por %p125, %p126
      %p128 = scmp.ne.s32.totalorder %s119, %s120
      %p129 = scmp.eq.s32.totalorder %s25, 0
      %p130 = por %p128, %p129
      %p131 = scmp.ne.s32.totalorder %s119, %s120
      %p132 = scmp.eq.s32.totalorder %s26, 1
      %p133 = por %p131, %p132
      %p135 = scmp.ne.s32.totalorder %s120, %s134
      %p136 = scmp.eq.s32.totalorder %s26, 0
      %p137 = por %p135, %p136
      %s139 = sadd.s32 %s138, 1
      %p142 = scmp.eq.s32.totalorder %s20, 1
      %p143 = scmp.ne.s32.totalorder %s138, %s140
      %p144 = scmp.eq.s32.totalorder %s20, 0
      %p145 = por %p143, %p144
      %p146 = scmp.ne.s32.totalorder %s138, %s140
      %p147 = scmp.eq.s32.totalorder %s25, 1
      %p148 = por %p146, %p147
      %p149 = scmp.ne.s32.totalorder %s140, %s141
      %p150 = scmp.eq.s32.totalorder %s25, 0
      %p151 = por %p149, %p150
      %p152 = scmp.ne.s32.totalorder %s140, %s141
      %p153 = scmp.eq.s32.totalorder %s26, 1
      %p154 = por %p152, %p153
      %p156 = scmp.ne.s32.totalorder %s141, %s155
      %p157 = scmp.eq.s32.totalorder %s26, 0
      %p158 = por %p156, %p157
      %s160 = sadd.s32 %s159, 1
      %p163 = scmp.eq.s32.totalorder %s20, 1
      %p164 = scmp.ne.s32.totalorder %s159, %s161
      %p165 = scmp.eq.s32.totalorder %s20, 0
      %p166 = por %p164, %p165
      %p167 = scmp.ne.s32.totalorder %s159, %s161
      %p168 = scmp.eq.s32.totalorder %s25, 1
      %p169 = por %p167, %p168
      %p170 = scmp.ne.s32.totalorder %s161, %s162
      %p171 = scmp.eq.s32.totalorder %s25, 0
      %p172 = por %p170, %p171
      %p173 = scmp.ne.s32.totalorder %s161, %s162
      %p174 = scmp.eq.s32.totalorder %s26, 1
      %p175 = por %p173, %p174
      %p177 = scmp.ne.s32.totalorder %s162, %s176
      %p178 = scmp.eq.s32.totalorder %s26, 0
      %p179 = por %p177, %p178
      %s181 = sadd.s32 %s180, 1
      %p184 = scmp.eq.s32.totalorder %s20, 1
      %p185 = scmp.ne.s32.totalorder %s180, %s182
      %p186 = scmp.eq.s32.totalorder %s20, 0
      %p187 = por %p185, %p186
      %p188 = scmp.ne.s32.totalorder %s180, %s182
      %p189 = scmp.eq.s32.totalorder %s25, 1
      %p190 = por %p188, %p189
      %p191 = scmp.ne.s32.totalorder %s182, %s183
      %p192 = scmp.eq.s32.totalorder %s25, 0
      %p193 = por %p191, %p192
      %p194 = scmp.ne.s32.totalorder %s182, %s183
      %p195 = scmp.eq.s32.totalorder %s26, 1
      %p196 = por %p194, %p195
      %p198 = scmp.ne.s32.totalorder %s183, %s197
      %p199 = scmp.eq.s32.totalorder %s26, 0
      %p200 = por %p198, %p199
      %s202 = sadd.s32 %s201, 1
      %p205 = scmp.eq.s32.totalorder %s20, 1
      %p206 = scmp.ne.s32.totalorder %s201, %s203
      %p207 = scmp.eq.s32.totalorder %s20, 0
      %p208 = por %p206, %p207
      %p209 = scmp.ne.s32.totalorder %s201, %s203
      %p210 = scmp.eq.s32.totalorder %s25, 1
      %p211 = por %p209, %p210
      %p212 = scmp.ne.s32.totalorder %s203, %s204
      %p213 = scmp.eq.s32.totalorder %s25, 0
      %p214 = por %p212, %p213
      %p215 = scmp.ne.s32.totalorder %s203, %s204
      %p216 = scmp.eq.s32.totalorder %s26, 1
      %p217 = por %p215, %p216
      %p219 = scmp.ne.s32.totalorder %s204, %s218
      %p220 = scmp.eq.s32.totalorder %s26, 0
      %p221 = por %p219, %p220
      %s223 = sadd.s32 %s222, 1
      %p226 = scmp.eq.s32.totalorder %s20, 1
      %p227 = scmp.ne.s32.totalorder %s222, %s224
      %p228 = scmp.eq.s32.totalorder %s20, 0
      %p229 = por %p227, %p228
      %p230 = scmp.ne.s32.totalorder %s222, %s224
      %p231 = scmp.eq.s32.totalorder %s25, 1
      %p232 = por %p230, %p231
      %p233 = scmp.ne.s32.totalorder %s224, %s225
      %p234 = scmp.eq.s32.totalorder %s25, 0
      %p235 = por %p233, %p234
      %p236 = scmp.ne.s32.totalorder %s224, %s225
      %p237 = scmp.eq.s32.totalorder %s26, 1
      %p238 = por %p236, %p237
      %p240 = scmp.ne.s32.totalorder %s225, %s239
      %p241 = scmp.eq.s32.totalorder %s26, 0
      %p242 = por %p240, %p241
      %s244 = sadd.s32 %s243, 1
      %p247 = scmp.eq.s32.totalorder %s20, 1
      %p248 = scmp.ne.s32.totalorder %s243, %s245
      %p249 = scmp.eq.s32.totalorder %s20, 0
      %p250 = por %p248, %p249
      %p251 = scmp.ne.s32.totalorder %s243, %s245
      %p252 = scmp.eq.s32.totalorder %s25, 1
      %p253 = por %p251, %p252
      %p254 = scmp.ne.s32.totalorder %s245, %s246
      %p255 = scmp.eq.s32.totalorder %s25, 0
      %p256 = por %p254, %p255
      %p257 = scmp.ne.s32.totalorder %s245, %s246
      %p258 = scmp.eq.s32.totalorder %s26, 1
      %p259 = por %p257, %p258
      %p261 = scmp.ne.s32.totalorder %s246, %s260
      %p262 = scmp.eq.s32.totalorder %s26, 0
      %p263 = por %p261, %p262
      %s264 = ssub.s32 %s20, %s27
      %p265 = scmp.eq.s32.totalorder %s264, 0
      %s267 = sadd.s32 %s266, 1
      %s268 = scalar_select %p265, %s266, %s267
      %p271 = pneg %p265
      %p272 = scmp.eq.s32.totalorder %s20, 1
      %p273 = por %p271, %p272
      %p274 = scmp.ne.s32.totalorder %s266, %s269
      %p275 = scmp.eq.s32.totalorder %s20, 0
      %p276 = por %p274, %p275
      %p277 = scmp.ne.s32.totalorder %s266, %s269
      %p278 = scmp.eq.s32.totalorder %s25, 1
      %p279 = por %p277, %p278
      %p280 = scmp.ne.s32.totalorder %s269, %s270
      %p281 = scmp.eq.s32.totalorder %s25, 0
      %p282 = por %p280, %p281
      %p283 = scmp.ne.s32.totalorder %s269, %s270
      %p284 = scmp.eq.s32.totalorder %s26, 1
      %p285 = por %p283, %p284
      %p287 = scmp.ne.s32.totalorder %s270, %s286
      %p288 = scmp.eq.s32.totalorder %s26, 0
      %p289 = por %p287, %p288
      %p290 = scmp.le.s32.totalorder 1, %s20
      %p291 = scmp.lt.s32.totalorder %s20, 3
      %p292 = pnand %p290, %p291
      %p293 = pneg %p292
      // Predicated region
      $region9: #{residual_group_forward.1} parent=5 // pred_check
        _
      $region10: #{residual_group_forward.1} parent=5 // pred_check_branch
        %295 = sbr.rel (%p292) target = $region12
      $region11: #{residual_group_forward.1} parent=5 // pred_region
        %s296 = ssub.s32 %s20, 1
        // Predicated region
        $region13: #{residual_group_forward.1} parent=11 // pred_check
          %p297 = pneg %p67
        $region14: #{residual_group_forward.1} parent=11 // pred_check_branch
          %299 = sbr.rel (%p297) target = $region16
        $region15: #{residual_group_forward.1} parent=11 // pred_region
          _
        $region16: #{residual_group_forward.1} parent=11 // pred_fallthru
          _
        // Predicated region
        $region17: #{residual_group_forward.1} parent=11 // pred_check
          %p300 = pneg %p88
        $region18: #{residual_group_forward.1} parent=11 // pred_check_branch
          %302 = sbr.rel (%p300) target = $region20
        $region19: #{residual_group_forward.1} parent=11 // pred_region
          _
        $region20: #{residual_group_forward.1} parent=11 // pred_fallthru
          _
        // Predicated region
        $region21: #{residual_group_forward.1} parent=11 // pred_check
          %p303 = pneg %p109
        $region22: #{residual_group_forward.1} parent=11 // pred_check_branch
          %305 = sbr.rel (%p303) target = $region24
        $region23: #{residual_group_forward.1} parent=11 // pred_region
          _
        $region24: #{residual_group_forward.1} parent=11 // pred_fallthru
          _
        // Predicated region
        $region25: #{residual_group_forward.1} parent=11 // pred_check
          %p306 = pneg %p130
        $region26: #{residual_group_forward.1} parent=11 // pred_check_branch
          %308 = sbr.rel (%p306) target = $region28
        $region27: #{residual_group_forward.1} parent=11 // pred_region
          _
        $region28: #{residual_group_forward.1} parent=11 // pred_fallthru
          _
        // Predicated region
        $region29: #{residual_group_forward.1} parent=11 // pred_check
          %p309 = pneg %p151
        $region30: #{residual_group_forward.1} parent=11 // pred_check_branch
          %311 = sbr.rel (%p309) target = $region32
        $region31: #{residual_group_forward.1} parent=11 // pred_region
          _
        $region32: #{residual_group_forward.1} parent=11 // pred_fallthru
          _
        // Predicated region
        $region33: #{residual_group_forward.1} parent=11 // pred_check
          %p312 = pneg %p172
        $region34: #{residual_group_forward.1} parent=11 // pred_check_branch
          %314 = sbr.rel (%p312) target = $region36
        $region35: #{residual_group_forward.1} parent=11 // pred_region
          _
        $region36: #{residual_group_forward.1} parent=11 // pred_fallthru
          _
        // Predicated region
        $region37: #{residual_group_forward.1} parent=11 // pred_check
          %p315 = pneg %p193
        $region38: #{residual_group_forward.1} parent=11 // pred_check_branch
          %317 = sbr.rel (%p315) target = $region40
        $region39: #{residual_group_forward.1} parent=11 // pred_region
          _
        $region40: #{residual_group_forward.1} parent=11 // pred_fallthru
          _
        // Predicated region
        $region41: #{residual_group_forward.1} parent=11 // pred_check
          %p318 = pneg %p214
        $region42: #{residual_group_forward.1} parent=11 // pred_check_branch
          %320 = sbr.rel (%p318) target = $region44
        $region43: #{residual_group_forward.1} parent=11 // pred_region
          _
        $region44: #{residual_group_forward.1} parent=11 // pred_fallthru
          _
        // Predicated region
        $region45: #{residual_group_forward.1} parent=11 // pred_check
          %p321 = pneg %p235
        $region46: #{residual_group_forward.1} parent=11 // pred_check_branch
          %323 = sbr.rel (%p321) target = $region48
        $region47: #{residual_group_forward.1} parent=11 // pred_region
          _
        $region48: #{residual_group_forward.1} parent=11 // pred_fallthru
          _
        // Predicated region
        $region49: #{residual_group_forward.1} parent=11 // pred_check
          %p324 = pneg %p256
        $region50: #{residual_group_forward.1} parent=11 // pred_check_branch
          %326 = sbr.rel (%p324) target = $region52
        $region51: #{residual_group_forward.1} parent=11 // pred_region
          _
        $region52: #{residual_group_forward.1} parent=11 // pred_fallthru
          _
      $region12: #{residual_group_forward.1} parent=5 // pred_fallthru
        _
      %p327 = scmp.lt.s32.totalorder %s20, 2
      // Predicated region
      $region53: #{residual_group_forward.1} parent=5 // pred_check
        %p328 = pneg %p327
      $region54: #{residual_group_forward.1} parent=5 // pred_check_branch
        %330 = sbr.rel (%p328) target = $region56
      $region55: #{residual_group_forward.1} parent=5 // pred_region
        // Predicated region
        $region57: #{residual_group_forward.1} parent=55 // pred_check
          %p331 = pneg %p40
        $region58: #{residual_group_forward.1} parent=55 // pred_check_branch
          %333 = sbr.rel (%p331) target = $region60
        $region59: #{residual_group_forward.1} parent=55 // pred_region
          %p334 = scmp.lt.s32.totalorder %s20, 1
          %s335 = scalar_select %p334, %s20, 1
          %s336 = smul.addr %s335, 32
          %s337 = smul.addr %s336, 8
          %s338 = scalar_lea.vmem %s0, %s337
        $region60: #{residual_group_forward.1} parent=55 // pred_fallthru
          _
      $region56: #{residual_group_forward.1} parent=5 // pred_fallthru
        _
      %p339 = scmp.le.s32.totalorder 1, %s20
      %p340 = scmp.lt.s32.totalorder %s20, 3
      %p341 = pnand %p339, %p340
      %p342 = pneg %p341
      // Predicated region
      $region61: #{residual_group_forward.1} parent=5 // pred_check
        _
      $region62: #{residual_group_forward.1} parent=5 // pred_check_branch
        %344 = sbr.rel (%p341) target = $region64
      $region63: #{residual_group_forward.1} parent=5 // pred_region
        %s345 = ssub.s32 %s20, 1
        %p346 = scmp.lt.s32.totalorder %s25, 1
        %s347 = scalar_select %p346, %s25, 1
        %s348 = smul.addr %s347, 32
        %s349 = smul.addr %s348, 8
        %s350 = scalar_lea.vmem %s0, %s349
        %p351 = pneg %p46
        %p352 = pneg %p43
        %p353 = pneg %p67
        %p354 = pneg %p64
        %p355 = pneg %p88
        %p356 = pneg %p85
        %p357 = pneg %p109
        %p358 = pneg %p106
        %p359 = pneg %p130
        %p360 = pneg %p127
        %p361 = pneg %p151
        %p362 = pneg %p148
        %p363 = pneg %p172
        %p364 = pneg %p169
        %p365 = pneg %p193
        %p366 = pneg %p190
        %p367 = pneg %p214
        %p368 = pneg %p211
        %p369 = pneg %p235
        %p370 = pneg %p232
        %p371 = pneg %p256
        %p372 = pneg %p253
        %p373 = pneg %p282
        %p374 = pneg %p279
        %s375 = sand.u32 %s269, 1
        %s376 = scalar_lea.sflag [#allocation5], %s375
        %s377 = sand.u32 %s269, 1
        %s378 = smul.addr %s377, 256
        %s379 = scalar_lea.vmem [#allocation4], %s378
        %p380 = scmp.lt.s32.totalorder %s25, 1
        %s381 = scalar_select %p380, %s25, 1
        %s382 = smul.addr %s381, 32
        %s383 = smul.addr %s382, 8
        %s384 = scalar_lea.vmem %s0, %s383
        %v385 = vld [vmem:[%s384] sm:$0xff]
        %v386 = vld [vmem:[%s384 + $0x8] sm:$0xff]
        %v387 = vld [vmem:[%s384 + $0x10] sm:$0xff]
        %v388 = vld [vmem:[%s384 + $0x18] sm:$0xff]
        %v389 = vld [vmem:[%s384 + $0x20] sm:$0xff]
        %v390 = vld [vmem:[%s384 + $0x28] sm:$0xff]
        %v391 = vld [vmem:[%s384 + $0x30] sm:$0xff]
        %v392 = vld [vmem:[%s384 + $0x38] sm:$0xff]
        %v393 = vld [vmem:[%s384 + $0x40] sm:$0xff]
        %v394 = vld [vmem:[%s384 + $0x48] sm:$0xff]
        %v395 = vld [vmem:[%s384 + $0x50] sm:$0xff]
        %v396 = vld [vmem:[%s384 + $0x58] sm:$0xff]
        %v397 = vld [vmem:[%s384 + $0x60] sm:$0xff]
        %v398 = vld [vmem:[%s384 + $0x68] sm:$0xff]
        %v399 = vld [vmem:[%s384 + $0x70] sm:$0xff]
        %v400 = vld [vmem:[%s384 + $0x78] sm:$0xff]
        %v401 = vld [vmem:[%s384 + $0x80] sm:$0xff]
        %v402 = vld [vmem:[%s384 + $0x88] sm:$0xff]
        %v403 = vld [vmem:[%s384 + $0x90] sm:$0xff]
        %v404 = vld [vmem:[%s384 + $0x98] sm:$0xff]
        %v405 = vld [vmem:[%s384 + $0xa0] sm:$0xff]
        %v406 = vld [vmem:[%s384 + $0xa8] sm:$0xff]
        %v407 = vld [vmem:[%s384 + $0xb0] sm:$0xff]
        %v408 = vld [vmem:[%s384 + $0xb8] sm:$0xff]
        %v409 = vld [vmem:[%s384 + $0xc0] sm:$0xff]
        %v410 = vld [vmem:[%s384 + $0xc8] sm:$0xff]
        %v411 = vld [vmem:[%s384 + $0xd0] sm:$0xff]
        %v412 = vld [vmem:[%s384 + $0xd8] sm:$0xff]
        %v413 = vld [vmem:[%s384 + $0xe0] sm:$0xff]
        %v414 = vld [vmem:[%s384 + $0xe8] sm:$0xff]
        %v415 = vld [vmem:[%s384 + $0xf0] sm:$0xff]
        %v416 = vld [vmem:[%s384 + $0xf8] sm:$0xff]
        %vm417 = vcmask 130048
        %418 = vst.msk [vmem:[#allocation2] sm:$0xff] %vm417, 0.0
        %419 = vst.msk [vmem:[#allocation2 + $0x8] sm:$0xff] %vm417, 0.0
        %vm420 = vcmask 123904
        %421 = vst.msk [vmem:[#allocation2 + $0x10] sm:$0x3] %vm420, 0.0
        %422 = vst.msk [vmem:[#allocation2 + $0x18] sm:$0xff] %vm417, 0.0
        %423 = vst.msk [vmem:[#allocation2 + $0x20] sm:$0xff] %vm417, 0.0
        %424 = vst.msk [vmem:[#allocation2 + $0x28] sm:$0x3] %vm420, 0.0
        %425 = vst.msk [vmem:[#allocation2 + $0x30] sm:$0xff] %vm417, 0.0
        %426 = vst.msk [vmem:[#allocation2 + $0x38] sm:$0xff] %vm417, 0.0
        %427 = vst.msk [vmem:[#allocation2 + $0x40] sm:$0x3] %vm420, 0.0
        %428 = vst.msk [vmem:[#allocation2 + $0x48] sm:$0xff] %vm417, 0.0
        %429 = vst.msk [vmem:[#allocation2 + $0x50] sm:$0xff] %vm417, 0.0
        %430 = vst.msk [vmem:[#allocation2 + $0x58] sm:$0x3] %vm420, 0.0
        %431 = vst.msk [vmem:[#allocation2 + $0x60] sm:$0xff] %vm417, 0.0
        %432 = vst.msk [vmem:[#allocation2 + $0x68] sm:$0xff] %vm417, 0.0
        %433 = vst.msk [vmem:[#allocation2 + $0x70] sm:$0x3] %vm420, 0.0
        %434 = vst.msk [vmem:[#allocation2 + $0x78] sm:$0xff] %vm417, 0.0
        %435 = vst.msk [vmem:[#allocation2 + $0x80] sm:$0xff] %vm417, 0.0
        %436 = vst.msk [vmem:[#allocation2 + $0x88] sm:$0x3] %vm420, 0.0
        %437 = vst.msk [vmem:[#allocation2 + $0x90] sm:$0xff] %vm417, 0.0
        %438 = vst.msk [vmem:[#allocation2 + $0x98] sm:$0xff] %vm417, 0.0
        %439 = vst.msk [vmem:[#allocation2 + $0xa0] sm:$0x3] %vm420, 0.0
        %440 = vst.msk [vmem:[#allocation2 + $0xa8] sm:$0xff] %vm417, 0.0
        %441 = vst.msk [vmem:[#allocation2 + $0xb0] sm:$0xff] %vm417, 0.0
        %442 = vst.msk [vmem:[#allocation2 + $0xb8] sm:$0x3] %vm420, 0.0
        %443 = vst.msk [vmem:[#allocation2 + $0xc0] sm:$0xff] %vm417, 0.0
        %444 = vst.msk [vmem:[#allocation2 + $0xc8] sm:$0xff] %vm417, 0.0
        %445 = vst.msk [vmem:[#allocation2 + $0xd0] sm:$0x3] %vm420, 0.0
        %446 = vst.msk [vmem:[#allocation2 + $0xd8] sm:$0xff] %vm417, 0.0
        %447 = vst.msk [vmem:[#allocation2 + $0xe0] sm:$0xff] %vm417, 0.0
        %448 = vst.msk [vmem:[#allocation2 + $0xe8] sm:$0x3] %vm420, 0.0
        %449 = vst.msk [vmem:[#allocation2 + $0xf0] sm:$0xff] %vm417, 0.0
        %450 = vst.msk [vmem:[#allocation2 + $0xf8] sm:$0xff] %vm417, 0.0
        %451 = vst.msk [vmem:[#allocation2 + $0x100] sm:$0x3] %vm420, 0.0
        %452 = vst.msk [vmem:[#allocation2 + $0x108] sm:$0xff] %vm417, 0.0
        %453 = vst.msk [vmem:[#allocation2 + $0x110] sm:$0xff] %vm417, 0.0
        %454 = vst.msk [vmem:[#allocation2 + $0x118] sm:$0x3] %vm420, 0.0
        %455 = vst.msk [vmem:[#allocation2 + $0x120] sm:$0xff] %vm417, 0.0
        %456 = vst.msk [vmem:[#allocation2 + $0x128] sm:$0xff] %vm417, 0.0
        %457 = vst.msk [vmem:[#allocation2 + $0x130] sm:$0x3] %vm420, 0.0
        %458 = vst.msk [vmem:[#allocation2 + $0x138] sm:$0xff] %vm417, 0.0
        %459 = vst.msk [vmem:[#allocation2 + $0x140] sm:$0xff] %vm417, 0.0
        %460 = vst.msk [vmem:[#allocation2 + $0x148] sm:$0x3] %vm420, 0.0
        %461 = vst.msk [vmem:[#allocation2 + $0x150] sm:$0xff] %vm417, 0.0
        %462 = vst.msk [vmem:[#allocation2 + $0x158] sm:$0xff] %vm417, 0.0
        %463 = vst.msk [vmem:[#allocation2 + $0x160] sm:$0x3] %vm420, 0.0
        %464 = vst.msk [vmem:[#allocation2 + $0x168] sm:$0xff] %vm417, 0.0
        %465 = vst.msk [vmem:[#allocation2 + $0x170] sm:$0xff] %vm417, 0.0
        %466 = vst.msk [vmem:[#allocation2 + $0x178] sm:$0x3] %vm420, 0.0
        %467 = vst.msk [vmem:[#allocation2 + $0x180] sm:$0xff] %vm417, 0.0
        %468 = vst.msk [vmem:[#allocation2 + $0x188] sm:$0xff] %vm417, 0.0
        %469 = vst.msk [vmem:[#allocation2 + $0x190] sm:$0x3] %vm420, 0.0
        %470 = vst.msk [vmem:[#allocation2 + $0x198] sm:$0xff] %vm417, 0.0
        %471 = vst.msk [vmem:[#allocation2 + $0x1a0] sm:$0xff] %vm417, 0.0
        %472 = vst.msk [vmem:[#allocation2 + $0x1a8] sm:$0x3] %vm420, 0.0
        %v473 = vld [vmem:[%s1] sm:$0xff]
        %v474 = vld [vmem:[%s1 + $0x8] sm:$0xff]
        %v475 = vld [vmem:[%s1 + $0x10] sm:$0xff]
        %v476 = vld [vmem:[%s1 + $0x18] sm:$0xff]
        %v477 = vld [vmem:[%s1 + $0x20] sm:$0xff]
        %v478 = vld [vmem:[%s1 + $0x28] sm:$0xff]
        %v479 = vld [vmem:[%s1 + $0x30] sm:$0xff]
        %v480 = vld [vmem:[%s1 + $0x38] sm:$0xff]
        %v481 = vld [vmem:[%s1 + $0x40] sm:$0xff]
        %v482 = vld [vmem:[%s1 + $0x48] sm:$0xff]
        %v483 = vld [vmem:[%s1 + $0x50] sm:$0xff]
        %v484 = vld [vmem:[%s1 + $0x58] sm:$0xff]
        %v485 = vld [vmem:[%s1 + $0x60] sm:$0xff]
        %v486 = vld [vmem:[%s1 + $0x68] sm:$0xff]
        %v487 = vld [vmem:[%s1 + $0x70] sm:$0xff]
        %v488 = vld [vmem:[%s1 + $0x78] sm:$0xff]
        %v489 = vld [vmem:[%s1 + $0x80] sm:$0xff]
        %v490 = vld [vmem:[%s1 + $0x88] sm:$0xff]
        %v491 = vld [vmem:[%s2] sm:$0x1]
        %s492 = scalar_lea.vmem [#allocation2], 24
        %493 = vst.msk [vmem:[%s492 + $0x1] sm:$0xff] %vm417, %v385
        %494 = vst.msk [vmem:[%s492 + $0x9] sm:$0xff] %vm417, %v386
        %495 = vst.msk [vmem:[%s492 + $0x19] sm:$0xff] %vm417, %v387
        %496 = vst.msk [vmem:[%s492 + $0x21] sm:$0xff] %vm417, %v388
        %497 = vst.msk [vmem:[%s492 + $0x31] sm:$0xff] %vm417, %v389
        %498 = vst.msk [vmem:[%s492 + $0x39] sm:$0xff] %vm417, %v390
        %499 = vst.msk [vmem:[%s492 + $0x49] sm:$0xff] %vm417, %v391
        %500 = vst.msk [vmem:[%s492 + $0x51] sm:$0xff] %vm417, %v392
        %501 = vst.msk [vmem:[%s492 + $0x61] sm:$0xff] %vm417, %v393
        %502 = vst.msk [vmem:[%s492 + $0x69] sm:$0xff] %vm417, %v394
        %503 = vst.msk [vmem:[%s492 + $0x79] sm:$0xff] %vm417, %v395
        %504 = vst.msk [vmem:[%s492 + $0x81] sm:$0xff] %vm417, %v396
        %505 = vst.msk [vmem:[%s492 + $0x91] sm:$0xff] %vm417, %v397
        %506 = vst.msk [vmem:[%s492 + $0x99] sm:$0xff] %vm417, %v398
        %507 = vst.msk [vmem:[%s492 + $0xa9] sm:$0xff] %vm417, %v399
        %508 = vst.msk [vmem:[%s492 + $0xb1] sm:$0xff] %vm417, %v400
        %509 = vst.msk [vmem:[%s492 + $0xc1] sm:$0xff] %vm417, %v401
        %510 = vst.msk [vmem:[%s492 + $0xc9] sm:$0xff] %vm417, %v402
        %511 = vst.msk [vmem:[%s492 + $0xd9] sm:$0xff] %vm417, %v403
        %512 = vst.msk [vmem:[%s492 + $0xe1] sm:$0xff] %vm417, %v404
        %513 = vst.msk [vmem:[%s492 + $0xf1] sm:$0xff] %vm417, %v405
        %514 = vst.msk [vmem:[%s492 + $0xf9] sm:$0xff] %vm417, %v406
        %515 = vst.msk [vmem:[%s492 + $0x109] sm:$0xff] %vm417, %v407
        %516 = vst.msk [vmem:[%s492 + $0x111] sm:$0xff] %vm417, %v408
        %517 = vst.msk [vmem:[%s492 + $0x121] sm:$0xff] %vm417, %v409
        %518 = vst.msk [vmem:[%s492 + $0x129] sm:$0xff] %vm417, %v410
        %519 = vst.msk [vmem:[%s492 + $0x139] sm:$0xff] %vm417, %v411
        %520 = vst.msk [vmem:[%s492 + $0x141] sm:$0xff] %vm417, %v412
        %521 = vst.msk [vmem:[%s492 + $0x151] sm:$0xff] %vm417, %v413
        %522 = vst.msk [vmem:[%s492 + $0x159] sm:$0xff] %vm417, %v414
        %523 = vst.msk [vmem:[%s492 + $0x169] sm:$0xff] %vm417, %v415
        %524 = vst.msk [vmem:[%s492 + $0x171] sm:$0xff] %vm417, %v416
        %v525 = vld [vmem:[#allocation2] sm:$0xff]
        %v526 = vld [vmem:[#allocation2 + $0x8] sm:$0xff]
        %v527 = vld [vmem:[#allocation2 + $0x10] sm:$0x3]
        %v528 = vld [vmem:[#allocation2 + $0x18] sm:$0xff]
        %v529 = vld [vmem:[#allocation2 + $0x20] sm:$0xff]
        %v530 = vld [vmem:[#allocation2 + $0x28] sm:$0x3]
        %v531 = vld [vmem:[#allocation2 + $0x30] sm:$0xff]
        %v532 = vld [vmem:[#allocation2 + $0x38] sm:$0xff]
        %v533 = vld [vmem:[#allocation2 + $0x40] sm:$0x3]
        %v534 = vld [vmem:[#allocation2 + $0x48] sm:$0xff]
        %v535 = vld [vmem:[#allocation2 + $0x50] sm:$0xff]
        %v536 = vld [vmem:[#allocation2 + $0x58] sm:$0x3]
        %v537 = vld [vmem:[#allocation2 + $0x60] sm:$0xff]
        %v538 = vld [vmem:[#allocation2 + $0x68] sm:$0xff]
        %v539 = vld [vmem:[#allocation2 + $0x70] sm:$0x3]
        %v540 = vld [vmem:[#allocation2 + $0x78] sm:$0xff]
        %v541 = vld [vmem:[#allocation2 + $0x80] sm:$0xff]
        %v542 = vld [vmem:[#allocation2 + $0x88] sm:$0x3]
        %v543 = vld [vmem:[#allocation2 + $0x90] sm:$0xff]
        %v544 = vld [vmem:[#allocation2 + $0x98] sm:$0xff]
        %v545 = vld [vmem:[#allocation2 + $0xa0] sm:$0x3]
        %v546 = vld [vmem:[#allocation2 + $0xa8] sm:$0xff]
        %v547 = vld [vmem:[#allocation2 + $0xb0] sm:$0xff]
        %v548 = vld [vmem:[#allocation2 + $0xb8] sm:$0x3]
        %v549 = vld [vmem:[#allocation2 + $0xc0] sm:$0xff]
        %v550 = vld [vmem:[#allocation2 + $0xc8] sm:$0xff]
        %v551 = vld [vmem:[#allocation2 + $0xd0] sm:$0x3]
        %v552 = vld [vmem:[#allocation2 + $0xd8] sm:$0xff]
        %v553 = vld [vmem:[#allocation2 + $0xe0] sm:$0xff]
        %v554 = vld [vmem:[#allocation2 + $0xe8] sm:$0x3]
        %v555 = vld [vmem:[#allocation2 + $0xf0] sm:$0xff]
        %v556 = vld [vmem:[#allocation2 + $0xf8] sm:$0xff]
        %v557 = vld [vmem:[#allocation2 + $0x100] sm:$0x3]
        %v558 = vld [vmem:[#allocation2 + $0x108] sm:$0xff]
        %v559 = vld [vmem:[#allocation2 + $0x110] sm:$0xff]
        %v560 = vld [vmem:[#allocation2 + $0x118] sm:$0x3]
        %v561 = vld [vmem:[#allocation2 + $0x120] sm:$0xff]
        %v562 = vld [vmem:[#allocation2 + $0x128] sm:$0xff]
        %v563 = vld [vmem:[#allocation2 + $0x130] sm:$0x3]
        %v564 = vld [vmem:[#allocation2 + $0x138] sm:$0xff]
        %v565 = vld [vmem:[#allocation2 + $0x140] sm:$0xff]
        %v566 = vld [vmem:[#allocation2 + $0x148] sm:$0x3]
        %v567 = vld [vmem:[#allocation2 + $0x150] sm:$0xff]
        %v568 = vld [vmem:[#allocation2 + $0x158] sm:$0xff]
        %v569 = vld [vmem:[#allocation2 + $0x160] sm:$0x3]
        %v570 = vld [vmem:[#allocation2 + $0x168] sm:$0xff]
        %v571 = vld [vmem:[#allocation2 + $0x170] sm:$0xff]
        %v572 = vld [vmem:[#allocation2 + $0x178] sm:$0x3]
        %v573 = vld [vmem:[#allocation2 + $0x180] sm:$0xff]
        %v574 = vld [vmem:[#allocation2 + $0x188] sm:$0xff]
        %v575 = vld [vmem:[#allocation2 + $0x190] sm:$0x3]
        %v576 = vld [vmem:[#allocation2 + $0x198] sm:$0xff]
        %v577 = vld [vmem:[#allocation2 + $0x1a0] sm:$0xff]
        %v578 = vld [vmem:[#allocation2 + $0x1a8] sm:$0x3]
        %579 = vst.msk [vmem:[#allocation3] sm:$0xff] %vm417, %v525
        %580 = vst.msk [vmem:[#allocation3 + $0x10] sm:$0xff] %vm417, %v526
        %581 = vst.msk [vmem:[#allocation3 + $0x20] sm:$0xff] %vm417, %v528
        %582 = vst.msk [vmem:[#allocation3 + $0x30] sm:$0xff] %vm417, %v529
        %583 = vst.msk [vmem:[#allocation3 + $0x40] sm:$0xff] %vm417, %v531
        %584 = vst.msk [vmem:[#allocation3 + $0x50] sm:$0xff] %vm417, %v532
        %585 = vst.msk [vmem:[#allocation3 + $0x60] sm:$0xff] %vm417, %v534
        %586 = vst.msk [vmem:[#allocation3 + $0x70] sm:$0xff] %vm417, %v535
        %587 = vst.msk [vmem:[#allocation3 + $0x80] sm:$0xff] %vm417, %v537
        %588 = vst.msk [vmem:[#allocation3 + $0x90] sm:$0xff] %vm417, %v538
        %589 = vst.msk [vmem:[#allocation3 + $0xa0] sm:$0xff] %vm417, %v540
        %590 = vst.msk [vmem:[#allocation3 + $0xb0] sm:$0xff] %vm417, %v541
        %591 = vst.msk [vmem:[#allocation3 + $0xc0] sm:$0xff] %vm417, %v543
        %592 = vst.msk [vmem:[#allocation3 + $0xd0] sm:$0xff] %vm417, %v544
        %593 = vst.msk [vmem:[#allocation3 + $0xe0] sm:$0xff] %vm417, %v546
        %594 = vst.msk [vmem:[#allocation3 + $0xf0] sm:$0xff] %vm417, %v547
        %595 = vst.msk [vmem:[#allocation3 + $0x100] sm:$0xff] %vm417, %v549
        %596 = vst.msk [vmem:[#allocation3 + $0x110] sm:$0xff] %vm417, %v550
        %597 = vst.msk [vmem:[#allocation3 + $0x120] sm:$0xff] %vm417, %v552
        %598 = vst.msk [vmem:[#allocation3 + $0x130] sm:$0xff] %vm417, %v553
        %599 = vst.msk [vmem:[#allocation3 + $0x140] sm:$0xff] %vm417, %v555
        %600 = vst.msk [vmem:[#allocation3 + $0x150] sm:$0xff] %vm417, %v556
        %601 = vst.msk [vmem:[#allocation3 + $0x160] sm:$0xff] %vm417, %v558
        %602 = vst.msk [vmem:[#allocation3 + $0x170] sm:$0xff] %vm417, %v559
        %603 = vst.msk [vmem:[#allocation3 + $0x180] sm:$0xff] %vm417, %v561
        %604 = vst.msk [vmem:[#allocation3 + $0x190] sm:$0xff] %vm417, %v562
        %605 = vst.msk [vmem:[#allocation3 + $0x1a0] sm:$0xff] %vm417, %v564
        %606 = vst.msk [vmem:[#allocation3 + $0x1b0] sm:$0xff] %vm417, %v565
        %607 = vst.msk [vmem:[#allocation3 + $0x1c0] sm:$0xff] %vm417, %v567
        %608 = vst.msk [vmem:[#allocation3 + $0x1d0] sm:$0xff] %vm417, %v568
        %609 = vst.msk [vmem:[#allocation3 + $0x1e0] sm:$0xff] %vm417, %v570
        %610 = vst.msk [vmem:[#allocation3 + $0x1f0] sm:$0xff] %vm417, %v571
        %vm659 = vcmask 1046528
        %v660 = vrot.slane %v525, 1
        %v661 = vrot.slane %v526, 1
        %v662 = vsel %vm659, %v660, %v661
        %v663 = vrot.slane %v527, 1
        %v664 = vsel %vm659, %v661, %v663
        %v665 = vrot.slane %v528, 1
        %v666 = vrot.slane %v529, 1
        %v667 = vsel %vm659, %v665, %v666
        %v668 = vrot.slane %v530, 1
        %v669 = vsel %vm659, %v666, %v668
        %v670 = vrot.slane %v531, 1
        %v671 = vrot.slane %v532, 1
        %v672 = vsel %vm659, %v670, %v671
        %v673 = vrot.slane %v533, 1
        %v674 = vsel %vm659, %v671, %v673
        %v675 = vrot.slane %v534, 1
        %v676 = vrot.slane %v535, 1
        %v677 = vsel %vm659, %v675, %v676
        %v678 = vrot.slane %v536, 1
        %v679 = vsel %vm659, %v676, %v678
        %v680 = vrot.slane %v537, 1
        %v681 = vrot.slane %v538, 1
        %v682 = vsel %vm659, %v680, %v681
        %v683 = vrot.slane %v539, 1
        %v684 = vsel %vm659, %v681, %v683
        %v685 = vrot.slane %v540, 1
        %v686 = vrot.slane %v541, 1
        %v687 = vsel %vm659, %v685, %v686
        %v688 = vrot.slane %v542, 1
        %v689 = vsel %vm659, %v686, %v688
        %v690 = vrot.slane %v543, 1
        %v691 = vrot.slane %v544, 1
        %v692 = vsel %vm659, %v690, %v691
        %v693 = vrot.slane %v545, 1
        %v694 = vsel %vm659, %v691, %v693
        %v695 = vrot.slane %v546, 1
        %v696 = vrot.slane %v547, 1
        %v697 = vsel %vm659, %v695, %v696
        %v698 = vrot.slane %v548, 1
        %v699 = vsel %vm659, %v696, %v698
        %v700 = vrot.slane %v549, 1
        %v701 = vrot.slane %v550, 1
        %v702 = vsel %vm659, %v700, %v701
        %v703 = vrot.slane %v551, 1
        %v704 = vsel %vm659, %v701, %v703
        %v705 = vrot.slane %v552, 1
        %v706 = vrot.slane %v553, 1
        %v707 = vsel %vm659, %v705, %v706
        %v708 = vrot.slane %v554, 1
        %v709 = vsel %vm659, %v706, %v708
        %v710 = vrot.slane %v555, 1
        %v711 = vrot.slane %v556, 1
        %v712 = vsel %vm659, %v710, %v711
        %v713 = vrot.slane %v557, 1
        %v714 = vsel %vm659, %v711, %v713
        %v715 = vrot.slane %v558, 1
        %v716 = vrot.slane %v559, 1
        %v717 = vsel %vm659, %v715, %v716
        %v718 = vrot.slane %v560, 1
        %v719 = vsel %vm659, %v716, %v718
        %v720 = vrot.slane %v561, 1
        %v721 = vrot.slane %v562, 1
        %v722 = vsel %vm659, %v720, %v721
        %v723 = vrot.slane %v563, 1
        %v724 = vsel %vm659, %v721, %v723
        %v725 = vrot.slane %v564, 1
        %v726 = vrot.slane %v565, 1
        %v727 = vsel %vm659, %v725, %v726
        %v728 = vrot.slane %v566, 1
        %v729 = vsel %vm659, %v726, %v728
        %v730 = vrot.slane %v567, 1
        %v731 = vrot.slane %v568, 1
        %v732 = vsel %vm659, %v730, %v731
        %v733 = vrot.slane %v569, 1
        %v734 = vsel %vm659, %v731, %v733
        %v735 = vrot.slane %v570, 1
        %v736 = vrot.slane %v571, 1
        %v737 = vsel %vm659, %v735, %v736
        %v738 = vrot.slane %v572, 1
        %v739 = vsel %vm659, %v736, %v738
        %740 = vrot.lane.b32.xlu0 %v662, 16
        %v741 = vpop.permute.xlu0 %740
        %742 = vrot.lane.b32.xlu0 %v664, 16
        %v743 = vpop.permute.xlu0 %742
        %744 = vrot.lane.b32.xlu0 %v667, 16
        %v745 = vpop.permute.xlu0 %744
        %746 = vrot.lane.b32.xlu0 %v669, 16
        %v747 = vpop.permute.xlu0 %746
        %748 = vrot.lane.b32.xlu0 %v672, 16
        %v749 = vpop.permute.xlu0 %748
        %750 = vrot.lane.b32.xlu0 %v674, 16
        %v751 = vpop.permute.xlu0 %750
        %752 = vrot.lane.b32.xlu0 %v677, 16
        %v753 = vpop.permute.xlu0 %752
        %754 = vrot.lane.b32.xlu0 %v679, 16
        %v755 = vpop.permute.xlu0 %754
        %756 = vrot.lane.b32.xlu0 %v682, 16
        %v757 = vpop.permute.xlu0 %756
        %758 = vrot.lane.b32.xlu0 %v684, 16
        %v759 = vpop.permute.xlu0 %758
        %760 = vrot.lane.b32.xlu0 %v687, 16
        %v761 = vpop.permute.xlu0 %760
        %762 = vrot.lane.b32.xlu0 %v689, 16
        %v763 = vpop.permute.xlu0 %762
        %764 = vrot.lane.b32.xlu0 %v692, 16
        %v765 = vpop.permute.xlu0 %764
        %766 = vrot.lane.b32.xlu0 %v694, 16
        %v767 = vpop.permute.xlu0 %766
        %768 = vrot.lane.b32.xlu0 %v697, 16
        %v769 = vpop.permute.xlu0 %768
        %770 = vrot.lane.b32.xlu0 %v699, 16
        %v771 = vpop.permute.xlu0 %770
        %772 = vrot.lane.b32.xlu0 %v702, 16
        %v773 = vpop.permute.xlu0 %772
        %774 = vrot.lane.b32.xlu0 %v704, 16
        %v775 = vpop.permute.xlu0 %774
        %776 = vrot.lane.b32.xlu0 %v707, 16
        %v777 = vpop.permute.xlu0 %776
        %778 = vrot.lane.b32.xlu0 %v709, 16
        %v779 = vpop.permute.xlu0 %778
        %780 = vrot.lane.b32.xlu0 %v712, 16
        %v781 = vpop.permute.xlu0 %780
        %782 = vrot.lane.b32.xlu0 %v714, 16
        %v783 = vpop.permute.xlu0 %782
        %784 = vrot.lane.b32.xlu0 %v717, 16
        %v785 = vpop.permute.xlu0 %784
        %786 = vrot.lane.b32.xlu0 %v719, 16
        %v787 = vpop.permute.xlu0 %786
        %788 = vrot.lane.b32.xlu0 %v722, 16
        %v789 = vpop.permute.xlu0 %788
        %790 = vrot.lane.b32.xlu0 %v724, 16
        %v791 = vpop.permute.xlu0 %790
        %792 = vrot.lane.b32.xlu0 %v727, 16
        %v793 = vpop.permute.xlu0 %792
        %794 = vrot.lane.b32.xlu0 %v729, 16
        %v795 = vpop.permute.xlu0 %794
        %796 = vrot.lane.b32.xlu0 %v732, 16
        %v797 = vpop.permute.xlu0 %796
        %798 = vrot.lane.b32.xlu0 %v734, 16
        %v799 = vpop.permute.xlu0 %798
        %800 = vrot.lane.b32.xlu0 %v737, 16
        %v801 = vpop.permute.xlu0 %800
        %802 = vrot.lane.b32.xlu0 %v739, 16
        %v803 = vpop.permute.xlu0 %802
        %vm836 = vcmask 261248
        %837 = vst.msk [vmem:[#allocation3] sm:$0xff] %vm836, %v741
        %838 = vst.msk [vmem:[#allocation3 + $0x10] sm:$0xff] %vm836, %v743
        %839 = vst.msk [vmem:[#allocation3 + $0x20] sm:$0xff] %vm836, %v745
        %840 = vst.msk [vmem:[#allocation3 + $0x30] sm:$0xff] %vm836, %v747
        %841 = vst.msk [vmem:[#allocation3 + $0x40] sm:$0xff] %vm836, %v749
        %842 = vst.msk [vmem:[#allocation3 + $0x50] sm:$0xff] %vm836, %v751
        %843 = vst.msk [vmem:[#allocation3 + $0x60] sm:$0xff] %vm836, %v753
        %844 = vst.msk [vmem:[#allocation3 + $0x70] sm:$0xff] %vm836, %v755
        %845 = vst.msk [vmem:[#allocation3 + $0x80] sm:$0xff] %vm836, %v757
        %846 = vst.msk [vmem:[#allocation3 + $0x90] sm:$0xff] %vm836, %v759
        %847 = vst.msk [vmem:[#allocation3 + $0xa0] sm:$0xff] %vm836, %v761
        %848 = vst.msk [vmem:[#allocation3 + $0xb0] sm:$0xff] %vm836, %v763
        %849 = vst.msk [vmem:[#allocation3 + $0xc0] sm:$0xff] %vm836, %v765
        %850 = vst.msk [vmem:[#allocation3 + $0xd0] sm:$0xff] %vm836, %v767
        %851 = vst.msk [vmem:[#allocation3 + $0xe0] sm:$0xff] %vm836, %v769
        %852 = vst.msk [vmem:[#allocation3 + $0xf0] sm:$0xff] %vm836, %v771
        %853 = vst.msk [vmem:[#allocation3 + $0x100] sm:$0xff] %vm836, %v773
        %854 = vst.msk [vmem:[#allocation3 + $0x110] sm:$0xff] %vm836, %v775
        %855 = vst.msk [vmem:[#allocation3 + $0x120] sm:$0xff] %vm836, %v777
        %856 = vst.msk [vmem:[#allocation3 + $0x130] sm:$0xff] %vm836, %v779
        %857 = vst.msk [vmem:[#allocation3 + $0x140] sm:$0xff] %vm836, %v781
        %858 = vst.msk [vmem:[#allocation3 + $0x150] sm:$0xff] %vm836, %v783
        %859 = vst.msk [vmem:[#allocation3 + $0x160] sm:$0xff] %vm836, %v785
        %860 = vst.msk [vmem:[#allocation3 + $0x170] sm:$0xff] %vm836, %v787
        %861 = vst.msk [vmem:[#allocation3 + $0x180] sm:$0xff] %vm836, %v789
        %862 = vst.msk [vmem:[#allocation3 + $0x190] sm:$0xff] %vm836, %v791
        %863 = vst.msk [vmem:[#allocation3 + $0x1a0] sm:$0xff] %vm836, %v793
        %864 = vst.msk [vmem:[#allocation3 + $0x1b0] sm:$0xff] %vm836, %v795
        %865 = vst.msk [vmem:[#allocation3 + $0x1c0] sm:$0xff] %vm836, %v797
        %866 = vst.msk [vmem:[#allocation3 + $0x1d0] sm:$0xff] %vm836, %v799
        %867 = vst.msk [vmem:[#allocation3 + $0x1e0] sm:$0xff] %vm836, %v801
        %868 = vst.msk [vmem:[#allocation3 + $0x1f0] sm:$0xff] %vm836, %v803
        %vm869 = vcmask 1045504
        %v870 = vrot.slane %v525, 2
        %v871 = vrot.slane %v526, 2
        %v872 = vsel %vm869, %v870, %v871
        %v873 = vrot.slane %v527, 2
        %v874 = vsel %vm869, %v871, %v873
        %v875 = vrot.slane %v528, 2
        %v876 = vrot.slane %v529, 2
        %v877 = vsel %vm869, %v875, %v876
        %v878 = vrot.slane %v530, 2
        %v879 = vsel %vm869, %v876, %v878
        %v880 = vrot.slane %v531, 2
        %v881 = vrot.slane %v532, 2
        %v882 = vsel %vm869, %v880, %v881
        %v883 = vrot.slane %v533, 2
        %v884 = vsel %vm869, %v881, %v883
        %v885 = vrot.slane %v534, 2
        %v886 = vrot.slane %v535, 2
        %v887 = vsel %vm869, %v885, %v886
        %v888 = vrot.slane %v536, 2
        %v889 = vsel %vm869, %v886, %v888
        %v890 = vrot.slane %v537, 2
        %v891 = vrot.slane %v538, 2
        %v892 = vsel %vm869, %v890, %v891
        %v893 = vrot.slane %v539, 2
        %v894 = vsel %vm869, %v891, %v893
        %v895 = vrot.slane %v540, 2
        %v896 = vrot.slane %v541, 2
        %v897 = vsel %vm869, %v895, %v896
        %v898 = vrot.slane %v542, 2
        %v899 = vsel %vm869, %v896, %v898
        %v900 = vrot.slane %v543, 2
        %v901 = vrot.slane %v544, 2
        %v902 = vsel %vm869, %v900, %v901
        %v903 = vrot.slane %v545, 2
        %v904 = vsel %vm869, %v901, %v903
        %v905 = vrot.slane %v546, 2
        %v906 = vrot.slane %v547, 2
        %v907 = vsel %vm869, %v905, %v906
        %v908 = vrot.slane %v548, 2
        %v909 = vsel %vm869, %v906, %v908
        %v910 = vrot.slane %v549, 2
        %v911 = vrot.slane %v550, 2
        %v912 = vsel %vm869, %v910, %v911
        %v913 = vrot.slane %v551, 2
        %v914 = vsel %vm869, %v911, %v913
        %v915 = vrot.slane %v552, 2
        %v916 = vrot.slane %v553, 2
        %v917 = vsel %vm869, %v915, %v916
        %v918 = vrot.slane %v554, 2
        %v919 = vsel %vm869, %v916, %v918
        %v920 = vrot.slane %v555, 2
        %v921 = vrot.slane %v556, 2
        %v922 = vsel %vm869, %v920, %v921
        %v923 = vrot.slane %v557, 2
        %v924 = vsel %vm869, %v921, %v923
        %v925 = vrot.slane %v558, 2
        %v926 = vrot.slane %v559, 2
        %v927 = vsel %vm869, %v925, %v926
        %v928 = vrot.slane %v560, 2
        %v929 = vsel %vm869, %v926, %v928
        %v930 = vrot.slane %v561, 2
        %v931 = vrot.slane %v562, 2
        %v932 = vsel %vm869, %v930, %v931
        %v933 = vrot.slane %v563, 2
        %v934 = vsel %vm869, %v931, %v933
        %v935 = vrot.slane %v564, 2
        %v936 = vrot.slane %v565, 2
        %v937 = vsel %vm869, %v935, %v936
        %v938 = vrot.slane %v566, 2
        %v939 = vsel %vm869, %v936, %v938
        %v940 = vrot.slane %v567, 2
        %v941 = vrot.slane %v568, 2
        %v942 = vsel %vm869, %v940, %v941
        %v943 = vrot.slane %v569, 2
        %v944 = vsel %vm869, %v941, %v943
        %v945 = vrot.slane %v570, 2
        %v946 = vrot.slane %v571, 2
        %v947 = vsel %vm869, %v945, %v946
        %v948 = vrot.slane %v572, 2
        %v949 = vsel %vm869, %v946, %v948
        %950 = vrot.lane.b32.xlu0 %v872, 32
        %v951 = vpop.permute.xlu0 %950
        %952 = vrot.lane.b32.xlu0 %v874, 32
        %v953 = vpop.permute.xlu0 %952
        %954 = vrot.lane.b32.xlu0 %v877, 32
        %v955 = vpop.permute.xlu0 %954
        %956 = vrot.lane.b32.xlu0 %v879, 32
        %v957 = vpop.permute.xlu0 %956
        %958 = vrot.lane.b32.xlu0 %v882, 32
        %v959 = vpop.permute.xlu0 %958
        %960 = vrot.lane.b32.xlu0 %v884, 32
        %v961 = vpop.permute.xlu0 %960
        %962 = vrot.lane.b32.xlu0 %v887, 32
        %v963 = vpop.permute.xlu0 %962
        %964 = vrot.lane.b32.xlu0 %v889, 32
        %v965 = vpop.permute.xlu0 %964
        %966 = vrot.lane.b32.xlu0 %v892, 32
        %v967 = vpop.permute.xlu0 %966
        %968 = vrot.lane.b32.xlu0 %v894, 32
        %v969 = vpop.permute.xlu0 %968
        %970 = vrot.lane.b32.xlu0 %v897, 32
        %v971 = vpop.permute.xlu0 %970
        %972 = vrot.lane.b32.xlu0 %v899, 32
        %v973 = vpop.permute.xlu0 %972
        %974 = vrot.lane.b32.xlu0 %v902, 32
        %v975 = vpop.permute.xlu0 %974
        %976 = vrot.lane.b32.xlu0 %v904, 32
        %v977 = vpop.permute.xlu0 %976
        %978 = vrot.lane.b32.xlu0 %v907, 32
        %v979 = vpop.permute.xlu0 %978
        %980 = vrot.lane.b32.xlu0 %v909, 32
        %v981 = vpop.permute.xlu0 %980
        %982 = vrot.lane.b32.xlu0 %v912, 32
        %v983 = vpop.permute.xlu0 %982
        %984 = vrot.lane.b32.xlu0 %v914, 32
        %v985 = vpop.permute.xlu0 %984
        %986 = vrot.lane.b32.xlu0 %v917, 32
        %v987 = vpop.permute.xlu0 %986
        %988 = vrot.lane.b32.xlu0 %v919, 32
        %v989 = vpop.permute.xlu0 %988
        %990 = vrot.lane.b32.xlu0 %v922, 32
        %v991 = vpop.permute.xlu0 %990
        %992 = vrot.lane.b32.xlu0 %v924, 32
        %v993 = vpop.permute.xlu0 %992
        %994 = vrot.lane.b32.xlu0 %v927, 32
        %v995 = vpop.permute.xlu0 %994
        %996 = vrot.lane.b32.xlu0 %v929, 32
        %v997 = vpop.permute.xlu0 %996
        %998 = vrot.lane.b32.xlu0 %v932, 32
        %v999 = vpop.permute.xlu0 %998
        %1000 = vrot.lane.b32.xlu0 %v934, 32
        %v1001 = vpop.permute.xlu0 %1000
        %1002 = vrot.lane.b32.xlu0 %v937, 32
        %v1003 = vpop.permute.xlu0 %1002
        %1004 = vrot.lane.b32.xlu0 %v939, 32
        %v1005 = vpop.permute.xlu0 %1004
        %1006 = vrot.lane.b32.xlu0 %v942, 32
        %v1007 = vpop.permute.xlu0 %1006
        %1008 = vrot.lane.b32.xlu0 %v944, 32
        %v1009 = vpop.permute.xlu0 %1008
        %1010 = vrot.lane.b32.xlu0 %v947, 32
        %v1011 = vpop.permute.xlu0 %1010
        %1012 = vrot.lane.b32.xlu0 %v949, 32
        %v1013 = vpop.permute.xlu0 %1012
        %vm1046 = vcmask 392448
        %1047 = vst.msk [vmem:[#allocation3] sm:$0xff] %vm1046, %v951
        %1048 = vst.msk [vmem:[#allocation3 + $0x10] sm:$0xff] %vm1046, %v953
        %1049 = vst.msk [vmem:[#allocation3 + $0x20] sm:$0xff] %vm1046, %v955
        %1050 = vst.msk [vmem:[#allocation3 + $0x30] sm:$0xff] %vm1046, %v957
        %1051 = vst.msk [vmem:[#allocation3 + $0x40] sm:$0xff] %vm1046, %v959
        %1052 = vst.msk [vmem:[#allocation3 + $0x50] sm:$0xff] %vm1046, %v961
        %1053 = vst.msk [vmem:[#allocation3 + $0x60] sm:$0xff] %vm1046, %v963
        %1054 = vst.msk [vmem:[#allocation3 + $0x70] sm:$0xff] %vm1046, %v965
        %1055 = vst.msk [vmem:[#allocation3 + $0x80] sm:$0xff] %vm1046, %v967
        %1056 = vst.msk [vmem:[#allocation3 + $0x90] sm:$0xff] %vm1046, %v969
        %1057 = vst.msk [vmem:[#allocation3 + $0xa0] sm:$0xff] %vm1046, %v971
        %1058 = vst.msk [vmem:[#allocation3 + $0xb0] sm:$0xff] %vm1046, %v973
        %1059 = vst.msk [vmem:[#allocation3 + $0xc0] sm:$0xff] %vm1046, %v975
        %1060 = vst.msk [vmem:[#allocation3 + $0xd0] sm:$0xff] %vm1046, %v977
        %1061 = vst.msk [vmem:[#allocation3 + $0xe0] sm:$0xff] %vm1046, %v979
        %1062 = vst.msk [vmem:[#allocation3 + $0xf0] sm:$0xff] %vm1046, %v981
        %1063 = vst.msk [vmem:[#allocation3 + $0x100] sm:$0xff] %vm1046, %v983
        %1064 = vst.msk [vmem:[#allocation3 + $0x110] sm:$0xff] %vm1046, %v985
        %1065 = vst.msk [vmem:[#allocation3 + $0x120] sm:$0xff] %vm1046, %v987
        %1066 = vst.msk [vmem:[#allocation3 + $0x130] sm:$0xff] %vm1046, %v989
        %1067 = vst.msk [vmem:[#allocation3 + $0x140] sm:$0xff] %vm1046, %v991
        %1068 = vst.msk [vmem:[#allocation3 + $0x150] sm:$0xff] %vm1046, %v993
        %1069 = vst.msk [vmem:[#allocation3 + $0x160] sm:$0xff] %vm1046, %v995
        %1070 = vst.msk [vmem:[#allocation3 + $0x170] sm:$0xff] %vm1046, %v997
        %1071 = vst.msk [vmem:[#allocation3 + $0x180] sm:$0xff] %vm1046, %v999
        %1072 = vst.msk [vmem:[#allocation3 + $0x190] sm:$0xff] %vm1046, %v1001
        %1073 = vst.msk [vmem:[#allocation3 + $0x1a0] sm:$0xff] %vm1046, %v1003
        %1074 = vst.msk [vmem:[#allocation3 + $0x1b0] sm:$0xff] %vm1046, %v1005
        %1075 = vst.msk [vmem:[#allocation3 + $0x1c0] sm:$0xff] %vm1046, %v1007
        %1076 = vst.msk [vmem:[#allocation3 + $0x1d0] sm:$0xff] %vm1046, %v1009
        %1077 = vst.msk [vmem:[#allocation3 + $0x1e0] sm:$0xff] %vm1046, %v1011
        %1078 = vst.msk [vmem:[#allocation3 + $0x1f0] sm:$0xff] %vm1046, %v1013
        %1081 = vrot.lane.b32.xlu0 %v528, 48
        %v1082 = vpop.permute.xlu0 %1081
        %1083 = vrot.lane.b32.xlu0 %v529, 48
        %v1084 = vpop.permute.xlu0 %1083
        %1085 = vrot.lane.b32.xlu0 %v531, 48
        %v1086 = vpop.permute.xlu0 %1085
        %1087 = vrot.lane.b32.xlu0 %v532, 48
        %v1088 = vpop.permute.xlu0 %1087
        %1089 = vrot.lane.b32.xlu0 %v534, 48
        %v1090 = vpop.permute.xlu0 %1089
        %1091 = vrot.lane.b32.xlu0 %v535, 48
        %v1092 = vpop.permute.xlu0 %1091
        %1093 = vrot.lane.b32.xlu0 %v537, 48
        %v1094 = vpop.permute.xlu0 %1093
        %1095 = vrot.lane.b32.xlu0 %v538, 48
        %v1096 = vpop.permute.xlu0 %1095
        %1097 = vrot.lane.b32.xlu0 %v540, 48
        %v1098 = vpop.permute.xlu0 %1097
        %1099 = vrot.lane.b32.xlu0 %v541, 48
        %v1100 = vpop.permute.xlu0 %1099
        %1101 = vrot.lane.b32.xlu0 %v543, 48
        %v1102 = vpop.permute.xlu0 %1101
        %1103 = vrot.lane.b32.xlu0 %v544, 48
        %v1104 = vpop.permute.xlu0 %1103
        %1105 = vrot.lane.b32.xlu0 %v546, 48
        %v1106 = vpop.permute.xlu0 %1105
        %1107 = vrot.lane.b32.xlu0 %v547, 48
        %v1108 = vpop.permute.xlu0 %1107
        %1109 = vrot.lane.b32.xlu0 %v549, 48
        %v1110 = vpop.permute.xlu0 %1109
        %1111 = vrot.lane.b32.xlu0 %v550, 48
        %v1112 = vpop.permute.xlu0 %1111
        %1113 = vrot.lane.b32.xlu0 %v552, 48
        %v1114 = vpop.permute.xlu0 %1113
        %1115 = vrot.lane.b32.xlu0 %v553, 48
        %v1116 = vpop.permute.xlu0 %1115
        %1117 = vrot.lane.b32.xlu0 %v555, 48
        %v1118 = vpop.permute.xlu0 %1117
        %1119 = vrot.lane.b32.xlu0 %v556, 48
        %v1120 = vpop.permute.xlu0 %1119
        %1121 = vrot.lane.b32.xlu0 %v558, 48
        %v1122 = vpop.permute.xlu0 %1121
        %1123 = vrot.lane.b32.xlu0 %v559, 48
        %v1124 = vpop.permute.xlu0 %1123
        %1125 = vrot.lane.b32.xlu0 %v561, 48
        %v1126 = vpop.permute.xlu0 %1125
        %1127 = vrot.lane.b32.xlu0 %v562, 48
        %v1128 = vpop.permute.xlu0 %1127
        %1129 = vrot.lane.b32.xlu0 %v564, 48
        %v1130 = vpop.permute.xlu0 %1129
        %1131 = vrot.lane.b32.xlu0 %v565, 48
        %v1132 = vpop.permute.xlu0 %1131
        %1133 = vrot.lane.b32.xlu0 %v567, 48
        %v1134 = vpop.permute.xlu0 %1133
        %1135 = vrot.lane.b32.xlu0 %v568, 48
        %v1136 = vpop.permute.xlu0 %1135
        %1137 = vrot.lane.b32.xlu0 %v570, 48
        %v1138 = vpop.permute.xlu0 %1137
        %1139 = vrot.lane.b32.xlu0 %v571, 48
        %v1140 = vpop.permute.xlu0 %1139
        %1141 = vrot.lane.b32.xlu0 %v573, 48
        %v1142 = vpop.permute.xlu0 %1141
        %1143 = vrot.lane.b32.xlu0 %v574, 48
        %v1144 = vpop.permute.xlu0 %1143
        %vm1177 = vcmask 523648
        %1178 = vst.msk [vmem:[#allocation3] sm:$0xff] %vm1177, %v1082
        %1179 = vst.msk [vmem:[#allocation3 + $0x10] sm:$0xff] %vm1177, %v1084
        %1180 = vst.msk [vmem:[#allocation3 + $0x20] sm:$0xff] %vm1177, %v1086
        %1181 = vst.msk [vmem:[#allocation3 + $0x30] sm:$0xff] %vm1177, %v1088
        %1182 = vst.msk [vmem:[#allocation3 + $0x40] sm:$0xff] %vm1177, %v1090
        %1183 = vst.msk [vmem:[#allocation3 + $0x50] sm:$0xff] %vm1177, %v1092
        %1184 = vst.msk [vmem:[#allocation3 + $0x60] sm:$0xff] %vm1177, %v1094
        %1185 = vst.msk [vmem:[#allocation3 + $0x70] sm:$0xff] %vm1177, %v1096
        %1186 = vst.msk [vmem:[#allocation3 + $0x80] sm:$0xff] %vm1177, %v1098
        %1187 = vst.msk [vmem:[#allocation3 + $0x90] sm:$0xff] %vm1177, %v1100
        %1188 = vst.msk [vmem:[#allocation3 + $0xa0] sm:$0xff] %vm1177, %v1102
        %1189 = vst.msk [vmem:[#allocation3 + $0xb0] sm:$0xff] %vm1177, %v1104
        %1190 = vst.msk [vmem:[#allocation3 + $0xc0] sm:$0xff] %vm1177, %v1106
        %1191 = vst.msk [vmem:[#allocation3 + $0xd0] sm:$0xff] %vm1177, %v1108
        %1192 = vst.msk [vmem:[#allocation3 + $0xe0] sm:$0xff] %vm1177, %v1110
        %1193 = vst.msk [vmem:[#allocation3 + $0xf0] sm:$0xff] %vm1177, %v1112
        %1194 = vst.msk [vmem:[#allocation3 + $0x100] sm:$0xff] %vm1177, %v1114
        %1195 = vst.msk [vmem:[#allocation3 + $0x110] sm:$0xff] %vm1177, %v1116
        %1196 = vst.msk [vmem:[#allocation3 + $0x120] sm:$0xff] %vm1177, %v1118
        %1197 = vst.msk [vmem:[#allocation3 + $0x130] sm:$0xff] %vm1177, %v1120
        %1198 = vst.msk [vmem:[#allocation3 + $0x140] sm:$0xff] %vm1177, %v1122
        %1199 = vst.msk [vmem:[#allocation3 + $0x150] sm:$0xff] %vm1177, %v1124
        %1200 = vst.msk [vmem:[#allocation3 + $0x160] sm:$0xff] %vm1177, %v1126
        %1201 = vst.msk [vmem:[#allocation3 + $0x170] sm:$0xff] %vm1177, %v1128
        %1202 = vst.msk [vmem:[#allocation3 + $0x180] sm:$0xff] %vm1177, %v1130
        %1203 = vst.msk [vmem:[#allocation3 + $0x190] sm:$0xff] %vm1177, %v1132
        %1204 = vst.msk [vmem:[#allocation3 + $0x1a0] sm:$0xff] %vm1177, %v1134
        %1205 = vst.msk [vmem:[#allocation3 + $0x1b0] sm:$0xff] %vm1177, %v1136
        %1206 = vst.msk [vmem:[#allocation3 + $0x1c0] sm:$0xff] %vm1177, %v1138
        %1207 = vst.msk [vmem:[#allocation3 + $0x1d0] sm:$0xff] %vm1177, %v1140
        %1208 = vst.msk [vmem:[#allocation3 + $0x1e0] sm:$0xff] %vm1177, %v1142
        %1209 = vst.msk [vmem:[#allocation3 + $0x1f0] sm:$0xff] %vm1177, %v1144
        %v1211 = vrot.slane %v573, 1
        %v1212 = vrot.slane %v574, 1
        %v1213 = vsel %vm659, %v1211, %v1212
        %v1214 = vrot.slane %v575, 1
        %v1215 = vsel %vm659, %v1212, %v1214
        %1216 = vrot.lane.b32.xlu0 %v667, 64
        %v1217 = vpop.permute.xlu0 %1216
        %1218 = vrot.lane.b32.xlu0 %v669, 64
        %v1219 = vpop.permute.xlu0 %1218
        %1220 = vrot.lane.b32.xlu0 %v672, 64
        %v1221 = vpop.permute.xlu0 %1220
        %1222 = vrot.lane.b32.xlu0 %v674, 64
        %v1223 = vpop.permute.xlu0 %1222
        %1224 = vrot.lane.b32.xlu0 %v677, 64
        %v1225 = vpop.permute.xlu0 %1224
        %1226 = vrot.lane.b32.xlu0 %v679, 64
        %v1227 = vpop.permute.xlu0 %1226
        %1228 = vrot.lane.b32.xlu0 %v682, 64
        %v1229 = vpop.permute.xlu0 %1228
        %1230 = vrot.lane.b32.xlu0 %v684, 64
        %v1231 = vpop.permute.xlu0 %1230
        %1232 = vrot.lane.b32.xlu0 %v687, 64
        %v1233 = vpop.permute.xlu0 %1232
        %1234 = vrot.lane.b32.xlu0 %v689, 64
        %v1235 = vpop.permute.xlu0 %1234
        %1236 = vrot.lane.b32.xlu0 %v692, 64
        %v1237 = vpop.permute.xlu0 %1236
        %1238 = vrot.lane.b32.xlu0 %v694, 64
        %v1239 = vpop.permute.xlu0 %1238
        %1240 = vrot.lane.b32.xlu0 %v697, 64
        %v1241 = vpop.permute.xlu0 %1240
        %1242 = vrot.lane.b32.xlu0 %v699, 64
        %v1243 = vpop.permute.xlu0 %1242
        %1244 = vrot.lane.b32.xlu0 %v702, 64
        %v1245 = vpop.permute.xlu0 %1244
        %1246 = vrot.lane.b32.xlu0 %v704, 64
        %v1247 = vpop.permute.xlu0 %1246
        %1248 = vrot.lane.b32.xlu0 %v707, 64
        %v1249 = vpop.permute.xlu0 %1248
        %1250 = vrot.lane.b32.xlu0 %v709, 64
        %v1251 = vpop.permute.xlu0 %1250
        %1252 = vrot.lane.b32.xlu0 %v712, 64
        %v1253 = vpop.permute.xlu0 %1252
        %1254 = vrot.lane.b32.xlu0 %v714, 64
        %v1255 = vpop.permute.xlu0 %1254
        %1256 = vrot.lane.b32.xlu0 %v717, 64
        %v1257 = vpop.permute.xlu0 %1256
        %1258 = vrot.lane.b32.xlu0 %v719, 64
        %v1259 = vpop.permute.xlu0 %1258
        %1260 = vrot.lane.b32.xlu0 %v722, 64
        %v1261 = vpop.permute.xlu0 %1260
        %1262 = vrot.lane.b32.xlu0 %v724, 64
        %v1263 = vpop.permute.xlu0 %1262
        %1264 = vrot.lane.b32.xlu0 %v727, 64
        %v1265 = vpop.permute.xlu0 %1264
        %1266 = vrot.lane.b32.xlu0 %v729, 64
        %v1267 = vpop.permute.xlu0 %1266
        %1268 = vrot.lane.b32.xlu0 %v732, 64
        %v1269 = vpop.permute.xlu0 %1268
        %1270 = vrot.lane.b32.xlu0 %v734, 64
        %v1271 = vpop.permute.xlu0 %1270
        %1272 = vrot.lane.b32.xlu0 %v737, 64
        %v1273 = vpop.permute.xlu0 %1272
        %1274 = vrot.lane.b32.xlu0 %v739, 64
        %v1275 = vpop.permute.xlu0 %1274
        %1276 = vrot.lane.b32.xlu0 %v1213, 64
        %v1277 = vpop.permute.xlu0 %1276
        %1278 = vrot.lane.b32.xlu0 %v1215, 64
        %v1279 = vpop.permute.xlu0 %1278
        %vm1312 = vcmask 654848
        %1313 = vst.msk [vmem:[#allocation3] sm:$0xff] %vm1312, %v1217
        %1314 = vst.msk [vmem:[#allocation3 + $0x10] sm:$0xff] %vm1312, %v1219
        %1315 = vst.msk [vmem:[#allocation3 + $0x20] sm:$0xff] %vm1312, %v1221
        %1316 = vst.msk [vmem:[#allocation3 + $0x30] sm:$0xff] %vm1312, %v1223
        %1317 = vst.msk [vmem:[#allocation3 + $0x40] sm:$0xff] %vm1312, %v1225
        %1318 = vst.msk [vmem:[#allocation3 + $0x50] sm:$0xff] %vm1312, %v1227
        %1319 = vst.msk [vmem:[#allocation3 + $0x60] sm:$0xff] %vm1312, %v1229
        %1320 = vst.msk [vmem:[#allocation3 + $0x70] sm:$0xff] %vm1312, %v1231
        %1321 = vst.msk [vmem:[#allocation3 + $0x80] sm:$0xff] %vm1312, %v1233
        %1322 = vst.msk [vmem:[#allocation3 + $0x90] sm:$0xff] %vm1312, %v1235
        %1323 = vst.msk [vmem:[#allocation3 + $0xa0] sm:$0xff] %vm1312, %v1237
        %1324 = vst.msk [vmem:[#allocation3 + $0xb0] sm:$0xff] %vm1312, %v1239
        %1325 = vst.msk [vmem:[#allocation3 + $0xc0] sm:$0xff] %vm1312, %v1241
        %1326 = vst.msk [vmem:[#allocation3 + $0xd0] sm:$0xff] %vm1312, %v1243
        %1327 = vst.msk [vmem:[#allocation3 + $0xe0] sm:$0xff] %vm1312, %v1245
        %1328 = vst.msk [vmem:[#allocation3 + $0xf0] sm:$0xff] %vm1312, %v1247
        %1329 = vst.msk [vmem:[#allocation3 + $0x100] sm:$0xff] %vm1312, %v1249
        %1330 = vst.msk [vmem:[#allocation3 + $0x110] sm:$0xff] %vm1312, %v1251
        %1331 = vst.msk [vmem:[#allocation3 + $0x120] sm:$0xff] %vm1312, %v1253
        %1332 = vst.msk [vmem:[#allocation3 + $0x130] sm:$0xff] %vm1312, %v1255
        %1333 = vst.msk [vmem:[#allocation3 + $0x140] sm:$0xff] %vm1312, %v1257
        %1334 = vst.msk [vmem:[#allocation3 + $0x150] sm:$0xff] %vm1312, %v1259
        %1335 = vst.msk [vmem:[#allocation3 + $0x160] sm:$0xff] %vm1312, %v1261
        %1336 = vst.msk [vmem:[#allocation3 + $0x170] sm:$0xff] %vm1312, %v1263
        %1337 = vst.msk [vmem:[#allocation3 + $0x180] sm:$0xff] %vm1312, %v1265
        %1338 = vst.msk [vmem:[#allocation3 + $0x190] sm:$0xff] %vm1312, %v1267
        %1339 = vst.msk [vmem:[#allocation3 + $0x1a0] sm:$0xff] %vm1312, %v1269
        %1340 = vst.msk [vmem:[#allocation3 + $0x1b0] sm:$0xff] %vm1312, %v1271
        %1341 = vst.msk [vmem:[#allocation3 + $0x1c0] sm:$0xff] %vm1312, %v1273
        %1342 = vst.msk [vmem:[#allocation3 + $0x1d0] sm:$0xff] %vm1312, %v1275
        %1343 = vst.msk [vmem:[#allocation3 + $0x1e0] sm:$0xff] %vm1312, %v1277
        %1344 = vst.msk [vmem:[#allocation3 + $0x1f0] sm:$0xff] %vm1312, %v1279
        %v1345 = vrot.slane %v573, 2
        %v1346 = vrot.slane %v574, 2
        %v1347 = vsel %vm869, %v1345, %v1346
        %v1348 = vrot.slane %v575, 2
        %v1349 = vsel %vm869, %v1346, %v1348
        %1350 = vrot.lane.b32.xlu0 %v877, 80
        %v1351 = vpop.permute.xlu0 %1350
        %1352 = vrot.lane.b32.xlu0 %v879, 80
        %v1353 = vpop.permute.xlu0 %1352
        %1354 = vrot.lane.b32.xlu0 %v882, 80
        %v1355 = vpop.permute.xlu0 %1354
        %1356 = vrot.lane.b32.xlu0 %v884, 80
        %v1357 = vpop.permute.xlu0 %1356
        %1358 = vrot.lane.b32.xlu0 %v887, 80
        %v1359 = vpop.permute.xlu0 %1358
        %1360 = vrot.lane.b32.xlu0 %v889, 80
        %v1361 = vpop.permute.xlu0 %1360
        %1362 = vrot.lane.b32.xlu0 %v892, 80
        %v1363 = vpop.permute.xlu0 %1362
        %1364 = vrot.lane.b32.xlu0 %v894, 80
        %v1365 = vpop.permute.xlu0 %1364
        %1366 = vrot.lane.b32.xlu0 %v897, 80
        %v1367 = vpop.permute.xlu0 %1366
        %1368 = vrot.lane.b32.xlu0 %v899, 80
        %v1369 = vpop.permute.xlu0 %1368
        %1370 = vrot.lane.b32.xlu0 %v902, 80
        %v1371 = vpop.permute.xlu0 %1370
        %1372 = vrot.lane.b32.xlu0 %v904, 80
        %v1373 = vpop.permute.xlu0 %1372
        %1374 = vrot.lane.b32.xlu0 %v907, 80
        %v1375 = vpop.permute.xlu0 %1374
        %1376 = vrot.lane.b32.xlu0 %v909, 80
        %v1377 = vpop.permute.xlu0 %1376
        %1378 = vrot.lane.b32.xlu0 %v912, 80
        %v1379 = vpop.permute.xlu0 %1378
        %1380 = vrot.lane.b32.xlu0 %v914, 80
        %v1381 = vpop.permute.xlu0 %1380
        %1382 = vrot.lane.b32.xlu0 %v917, 80
        %v1383 = vpop.permute.xlu0 %1382
        %1384 = vrot.lane.b32.xlu0 %v919, 80
        %v1385 = vpop.permute.xlu0 %1384
        %1386 = vrot.lane.b32.xlu0 %v922, 80
        %v1387 = vpop.permute.xlu0 %1386
        %1388 = vrot.lane.b32.xlu0 %v924, 80
        %v1389 = vpop.permute.xlu0 %1388
        %1390 = vrot.lane.b32.xlu0 %v927, 80
        %v1391 = vpop.permute.xlu0 %1390
        %1392 = vrot.lane.b32.xlu0 %v929, 80
        %v1393 = vpop.permute.xlu0 %1392
        %1394 = vrot.lane.b32.xlu0 %v932, 80
        %v1395 = vpop.permute.xlu0 %1394
        %1396 = vrot.lane.b32.xlu0 %v934, 80
        %v1397 = vpop.permute.xlu0 %1396
        %1398 = vrot.lane.b32.xlu0 %v937, 80
        %v1399 = vpop.permute.xlu0 %1398
        %1400 = vrot.lane.b32.xlu0 %v939, 80
        %v1401 = vpop.permute.xlu0 %1400
        %1402 = vrot.lane.b32.xlu0 %v942, 80
        %v1403 = vpop.permute.xlu0 %1402
        %1404 = vrot.lane.b32.xlu0 %v944, 80
        %v1405 = vpop.permute.xlu0 %1404
        %1406 = vrot.lane.b32.xlu0 %v947, 80
        %v1407 = vpop.permute.xlu0 %1406
        %1408 = vrot.lane.b32.xlu0 %v949, 80
        %v1409 = vpop.permute.xlu0 %1408
        %1410 = vrot.lane.b32.xlu0 %v1347, 80
        %v1411 = vpop.permute.xlu0 %1410
        %1412 = vrot.lane.b32.xlu0 %v1349, 80
        %v1413 = vpop.permute.xlu0 %1412
        %vm1446 = vcmask 786048
        %1447 = vst.msk [vmem:[#allocation3] sm:$0xff] %vm1446, %v1351
        %1448 = vst.msk [vmem:[#allocation3 + $0x10] sm:$0xff] %vm1446, %v1353
        %1449 = vst.msk [vmem:[#allocation3 + $0x20] sm:$0xff] %vm1446, %v1355
        %1450 = vst.msk [vmem:[#allocation3 + $0x30] sm:$0xff] %vm1446, %v1357
        %1451 = vst.msk [vmem:[#allocation3 + $0x40] sm:$0xff] %vm1446, %v1359
        %1452 = vst.msk [vmem:[#allocation3 + $0x50] sm:$0xff] %vm1446, %v1361
        %1453 = vst.msk [vmem:[#allocation3 + $0x60] sm:$0xff] %vm1446, %v1363
        %1454 = vst.msk [vmem:[#allocation3 + $0x70] sm:$0xff] %vm1446, %v1365
        %1455 = vst.msk [vmem:[#allocation3 + $0x80] sm:$0xff] %vm1446, %v1367
        %1456 = vst.msk [vmem:[#allocation3 + $0x90] sm:$0xff] %vm1446, %v1369
        %1457 = vst.msk [vmem:[#allocation3 + $0xa0] sm:$0xff] %vm1446, %v1371
        %1458 = vst.msk [vmem:[#allocation3 + $0xb0] sm:$0xff] %vm1446, %v1373
        %1459 = vst.msk [vmem:[#allocation3 + $0xc0] sm:$0xff] %vm1446, %v1375
        %1460 = vst.msk [vmem:[#allocation3 + $0xd0] sm:$0xff] %vm1446, %v1377
        %1461 = vst.msk [vmem:[#allocation3 + $0xe0] sm:$0xff] %vm1446, %v1379
        %1462 = vst.msk [vmem:[#allocation3 + $0xf0] sm:$0xff] %vm1446, %v1381
        %1463 = vst.msk [vmem:[#allocation3 + $0x100] sm:$0xff] %vm1446, %v1383
        %1464 = vst.msk [vmem:[#allocation3 + $0x110] sm:$0xff] %vm1446, %v1385
        %1465 = vst.msk [vmem:[#allocation3 + $0x120] sm:$0xff] %vm1446, %v1387
        %1466 = vst.msk [vmem:[#allocation3 + $0x130] sm:$0xff] %vm1446, %v1389
        %1467 = vst.msk [vmem:[#allocation3 + $0x140] sm:$0xff] %vm1446, %v1391
        %1468 = vst.msk [vmem:[#allocation3 + $0x150] sm:$0xff] %vm1446, %v1393
        %1469 = vst.msk [vmem:[#allocation3 + $0x160] sm:$0xff] %vm1446, %v1395
        %1470 = vst.msk [vmem:[#allocation3 + $0x170] sm:$0xff] %vm1446, %v1397
        %1471 = vst.msk [vmem:[#allocation3 + $0x180] sm:$0xff] %vm1446, %v1399
        %1472 = vst.msk [vmem:[#allocation3 + $0x190] sm:$0xff] %vm1446, %v1401
        %1473 = vst.msk [vmem:[#allocation3 + $0x1a0] sm:$0xff] %vm1446, %v1403
        %1474 = vst.msk [vmem:[#allocation3 + $0x1b0] sm:$0xff] %vm1446, %v1405
        %1475 = vst.msk [vmem:[#allocation3 + $0x1c0] sm:$0xff] %vm1446, %v1407
        %1476 = vst.msk [vmem:[#allocation3 + $0x1d0] sm:$0xff] %vm1446, %v1409
        %1477 = vst.msk [vmem:[#allocation3 + $0x1e0] sm:$0xff] %vm1446, %v1411
        %1478 = vst.msk [vmem:[#allocation3 + $0x1f0] sm:$0xff] %vm1446, %v1413
        %1481 = vrot.lane.b32.xlu0 %v531, 96
        %v1482 = vpop.permute.xlu0 %1481
        %1483 = vrot.lane.b32.xlu0 %v532, 96
        %v1484 = vpop.permute.xlu0 %1483
        %1485 = vrot.lane.b32.xlu0 %v534, 96
        %v1486 = vpop.permute.xlu0 %1485
        %1487 = vrot.lane.b32.xlu0 %v535, 96
        %v1488 = vpop.permute.xlu0 %1487
        %1489 = vrot.lane.b32.xlu0 %v537, 96
        %v1490 = vpop.permute.xlu0 %1489
        %1491 = vrot.lane.b32.xlu0 %v538, 96
        %v1492 = vpop.permute.xlu0 %1491
        %1493 = vrot.lane.b32.xlu0 %v540, 96
        %v1494 = vpop.permute.xlu0 %1493
        %1495 = vrot.lane.b32.xlu0 %v541, 96
        %v1496 = vpop.permute.xlu0 %1495
        %1497 = vrot.lane.b32.xlu0 %v543, 96
        %v1498 = vpop.permute.xlu0 %1497
        %1499 = vrot.lane.b32.xlu0 %v544, 96
        %v1500 = vpop.permute.xlu0 %1499
        %1501 = vrot.lane.b32.xlu0 %v546, 96
        %v1502 = vpop.permute.xlu0 %1501
        %1503 = vrot.lane.b32.xlu0 %v547, 96
        %v1504 = vpop.permute.xlu0 %1503
        %1505 = vrot.lane.b32.xlu0 %v549, 96
        %v1506 = vpop.permute.xlu0 %1505
        %1507 = vrot.lane.b32.xlu0 %v550, 96
        %v1508 = vpop.permute.xlu0 %1507
        %1509 = vrot.lane.b32.xlu0 %v552, 96
        %v1510 = vpop.permute.xlu0 %1509
        %1511 = vrot.lane.b32.xlu0 %v553, 96
        %v1512 = vpop.permute.xlu0 %1511
        %1513 = vrot.lane.b32.xlu0 %v555, 96
        %v1514 = vpop.permute.xlu0 %1513
        %1515 = vrot.lane.b32.xlu0 %v556, 96
        %v1516 = vpop.permute.xlu0 %1515
        %1517 = vrot.lane.b32.xlu0 %v558, 96
        %v1518 = vpop.permute.xlu0 %1517
        %1519 = vrot.lane.b32.xlu0 %v559, 96
        %v1520 = vpop.permute.xlu0 %1519
        %1521 = vrot.lane.b32.xlu0 %v561, 96
        %v1522 = vpop.permute.xlu0 %1521
        %1523 = vrot.lane.b32.xlu0 %v562, 96
        %v1524 = vpop.permute.xlu0 %1523
        %1525 = vrot.lane.b32.xlu0 %v564, 96
        %v1526 = vpop.permute.xlu0 %1525
        %1527 = vrot.lane.b32.xlu0 %v565, 96
        %v1528 = vpop.permute.xlu0 %1527
        %1529 = vrot.lane.b32.xlu0 %v567, 96
        %v1530 = vpop.permute.xlu0 %1529
        %1531 = vrot.lane.b32.xlu0 %v568, 96
        %v1532 = vpop.permute.xlu0 %1531
        %1533 = vrot.lane.b32.xlu0 %v570, 96
        %v1534 = vpop.permute.xlu0 %1533
        %1535 = vrot.lane.b32.xlu0 %v571, 96
        %v1536 = vpop.permute.xlu0 %1535
        %1537 = vrot.lane.b32.xlu0 %v573, 96
        %v1538 = vpop.permute.xlu0 %1537
        %1539 = vrot.lane.b32.xlu0 %v574, 96
        %v1540 = vpop.permute.xlu0 %1539
        %1541 = vrot.lane.b32.xlu0 %v576, 96
        %v1542 = vpop.permute.xlu0 %1541
        %1543 = vrot.lane.b32.xlu0 %v577, 96
        %v1544 = vpop.permute.xlu0 %1543
        %vm1577 = vcmask 917248
        %1578 = vst.msk [vmem:[#allocation3] sm:$0xff] %vm1577, %v1482
        %1579 = vst.msk [vmem:[#allocation3 + $0x10] sm:$0xff] %vm1577, %v1484
        %1580 = vst.msk [vmem:[#allocation3 + $0x20] sm:$0xff] %vm1577, %v1486
        %1581 = vst.msk [vmem:[#allocation3 + $0x30] sm:$0xff] %vm1577, %v1488
        %1582 = vst.msk [vmem:[#allocation3 + $0x40] sm:$0xff] %vm1577, %v1490
        %1583 = vst.msk [vmem:[#allocation3 + $0x50] sm:$0xff] %vm1577, %v1492
        %1584 = vst.msk [vmem:[#allocation3 + $0x60] sm:$0xff] %vm1577, %v1494
        %1585 = vst.msk [vmem:[#allocation3 + $0x70] sm:$0xff] %vm1577, %v1496
        %1586 = vst.msk [vmem:[#allocation3 + $0x80] sm:$0xff] %vm1577, %v1498
        %1587 = vst.msk [vmem:[#allocation3 + $0x90] sm:$0xff] %vm1577, %v1500
        %1588 = vst.msk [vmem:[#allocation3 + $0xa0] sm:$0xff] %vm1577, %v1502
        %1589 = vst.msk [vmem:[#allocation3 + $0xb0] sm:$0xff] %vm1577, %v1504
        %1590 = vst.msk [vmem:[#allocation3 + $0xc0] sm:$0xff] %vm1577, %v1506
        %1591 = vst.msk [vmem:[#allocation3 + $0xd0] sm:$0xff] %vm1577, %v1508
        %1592 = vst.msk [vmem:[#allocation3 + $0xe0] sm:$0xff] %vm1577, %v1510
        %1593 = vst.msk [vmem:[#allocation3 + $0xf0] sm:$0xff] %vm1577, %v1512
        %1594 = vst.msk [vmem:[#allocation3 + $0x100] sm:$0xff] %vm1577, %v1514
        %1595 = vst.msk [vmem:[#allocation3 + $0x110] sm:$0xff] %vm1577, %v1516
        %1596 = vst.msk [vmem:[#allocation3 + $0x120] sm:$0xff] %vm1577, %v1518
        %1597 = vst.msk [vmem:[#allocation3 + $0x130] sm:$0xff] %vm1577, %v1520
        %1598 = vst.msk [vmem:[#allocation3 + $0x140] sm:$0xff] %vm1577, %v1522
        %1599 = vst.msk [vmem:[#allocation3 + $0x150] sm:$0xff] %vm1577, %v1524
        %1600 = vst.msk [vmem:[#allocation3 + $0x160] sm:$0xff] %vm1577, %v1526
        %1601 = vst.msk [vmem:[#allocation3 + $0x170] sm:$0xff] %vm1577, %v1528
        %1602 = vst.msk [vmem:[#allocation3 + $0x180] sm:$0xff] %vm1577, %v1530
        %1603 = vst.msk [vmem:[#allocation3 + $0x190] sm:$0xff] %vm1577, %v1532
        %1604 = vst.msk [vmem:[#allocation3 + $0x1a0] sm:$0xff] %vm1577, %v1534
        %1605 = vst.msk [vmem:[#allocation3 + $0x1b0] sm:$0xff] %vm1577, %v1536
        %1606 = vst.msk [vmem:[#allocation3 + $0x1c0] sm:$0xff] %vm1577, %v1538
        %1607 = vst.msk [vmem:[#allocation3 + $0x1d0] sm:$0xff] %vm1577, %v1540
        %1608 = vst.msk [vmem:[#allocation3 + $0x1e0] sm:$0xff] %vm1577, %v1542
        %1609 = vst.msk [vmem:[#allocation3 + $0x1f0] sm:$0xff] %vm1577, %v1544
        %v1611 = vrot.slane %v576, 1
        %v1612 = vrot.slane %v577, 1
        %v1613 = vsel %vm659, %v1611, %v1612
        %v1614 = vrot.slane %v578, 1
        %v1615 = vsel %vm659, %v1612, %v1614
        %1616 = vrot.lane.b32.xlu0 %v672, 112
        %v1617 = vpop.permute.xlu0 %1616
        %1618 = vrot.lane.b32.xlu0 %v674, 112
        %v1619 = vpop.permute.xlu0 %1618
        %1620 = vrot.lane.b32.xlu0 %v677, 112
        %v1621 = vpop.permute.xlu0 %1620
        %1622 = vrot.lane.b32.xlu0 %v679, 112
        %v1623 = vpop.permute.xlu0 %1622
        %1624 = vrot.lane.b32.xlu0 %v682, 112
        %v1625 = vpop.permute.xlu0 %1624
        %1626 = vrot.lane.b32.xlu0 %v684, 112
        %v1627 = vpop.permute.xlu0 %1626
        %1628 = vrot.lane.b32.xlu0 %v687, 112
        %v1629 = vpop.permute.xlu0 %1628
        %1630 = vrot.lane.b32.xlu0 %v689, 112
        %v1631 = vpop.permute.xlu0 %1630
        %1632 = vrot.lane.b32.xlu0 %v692, 112
        %v1633 = vpop.permute.xlu0 %1632
        %1634 = vrot.lane.b32.xlu0 %v694, 112
        %v1635 = vpop.permute.xlu0 %1634
        %1636 = vrot.lane.b32.xlu0 %v697, 112
        %v1637 = vpop.permute.xlu0 %1636
        %1638 = vrot.lane.b32.xlu0 %v699, 112
        %v1639 = vpop.permute.xlu0 %1638
        %1640 = vrot.lane.b32.xlu0 %v702, 112
        %v1641 = vpop.permute.xlu0 %1640
        %1642 = vrot.lane.b32.xlu0 %v704, 112
        %v1643 = vpop.permute.xlu0 %1642
        %1644 = vrot.lane.b32.xlu0 %v707, 112
        %v1645 = vpop.permute.xlu0 %1644
        %1646 = vrot.lane.b32.xlu0 %v709, 112
        %v1647 = vpop.permute.xlu0 %1646
        %1648 = vrot.lane.b32.xlu0 %v712, 112
        %v1649 = vpop.permute.xlu0 %1648
        %1650 = vrot.lane.b32.xlu0 %v714, 112
        %v1651 = vpop.permute.xlu0 %1650
        %1652 = vrot.lane.b32.xlu0 %v717, 112
        %v1653 = vpop.permute.xlu0 %1652
        %1654 = vrot.lane.b32.xlu0 %v719, 112
        %v1655 = vpop.permute.xlu0 %1654
        %1656 = vrot.lane.b32.xlu0 %v722, 112
        %v1657 = vpop.permute.xlu0 %1656
        %1658 = vrot.lane.b32.xlu0 %v724, 112
        %v1659 = vpop.permute.xlu0 %1658
        %1660 = vrot.lane.b32.xlu0 %v727, 112
        %v1661 = vpop.permute.xlu0 %1660
        %1662 = vrot.lane.b32.xlu0 %v729, 112
        %v1663 = vpop.permute.xlu0 %1662
        %1664 = vrot.lane.b32.xlu0 %v732, 112
        %v1665 = vpop.permute.xlu0 %1664
        %1666 = vrot.lane.b32.xlu0 %v734, 112
        %v1667 = vpop.permute.xlu0 %1666
        %1668 = vrot.lane.b32.xlu0 %v737, 112
        %v1669 = vpop.permute.xlu0 %1668
        %1670 = vrot.lane.b32.xlu0 %v739, 112
        %v1671 = vpop.permute.xlu0 %1670
        %1672 = vrot.lane.b32.xlu0 %v1213, 112
        %v1673 = vpop.permute.xlu0 %1672
        %1674 = vrot.lane.b32.xlu0 %v1215, 112
        %v1675 = vpop.permute.xlu0 %1674
        %1676 = vrot.lane.b32.xlu0 %v1613, 112
        %v1677 = vpop.permute.xlu0 %1676
        %1678 = vrot.lane.b32.xlu0 %v1615, 112
        %v1679 = vpop.permute.xlu0 %1678
        %vm1712 = vcmask 1048448
        %1713 = vst.msk [vmem:[#allocation3] sm:$0xff] %vm1712, %v1617
        %1714 = vst.msk [vmem:[#allocation3 + $0x10] sm:$0xff] %vm1712, %v1619
        %1715 = vst.msk [vmem:[#allocation3 + $0x20] sm:$0xff] %vm1712, %v1621
        %1716 = vst.msk [vmem:[#allocation3 + $0x30] sm:$0xff] %vm1712, %v1623
        %1717 = vst.msk [vmem:[#allocation3 + $0x40] sm:$0xff] %vm1712, %v1625
        %1718 = vst.msk [vmem:[#allocation3 + $0x50] sm:$0xff] %vm1712, %v1627
        %1719 = vst.msk [vmem:[#allocation3 + $0x60] sm:$0xff] %vm1712, %v1629
        %1720 = vst.msk [vmem:[#allocation3 + $0x70] sm:$0xff] %vm1712, %v1631
        %1721 = vst.msk [vmem:[#allocation3 + $0x80] sm:$0xff] %vm1712, %v1633
        %1722 = vst.msk [vmem:[#allocation3 + $0x90] sm:$0xff] %vm1712, %v1635
        %1723 = vst.msk [vmem:[#allocation3 + $0xa0] sm:$0xff] %vm1712, %v1637
        %1724 = vst.msk [vmem:[#allocation3 + $0xb0] sm:$0xff] %vm1712, %v1639
        %1725 = vst.msk [vmem:[#allocation3 + $0xc0] sm:$0xff] %vm1712, %v1641
        %1726 = vst.msk [vmem:[#allocation3 + $0xd0] sm:$0xff] %vm1712, %v1643
        %1727 = vst.msk [vmem:[#allocation3 + $0xe0] sm:$0xff] %vm1712, %v1645
        %1728 = vst.msk [vmem:[#allocation3 + $0xf0] sm:$0xff] %vm1712, %v1647
        %1729 = vst.msk [vmem:[#allocation3 + $0x100] sm:$0xff] %vm1712, %v1649
        %1730 = vst.msk [vmem:[#allocation3 + $0x110] sm:$0xff] %vm1712, %v1651
        %1731 = vst.msk [vmem:[#allocation3 + $0x120] sm:$0xff] %vm1712, %v1653
        %1732 = vst.msk [vmem:[#allocation3 + $0x130] sm:$0xff] %vm1712, %v1655
        %1733 = vst.msk [vmem:[#allocation3 + $0x140] sm:$0xff] %vm1712, %v1657
        %1734 = vst.msk [vmem:[#allocation3 + $0x150] sm:$0xff] %vm1712, %v1659
        %1735 = vst.msk [vmem:[#allocation3 + $0x160] sm:$0xff] %vm1712, %v1661
        %1736 = vst.msk [vmem:[#allocation3 + $0x170] sm:$0xff] %vm1712, %v1663
        %1737 = vst.msk [vmem:[#allocation3 + $0x180] sm:$0xff] %vm1712, %v1665
        %1738 = vst.msk [vmem:[#allocation3 + $0x190] sm:$0xff] %vm1712, %v1667
        %1739 = vst.msk [vmem:[#allocation3 + $0x1a0] sm:$0xff] %vm1712, %v1669
        %1740 = vst.msk [vmem:[#allocation3 + $0x1b0] sm:$0xff] %vm1712, %v1671
        %1741 = vst.msk [vmem:[#allocation3 + $0x1c0] sm:$0xff] %vm1712, %v1673
        %1742 = vst.msk [vmem:[#allocation3 + $0x1d0] sm:$0xff] %vm1712, %v1675
        %1743 = vst.msk [vmem:[#allocation3 + $0x1e0] sm:$0xff] %vm1712, %v1677
        %1744 = vst.msk [vmem:[#allocation3 + $0x1f0] sm:$0xff] %vm1712, %v1679
        %v1745 = vrot.slane %v576, 2
        %v1746 = vrot.slane %v577, 2
        %v1747 = vsel %vm869, %v1745, %v1746
        %v1748 = vrot.slane %v578, 2
        %v1749 = vsel %vm869, %v1746, %v1748
        %1782 = vst.msk [vmem:[#allocation3 + $0x8] sm:$0xff] %vm417, %v882
        %1783 = vst.msk [vmem:[#allocation3 + $0x18] sm:$0xff] %vm417, %v884
        %1784 = vst.msk [vmem:[#allocation3 + $0x28] sm:$0xff] %vm417, %v887
        %1785 = vst.msk [vmem:[#allocation3 + $0x38] sm:$0xff] %vm417, %v889
        %1786 = vst.msk [vmem:[#allocation3 + $0x48] sm:$0xff] %vm417, %v892
        %1787 = vst.msk [vmem:[#allocation3 + $0x58] sm:$0xff] %vm417, %v894
        %1788 = vst.msk [vmem:[#allocation3 + $0x68] sm:$0xff] %vm417, %v897
        %1789 = vst.msk [vmem:[#allocation3 + $0x78] sm:$0xff] %vm417, %v899
        %1790 = vst.msk [vmem:[#allocation3 + $0x88] sm:$0xff] %vm417, %v902
        %1791 = vst.msk [vmem:[#allocation3 + $0x98] sm:$0xff] %vm417, %v904
        %1792 = vst.msk [vmem:[#allocation3 + $0xa8] sm:$0xff] %vm417, %v907
        %1793 = vst.msk [vmem:[#allocation3 + $0xb8] sm:$0xff] %vm417, %v909
        %1794 = vst.msk [vmem:[#allocation3 + $0xc8] sm:$0xff] %vm417, %v912
        %1795 = vst.msk [vmem:[#allocation3 + $0xd8] sm:$0xff] %vm417, %v914
        %1796 = vst.msk [vmem:[#allocation3 + $0xe8] sm:$0xff] %vm417, %v917
        %1797 = vst.msk [vmem:[#allocation3 + $0xf8] sm:$0xff] %vm417, %v919
        %1798 = vst.msk [vmem:[#allocation3 + $0x108] sm:$0xff] %vm417, %v922
        %1799 = vst.msk [vmem:[#allocation3 + $0x118] sm:$0xff] %vm417, %v924
        %1800 = vst.msk [vmem:[#allocation3 + $0x128] sm:$0xff] %vm417, %v927
        %1801 = vst.msk [vmem:[#allocation3 + $0x138] sm:$0xff] %vm417, %v929
        %1802 = vst.msk [vmem:[#allocation3 + $0x148] sm:$0xff] %vm417, %v932
        %1803 = vst.msk [vmem:[#allocation3 + $0x158] sm:$0xff] %vm417, %v934
        %1804 = vst.msk [vmem:[#allocation3 + $0x168] sm:$0xff] %vm417, %v937
        %1805 = vst.msk [vmem:[#allocation3 + $0x178] sm:$0xff] %vm417, %v939
        %1806 = vst.msk [vmem:[#allocation3 + $0x188] sm:$0xff] %vm417, %v942
        %1807 = vst.msk [vmem:[#allocation3 + $0x198] sm:$0xff] %vm417, %v944
        %1808 = vst.msk [vmem:[#allocation3 + $0x1a8] sm:$0xff] %vm417, %v947
        %1809 = vst.msk [vmem:[#allocation3 + $0x1b8] sm:$0xff] %vm417, %v949
        %1810 = vst.msk [vmem:[#allocation3 + $0x1c8] sm:$0xff] %vm417, %v1347
        %1811 = vst.msk [vmem:[#allocation3 + $0x1d8] sm:$0xff] %vm417, %v1349
        %1812 = vst.msk [vmem:[#allocation3 + $0x1e8] sm:$0xff] %vm417, %v1747
        %1813 = vst.msk [vmem:[#allocation3 + $0x1f8] sm:$0xff] %vm417, %v1749
        %v1814 = vld [vmem:[#allocation3] sm:$0xff]
        %v1815 = vld [vmem:[#allocation3 + $0x8] sm:$0xff]
        %v1816 = vld [vmem:[#allocation3 + $0x10] sm:$0xff]
        %v1817 = vld [vmem:[#allocation3 + $0x18] sm:$0xff]
        %v1818 = vld [vmem:[#allocation3 + $0x20] sm:$0xff]
        %v1819 = vld [vmem:[#allocation3 + $0x28] sm:$0xff]
        %v1820 = vld [vmem:[#allocation3 + $0x30] sm:$0xff]
        %v1821 = vld [vmem:[#allocation3 + $0x38] sm:$0xff]
        %v1822 = vld [vmem:[#allocation3 + $0x40] sm:$0xff]
        %v1823 = vld [vmem:[#allocation3 + $0x48] sm:$0xff]
        %v1824 = vld [vmem:[#allocation3 + $0x50] sm:$0xff]
        %v1825 = vld [vmem:[#allocation3 + $0x58] sm:$0xff]
        %v1826 = vld [vmem:[#allocation3 + $0x60] sm:$0xff]
        %v1827 = vld [vmem:[#allocation3 + $0x68] sm:$0xff]
        %v1828 = vld [vmem:[#allocation3 + $0x70] sm:$0xff]
        %v1829 = vld [vmem:[#allocation3 + $0x78] sm:$0xff]
        %v1830 = vld [vmem:[#allocation3 + $0x80] sm:$0xff]
        %v1831 = vld [vmem:[#allocation3 + $0x88] sm:$0xff]
        %v1832 = vld [vmem:[#allocation3 + $0x90] sm:$0xff]
        %v1833 = vld [vmem:[#allocation3 + $0x98] sm:$0xff]
        %v1834 = vld [vmem:[#allocation3 + $0xa0] sm:$0xff]
        %v1835 = vld [vmem:[#allocation3 + $0xa8] sm:$0xff]
        %v1836 = vld [vmem:[#allocation3 + $0xb0] sm:$0xff]
        %v1837 = vld [vmem:[#allocation3 + $0xb8] sm:$0xff]
        %v1838 = vld [vmem:[#allocation3 + $0xc0] sm:$0xff]
        %v1839 = vld [vmem:[#allocation3 + $0xc8] sm:$0xff]
        %v1840 = vld [vmem:[#allocation3 + $0xd0] sm:$0xff]
        %v1841 = vld [vmem:[#allocation3 + $0xd8] sm:$0xff]
        %v1842 = vld [vmem:[#allocation3 + $0xe0] sm:$0xff]
        %v1843 = vld [vmem:[#allocation3 + $0xe8] sm:$0xff]
        %v1844 = vld [vmem:[#allocation3 + $0xf0] sm:$0xff]
        %v1845 = vld [vmem:[#allocation3 + $0xf8] sm:$0xff]
        %v1846 = vld [vmem:[#allocation3 + $0x100] sm:$0xff]
        %v1847 = vld [vmem:[#allocation3 + $0x108] sm:$0xff]
        %v1848 = vld [vmem:[#allocation3 + $0x110] sm:$0xff]
        %v1849 = vld [vmem:[#allocation3 + $0x118] sm:$0xff]
        %v1850 = vld [vmem:[#allocation3 + $0x120] sm:$0xff]
        %v1851 = vld [vmem:[#allocation3 + $0x128] sm:$0xff]
        %v1852 = vld [vmem:[#allocation3 + $0x130] sm:$0xff]
        %v1853 = vld [vmem:[#allocation3 + $0x138] sm:$0xff]
        %v1854 = vld [vmem:[#allocation3 + $0x140] sm:$0xff]
        %v1855 = vld [vmem:[#allocation3 + $0x148] sm:$0xff]
        %v1856 = vld [vmem:[#allocation3 + $0x150] sm:$0xff]
        %v1857 = vld [vmem:[#allocation3 + $0x158] sm:$0xff]
        %v1858 = vld [vmem:[#allocation3 + $0x160] sm:$0xff]
        %v1859 = vld [vmem:[#allocation3 + $0x168] sm:$0xff]
        %v1860 = vld [vmem:[#allocation3 + $0x170] sm:$0xff]
        %v1861 = vld [vmem:[#allocation3 + $0x178] sm:$0xff]
        %v1862 = vld [vmem:[#allocation3 + $0x180] sm:$0xff]
        %v1863 = vld [vmem:[#allocation3 + $0x188] sm:$0xff]
        %v1864 = vld [vmem:[#allocation3 + $0x190] sm:$0xff]
        %v1865 = vld [vmem:[#allocation3 + $0x198] sm:$0xff]
        %v1866 = vld [vmem:[#allocation3 + $0x1a0] sm:$0xff]
        %v1867 = vld [vmem:[#allocation3 + $0x1a8] sm:$0xff]
        %v1868 = vld [vmem:[#allocation3 + $0x1b0] sm:$0xff]
        %v1869 = vld [vmem:[#allocation3 + $0x1b8] sm:$0xff]
        %v1870 = vld [vmem:[#allocation3 + $0x1c0] sm:$0xff]
        %v1871 = vld [vmem:[#allocation3 + $0x1c8] sm:$0xff]
        %v1872 = vld [vmem:[#allocation3 + $0x1d0] sm:$0xff]
        %v1873 = vld [vmem:[#allocation3 + $0x1d8] sm:$0xff]
        %v1874 = vld [vmem:[#allocation3 + $0x1e0] sm:$0xff]
        %v1875 = vld [vmem:[#allocation3 + $0x1e8] sm:$0xff]
        %v1876 = vld [vmem:[#allocation3 + $0x1f0] sm:$0xff]
        %v1877 = vld [vmem:[#allocation3 + $0x1f8] sm:$0xff]
        %v1879 = vlaneseq
        %v1880 = vshrl.u32 %v1879, 7
        %v1881 = vsub.s32 0, %v1880
        %v1882 = vrot.slane %v491, %v1881
        %v1885 = vsel %vm417, %v1815, 0
        %v1888 = vsel %vm417, %v1817, 0
        %v1891 = vsel %vm417, %v1819, 0
        %v1894 = vsel %vm417, %v1821, 0
        %v1897 = vsel %vm417, %v1823, 0
        %v1900 = vsel %vm417, %v1825, 0
        %v1903 = vsel %vm417, %v1827, 0
        %v1906 = vsel %vm417, %v1829, 0
        %v1909 = vsel %vm417, %v1831, 0
        %v1912 = vsel %vm417, %v1833, 0
        %v1915 = vsel %vm417, %v1835, 0
        %v1918 = vsel %vm417, %v1837, 0
        %v1921 = vsel %vm417, %v1839, 0
        %v1924 = vsel %vm417, %v1841, 0
        %v1927 = vsel %vm417, %v1843, 0
        %v1930 = vsel %vm417, %v1845, 0
        %v1933 = vsel %vm417, %v1847, 0
        %v1936 = vsel %vm417, %v1849, 0
        %v1939 = vsel %vm417, %v1851, 0
        %v1942 = vsel %vm417, %v1853, 0
        %v1945 = vsel %vm417, %v1855, 0
        %v1948 = vsel %vm417, %v1857, 0
        %v1951 = vsel %vm417, %v1859, 0
        %v1954 = vsel %vm417, %v1861, 0
        %v1957 = vsel %vm417, %v1863, 0
        %v1960 = vsel %vm417, %v1865, 0
        %v1963 = vsel %vm417, %v1867, 0
        %v1966 = vsel %vm417, %v1869, 0
        %v1969 = vsel %vm417, %v1871, 0
        %v1972 = vsel %vm417, %v1873, 0
        %v1975 = vsel %vm417, %v1875, 0
        %v1978 = vsel %vm417, %v1877, 0
        %1980 = vmatprep.subr.mxu0 0.0
        %1981 = vmatpush1.msra.mxu0 %v473
        %1982 = vmatprep.subr.mxu0 0.0
        %1983 = vmatpush1.msra.mxu0 %v474
        %1984 = vmatprep.subr.mxu0 0.0
        %1985 = vmatpush1.msra.mxu0 %v475
        %1986 = vmatprep.subr.mxu0 0.0
        %1987 = vmatpush1.msra.mxu0 %v476
        %1988 = vmatprep.subr.mxu0 0.0
        %1989 = vmatpush1.msra.mxu0 %v477
        %1990 = vmatprep.subr.mxu0 0.0
        %1991 = vmatpush1.msra.mxu0 %v478
        %1992 = vmatprep.subr.mxu0 0.0
        %1993 = vmatpush1.msra.mxu0 %v479
        %1994 = vmatprep.subr.mxu0 0.0
        %1995 = vmatpush1.msra.mxu0 %v480
        %1996 = vmatprep.subr.mxu0 0.0
        %1997 = vmatpush1.msra.mxu0 %v481
        %1998 = vmatprep.subr.mxu0 0.0
        %1999 = vmatpush1.msra.mxu0 %v482
        %2000 = vmatprep.subr.mxu0 0.0
        %2001 = vmatpush1.msra.mxu0 %v483
        %2002 = vmatprep.subr.mxu0 0.0
        %2003 = vmatpush1.msra.mxu0 %v484
        %2004 = vmatprep.subr.mxu0 0.0
        %2005 = vmatpush1.msra.mxu0 %v485
        %2006 = vmatprep.subr.mxu0 0.0
        %2007 = vmatpush1.msra.mxu0 %v486
        %2008 = vmatprep.subr.mxu0 0.0
        %2009 = vmatpush1.msra.mxu0 %v487
        %2010 = vmatprep.subr.mxu0 0.0
        %2011 = vmatpush1.msra.mxu0 %v488
        %2012 = vmatprep.subr.mxu0 0.0
        %2013 = vmatpush1.msra.mxu0 %v489
        %2014 = vmatprep.subr.mxu0 0.0
        %2015 = vmatpush1.msra.mxu0 %v490
        %2016 = vmatprep.subr.mxu0 0.0
        %2017 = vmatpush1.msra.mxu0 0.0
        %2018 = vmatprep.subr.mxu0 0.0
        %2019 = vmatpush1.msra.mxu0 0.0
        %2020 = vmatprep.subr.mxu0 0.0
        %2021 = vmatpush1.msra.mxu0 0.0
        %2022 = vmatprep.subr.mxu0 0.0
        %2023 = vmatpush1.msra.mxu0 0.0
        %2024 = vmatprep.subr.mxu0 0.0
        %2025 = vmatpush1.msra.mxu0 0.0
        %2026 = vmatprep.subr.mxu0 0.0
        %2027 = vmatpush1.msra.mxu0 0.0
        %2028 = vmatprep.subr.mxu0 0.0
        %2029 = vmatpush1.msra.mxu0 0.0
        %2030 = vmatprep.subr.mxu0 0.0
        %2031 = vmatpush1.msra.mxu0 0.0
        %2032 = vmatprep.subr.mxu0 0.0
        %2033 = vmatpush1.msra.mxu0 0.0
        %2034 = vmatprep.subr.mxu0 0.0
        %2035 = vmatpush1.msra.mxu0 0.0
        %2036 = vmatprep.subr.mxu0 0.0
        %2037 = vmatpush1.msra.mxu0 0.0
        %2038 = vmatprep.subr.mxu0 0.0
        %2039 = vmatpush1.msra.mxu0 0.0
        %2040 = vmatprep.subr.mxu0 0.0
        %2041 = vmatpush1.msra.mxu0 0.0
        %2042 = vmatprep.subr.mxu0 0.0
        %2043 = vmatpush1.msra.mxu0 0.0
        %2044 = vmatprep.mubr.f32.mxu0 %v1885
        %2045 = vmatmul.mubr.f32.gmra.mrb[0].mxu0 %v1814
        %v2046 = vpop.f32.mrb[0].mxu0
        %v2047 = vadd.f32 %v1882, %v2046
        %v2048 = vpop.f32.mrb[0].mxu0
        %2049 = vmatprep.mubr.f32.mxu0 %v1888
        %2050 = vmatmul.mubr.f32.gmra.mrb[0].mxu0 %v1816
        %v2051 = vpop.f32.mrb[0].mxu0
        %v2052 = vadd.f32 %v1882, %v2051
        %v2053 = vpop.f32.mrb[0].mxu0
        %2054 = vmatprep.mubr.f32.mxu0 %v1891
        %2055 = vmatmul.mubr.f32.gmra.mrb[0].mxu0 %v1818
        %v2056 = vpop.f32.mrb[0].mxu0
        %v2057 = vadd.f32 %v1882, %v2056
        %v2058 = vpop.f32.mrb[0].mxu0
        %2059 = vmatprep.mubr.f32.mxu0 %v1894
        %2060 = vmatmul.mubr.f32.gmra.mrb[0].mxu0 %v1820
        %v2061 = vpop.f32.mrb[0].mxu0
        %v2062 = vadd.f32 %v1882, %v2061
        %v2063 = vpop.f32.mrb[0].mxu0
        %2064 = vmatprep.mubr.f32.mxu0 %v1897
        %2065 = vmatmul.mubr.f32.gmra.mrb[0].mxu0 %v1822
        %v2066 = vpop.f32.mrb[0].mxu0
        %v2067 = vadd.f32 %v1882, %v2066
        %v2068 = vpop.f32.mrb[0].mxu0
        %2069 = vmatprep.mubr.f32.mxu0 %v1900
        %2070 = vmatmul.mubr.f32.gmra.mrb[0].mxu0 %v1824
        %v2071 = vpop.f32.mrb[0].mxu0
        %v2072 = vadd.f32 %v1882, %v2071
        %v2073 = vpop.f32.mrb[0].mxu0
        %2074 = vmatprep.mubr.f32.mxu0 %v1903
        %2075 = vmatmul.mubr.f32.gmra.mrb[0].mxu0 %v1826
        %v2076 = vpop.f32.mrb[0].mxu0
        %v2077 = vadd.f32 %v1882, %v2076
        %v2078 = vpop.f32.mrb[0].mxu0
        %2079 = vmatprep.mubr.f32.mxu0 %v1906
        %2080 = vmatmul.mubr.f32.gmra.mrb[0].mxu0 %v1828
        %v2081 = vpop.f32.mrb[0].mxu0
        %v2082 = vadd.f32 %v1882, %v2081
        %v2083 = vpop.f32.mrb[0].mxu0
        %2084 = vmatprep.mubr.f32.mxu0 %v1909
        %2085 = vmatmul.mubr.f32.gmra.mrb[0].mxu0 %v1830
        %v2086 = vpop.f32.mrb[0].mxu0
        %v2087 = vadd.f32 %v1882, %v2086
        %v2088 = vpop.f32.mrb[0].mxu0
        %2089 = vmatprep.mubr.f32.mxu0 %v1912
        %2090 = vmatmul.mubr.f32.gmra.mrb[0].mxu0 %v1832
        %v2091 = vpop.f32.mrb[0].mxu0
        %v2092 = vadd.f32 %v1882, %v2091
        %v2093 = vpop.f32.mrb[0].mxu0
        %2094 = vmatprep.mubr.f32.mxu0 %v1915
        %2095 = vmatmul.mubr.f32.gmra.mrb[0].mxu0 %v1834
        %v2096 = vpop.f32.mrb[0].mxu0
        %v2097 = vadd.f32 %v1882, %v2096
        %v2098 = vpop.f32.mrb[0].mxu0
        %2099 = vmatprep.mubr.f32.mxu0 %v1918
        %2100 = vmatmul.mubr.f32.gmra.mrb[0].mxu0 %v1836
        %v2101 = vpop.f32.mrb[0].mxu0
        %v2102 = vadd.f32 %v1882, %v2101
        %v2103 = vpop.f32.mrb[0].mxu0
        %2104 = vmatprep.mubr.f32.mxu0 %v1921
        %2105 = vmatmul.mubr.f32.gmra.mrb[0].mxu0 %v1838
        %v2106 = vpop.f32.mrb[0].mxu0
        %v2107 = vadd.f32 %v1882, %v2106
        %v2108 = vpop.f32.mrb[0].mxu0
        %2109 = vmatprep.mubr.f32.mxu0 %v1924
        %2110 = vmatmul.mubr.f32.gmra.mrb[0].mxu0 %v1840
        %v2111 = vpop.f32.mrb[0].mxu0
        %v2112 = vadd.f32 %v1882, %v2111
        %v2113 = vpop.f32.mrb[0].mxu0
        %2114 = vmatprep.mubr.f32.mxu0 %v1927
        %2115 = vmatmul.mubr.f32.gmra.mrb[0].mxu0 %v1842
        %v2116 = vpop.f32.mrb[0].mxu0
        %v2117 = vadd.f32 %v1882, %v2116
        %v2118 = vpop.f32.mrb[0].mxu0
        %2119 = vmatprep.mubr.f32.mxu0 %v1930
        %2120 = vmatmul.mubr.f32.gmra.mrb[0].mxu0 %v1844
        %v2121 = vpop.f32.mrb[0].mxu0
        %v2122 = vadd.f32 %v1882, %v2121
        %v2123 = vpop.f32.mrb[0].mxu0
        %2124 = vmatprep.mubr.f32.mxu0 %v1933
        %2125 = vmatmul.mubr.f32.gmra.mrb[0].mxu0 %v1846
        %v2126 = vpop.f32.mrb[0].mxu0
        %v2127 = vadd.f32 %v1882, %v2126
        %v2128 = vpop.f32.mrb[0].mxu0
        %2129 = vmatprep.mubr.f32.mxu0 %v1936
        %2130 = vmatmul.mubr.f32.gmra.mrb[0].mxu0 %v1848
        %v2131 = vpop.f32.mrb[0].mxu0
        %v2132 = vadd.f32 %v1882, %v2131
        %v2133 = vpop.f32.mrb[0].mxu0
        %2134 = vmatprep.mubr.f32.mxu0 %v1939
        %2135 = vmatmul.mubr.f32.gmra.mrb[0].mxu0 %v1850
        %v2136 = vpop.f32.mrb[0].mxu0
        %v2137 = vadd.f32 %v1882, %v2136
        %v2138 = vpop.f32.mrb[0].mxu0
        %2139 = vmatprep.mubr.f32.mxu0 %v1942
        %2140 = vmatmul.mubr.f32.gmra.mrb[0].mxu0 %v1852
        %v2141 = vpop.f32.mrb[0].mxu0
        %v2142 = vadd.f32 %v1882, %v2141
        %v2143 = vpop.f32.mrb[0].mxu0
        %2144 = vmatprep.mubr.f32.mxu0 %v1945
        %2145 = vmatmul.mubr.f32.gmra.mrb[0].mxu0 %v1854
        %v2146 = vpop.f32.mrb[0].mxu0
        %v2147 = vadd.f32 %v1882, %v2146
        %v2148 = vpop.f32.mrb[0].mxu0
        %2149 = vmatprep.mubr.f32.mxu0 %v1948
        %2150 = vmatmul.mubr.f32.gmra.mrb[0].mxu0 %v1856
        %v2151 = vpop.f32.mrb[0].mxu0
        %v2152 = vadd.f32 %v1882, %v2151
        %v2153 = vpop.f32.mrb[0].mxu0
        %2154 = vmatprep.mubr.f32.mxu0 %v1951
        %2155 = vmatmul.mubr.f32.gmra.mrb[0].mxu0 %v1858
        %v2156 = vpop.f32.mrb[0].mxu0
        %v2157 = vadd.f32 %v1882, %v2156
        %v2158 = vpop.f32.mrb[0].mxu0
        %2159 = vmatprep.mubr.f32.mxu0 %v1954
        %2160 = vmatmul.mubr.f32.gmra.mrb[0].mxu0 %v1860
        %v2161 = vpop.f32.mrb[0].mxu0
        %v2162 = vadd.f32 %v1882, %v2161
        %v2163 = vpop.f32.mrb[0].mxu0
        %2164 = vmatprep.mubr.f32.mxu0 %v1957
        %2165 = vmatmul.mubr.f32.gmra.mrb[0].mxu0 %v1862
        %v2166 = vpop.f32.mrb[0].mxu0
        %v2167 = vadd.f32 %v1882, %v2166
        %v2168 = vpop.f32.mrb[0].mxu0
        %2169 = vmatprep.mubr.f32.mxu0 %v1960
        %2170 = vmatmul.mubr.f32.gmra.mrb[0].mxu0 %v1864
        %v2171 = vpop.f32.mrb[0].mxu0
        %v2172 = vadd.f32 %v1882, %v2171
        %v2173 = vpop.f32.mrb[0].mxu0
        %2174 = vmatprep.mubr.f32.mxu0 %v1963
        %2175 = vmatmul.mubr.f32.gmra.mrb[0].mxu0 %v1866
        %v2176 = vpop.f32.mrb[0].mxu0
        %v2177 = vadd.f32 %v1882, %v2176
        %v2178 = vpop.f32.mrb[0].mxu0
        %2179 = vmatprep.mubr.f32.mxu0 %v1966
        %2180 = vmatmul.mubr.f32.gmra.mrb[0].mxu0 %v1868
        %v2181 = vpop.f32.mrb[0].mxu0
        %v2182 = vadd.f32 %v1882, %v2181
        %v2183 = vpop.f32.mrb[0].mxu0
        %2184 = vmatprep.mubr.f32.mxu0 %v1969
        %2185 = vmatmul.mubr.f32.gmra.mrb[0].mxu0 %v1870
        %v2186 = vpop.f32.mrb[0].mxu0
        %v2187 = vadd.f32 %v1882, %v2186
        %v2188 = vpop.f32.mrb[0].mxu0
        %2189 = vmatprep.mubr.f32.mxu0 %v1972
        %2190 = vmatmul.mubr.f32.gmra.mrb[0].mxu0 %v1872
        %v2191 = vpop.f32.mrb[0].mxu0
        %v2192 = vadd.f32 %v1882, %v2191
        %v2193 = vpop.f32.mrb[0].mxu0
        %2194 = vmatprep.mubr.f32.mxu0 %v1975
        %2195 = vmatmul.mubr.f32.gmra.mrb[0].mxu0 %v1874
        %v2196 = vpop.f32.mrb[0].mxu0
        %v2197 = vadd.f32 %v1882, %v2196
        %v2198 = vpop.f32.mrb[0].mxu0
        %2199 = vmatprep.mubr.f32.mxu0 %v1978
        %2200 = vmatmul.mubr.f32.gmra.mrb[0].mxu0 %v1876
        %v2201 = vpop.f32.mrb[0].mxu0
        %v2202 = vadd.f32 %v1882, %v2201
        %v2203 = vpop.f32.mrb[0].mxu0
        %2204 = vdwg.mxu0
        %v2205 = vmax.f32 %v2047, 0.0
        %v2206 = vmax.f32 %v2052, 0.0
        %v2207 = vmax.f32 %v2057, 0.0
        %v2208 = vmax.f32 %v2062, 0.0
        %v2209 = vmax.f32 %v2067, 0.0
        %v2210 = vmax.f32 %v2072, 0.0
        %v2211 = vmax.f32 %v2077, 0.0
        %v2212 = vmax.f32 %v2082, 0.0
        %v2213 = vmax.f32 %v2087, 0.0
        %v2214 = vmax.f32 %v2092, 0.0
        %v2215 = vmax.f32 %v2097, 0.0
        %v2216 = vmax.f32 %v2102, 0.0
        %v2217 = vmax.f32 %v2107, 0.0
        %v2218 = vmax.f32 %v2112, 0.0
        %v2219 = vmax.f32 %v2117, 0.0
        %v2220 = vmax.f32 %v2122, 0.0
        %v2221 = vmax.f32 %v2127, 0.0
        %v2222 = vmax.f32 %v2132, 0.0
        %v2223 = vmax.f32 %v2137, 0.0
        %v2224 = vmax.f32 %v2142, 0.0
        %v2225 = vmax.f32 %v2147, 0.0
        %v2226 = vmax.f32 %v2152, 0.0
        %v2227 = vmax.f32 %v2157, 0.0
        %v2228 = vmax.f32 %v2162, 0.0
        %v2229 = vmax.f32 %v2167, 0.0
        %v2230 = vmax.f32 %v2172, 0.0
        %v2231 = vmax.f32 %v2177, 0.0
        %v2232 = vmax.f32 %v2182, 0.0
        %v2233 = vmax.f32 %v2187, 0.0
        %v2234 = vmax.f32 %v2192, 0.0
        %v2235 = vmax.f32 %v2197, 0.0
        %v2236 = vmax.f32 %v2202, 0.0
        %v2237 = vld [vmem:[%s3] sm:$0xff]
        %v2238 = vld [vmem:[%s3 + $0x8] sm:$0xff]
        %v2239 = vld [vmem:[%s3 + $0x10] sm:$0xff]
        %v2240 = vld [vmem:[%s3 + $0x18] sm:$0xff]
        %v2241 = vld [vmem:[%s3 + $0x20] sm:$0xff]
        %v2242 = vld [vmem:[%s3 + $0x28] sm:$0xff]
        %v2243 = vld [vmem:[%s3 + $0x30] sm:$0xff]
        %v2244 = vld [vmem:[%s3 + $0x38] sm:$0xff]
        %v2245 = vld [vmem:[%s3 + $0x40] sm:$0xff]
        %v2246 = vld [vmem:[%s3 + $0x48] sm:$0xff]
        %v2247 = vld [vmem:[%s3 + $0x50] sm:$0xff]
        %v2248 = vld [vmem:[%s3 + $0x58] sm:$0xff]
        %v2249 = vld [vmem:[%s3 + $0x60] sm:$0xff]
        %v2250 = vld [vmem:[%s3 + $0x68] sm:$0xff]
        %v2251 = vld [vmem:[%s3 + $0x70] sm:$0xff]
        %v2252 = vld [vmem:[%s3 + $0x78] sm:$0xff]
        %v2253 = vld [vmem:[%s3 + $0x80] sm:$0xff]
        %v2254 = vld [vmem:[%s3 + $0x88] sm:$0xff]
        %v2255 = vld [vmem:[%s4] sm:$0x1]
        %2256 = vst.msk [vmem:[%s492 + $0x1] sm:$0xff] %vm417, %v2205
        %2257 = vst.msk [vmem:[%s492 + $0x9] sm:$0xff] %vm417, %v2206
        %2258 = vst.msk [vmem:[%s492 + $0x19] sm:$0xff] %vm417, %v2207
        %2259 = vst.msk [vmem:[%s492 + $0x21] sm:$0xff] %vm417, %v2208
        %2260 = vst.msk [vmem:[%s492 + $0x31] sm:$0xff] %vm417, %v2209
        %2261 = vst.msk [vmem:[%s492 + $0x39] sm:$0xff] %vm417, %v2210
        %2262 = vst.msk [vmem:[%s492 + $0x49] sm:$0xff] %vm417, %v2211
        %2263 = vst.msk [vmem:[%s492 + $0x51] sm:$0xff] %vm417, %v2212
        %2264 = vst.msk [vmem:[%s492 + $0x61] sm:$0xff] %vm417, %v2213
        %2265 = vst.msk [vmem:[%s492 + $0x69] sm:$0xff] %vm417, %v2214
        %2266 = vst.msk [vmem:[%s492 + $0x79] sm:$0xff] %vm417, %v2215
        %2267 = vst.msk [vmem:[%s492 + $0x81] sm:$0xff] %vm417, %v2216
        %2268 = vst.msk [vmem:[%s492 + $0x91] sm:$0xff] %vm417, %v2217
        %2269 = vst.msk [vmem:[%s492 + $0x99] sm:$0xff] %vm417, %v2218
        %2270 = vst.msk [vmem:[%s492 + $0xa9] sm:$0xff] %vm417, %v2219
        %2271 = vst.msk [vmem:[%s492 + $0xb1] sm:$0xff] %vm417, %v2220
        %2272 = vst.msk [vmem:[%s492 + $0xc1] sm:$0xff] %vm417, %v2221
        %2273 = vst.msk [vmem:[%s492 + $0xc9] sm:$0xff] %vm417, %v2222
        %2274 = vst.msk [vmem:[%s492 + $0xd9] sm:$0xff] %vm417, %v2223
        %2275 = vst.msk [vmem:[%s492 + $0xe1] sm:$0xff] %vm417, %v2224
        %2276 = vst.msk [vmem:[%s492 + $0xf1] sm:$0xff] %vm417, %v2225
        %2277 = vst.msk [vmem:[%s492 + $0xf9] sm:$0xff] %vm417, %v2226
        %2278 = vst.msk [vmem:[%s492 + $0x109] sm:$0xff] %vm417, %v2227
        %2279 = vst.msk [vmem:[%s492 + $0x111] sm:$0xff] %vm417, %v2228
        %2280 = vst.msk [vmem:[%s492 + $0x121] sm:$0xff] %vm417, %v2229
        %2281 = vst.msk [vmem:[%s492 + $0x129] sm:$0xff] %vm417, %v2230
        %2282 = vst.msk [vmem:[%s492 + $0x139] sm:$0xff] %vm417, %v2231
        %2283 = vst.msk [vmem:[%s492 + $0x141] sm:$0xff] %vm417, %v2232
        %2284 = vst.msk [vmem:[%s492 + $0x151] sm:$0xff] %vm417, %v2233
        %2285 = vst.msk [vmem:[%s492 + $0x159] sm:$0xff] %vm417, %v2234
        %2286 = vst.msk [vmem:[%s492 + $0x169] sm:$0xff] %vm417, %v2235
        %2287 = vst.msk [vmem:[%s492 + $0x171] sm:$0xff] %vm417, %v2236
        %v2288 = vld [vmem:[#allocation2] sm:$0xff]
        %v2289 = vld [vmem:[#allocation2 + $0x8] sm:$0xff]
        %v2290 = vld [vmem:[#allocation2 + $0x10] sm:$0x3]
        %v2291 = vld [vmem:[#allocation2 + $0x18] sm:$0xff]
        %v2292 = vld [vmem:[#allocation2 + $0x20] sm:$0xff]
        %v2293 = vld [vmem:[#allocation2 + $0x28] sm:$0x3]
        %v2294 = vld [vmem:[#allocation2 + $0x30] sm:$0xff]
        %v2295 = vld [vmem:[#allocation2 + $0x38] sm:$0xff]
        %v2296 = vld [vmem:[#allocation2 + $0x40] sm:$0x3]
        %v2297 = vld [vmem:[#allocation2 + $0x48] sm:$0xff]
        %v2298 = vld [vmem:[#allocation2 + $0x50] sm:$0xff]
        %v2299 = vld [vmem:[#allocation2 + $0x58] sm:$0x3]
        %v2300 = vld [vmem:[#allocation2 + $0x60] sm:$0xff]
        %v2301 = vld [vmem:[#allocation2 + $0x68] sm:$0xff]
        %v2302 = vld [vmem:[#allocation2 + $0x70] sm:$0x3]
        %v2303 = vld [vmem:[#allocation2 + $0x78] sm:$0xff]
        %v2304 = vld [vmem:[#allocation2 + $0x80] sm:$0xff]
        %v2305 = vld [vmem:[#allocation2 + $0x88] sm:$0x3]
        %v2306 = vld [vmem:[#allocation2 + $0x90] sm:$0xff]
        %v2307 = vld [vmem:[#allocation2 + $0x98] sm:$0xff]
        %v2308 = vld [vmem:[#allocation2 + $0xa0] sm:$0x3]
        %v2309 = vld [vmem:[#allocation2 + $0xa8] sm:$0xff]
        %v2310 = vld [vmem:[#allocation2 + $0xb0] sm:$0xff]
        %v2311 = vld [vmem:[#allocation2 + $0xb8] sm:$0x3]
        %v2312 = vld [vmem:[#allocation2 + $0xc0] sm:$0xff]
        %v2313 = vld [vmem:[#allocation2 + $0xc8] sm:$0xff]
        %v2314 = vld [vmem:[#allocation2 + $0xd0] sm:$0x3]
        %v2315 = vld [vmem:[#allocation2 + $0xd8] sm:$0xff]
        %v2316 = vld [vmem:[#allocation2 + $0xe0] sm:$0xff]
        %v2317 = vld [vmem:[#allocation2 + $0xe8] sm:$0x3]
        %v2318 = vld [vmem:[#allocation2 + $0xf0] sm:$0xff]
        %v2319 = vld [vmem:[#allocation2 + $0xf8] sm:$0xff]
        %v2320 = vld [vmem:[#allocation2 + $0x100] sm:$0x3]
        %v2321 = vld [vmem:[#allocation2 + $0x108] sm:$0xff]
        %v2322 = vld [vmem:[#allocation2 + $0x110] sm:$0xff]
        %v2323 = vld [vmem:[#allocation2 + $0x118] sm:$0x3]
        %v2324 = vld [vmem:[#allocation2 + $0x120] sm:$0xff]
        %v2325 = vld [vmem:[#allocation2 + $0x128] sm:$0xff]
        %v2326 = vld [vmem:[#allocation2 + $0x130] sm:$0x3]
        %v2327 = vld [vmem:[#allocation2 + $0x138] sm:$0xff]
        %v2328 = vld [vmem:[#allocation2 + $0x140] sm:$0xff]
        %v2329 = vld [vmem:[#allocation2 + $0x148] sm:$0x3]
        %v2330 = vld [vmem:[#allocation2 + $0x150] sm:$0xff]
        %v2331 = vld [vmem:[#allocation2 + $0x158] sm:$0xff]
        %v2332 = vld [vmem:[#allocation2 + $0x160] sm:$0x3]
        %v2333 = vld [vmem:[#allocation2 + $0x168] sm:$0xff]
        %v2334 = vld [vmem:[#allocation2 + $0x170] sm:$0xff]
        %v2335 = vld [vmem:[#allocation2 + $0x178] sm:$0x3]
        %v2336 = vld [vmem:[#allocation2 + $0x180] sm:$0xff]
        %v2337 = vld [vmem:[#allocation2 + $0x188] sm:$0xff]
        %v2338 = vld [vmem:[#allocation2 + $0x190] sm:$0x3]
        %v2339 = vld [vmem:[#allocation2 + $0x198] sm:$0xff]
        %v2340 = vld [vmem:[#allocation2 + $0x1a0] sm:$0xff]
        %v2341 = vld [vmem:[#allocation2 + $0x1a8] sm:$0x3]
        %2342 = vst.msk [vmem:[#allocation3] sm:$0xff] %vm417, %v2288
        %2343 = vst.msk [vmem:[#allocation3 + $0x10] sm:$0xff] %vm417, %v2289
        %2344 = vst.msk [vmem:[#allocation3 + $0x20] sm:$0xff] %vm417, %v2291
        %2345 = vst.msk [vmem:[#allocation3 + $0x30] sm:$0xff] %vm417, %v2292
        %2346 = vst.msk [vmem:[#allocation3 + $0x40] sm:$0xff] %vm417, %v2294
        %2347 = vst.msk [vmem:[#allocation3 + $0x50] sm:$0xff] %vm417, %v2295
        %2348 = vst.msk [vmem:[#allocation3 + $0x60] sm:$0xff] %vm417, %v2297
        %2349 = vst.msk [vmem:[#allocation3 + $0x70] sm:$0xff] %vm417, %v2298
        %2350 = vst.msk [vmem:[#allocation3 + $0x80] sm:$0xff] %vm417, %v2300
        %2351 = vst.msk [vmem:[#allocation3 + $0x90] sm:$0xff] %vm417, %v2301
        %2352 = vst.msk [vmem:[#allocation3 + $0xa0] sm:$0xff] %vm417, %v2303
        %2353 = vst.msk [vmem:[#allocation3 + $0xb0] sm:$0xff] %vm417, %v2304
        %2354 = vst.msk [vmem:[#allocation3 + $0xc0] sm:$0xff] %vm417, %v2306
        %2355 = vst.msk [vmem:[#allocation3 + $0xd0] sm:$0xff] %vm417, %v2307
        %2356 = vst.msk [vmem:[#allocation3 + $0xe0] sm:$0xff] %vm417, %v2309
        %2357 = vst.msk [vmem:[#allocation3 + $0xf0] sm:$0xff] %vm417, %v2310
        %2358 = vst.msk [vmem:[#allocation3 + $0x100] sm:$0xff] %vm417, %v2312
        %2359 = vst.msk [vmem:[#allocation3 + $0x110] sm:$0xff] %vm417, %v2313
        %2360 = vst.msk [vmem:[#allocation3 + $0x120] sm:$0xff] %vm417, %v2315
        %2361 = vst.msk [vmem:[#allocation3 + $0x130] sm:$0xff] %vm417, %v2316
        %2362 = vst.msk [vmem:[#allocation3 + $0x140] sm:$0xff] %vm417, %v2318
        %2363 = vst.msk [vmem:[#allocation3 + $0x150] sm:$0xff] %vm417, %v2319
        %2364 = vst.msk [vmem:[#allocation3 + $0x160] sm:$0xff] %vm417, %v2321
        %2365 = vst.msk [vmem:[#allocation3 + $0x170] sm:$0xff] %vm417, %v2322
        %2366 = vst.msk [vmem:[#allocation3 + $0x180] sm:$0xff] %vm417, %v2324
        %2367 = vst.msk [vmem:[#allocation3 + $0x190] sm:$0xff] %vm417, %v2325
        %2368 = vst.msk [vmem:[#allocation3 + $0x1a0] sm:$0xff] %vm417, %v2327
        %2369 = vst.msk [vmem:[#allocation3 + $0x1b0] sm:$0xff] %vm417, %v2328
        %2370 = vst.msk [vmem:[#allocation3 + $0x1c0] sm:$0xff] %vm417, %v2330
        %2371 = vst.msk [vmem:[#allocation3 + $0x1d0] sm:$0xff] %vm417, %v2331
        %2372 = vst.msk [vmem:[#allocation3 + $0x1e0] sm:$0xff] %vm417, %v2333
        %2373 = vst.msk [vmem:[#allocation3 + $0x1f0] sm:$0xff] %vm417, %v2334
        %v2422 = vrot.slane %v2288, 1
        %v2423 = vrot.slane %v2289, 1
        %v2424 = vsel %vm659, %v2422, %v2423
        %v2425 = vrot.slane %v2290, 1
        %v2426 = vsel %vm659, %v2423, %v2425
        %v2427 = vrot.slane %v2291, 1
        %v2428 = vrot.slane %v2292, 1
        %v2429 = vsel %vm659, %v2427, %v2428
        %v2430 = vrot.slane %v2293, 1
        %v2431 = vsel %vm659, %v2428, %v2430
        %v2432 = vrot.slane %v2294, 1
        %v2433 = vrot.slane %v2295, 1
        %v2434 = vsel %vm659, %v2432, %v2433
        %v2435 = vrot.slane %v2296, 1
        %v2436 = vsel %vm659, %v2433, %v2435
        %v2437 = vrot.slane %v2297, 1
        %v2438 = vrot.slane %v2298, 1
        %v2439 = vsel %vm659, %v2437, %v2438
        %v2440 = vrot.slane %v2299, 1
        %v2441 = vsel %vm659, %v2438, %v2440
        %v2442 = vrot.slane %v2300, 1
        %v2443 = vrot.slane %v2301, 1
        %v2444 = vsel %vm659, %v2442, %v2443
        %v2445 = vrot.slane %v2302, 1
        %v2446 = vsel %vm659, %v2443, %v2445
        %v2447 = vrot.slane %v2303, 1
        %v2448 = vrot.slane %v2304, 1
        %v2449 = vsel %vm659, %v2447, %v2448
        %v2450 = vrot.slane %v2305, 1
        %v2451 = vsel %vm659, %v2448, %v2450
        %v2452 = vrot.slane %v2306, 1
        %v2453 = vrot.slane %v2307, 1
        %v2454 = vsel %vm659, %v2452, %v2453
        %v2455 = vrot.slane %v2308, 1
        %v2456 = vsel %vm659, %v2453, %v2455
        %v2457 = vrot.slane %v2309, 1
        %v2458 = vrot.slane %v2310, 1
        %v2459 = vsel %vm659, %v2457, %v2458
        %v2460 = vrot.slane %v2311, 1
        %v2461 = vsel %vm659, %v2458, %v2460
        %v2462 = vrot.slane %v2312, 1
        %v2463 = vrot.slane %v2313, 1
        %v2464 = vsel %vm659, %v2462, %v2463
        %v2465 = vrot.slane %v2314, 1
        %v2466 = vsel %vm659, %v2463, %v2465
        %v2467 = vrot.slane %v2315, 1
        %v2468 = vrot.slane %v2316, 1
        %v2469 = vsel %vm659, %v2467, %v2468
        %v2470 = vrot.slane %v2317, 1
        %v2471 = vsel %vm659, %v2468, %v2470
        %v2472 = vrot.slane %v2318, 1
        %v2473 = vrot.slane %v2319, 1
        %v2474 = vsel %vm659, %v2472, %v2473
        %v2475 = vrot.slane %v2320, 1
        %v2476 = vsel %vm659, %v2473, %v2475
        %v2477 = vrot.slane %v2321, 1
        %v2478 = vrot.slane %v2322, 1
        %v2479 = vsel %vm659, %v2477, %v2478
        %v2480 = vrot.slane %v2323, 1
        %v2481 = vsel %vm659, %v2478, %v2480
        %v2482 = vrot.slane %v2324, 1
        %v2483 = vrot.slane %v2325, 1
        %v2484 = vsel %vm659, %v2482, %v2483
        %v2485 = vrot.slane %v2326, 1
        %v2486 = vsel %vm659, %v2483, %v2485
        %v2487 = vrot.slane %v2327, 1
        %v2488 = vrot.slane %v2328, 1
        %v2489 = vsel %vm659, %v2487, %v2488
        %v2490 = vrot.slane %v2329, 1
        %v2491 = vsel %vm659, %v2488, %v2490
        %v2492 = vrot.slane %v2330, 1
        %v2493 = vrot.slane %v2331, 1
        %v2494 = vsel %vm659, %v2492, %v2493
        %v2495 = vrot.slane %v2332, 1
        %v2496 = vsel %vm659, %v2493, %v2495
        %v2497 = vrot.slane %v2333, 1
        %v2498 = vrot.slane %v2334, 1
        %v2499 = vsel %vm659, %v2497, %v2498
        %v2500 = vrot.slane %v2335, 1
        %v2501 = vsel %vm659, %v2498, %v2500
        %2502 = vrot.lane.b32.xlu0 %v2424, 16
        %v2503 = vpop.permute.xlu0 %2502
        %2504 = vrot.lane.b32.xlu0 %v2426, 16
        %v2505 = vpop.permute.xlu0 %2504
        %2506 = vrot.lane.b32.xlu0 %v2429, 16
        %v2507 = vpop.permute.xlu0 %2506
        %2508 = vrot.lane.b32.xlu0 %v2431, 16
        %v2509 = vpop.permute.xlu0 %2508
        %2510 = vrot.lane.b32.xlu0 %v2434, 16
        %v2511 = vpop.permute.xlu0 %2510
        %2512 = vrot.lane.b32.xlu0 %v2436, 16
        %v2513 = vpop.permute.xlu0 %2512
        %2514 = vrot.lane.b32.xlu0 %v2439, 16
        %v2515 = vpop.permute.xlu0 %2514
        %2516 = vrot.lane.b32.xlu0 %v2441, 16
        %v2517 = vpop.permute.xlu0 %2516
        %2518 = vrot.lane.b32.xlu0 %v2444, 16
        %v2519 = vpop.permute.xlu0 %2518
        %2520 = vrot.lane.b32.xlu0 %v2446, 16
        %v2521 = vpop.permute.xlu0 %2520
        %2522 = vrot.lane.b32.xlu0 %v2449, 16
        %v2523 = vpop.permute.xlu0 %2522
        %2524 = vrot.lane.b32.xlu0 %v2451, 16
        %v2525 = vpop.permute.xlu0 %2524
        %2526 = vrot.lane.b32.xlu0 %v2454, 16
        %v2527 = vpop.permute.xlu0 %2526
        %2528 = vrot.lane.b32.xlu0 %v2456, 16
        %v2529 = vpop.permute.xlu0 %2528
        %2530 = vrot.lane.b32.xlu0 %v2459, 16
        %v2531 = vpop.permute.xlu0 %2530
        %2532 = vrot.lane.b32.xlu0 %v2461, 16
        %v2533 = vpop.permute.xlu0 %2532
        %2534 = vrot.lane.b32.xlu0 %v2464, 16
        %v2535 = vpop.permute.xlu0 %2534
        %2536 = vrot.lane.b32.xlu0 %v2466, 16
        %v2537 = vpop.permute.xlu0 %2536
        %2538 = vrot.lane.b32.xlu0 %v2469, 16
        %v2539 = vpop.permute.xlu0 %2538
        %2540 = vrot.lane.b32.xlu0 %v2471, 16
        %v2541 = vpop.permute.xlu0 %2540
        %2542 = vrot.lane.b32.xlu0 %v2474, 16
        %v2543 = vpop.permute.xlu0 %2542
        %2544 = vrot.lane.b32.xlu0 %v2476, 16
        %v2545 = vpop.permute.xlu0 %2544
        %2546 = vrot.lane.b32.xlu0 %v2479, 16
        %v2547 = vpop.permute.xlu0 %2546
        %2548 = vrot.lane.b32.xlu0 %v2481, 16
        %v2549 = vpop.permute.xlu0 %2548
        %2550 = vrot.lane.b32.xlu0 %v2484, 16
        %v2551 = vpop.permute.xlu0 %2550
        %2552 = vrot.lane.b32.xlu0 %v2486, 16
        %v2553 = vpop.permute.xlu0 %2552
        %2554 = vrot.lane.b32.xlu0 %v2489, 16
        %v2555 = vpop.permute.xlu0 %2554
        %2556 = vrot.lane.b32.xlu0 %v2491, 16
        %v2557 = vpop.permute.xlu0 %2556
        %2558 = vrot.lane.b32.xlu0 %v2494, 16
        %v2559 = vpop.permute.xlu0 %2558
        %2560 = vrot.lane.b32.xlu0 %v2496, 16
        %v2561 = vpop.permute.xlu0 %2560
        %2562 = vrot.lane.b32.xlu0 %v2499, 16
        %v2563 = vpop.permute.xlu0 %2562
        %2564 = vrot.lane.b32.xlu0 %v2501, 16
        %v2565 = vpop.permute.xlu0 %2564
        %2598 = vst.msk [vmem:[#allocation3] sm:$0xff] %vm836, %v2503
        %2599 = vst.msk [vmem:[#allocation3 + $0x10] sm:$0xff] %vm836, %v2505
        %2600 = vst.msk [vmem:[#allocation3 + $0x20] sm:$0xff] %vm836, %v2507
        %2601 = vst.msk [vmem:[#allocation3 + $0x30] sm:$0xff] %vm836, %v2509
        %2602 = vst.msk [vmem:[#allocation3 + $0x40] sm:$0xff] %vm836, %v2511
        %2603 = vst.msk [vmem:[#allocation3 + $0x50] sm:$0xff] %vm836, %v2513
        %2604 = vst.msk [vmem:[#allocation3 + $0x60] sm:$0xff] %vm836, %v2515
        %2605 = vst.msk [vmem:[#allocation3 + $0x70] sm:$0xff] %vm836, %v2517
        %2606 = vst.msk [vmem:[#allocation3 + $0x80] sm:$0xff] %vm836, %v2519
        %2607 = vst.msk [vmem:[#allocation3 + $0x90] sm:$0xff] %vm836, %v2521
        %2608 = vst.msk [vmem:[#allocation3 + $0xa0] sm:$0xff] %vm836, %v2523
        %2609 = vst.msk [vmem:[#allocation3 + $0xb0] sm:$0xff] %vm836, %v2525
        %2610 = vst.msk [vmem:[#allocation3 + $0xc0] sm:$0xff] %vm836, %v2527
        %2611 = vst.msk [vmem:[#allocation3 + $0xd0] sm:$0xff] %vm836, %v2529
        %2612 = vst.msk [vmem:[#allocation3 + $0xe0] sm:$0xff] %vm836, %v2531
        %2613 = vst.msk [vmem:[#allocation3 + $0xf0] sm:$0xff] %vm836, %v2533
        %2614 = vst.msk [vmem:[#allocation3 + $0x100] sm:$0xff] %vm836, %v2535
        %2615 = vst.msk [vmem:[#allocation3 + $0x110] sm:$0xff] %vm836, %v2537
        %2616 = vst.msk [vmem:[#allocation3 + $0x120] sm:$0xff] %vm836, %v2539
        %2617 = vst.msk [vmem:[#allocation3 + $0x130] sm:$0xff] %vm836, %v2541
        %2618 = vst.msk [vmem:[#allocation3 + $0x140] sm:$0xff] %vm836, %v2543
        %2619 = vst.msk [vmem:[#allocation3 + $0x150] sm:$0xff] %vm836, %v2545
        %2620 = vst.msk [vmem:[#allocation3 + $0x160] sm:$0xff] %vm836, %v2547
        %2621 = vst.msk [vmem:[#allocation3 + $0x170] sm:$0xff] %vm836, %v2549
        %2622 = vst.msk [vmem:[#allocation3 + $0x180] sm:$0xff] %vm836, %v2551
        %2623 = vst.msk [vmem:[#allocation3 + $0x190] sm:$0xff] %vm836, %v2553
        %2624 = vst.msk [vmem:[#allocation3 + $0x1a0] sm:$0xff] %vm836, %v2555
        %2625 = vst.msk [vmem:[#allocation3 + $0x1b0] sm:$0xff] %vm836, %v2557
        %2626 = vst.msk [vmem:[#allocation3 + $0x1c0] sm:$0xff] %vm836, %v2559
        %2627 = vst.msk [vmem:[#allocation3 + $0x1d0] sm:$0xff] %vm836, %v2561
        %2628 = vst.msk [vmem:[#allocation3 + $0x1e0] sm:$0xff] %vm836, %v2563
        %2629 = vst.msk [vmem:[#allocation3 + $0x1f0] sm:$0xff] %vm836, %v2565
        %v2630 = vrot.slane %v2288, 2
        %v2631 = vrot.slane %v2289, 2
        %v2632 = vsel %vm869, %v2630, %v2631
        %v2633 = vrot.slane %v2290, 2
        %v2634 = vsel %vm869, %v2631, %v2633
        %v2635 = vrot.slane %v2291, 2
        %v2636 = vrot.slane %v2292, 2
        %v2637 = vsel %vm869, %v2635, %v2636
        %v2638 = vrot.slane %v2293, 2
        %v2639 = vsel %vm869, %v2636, %v2638
        %v2640 = vrot.slane %v2294, 2
        %v2641 = vrot.slane %v2295, 2
        %v2642 = vsel %vm869, %v2640, %v2641
        %v2643 = vrot.slane %v2296, 2
        %v2644 = vsel %vm869, %v2641, %v2643
        %v2645 = vrot.slane %v2297, 2
        %v2646 = vrot.slane %v2298, 2
        %v2647 = vsel %vm869, %v2645, %v2646
        %v2648 = vrot.slane %v2299, 2
        %v2649 = vsel %vm869, %v2646, %v2648
        %v2650 = vrot.slane %v2300, 2
        %v2651 = vrot.slane %v2301, 2
        %v2652 = vsel %vm869, %v2650, %v2651
        %v2653 = vrot.slane %v2302, 2
        %v2654 = vsel %vm869, %v2651, %v2653
        %v2655 = vrot.slane %v2303, 2
        %v2656 = vrot.slane %v2304, 2
        %v2657 = vsel %vm869, %v2655, %v2656
        %v2658 = vrot.slane %v2305, 2
        %v2659 = vsel %vm869, %v2656, %v2658
        %v2660 = vrot.slane %v2306, 2
        %v2661 = vrot.slane %v2307, 2
        %v2662 = vsel %vm869, %v2660, %v2661
        %v2663 = vrot.slane %v2308, 2
        %v2664 = vsel %vm869, %v2661, %v2663
        %v2665 = vrot.slane %v2309, 2
        %v2666 = vrot.slane %v2310, 2
        %v2667 = vsel %vm869, %v2665, %v2666
        %v2668 = vrot.slane %v2311, 2
        %v2669 = vsel %vm869, %v2666, %v2668
        %v2670 = vrot.slane %v2312, 2
        %v2671 = vrot.slane %v2313, 2
        %v2672 = vsel %vm869, %v2670, %v2671
        %v2673 = vrot.slane %v2314, 2
        %v2674 = vsel %vm869, %v2671, %v2673
        %v2675 = vrot.slane %v2315, 2
        %v2676 = vrot.slane %v2316, 2
        %v2677 = vsel %vm869, %v2675, %v2676
        %v2678 = vrot.slane %v2317, 2
        %v2679 = vsel %vm869, %v2676, %v2678
        %v2680 = vrot.slane %v2318, 2
        %v2681 = vrot.slane %v2319, 2
        %v2682 = vsel %vm869, %v2680, %v2681
        %v2683 = vrot.slane %v2320, 2
        %v2684 = vsel %vm869, %v2681, %v2683
        %v2685 = vrot.slane %v2321, 2
        %v2686 = vrot.slane %v2322, 2
        %v2687 = vsel %vm869, %v2685, %v2686
        %v2688 = vrot.slane %v2323, 2
        %v2689 = vsel %vm869, %v2686, %v2688
        %v2690 = vrot.slane %v2324, 2
        %v2691 = vrot.slane %v2325, 2
        %v2692 = vsel %vm869, %v2690, %v2691
        %v2693 = vrot.slane %v2326, 2
        %v2694 = vsel %vm869, %v2691, %v2693
        %v2695 = vrot.slane %v2327, 2
        %v2696 = vrot.slane %v2328, 2
        %v2697 = vsel %vm869, %v2695, %v2696
        %v2698 = vrot.slane %v2329, 2
        %v2699 = vsel %vm869, %v2696, %v2698
        %v2700 = vrot.slane %v2330, 2
        %v2701 = vrot.slane %v2331, 2
        %v2702 = vsel %vm869, %v2700, %v2701
        %v2703 = vrot.slane %v2332, 2
        %v2704 = vsel %vm869, %v2701, %v2703
        %v2705 = vrot.slane %v2333, 2
        %v2706 = vrot.slane %v2334, 2
        %v2707 = vsel %vm869, %v2705, %v2706
        %v2708 = vrot.slane %v2335, 2
        %v2709 = vsel %vm869, %v2706, %v2708
        %2710 = vrot.lane.b32.xlu0 %v2632, 32
        %v2711 = vpop.permute.xlu0 %2710
        %2712 = vrot.lane.b32.xlu0 %v2634, 32
        %v2713 = vpop.permute.xlu0 %2712
        %2714 = vrot.lane.b32.xlu0 %v2637, 32
        %v2715 = vpop.permute.xlu0 %2714
        %2716 = vrot.lane.b32.xlu0 %v2639, 32
        %v2717 = vpop.permute.xlu0 %2716
        %2718 = vrot.lane.b32.xlu0 %v2642, 32
        %v2719 = vpop.permute.xlu0 %2718
        %2720 = vrot.lane.b32.xlu0 %v2644, 32
        %v2721 = vpop.permute.xlu0 %2720
        %2722 = vrot.lane.b32.xlu0 %v2647, 32
        %v2723 = vpop.permute.xlu0 %2722
        %2724 = vrot.lane.b32.xlu0 %v2649, 32
        %v2725 = vpop.permute.xlu0 %2724
        %2726 = vrot.lane.b32.xlu0 %v2652, 32
        %v2727 = vpop.permute.xlu0 %2726
        %2728 = vrot.lane.b32.xlu0 %v2654, 32
        %v2729 = vpop.permute.xlu0 %2728
        %2730 = vrot.lane.b32.xlu0 %v2657, 32
        %v2731 = vpop.permute.xlu0 %2730
        %2732 = vrot.lane.b32.xlu0 %v2659, 32
        %v2733 = vpop.permute.xlu0 %2732
        %2734 = vrot.lane.b32.xlu0 %v2662, 32
        %v2735 = vpop.permute.xlu0 %2734
        %2736 = vrot.lane.b32.xlu0 %v2664, 32
        %v2737 = vpop.permute.xlu0 %2736
        %2738 = vrot.lane.b32.xlu0 %v2667, 32
        %v2739 = vpop.permute.xlu0 %2738
        %2740 = vrot.lane.b32.xlu0 %v2669, 32
        %v2741 = vpop.permute.xlu0 %2740
        %2742 = vrot.lane.b32.xlu0 %v2672, 32
        %v2743 = vpop.permute.xlu0 %2742
        %2744 = vrot.lane.b32.xlu0 %v2674, 32
        %v2745 = vpop.permute.xlu0 %2744
        %2746 = vrot.lane.b32.xlu0 %v2677, 32
        %v2747 = vpop.permute.xlu0 %2746
        %2748 = vrot.lane.b32.xlu0 %v2679, 32
        %v2749 = vpop.permute.xlu0 %2748
        %2750 = vrot.lane.b32.xlu0 %v2682, 32
        %v2751 = vpop.permute.xlu0 %2750
        %2752 = vrot.lane.b32.xlu0 %v2684, 32
        %v2753 = vpop.permute.xlu0 %2752
        %2754 = vrot.lane.b32.xlu0 %v2687, 32
        %v2755 = vpop.permute.xlu0 %2754
        %2756 = vrot.lane.b32.xlu0 %v2689, 32
        %v2757 = vpop.permute.xlu0 %2756
        %2758 = vrot.lane.b32.xlu0 %v2692, 32
        %v2759 = vpop.permute.xlu0 %2758
        %2760 = vrot.lane.b32.xlu0 %v2694, 32
        %v2761 = vpop.permute.xlu0 %2760
        %2762 = vrot.lane.b32.xlu0 %v2697, 32
        %v2763 = vpop.permute.xlu0 %2762
        %2764 = vrot.lane.b32.xlu0 %v2699, 32
        %v2765 = vpop.permute.xlu0 %2764
        %2766 = vrot.lane.b32.xlu0 %v2702, 32
        %v2767 = vpop.permute.xlu0 %2766
        %2768 = vrot.lane.b32.xlu0 %v2704, 32
        %v2769 = vpop.permute.xlu0 %2768
        %2770 = vrot.lane.b32.xlu0 %v2707, 32
        %v2771 = vpop.permute.xlu0 %2770
        %2772 = vrot.lane.b32.xlu0 %v2709, 32
        %v2773 = vpop.permute.xlu0 %2772
        %2806 = vst.msk [vmem:[#allocation3] sm:$0xff] %vm1046, %v2711
        %2807 = vst.msk [vmem:[#allocation3 + $0x10] sm:$0xff] %vm1046, %v2713
        %2808 = vst.msk [vmem:[#allocation3 + $0x20] sm:$0xff] %vm1046, %v2715
        %2809 = vst.msk [vmem:[#allocation3 + $0x30] sm:$0xff] %vm1046, %v2717
        %2810 = vst.msk [vmem:[#allocation3 + $0x40] sm:$0xff] %vm1046, %v2719
        %2811 = vst.msk [vmem:[#allocation3 + $0x50] sm:$0xff] %vm1046, %v2721
        %2812 = vst.msk [vmem:[#allocation3 + $0x60] sm:$0xff] %vm1046, %v2723
        %2813 = vst.msk [vmem:[#allocation3 + $0x70] sm:$0xff] %vm1046, %v2725
        %2814 = vst.msk [vmem:[#allocation3 + $0x80] sm:$0xff] %vm1046, %v2727
        %2815 = vst.msk [vmem:[#allocation3 + $0x90] sm:$0xff] %vm1046, %v2729
        %2816 = vst.msk [vmem:[#allocation3 + $0xa0] sm:$0xff] %vm1046, %v2731
        %2817 = vst.msk [vmem:[#allocation3 + $0xb0] sm:$0xff] %vm1046, %v2733
        %2818 = vst.msk [vmem:[#allocation3 + $0xc0] sm:$0xff] %vm1046, %v2735
        %2819 = vst.msk [vmem:[#allocation3 + $0xd0] sm:$0xff] %vm1046, %v2737
        %2820 = vst.msk [vmem:[#allocation3 + $0xe0] sm:$0xff] %vm1046, %v2739
        %2821 = vst.msk [vmem:[#allocation3 + $0xf0] sm:$0xff] %vm1046, %v2741
        %2822 = vst.msk [vmem:[#allocation3 + $0x100] sm:$0xff] %vm1046, %v2743
        %2823 = vst.msk [vmem:[#allocation3 + $0x110] sm:$0xff] %vm1046, %v2745
        %2824 = vst.msk [vmem:[#allocation3 + $0x120] sm:$0xff] %vm1046, %v2747
        %2825 = vst.msk [vmem:[#allocation3 + $0x130] sm:$0xff] %vm1046, %v2749
        %2826 = vst.msk [vmem:[#allocation3 + $0x140] sm:$0xff] %vm1046, %v2751
        %2827 = vst.msk [vmem:[#allocation3 + $0x150] sm:$0xff] %vm1046, %v2753
        %2828 = vst.msk [vmem:[#allocation3 + $0x160] sm:$0xff] %vm1046, %v2755
        %2829 = vst.msk [vmem:[#allocation3 + $0x170] sm:$0xff] %vm1046, %v2757
        %2830 = vst.msk [vmem:[#allocation3 + $0x180] sm:$0xff] %vm1046, %v2759
        %2831 = vst.msk [vmem:[#allocation3 + $0x190] sm:$0xff] %vm1046, %v2761
        %2832 = vst.msk [vmem:[#allocation3 + $0x1a0] sm:$0xff] %vm1046, %v2763
        %2833 = vst.msk [vmem:[#allocation3 + $0x1b0] sm:$0xff] %vm1046, %v2765
        %2834 = vst.msk [vmem:[#allocation3 + $0x1c0] sm:$0xff] %vm1046, %v2767
        %2835 = vst.msk [vmem:[#allocation3 + $0x1d0] sm:$0xff] %vm1046, %v2769
        %2836 = vst.msk [vmem:[#allocation3 + $0x1e0] sm:$0xff] %vm1046, %v2771
        %2837 = vst.msk [vmem:[#allocation3 + $0x1f0] sm:$0xff] %vm1046, %v2773
        %2840 = vrot.lane.b32.xlu0 %v2291, 48
        %v2841 = vpop.permute.xlu0 %2840
        %2842 = vrot.lane.b32.xlu0 %v2292, 48
        %v2843 = vpop.permute.xlu0 %2842
        %2844 = vrot.lane.b32.xlu0 %v2294, 48
        %v2845 = vpop.permute.xlu0 %2844
        %2846 = vrot.lane.b32.xlu0 %v2295, 48
        %v2847 = vpop.permute.xlu0 %2846
        %2848 = vrot.lane.b32.xlu0 %v2297, 48
        %v2849 = vpop.permute.xlu0 %2848
        %2850 = vrot.lane.b32.xlu0 %v2298, 48
        %v2851 = vpop.permute.xlu0 %2850
        %2852 = vrot.lane.b32.xlu0 %v2300, 48
        %v2853 = vpop.permute.xlu0 %2852
        %2854 = vrot.lane.b32.xlu0 %v2301, 48
        %v2855 = vpop.permute.xlu0 %2854
        %2856 = vrot.lane.b32.xlu0 %v2303, 48
        %v2857 = vpop.permute.xlu0 %2856
        %2858 = vrot.lane.b32.xlu0 %v2304, 48
        %v2859 = vpop.permute.xlu0 %2858
        %2860 = vrot.lane.b32.xlu0 %v2306, 48
        %v2861 = vpop.permute.xlu0 %2860
        %2862 = vrot.lane.b32.xlu0 %v2307, 48
        %v2863 = vpop.permute.xlu0 %2862
        %2864 = vrot.lane.b32.xlu0 %v2309, 48
        %v2865 = vpop.permute.xlu0 %2864
        %2866 = vrot.lane.b32.xlu0 %v2310, 48
        %v2867 = vpop.permute.xlu0 %2866
        %2868 = vrot.lane.b32.xlu0 %v2312, 48
        %v2869 = vpop.permute.xlu0 %2868
        %2870 = vrot.lane.b32.xlu0 %v2313, 48
        %v2871 = vpop.permute.xlu0 %2870
        %2872 = vrot.lane.b32.xlu0 %v2315, 48
        %v2873 = vpop.permute.xlu0 %2872
        %2874 = vrot.lane.b32.xlu0 %v2316, 48
        %v2875 = vpop.permute.xlu0 %2874
        %2876 = vrot.lane.b32.xlu0 %v2318, 48
        %v2877 = vpop.permute.xlu0 %2876
        %2878 = vrot.lane.b32.xlu0 %v2319, 48
        %v2879 = vpop.permute.xlu0 %2878
        %2880 = vrot.lane.b32.xlu0 %v2321, 48
        %v2881 = vpop.permute.xlu0 %2880
        %2882 = vrot.lane.b32.xlu0 %v2322, 48
        %v2883 = vpop.permute.xlu0 %2882
        %2884 = vrot.lane.b32.xlu0 %v2324, 48
        %v2885 = vpop.permute.xlu0 %2884
        %2886 = vrot.lane.b32.xlu0 %v2325, 48
        %v2887 = vpop.permute.xlu0 %2886
        %2888 = vrot.lane.b32.xlu0 %v2327, 48
        %v2889 = vpop.permute.xlu0 %2888
        %2890 = vrot.lane.b32.xlu0 %v2328, 48
        %v2891 = vpop.permute.xlu0 %2890
        %2892 = vrot.lane.b32.xlu0 %v2330, 48
        %v2893 = vpop.permute.xlu0 %2892
        %2894 = vrot.lane.b32.xlu0 %v2331, 48
        %v2895 = vpop.permute.xlu0 %2894
        %2896 = vrot.lane.b32.xlu0 %v2333, 48
        %v2897 = vpop.permute.xlu0 %2896
        %2898 = vrot.lane.b32.xlu0 %v2334, 48
        %v2899 = vpop.permute.xlu0 %2898
        %2900 = vrot.lane.b32.xlu0 %v2336, 48
        %v2901 = vpop.permute.xlu0 %2900
        %2902 = vrot.lane.b32.xlu0 %v2337, 48
        %v2903 = vpop.permute.xlu0 %2902
        %2936 = vst.msk [vmem:[#allocation3] sm:$0xff] %vm1177, %v2841
        %2937 = vst.msk [vmem:[#allocation3 + $0x10] sm:$0xff] %vm1177, %v2843
        %2938 = vst.msk [vmem:[#allocation3 + $0x20] sm:$0xff] %vm1177, %v2845
        %2939 = vst.msk [vmem:[#allocation3 + $0x30] sm:$0xff] %vm1177, %v2847
        %2940 = vst.msk [vmem:[#allocation3 + $0x40] sm:$0xff] %vm1177, %v2849
        %2941 = vst.msk [vmem:[#allocation3 + $0x50] sm:$0xff] %vm1177, %v2851
        %2942 = vst.msk [vmem:[#allocation3 + $0x60] sm:$0xff] %vm1177, %v2853
        %2943 = vst.msk [vmem:[#allocation3 + $0x70] sm:$0xff] %vm1177, %v2855
        %2944 = vst.msk [vmem:[#allocation3 + $0x80] sm:$0xff] %vm1177, %v2857
        %2945 = vst.msk [vmem:[#allocation3 + $0x90] sm:$0xff] %vm1177, %v2859
        %2946 = vst.msk [vmem:[#allocation3 + $0xa0] sm:$0xff] %vm1177, %v2861
        %2947 = vst.msk [vmem:[#allocation3 + $0xb0] sm:$0xff] %vm1177, %v2863
        %2948 = vst.msk [vmem:[#allocation3 + $0xc0] sm:$0xff] %vm1177, %v2865
        %2949 = vst.msk [vmem:[#allocation3 + $0xd0] sm:$0xff] %vm1177, %v2867
        %2950 = vst.msk [vmem:[#allocation3 + $0xe0] sm:$0xff] %vm1177, %v2869
        %2951 = vst.msk [vmem:[#allocation3 + $0xf0] sm:$0xff] %vm1177, %v2871
        %2952 = vst.msk [vmem:[#allocation3 + $0x100] sm:$0xff] %vm1177, %v2873
        %2953 = vst.msk [vmem:[#allocation3 + $0x110] sm:$0xff] %vm1177, %v2875
        %2954 = vst.msk [vmem:[#allocation3 + $0x120] sm:$0xff] %vm1177, %v2877
        %2955 = vst.msk [vmem:[#allocation3 + $0x130] sm:$0xff] %vm1177, %v2879
        %2956 = vst.msk [vmem:[#allocation3 + $0x140] sm:$0xff] %vm1177, %v2881
        %2957 = vst.msk [vmem:[#allocation3 + $0x150] sm:$0xff] %vm1177, %v2883
        %2958 = vst.msk [vmem:[#allocation3 + $0x160] sm:$0xff] %vm1177, %v2885
        %2959 = vst.msk [vmem:[#allocation3 + $0x170] sm:$0xff] %vm1177, %v2887
        %2960 = vst.msk [vmem:[#allocation3 + $0x180] sm:$0xff] %vm1177, %v2889
        %2961 = vst.msk [vmem:[#allocation3 + $0x190] sm:$0xff] %vm1177, %v2891
        %2962 = vst.msk [vmem:[#allocation3 + $0x1a0] sm:$0xff] %vm1177, %v2893
        %2963 = vst.msk [vmem:[#allocation3 + $0x1b0] sm:$0xff] %vm1177, %v2895
        %2964 = vst.msk [vmem:[#allocation3 + $0x1c0] sm:$0xff] %vm1177, %v2897
        %2965 = vst.msk [vmem:[#allocation3 + $0x1d0] sm:$0xff] %vm1177, %v2899
        %2966 = vst.msk [vmem:[#allocation3 + $0x1e0] sm:$0xff] %vm1177, %v2901
        %2967 = vst.msk [vmem:[#allocation3 + $0x1f0] sm:$0xff] %vm1177, %v2903
        %v2969 = vrot.slane %v2336, 1
        %v2970 = vrot.slane %v2337, 1
        %v2971 = vsel %vm659, %v2969, %v2970
        %v2972 = vrot.slane %v2338, 1
        %v2973 = vsel %vm659, %v2970, %v2972
        %2974 = vrot.lane.b32.xlu0 %v2429, 64
        %v2975 = vpop.permute.xlu0 %2974
        %2976 = vrot.lane.b32.xlu0 %v2431, 64
        %v2977 = vpop.permute.xlu0 %2976
        %2978 = vrot.lane.b32.xlu0 %v2434, 64
        %v2979 = vpop.permute.xlu0 %2978
        %2980 = vrot.lane.b32.xlu0 %v2436, 64
        %v2981 = vpop.permute.xlu0 %2980
        %2982 = vrot.lane.b32.xlu0 %v2439, 64
        %v2983 = vpop.permute.xlu0 %2982
        %2984 = vrot.lane.b32.xlu0 %v2441, 64
        %v2985 = vpop.permute.xlu0 %2984
        %2986 = vrot.lane.b32.xlu0 %v2444, 64
        %v2987 = vpop.permute.xlu0 %2986
        %2988 = vrot.lane.b32.xlu0 %v2446, 64
        %v2989 = vpop.permute.xlu0 %2988
        %2990 = vrot.lane.b32.xlu0 %v2449, 64
        %v2991 = vpop.permute.xlu0 %2990
        %2992 = vrot.lane.b32.xlu0 %v2451, 64
        %v2993 = vpop.permute.xlu0 %2992
        %2994 = vrot.lane.b32.xlu0 %v2454, 64
        %v2995 = vpop.permute.xlu0 %2994
        %2996 = vrot.lane.b32.xlu0 %v2456, 64
        %v2997 = vpop.permute.xlu0 %2996
        %2998 = vrot.lane.b32.xlu0 %v2459, 64
        %v2999 = vpop.permute.xlu0 %2998
        %3000 = vrot.lane.b32.xlu0 %v2461, 64
        %v3001 = vpop.permute.xlu0 %3000
        %3002 = vrot.lane.b32.xlu0 %v2464, 64
        %v3003 = vpop.permute.xlu0 %3002
        %3004 = vrot.lane.b32.xlu0 %v2466, 64
        %v3005 = vpop.permute.xlu0 %3004
        %3006 = vrot.lane.b32.xlu0 %v2469, 64
        %v3007 = vpop.permute.xlu0 %3006
        %3008 = vrot.lane.b32.xlu0 %v2471, 64
        %v3009 = vpop.permute.xlu0 %3008
        %3010 = vrot.lane.b32.xlu0 %v2474, 64
        %v3011 = vpop.permute.xlu0 %3010
        %3012 = vrot.lane.b32.xlu0 %v2476, 64
        %v3013 = vpop.permute.xlu0 %3012
        %3014 = vrot.lane.b32.xlu0 %v2479, 64
        %v3015 = vpop.permute.xlu0 %3014
        %3016 = vrot.lane.b32.xlu0 %v2481, 64
        %v3017 = vpop.permute.xlu0 %3016
        %3018 = vrot.lane.b32.xlu0 %v2484, 64
        %v3019 = vpop.permute.xlu0 %3018
        %3020 = vrot.lane.b32.xlu0 %v2486, 64
        %v3021 = vpop.permute.xlu0 %3020
        %3022 = vrot.lane.b32.xlu0 %v2489, 64
        %v3023 = vpop.permute.xlu0 %3022
        %3024 = vrot.lane.b32.xlu0 %v2491, 64
        %v3025 = vpop.permute.xlu0 %3024
        %3026 = vrot.lane.b32.xlu0 %v2494, 64
        %v3027 = vpop.permute.xlu0 %3026
        %3028 = vrot.lane.b32.xlu0 %v2496, 64
        %v3029 = vpop.permute.xlu0 %3028
        %3030 = vrot.lane.b32.xlu0 %v2499, 64
        %v3031 = vpop.permute.xlu0 %3030
        %3032 = vrot.lane.b32.xlu0 %v2501, 64
        %v3033 = vpop.permute.xlu0 %3032
        %3034 = vrot.lane.b32.xlu0 %v2971, 64
        %v3035 = vpop.permute.xlu0 %3034
        %3036 = vrot.lane.b32.xlu0 %v2973, 64
        %v3037 = vpop.permute.xlu0 %3036
        %3070 = vst.msk [vmem:[#allocation3] sm:$0xff] %vm1312, %v2975
        %3071 = vst.msk [vmem:[#allocation3 + $0x10] sm:$0xff] %vm1312, %v2977
        %3072 = vst.msk [vmem:[#allocation3 + $0x20] sm:$0xff] %vm1312, %v2979
        %3073 = vst.msk [vmem:[#allocation3 + $0x30] sm:$0xff] %vm1312, %v2981
        %3074 = vst.msk [vmem:[#allocation3 + $0x40] sm:$0xff] %vm1312, %v2983
        %3075 = vst.msk [vmem:[#allocation3 + $0x50] sm:$0xff] %vm1312, %v2985
        %3076 = vst.msk [vmem:[#allocation3 + $0x60] sm:$0xff] %vm1312, %v2987
        %3077 = vst.msk [vmem:[#allocation3 + $0x70] sm:$0xff] %vm1312, %v2989
        %3078 = vst.msk [vmem:[#allocation3 + $0x80] sm:$0xff] %vm1312, %v2991
        %3079 = vst.msk [vmem:[#allocation3 + $0x90] sm:$0xff] %vm1312, %v2993
        %3080 = vst.msk [vmem:[#allocation3 + $0xa0] sm:$0xff] %vm1312, %v2995
        %3081 = vst.msk [vmem:[#allocation3 + $0xb0] sm:$0xff] %vm1312, %v2997
        %3082 = vst.msk [vmem:[#allocation3 + $0xc0] sm:$0xff] %vm1312, %v2999
        %3083 = vst.msk [vmem:[#allocation3 + $0xd0] sm:$0xff] %vm1312, %v3001
        %3084 = vst.msk [vmem:[#allocation3 + $0xe0] sm:$0xff] %vm1312, %v3003
        %3085 = vst.msk [vmem:[#allocation3 + $0xf0] sm:$0xff] %vm1312, %v3005
        %3086 = vst.msk [vmem:[#allocation3 + $0x100] sm:$0xff] %vm1312, %v3007
        %3087 = vst.msk [vmem:[#allocation3 + $0x110] sm:$0xff] %vm1312, %v3009
        %3088 = vst.msk [vmem:[#allocation3 + $0x120] sm:$0xff] %vm1312, %v3011
        %3089 = vst.msk [vmem:[#allocation3 + $0x130] sm:$0xff] %vm1312, %v3013
        %3090 = vst.msk [vmem:[#allocation3 + $0x140] sm:$0xff] %vm1312, %v3015
        %3091 = vst.msk [vmem:[#allocation3 + $0x150] sm:$0xff] %vm1312, %v3017
        %3092 = vst.msk [vmem:[#allocation3 + $0x160] sm:$0xff] %vm1312, %v3019
        %3093 = vst.msk [vmem:[#allocation3 + $0x170] sm:$0xff] %vm1312, %v3021
        %3094 = vst.msk [vmem:[#allocation3 + $0x180] sm:$0xff] %vm1312, %v3023
        %3095 = vst.msk [vmem:[#allocation3 + $0x190] sm:$0xff] %vm1312, %v3025
        %3096 = vst.msk [vmem:[#allocation3 + $0x1a0] sm:$0xff] %vm1312, %v3027
        %3097 = vst.msk [vmem:[#allocation3 + $0x1b0] sm:$0xff] %vm1312, %v3029
        %3098 = vst.msk [vmem:[#allocation3 + $0x1c0] sm:$0xff] %vm1312, %v3031
        %3099 = vst.msk [vmem:[#allocation3 + $0x1d0] sm:$0xff] %vm1312, %v3033
        %3100 = vst.msk [vmem:[#allocation3 + $0x1e0] sm:$0xff] %vm1312, %v3035
        %3101 = vst.msk [vmem:[#allocation3 + $0x1f0] sm:$0xff] %vm1312, %v3037
        %v3102 = vrot.slane %v2336, 2
        %v3103 = vrot.slane %v2337, 2
        %v3104 = vsel %vm869, %v3102, %v3103
        %v3105 = vrot.slane %v2338, 2
        %v3106 = vsel %vm869, %v3103, %v3105
        %3107 = vrot.lane.b32.xlu0 %v2637, 80
        %v3108 = vpop.permute.xlu0 %3107
        %3109 = vrot.lane.b32.xlu0 %v2639, 80
        %v3110 = vpop.permute.xlu0 %3109
        %3111 = vrot.lane.b32.xlu0 %v2642, 80
        %v3112 = vpop.permute.xlu0 %3111
        %3113 = vrot.lane.b32.xlu0 %v2644, 80
        %v3114 = vpop.permute.xlu0 %3113
        %3115 = vrot.lane.b32.xlu0 %v2647, 80
        %v3116 = vpop.permute.xlu0 %3115
        %3117 = vrot.lane.b32.xlu0 %v2649, 80
        %v3118 = vpop.permute.xlu0 %3117
        %3119 = vrot.lane.b32.xlu0 %v2652, 80
        %v3120 = vpop.permute.xlu0 %3119
        %3121 = vrot.lane.b32.xlu0 %v2654, 80
        %v3122 = vpop.permute.xlu0 %3121
        %3123 = vrot.lane.b32.xlu0 %v2657, 80
        %v3124 = vpop.permute.xlu0 %3123
        %3125 = vrot.lane.b32.xlu0 %v2659, 80
        %v3126 = vpop.permute.xlu0 %3125
        %3127 = vrot.lane.b32.xlu0 %v2662, 80
        %v3128 = vpop.permute.xlu0 %3127
        %3129 = vrot.lane.b32.xlu0 %v2664, 80
        %v3130 = vpop.permute.xlu0 %3129
        %3131 = vrot.lane.b32.xlu0 %v2667, 80
        %v3132 = vpop.permute.xlu0 %3131
        %3133 = vrot.lane.b32.xlu0 %v2669, 80
        %v3134 = vpop.permute.xlu0 %3133
        %3135 = vrot.lane.b32.xlu0 %v2672, 80
        %v3136 = vpop.permute.xlu0 %3135
        %3137 = vrot.lane.b32.xlu0 %v2674, 80
        %v3138 = vpop.permute.xlu0 %3137
        %3139 = vrot.lane.b32.xlu0 %v2677, 80
        %v3140 = vpop.permute.xlu0 %3139
        %3141 = vrot.lane.b32.xlu0 %v2679, 80
        %v3142 = vpop.permute.xlu0 %3141
        %3143 = vrot.lane.b32.xlu0 %v2682, 80
        %v3144 = vpop.permute.xlu0 %3143
        %3145 = vrot.lane.b32.xlu0 %v2684, 80
        %v3146 = vpop.permute.xlu0 %3145
        %3147 = vrot.lane.b32.xlu0 %v2687, 80
        %v3148 = vpop.permute.xlu0 %3147
        %3149 = vrot.lane.b32.xlu0 %v2689, 80
        %v3150 = vpop.permute.xlu0 %3149
        %3151 = vrot.lane.b32.xlu0 %v2692, 80
        %v3152 = vpop.permute.xlu0 %3151
        %3153 = vrot.lane.b32.xlu0 %v2694, 80
        %v3154 = vpop.permute.xlu0 %3153
        %3155 = vrot.lane.b32.xlu0 %v2697, 80
        %v3156 = vpop.permute.xlu0 %3155
        %3157 = vrot.lane.b32.xlu0 %v2699, 80
        %v3158 = vpop.permute.xlu0 %3157
        %3159 = vrot.lane.b32.xlu0 %v2702, 80
        %v3160 = vpop.permute.xlu0 %3159
        %3161 = vrot.lane.b32.xlu0 %v2704, 80
        %v3162 = vpop.permute.xlu0 %3161
        %3163 = vrot.lane.b32.xlu0 %v2707, 80
        %v3164 = vpop.permute.xlu0 %3163
        %3165 = vrot.lane.b32.xlu0 %v2709, 80
        %v3166 = vpop.permute.xlu0 %3165
        %3167 = vrot.lane.b32.xlu0 %v3104, 80
        %v3168 = vpop.permute.xlu0 %3167
        %3169 = vrot.lane.b32.xlu0 %v3106, 80
        %v3170 = vpop.permute.xlu0 %3169
        %3203 = vst.msk [vmem:[#allocation3] sm:$0xff] %vm1446, %v3108
        %3204 = vst.msk [vmem:[#allocation3 + $0x10] sm:$0xff] %vm1446, %v3110
        %3205 = vst.msk [vmem:[#allocation3 + $0x20] sm:$0xff] %vm1446, %v3112
        %3206 = vst.msk [vmem:[#allocation3 + $0x30] sm:$0xff] %vm1446, %v3114
        %3207 = vst.msk [vmem:[#allocation3 + $0x40] sm:$0xff] %vm1446, %v3116
        %3208 = vst.msk [vmem:[#allocation3 + $0x50] sm:$0xff] %vm1446, %v3118
        %3209 = vst.msk [vmem:[#allocation3 + $0x60] sm:$0xff] %vm1446, %v3120
        %3210 = vst.msk [vmem:[#allocation3 + $0x70] sm:$0xff] %vm1446, %v3122
        %3211 = vst.msk [vmem:[#allocation3 + $0x80] sm:$0xff] %vm1446, %v3124
        %3212 = vst.msk [vmem:[#allocation3 + $0x90] sm:$0xff] %vm1446, %v3126
        %3213 = vst.msk [vmem:[#allocation3 + $0xa0] sm:$0xff] %vm1446, %v3128
        %3214 = vst.msk [vmem:[#allocation3 + $0xb0] sm:$0xff] %vm1446, %v3130
        %3215 = vst.msk [vmem:[#allocation3 + $0xc0] sm:$0xff] %vm1446, %v3132
        %3216 = vst.msk [vmem:[#allocation3 + $0xd0] sm:$0xff] %vm1446, %v3134
        %3217 = vst.msk [vmem:[#allocation3 + $0xe0] sm:$0xff] %vm1446, %v3136
        %3218 = vst.msk [vmem:[#allocation3 + $0xf0] sm:$0xff] %vm1446, %v3138
        %3219 = vst.msk [vmem:[#allocation3 + $0x100] sm:$0xff] %vm1446, %v3140
        %3220 = vst.msk [vmem:[#allocation3 + $0x110] sm:$0xff] %vm1446, %v3142
        %3221 = vst.msk [vmem:[#allocation3 + $0x120] sm:$0xff] %vm1446, %v3144
        %3222 = vst.msk [vmem:[#allocation3 + $0x130] sm:$0xff] %vm1446, %v3146
        %3223 = vst.msk [vmem:[#allocation3 + $0x140] sm:$0xff] %vm1446, %v3148
        %3224 = vst.msk [vmem:[#allocation3 + $0x150] sm:$0xff] %vm1446, %v3150
        %3225 = vst.msk [vmem:[#allocation3 + $0x160] sm:$0xff] %vm1446, %v3152
        %3226 = vst.msk [vmem:[#allocation3 + $0x170] sm:$0xff] %vm1446, %v3154
        %3227 = vst.msk [vmem:[#allocation3 + $0x180] sm:$0xff] %vm1446, %v3156
        %3228 = vst.msk [vmem:[#allocation3 + $0x190] sm:$0xff] %vm1446, %v3158
        %3229 = vst.msk [vmem:[#allocation3 + $0x1a0] sm:$0xff] %vm1446, %v3160
        %3230 = vst.msk [vmem:[#allocation3 + $0x1b0] sm:$0xff] %vm1446, %v3162
        %3231 = vst.msk [vmem:[#allocation3 + $0x1c0] sm:$0xff] %vm1446, %v3164
        %3232 = vst.msk [vmem:[#allocation3 + $0x1d0] sm:$0xff] %vm1446, %v3166
        %3233 = vst.msk [vmem:[#allocation3 + $0x1e0] sm:$0xff] %vm1446, %v3168
        %3234 = vst.msk [vmem:[#allocation3 + $0x1f0] sm:$0xff] %vm1446, %v3170
        %3237 = vrot.lane.b32.xlu0 %v2294, 96
        %v3238 = vpop.permute.xlu0 %3237
        %3239 = vrot.lane.b32.xlu0 %v2295, 96
        %v3240 = vpop.permute.xlu0 %3239
        %3241 = vrot.lane.b32.xlu0 %v2297, 96
        %v3242 = vpop.permute.xlu0 %3241
        %3243 = vrot.lane.b32.xlu0 %v2298, 96
        %v3244 = vpop.permute.xlu0 %3243
        %3245 = vrot.lane.b32.xlu0 %v2300, 96
        %v3246 = vpop.permute.xlu0 %3245
        %3247 = vrot.lane.b32.xlu0 %v2301, 96
        %v3248 = vpop.permute.xlu0 %3247
        %3249 = vrot.lane.b32.xlu0 %v2303, 96
        %v3250 = vpop.permute.xlu0 %3249
        %3251 = vrot.lane.b32.xlu0 %v2304, 96
        %v3252 = vpop.permute.xlu0 %3251
        %3253 = vrot.lane.b32.xlu0 %v2306, 96
        %v3254 = vpop.permute.xlu0 %3253
        %3255 = vrot.lane.b32.xlu0 %v2307, 96
        %v3256 = vpop.permute.xlu0 %3255
        %3257 = vrot.lane.b32.xlu0 %v2309, 96
        %v3258 = vpop.permute.xlu0 %3257
        %3259 = vrot.lane.b32.xlu0 %v2310, 96
        %v3260 = vpop.permute.xlu0 %3259
        %3261 = vrot.lane.b32.xlu0 %v2312, 96
        %v3262 = vpop.permute.xlu0 %3261
        %3263 = vrot.lane.b32.xlu0 %v2313, 96
        %v3264 = vpop.permute.xlu0 %3263
        %3265 = vrot.lane.b32.xlu0 %v2315, 96
        %v3266 = vpop.permute.xlu0 %3265
        %3267 = vrot.lane.b32.xlu0 %v2316, 96
        %v3268 = vpop.permute.xlu0 %3267
        %3269 = vrot.lane.b32.xlu0 %v2318, 96
        %v3270 = vpop.permute.xlu0 %3269
        %3271 = vrot.lane.b32.xlu0 %v2319, 96
        %v3272 = vpop.permute.xlu0 %3271
        %3273 = vrot.lane.b32.xlu0 %v2321, 96
        %v3274 = vpop.permute.xlu0 %3273
        %3275 = vrot.lane.b32.xlu0 %v2322, 96
        %v3276 = vpop.permute.xlu0 %3275
        %3277 = vrot.lane.b32.xlu0 %v2324, 96
        %v3278 = vpop.permute.xlu0 %3277
        %3279 = vrot.lane.b32.xlu0 %v2325, 96
        %v3280 = vpop.permute.xlu0 %3279
        %3281 = vrot.lane.b32.xlu0 %v2327, 96
        %v3282 = vpop.permute.xlu0 %3281
        %3283 = vrot.lane.b32.xlu0 %v2328, 96
        %v3284 = vpop.permute.xlu0 %3283
        %3285 = vrot.lane.b32.xlu0 %v2330, 96
        %v3286 = vpop.permute.xlu0 %3285
        %3287 = vrot.lane.b32.xlu0 %v2331, 96
        %v3288 = vpop.permute.xlu0 %3287
        %3289 = vrot.lane.b32.xlu0 %v2333, 96
        %v3290 = vpop.permute.xlu0 %3289
        %3291 = vrot.lane.b32.xlu0 %v2334, 96
        %v3292 = vpop.permute.xlu0 %3291
        %3293 = vrot.lane.b32.xlu0 %v2336, 96
        %v3294 = vpop.permute.xlu0 %3293
        %3295 = vrot.lane.b32.xlu0 %v2337, 96
        %v3296 = vpop.permute.xlu0 %3295
        %3297 = vrot.lane.b32.xlu0 %v2339, 96
        %v3298 = vpop.permute.xlu0 %3297
        %3299 = vrot.lane.b32.xlu0 %v2340, 96
        %v3300 = vpop.permute.xlu0 %3299
        %3333 = vst.msk [vmem:[#allocation3] sm:$0xff] %vm1577, %v3238
        %3334 = vst.msk [vmem:[#allocation3 + $0x10] sm:$0xff] %vm1577, %v3240
        %3335 = vst.msk [vmem:[#allocation3 + $0x20] sm:$0xff] %vm1577, %v3242
        %3336 = vst.msk [vmem:[#allocation3 + $0x30] sm:$0xff] %vm1577, %v3244
        %3337 = vst.msk [vmem:[#allocation3 + $0x40] sm:$0xff] %vm1577, %v3246
        %3338 = vst.msk [vmem:[#allocation3 + $0x50] sm:$0xff] %vm1577, %v3248
        %3339 = vst.msk [vmem:[#allocation3 + $0x60] sm:$0xff] %vm1577, %v3250
        %3340 = vst.msk [vmem:[#allocation3 + $0x70] sm:$0xff] %vm1577, %v3252
        %3341 = vst.msk [vmem:[#allocation3 + $0x80] sm:$0xff] %vm1577, %v3254
        %3342 = vst.msk [vmem:[#allocation3 + $0x90] sm:$0xff] %vm1577, %v3256
        %3343 = vst.msk [vmem:[#allocation3 + $0xa0] sm:$0xff] %vm1577, %v3258
        %3344 = vst.msk [vmem:[#allocation3 + $0xb0] sm:$0xff] %vm1577, %v3260
        %3345 = vst.msk [vmem:[#allocation3 + $0xc0] sm:$0xff] %vm1577, %v3262
        %3346 = vst.msk [vmem:[#allocation3 + $0xd0] sm:$0xff] %vm1577, %v3264
        %3347 = vst.msk [vmem:[#allocation3 + $0xe0] sm:$0xff] %vm1577, %v3266
        %3348 = vst.msk [vmem:[#allocation3 + $0xf0] sm:$0xff] %vm1577, %v3268
        %3349 = vst.msk [vmem:[#allocation3 + $0x100] sm:$0xff] %vm1577, %v3270
        %3350 = vst.msk [vmem:[#allocation3 + $0x110] sm:$0xff] %vm1577, %v3272
        %3351 = vst.msk [vmem:[#allocation3 + $0x120] sm:$0xff] %vm1577, %v3274
        %3352 = vst.msk [vmem:[#allocation3 + $0x130] sm:$0xff] %vm1577, %v3276
        %3353 = vst.msk [vmem:[#allocation3 + $0x140] sm:$0xff] %vm1577, %v3278
        %3354 = vst.msk [vmem:[#allocation3 + $0x150] sm:$0xff] %vm1577, %v3280
        %3355 = vst.msk [vmem:[#allocation3 + $0x160] sm:$0xff] %vm1577, %v3282
        %3356 = vst.msk [vmem:[#allocation3 + $0x170] sm:$0xff] %vm1577, %v3284
        %3357 = vst.msk [vmem:[#allocation3 + $0x180] sm:$0xff] %vm1577, %v3286
        %3358 = vst.msk [vmem:[#allocation3 + $0x190] sm:$0xff] %vm1577, %v3288
        %3359 = vst.msk [vmem:[#allocation3 + $0x1a0] sm:$0xff] %vm1577, %v3290
        %3360 = vst.msk [vmem:[#allocation3 + $0x1b0] sm:$0xff] %vm1577, %v3292
        %3361 = vst.msk [vmem:[#allocation3 + $0x1c0] sm:$0xff] %vm1577, %v3294
        %3362 = vst.msk [vmem:[#allocation3 + $0x1d0] sm:$0xff] %vm1577, %v3296
        %3363 = vst.msk [vmem:[#allocation3 + $0x1e0] sm:$0xff] %vm1577, %v3298
        %3364 = vst.msk [vmem:[#allocation3 + $0x1f0] sm:$0xff] %vm1577, %v3300
        %v3366 = vrot.slane %v2339, 1
        %v3367 = vrot.slane %v2340, 1
        %v3368 = vsel %vm659, %v3366, %v3367
        %v3369 = vrot.slane %v2341, 1
        %v3370 = vsel %vm659, %v3367, %v3369
        %3371 = vrot.lane.b32.xlu0 %v2434, 112
        %v3372 = vpop.permute.xlu0 %3371
        %3373 = vrot.lane.b32.xlu0 %v2436, 112
        %v3374 = vpop.permute.xlu0 %3373
        %3375 = vrot.lane.b32.xlu0 %v2439, 112
        %v3376 = vpop.permute.xlu0 %3375
        %3377 = vrot.lane.b32.xlu0 %v2441, 112
        %v3378 = vpop.permute.xlu0 %3377
        %3379 = vrot.lane.b32.xlu0 %v2444, 112
        %v3380 = vpop.permute.xlu0 %3379
        %3381 = vrot.lane.b32.xlu0 %v2446, 112
        %v3382 = vpop.permute.xlu0 %3381
        %3383 = vrot.lane.b32.xlu0 %v2449, 112
        %v3384 = vpop.permute.xlu0 %3383
        %3385 = vrot.lane.b32.xlu0 %v2451, 112
        %v3386 = vpop.permute.xlu0 %3385
        %3387 = vrot.lane.b32.xlu0 %v2454, 112
        %v3388 = vpop.permute.xlu0 %3387
        %3389 = vrot.lane.b32.xlu0 %v2456, 112
        %v3390 = vpop.permute.xlu0 %3389
        %3391 = vrot.lane.b32.xlu0 %v2459, 112
        %v3392 = vpop.permute.xlu0 %3391
        %3393 = vrot.lane.b32.xlu0 %v2461, 112
        %v3394 = vpop.permute.xlu0 %3393
        %3395 = vrot.lane.b32.xlu0 %v2464, 112
        %v3396 = vpop.permute.xlu0 %3395
        %3397 = vrot.lane.b32.xlu0 %v2466, 112
        %v3398 = vpop.permute.xlu0 %3397
        %3399 = vrot.lane.b32.xlu0 %v2469, 112
        %v3400 = vpop.permute.xlu0 %3399
        %3401 = vrot.lane.b32.xlu0 %v2471, 112
        %v3402 = vpop.permute.xlu0 %3401
        %3403 = vrot.lane.b32.xlu0 %v2474, 112
        %v3404 = vpop.permute.xlu0 %3403
        %3405 = vrot.lane.b32.xlu0 %v2476, 112
        %v3406 = vpop.permute.xlu0 %3405
        %3407 = vrot.lane.b32.xlu0 %v2479, 112
        %v3408 = vpop.permute.xlu0 %3407
        %3409 = vrot.lane.b32.xlu0 %v2481, 112
        %v3410 = vpop.permute.xlu0 %3409
        %3411 = vrot.lane.b32.xlu0 %v2484, 112
        %v3412 = vpop.permute.xlu0 %3411
        %3413 = vrot.lane.b32.xlu0 %v2486, 112
        %v3414 = vpop.permute.xlu0 %3413
        %3415 = vrot.lane.b32.xlu0 %v2489, 112
        %v3416 = vpop.permute.xlu0 %3415
        %3417 = vrot.lane.b32.xlu0 %v2491, 112
        %v3418 = vpop.permute.xlu0 %3417
        %3419 = vrot.lane.b32.xlu0 %v2494, 112
        %v3420 = vpop.permute.xlu0 %3419
        %3421 = vrot.lane.b32.xlu0 %v2496, 112
        %v3422 = vpop.permute.xlu0 %3421
        %3423 = vrot.lane.b32.xlu0 %v2499, 112
        %v3424 = vpop.permute.xlu0 %3423
        %3425 = vrot.lane.b32.xlu0 %v2501, 112
        %v3426 = vpop.permute.xlu0 %3425
        %3427 = vrot.lane.b32.xlu0 %v2971, 112
        %v3428 = vpop.permute.xlu0 %3427
        %3429 = vrot.lane.b32.xlu0 %v2973, 112
        %v3430 = vpop.permute.xlu0 %3429
        %3431 = vrot.lane.b32.xlu0 %v3368, 112
        %v3432 = vpop.permute.xlu0 %3431
        %3433 = vrot.lane.b32.xlu0 %v3370, 112
        %v3434 = vpop.permute.xlu0 %3433
        %3467 = vst.msk [vmem:[#allocation3] sm:$0xff] %vm1712, %v3372
        %3468 = vst.msk [vmem:[#allocation3 + $0x10] sm:$0xff] %vm1712, %v3374
        %3469 = vst.msk [vmem:[#allocation3 + $0x20] sm:$0xff] %vm1712, %v3376
        %3470 = vst.msk [vmem:[#allocation3 + $0x30] sm:$0xff] %vm1712, %v3378
        %3471 = vst.msk [vmem:[#allocation3 + $0x40] sm:$0xff] %vm1712, %v3380
        %3472 = vst.msk [vmem:[#allocation3 + $0x50] sm:$0xff] %vm1712, %v3382
        %3473 = vst.msk [vmem:[#allocation3 + $0x60] sm:$0xff] %vm1712, %v3384
        %3474 = vst.msk [vmem:[#allocation3 + $0x70] sm:$0xff] %vm1712, %v3386
        %3475 = vst.msk [vmem:[#allocation3 + $0x80] sm:$0xff] %vm1712, %v3388
        %3476 = vst.msk [vmem:[#allocation3 + $0x90] sm:$0xff] %vm1712, %v3390
        %3477 = vst.msk [vmem:[#allocation3 + $0xa0] sm:$0xff] %vm1712, %v3392
        %3478 = vst.msk [vmem:[#allocation3 + $0xb0] sm:$0xff] %vm1712, %v3394
        %3479 = vst.msk [vmem:[#allocation3 + $0xc0] sm:$0xff] %vm1712, %v3396
        %3480 = vst.msk [vmem:[#allocation3 + $0xd0] sm:$0xff] %vm1712, %v3398
        %3481 = vst.msk [vmem:[#allocation3 + $0xe0] sm:$0xff] %vm1712, %v3400
        %3482 = vst.msk [vmem:[#allocation3 + $0xf0] sm:$0xff] %vm1712, %v3402
        %3483 = vst.msk [vmem:[#allocation3 + $0x100] sm:$0xff] %vm1712, %v3404
        %3484 = vst.msk [vmem:[#allocation3 + $0x110] sm:$0xff] %vm1712, %v3406
        %3485 = vst.msk [vmem:[#allocation3 + $0x120] sm:$0xff] %vm1712, %v3408
        %3486 = vst.msk [vmem:[#allocation3 + $0x130] sm:$0xff] %vm1712, %v3410
        %3487 = vst.msk [vmem:[#allocation3 + $0x140] sm:$0xff] %vm1712, %v3412
        %3488 = vst.msk [vmem:[#allocation3 + $0x150] sm:$0xff] %vm1712, %v3414
        %3489 = vst.msk [vmem:[#allocation3 + $0x160] sm:$0xff] %vm1712, %v3416
        %3490 = vst.msk [vmem:[#allocation3 + $0x170] sm:$0xff] %vm1712, %v3418
        %3491 = vst.msk [vmem:[#allocation3 + $0x180] sm:$0xff] %vm1712, %v3420
        %3492 = vst.msk [vmem:[#allocation3 + $0x190] sm:$0xff] %vm1712, %v3422
        %3493 = vst.msk [vmem:[#allocation3 + $0x1a0] sm:$0xff] %vm1712, %v3424
        %3494 = vst.msk [vmem:[#allocation3 + $0x1b0] sm:$0xff] %vm1712, %v3426
        %3495 = vst.msk [vmem:[#allocation3 + $0x1c0] sm:$0xff] %vm1712, %v3428
        %3496 = vst.msk [vmem:[#allocation3 + $0x1d0] sm:$0xff] %vm1712, %v3430
        %3497 = vst.msk [vmem:[#allocation3 + $0x1e0] sm:$0xff] %vm1712, %v3432
        %3498 = vst.msk [vmem:[#allocation3 + $0x1f0] sm:$0xff] %vm1712, %v3434
        %v3499 = vrot.slane %v2339, 2
        %v3500 = vrot.slane %v2340, 2
        %v3501 = vsel %vm869, %v3499, %v3500
        %v3502 = vrot.slane %v2341, 2
        %v3503 = vsel %vm869, %v3500, %v3502
        %3536 = vst.msk [vmem:[#allocation3 + $0x8] sm:$0xff] %vm417, %v2642
        %3537 = vst.msk [vmem:[#allocation3 + $0x18] sm:$0xff] %vm417, %v2644
        %3538 = vst.msk [vmem:[#allocation3 + $0x28] sm:$0xff] %vm417, %v2647
        %3539 = vst.msk [vmem:[#allocation3 + $0x38] sm:$0xff] %vm417, %v2649
        %3540 = vst.msk [vmem:[#allocation3 + $0x48] sm:$0xff] %vm417, %v2652
        %3541 = vst.msk [vmem:[#allocation3 + $0x58] sm:$0xff] %vm417, %v2654
        %3542 = vst.msk [vmem:[#allocation3 + $0x68] sm:$0xff] %vm417, %v2657
        %3543 = vst.msk [vmem:[#allocation3 + $0x78] sm:$0xff] %vm417, %v2659
        %3544 = vst.msk [vmem:[#allocation3 + $0x88] sm:$0xff] %vm417, %v2662
        %3545 = vst.msk [vmem:[#allocation3 + $0x98] sm:$0xff] %vm417, %v2664
        %3546 = vst.msk [vmem:[#allocation3 + $0xa8] sm:$0xff] %vm417, %v2667
        %3547 = vst.msk [vmem:[#allocation3 + $0xb8] sm:$0xff] %vm417, %v2669
        %3548 = vst.msk [vmem:[#allocation3 + $0xc8] sm:$0xff] %vm417, %v2672
        %3549 = vst.msk [vmem:[#allocation3 + $0xd8] sm:$0xff] %vm417, %v2674
        %3550 = vst.msk [vmem:[#allocation3 + $0xe8] sm:$0xff] %vm417, %v2677
        %3551 = vst.msk [vmem:[#allocation3 + $0xf8] sm:$0xff] %vm417, %v2679
        %3552 = vst.msk [vmem:[#allocation3 + $0x108] sm:$0xff] %vm417, %v2682
        %3553 = vst.msk [vmem:[#allocation3 + $0x118] sm:$0xff] %vm417, %v2684
        %3554 = vst.msk [vmem:[#allocation3 + $0x128] sm:$0xff] %vm417, %v2687
        %3555 = vst.msk [vmem:[#allocation3 + $0x138] sm:$0xff] %vm417, %v2689
        %3556 = vst.msk [vmem:[#allocation3 + $0x148] sm:$0xff] %vm417, %v2692
        %3557 = vst.msk [vmem:[#allocation3 + $0x158] sm:$0xff] %vm417, %v2694
        %3558 = vst.msk [vmem:[#allocation3 + $0x168] sm:$0xff] %vm417, %v2697
        %3559 = vst.msk [vmem:[#allocation3 + $0x178] sm:$0xff] %vm417, %v2699
        %3560 = vst.msk [vmem:[#allocation3 + $0x188] sm:$0xff] %vm417, %v2702
        %3561 = vst.msk [vmem:[#allocation3 + $0x198] sm:$0xff] %vm417, %v2704
        %3562 = vst.msk [vmem:[#allocation3 + $0x1a8] sm:$0xff] %vm417, %v2707
        %3563 = vst.msk [vmem:[#allocation3 + $0x1b8] sm:$0xff] %vm417, %v2709
        %3564 = vst.msk [vmem:[#allocation3 + $0x1c8] sm:$0xff] %vm417, %v3104
        %3565 = vst.msk [vmem:[#allocation3 + $0x1d8] sm:$0xff] %vm417, %v3106
        %3566 = vst.msk [vmem:[#allocation3 + $0x1e8] sm:$0xff] %vm417, %v3501
        %3567 = vst.msk [vmem:[#allocation3 + $0x1f8] sm:$0xff] %vm417, %v3503
        %v3568 = vld [vmem:[#allocation3] sm:$0xff]
        %v3569 = vld [vmem:[#allocation3 + $0x8] sm:$0xff]
        %v3570 = vld [vmem:[#allocation3 + $0x10] sm:$0xff]
        %v3571 = vld [vmem:[#allocation3 + $0x18] sm:$0xff]
        %v3572 = vld [vmem:[#allocation3 + $0x20] sm:$0xff]
        %v3573 = vld [vmem:[#allocation3 + $0x28] sm:$0xff]
        %v3574 = vld [vmem:[#allocation3 + $0x30] sm:$0xff]
        %v3575 = vld [vmem:[#allocation3 + $0x38] sm:$0xff]
        %v3576 = vld [vmem:[#allocation3 + $0x40] sm:$0xff]
        %v3577 = vld [vmem:[#allocation3 + $0x48] sm:$0xff]
        %v3578 = vld [vmem:[#allocation3 + $0x50] sm:$0xff]
        %v3579 = vld [vmem:[#allocation3 + $0x58] sm:$0xff]
        %v3580 = vld [vmem:[#allocation3 + $0x60] sm:$0xff]
        %v3581 = vld [vmem:[#allocation3 + $0x68] sm:$0xff]
        %v3582 = vld [vmem:[#allocation3 + $0x70] sm:$0xff]
        %v3583 = vld [vmem:[#allocation3 + $0x78] sm:$0xff]
        %v3584 = vld [vmem:[#allocation3 + $0x80] sm:$0xff]
        %v3585 = vld [vmem:[#allocation3 + $0x88] sm:$0xff]
        %v3586 = vld [vmem:[#allocation3 + $0x90] sm:$0xff]
        %v3587 = vld [vmem:[#allocation3 + $0x98] sm:$0xff]
        %v3588 = vld [vmem:[#allocation3 + $0xa0] sm:$0xff]
        %v3589 = vld [vmem:[#allocation3 + $0xa8] sm:$0xff]
        %v3590 = vld [vmem:[#allocation3 + $0xb0] sm:$0xff]
        %v3591 = vld [vmem:[#allocation3 + $0xb8] sm:$0xff]
        %v3592 = vld [vmem:[#allocation3 + $0xc0] sm:$0xff]
        %v3593 = vld [vmem:[#allocation3 + $0xc8] sm:$0xff]
        %v3594 = vld [vmem:[#allocation3 + $0xd0] sm:$0xff]
        %v3595 = vld [vmem:[#allocation3 + $0xd8] sm:$0xff]
        %v3596 = vld [vmem:[#allocation3 + $0xe0] sm:$0xff]
        %v3597 = vld [vmem:[#allocation3 + $0xe8] sm:$0xff]
        %v3598 = vld [vmem:[#allocation3 + $0xf0] sm:$0xff]
        %v3599 = vld [vmem:[#allocation3 + $0xf8] sm:$0xff]
        %v3600 = vld [vmem:[#allocation3 + $0x100] sm:$0xff]
        %v3601 = vld [vmem:[#allocation3 + $0x108] sm:$0xff]
        %v3602 = vld [vmem:[#allocation3 + $0x110] sm:$0xff]
        %v3603 = vld [vmem:[#allocation3 + $0x118] sm:$0xff]
        %v3604 = vld [vmem:[#allocation3 + $0x120] sm:$0xff]
        %v3605 = vld [vmem:[#allocation3 + $0x128] sm:$0xff]
        %v3606 = vld [vmem:[#allocation3 + $0x130] sm:$0xff]
        %v3607 = vld [vmem:[#allocation3 + $0x138] sm:$0xff]
        %v3608 = vld [vmem:[#allocation3 + $0x140] sm:$0xff]
        %v3609 = vld [vmem:[#allocation3 + $0x148] sm:$0xff]
        %v3610 = vld [vmem:[#allocation3 + $0x150] sm:$0xff]
        %v3611 = vld [vmem:[#allocation3 + $0x158] sm:$0xff]
        %v3612 = vld [vmem:[#allocation3 + $0x160] sm:$0xff]
        %v3613 = vld [vmem:[#allocation3 + $0x168] sm:$0xff]
        %v3614 = vld [vmem:[#allocation3 + $0x170] sm:$0xff]
        %v3615 = vld [vmem:[#allocation3 + $0x178] sm:$0xff]
        %v3616 = vld [vmem:[#allocation3 + $0x180] sm:$0xff]
        %v3617 = vld [vmem:[#allocation3 + $0x188] sm:$0xff]
        %v3618 = vld [vmem:[#allocation3 + $0x190] sm:$0xff]
        %v3619 = vld [vmem:[#allocation3 + $0x198] sm:$0xff]
        %v3620 = vld [vmem:[#allocation3 + $0x1a0] sm:$0xff]
        %v3621 = vld [vmem:[#allocation3 + $0x1a8] sm:$0xff]
        %v3622 = vld [vmem:[#allocation3 + $0x1b0] sm:$0xff]
        %v3623 = vld [vmem:[#allocation3 + $0x1b8] sm:$0xff]
        %v3624 = vld [vmem:[#allocation3 + $0x1c0] sm:$0xff]
        %v3625 = vld [vmem:[#allocation3 + $0x1c8] sm:$0xff]
        %v3626 = vld [vmem:[#allocation3 + $0x1d0] sm:$0xff]
        %v3627 = vld [vmem:[#allocation3 + $0x1d8] sm:$0xff]
        %v3628 = vld [vmem:[#allocation3 + $0x1e0] sm:$0xff]
        %v3629 = vld [vmem:[#allocation3 + $0x1e8] sm:$0xff]
        %v3630 = vld [vmem:[#allocation3 + $0x1f0] sm:$0xff]
        %v3631 = vld [vmem:[#allocation3 + $0x1f8] sm:$0xff]
        %v3633 = vlaneseq
        %v3634 = vshrl.u32 %v3633, 7
        %v3635 = vsub.s32 0, %v3634
        %v3636 = vrot.slane %v2255, %v3635
        %v3639 = vsel %vm417, %v3569, 0
        %v3642 = vsel %vm417, %v3571, 0
        %v3645 = vsel %vm417, %v3573, 0
        %v3648 = vsel %vm417, %v3575, 0
        %v3651 = vsel %vm417, %v3577, 0
        %v3654 = vsel %vm417, %v3579, 0
        %v3657 = vsel %vm417, %v3581, 0
        %v3660 = vsel %vm417, %v3583, 0
        %v3663 = vsel %vm417, %v3585, 0
        %v3666 = vsel %vm417, %v3587, 0
        %v3669 = vsel %vm417, %v3589, 0
        %v3672 = vsel %vm417, %v3591, 0
        %v3675 = vsel %vm417, %v3593, 0
        %v3678 = vsel %vm417, %v3595, 0
        %v3681 = vsel %vm417, %v3597, 0
        %v3684 = vsel %vm417, %v3599, 0
        %v3687 = vsel %vm417, %v3601, 0
        %v3690 = vsel %vm417, %v3603, 0
        %v3693 = vsel %vm417, %v3605, 0
        %v3696 = vsel %vm417, %v3607, 0
        %v3699 = vsel %vm417, %v3609, 0
        %v3702 = vsel %vm417, %v3611, 0
        %v3705 = vsel %vm417, %v3613, 0
        %v3708 = vsel %vm417, %v3615, 0
        %v3711 = vsel %vm417, %v3617, 0
        %v3714 = vsel %vm417, %v3619, 0
        %v3717 = vsel %vm417, %v3621, 0
        %v3720 = vsel %vm417, %v3623, 0
        %v3723 = vsel %vm417, %v3625, 0
        %v3726 = vsel %vm417, %v3627, 0
        %v3729 = vsel %vm417, %v3629, 0
        %v3732 = vsel %vm417, %v3631, 0
        %3734 = vmatprep.subr.mxu0 0.0
        %3735 = vmatpush1.msra.mxu0 %v2237
        %3736 = vmatprep.subr.mxu0 0.0
        %3737 = vmatpush1.msra.mxu0 %v2238
        %3738 = vmatprep.subr.mxu0 0.0
        %3739 = vmatpush1.msra.mxu0 %v2239
        %3740 = vmatprep.subr.mxu0 0.0
        %3741 = vmatpush1.msra.mxu0 %v2240
        %3742 = vmatprep.subr.mxu0 0.0
        %3743 = vmatpush1.msra.mxu0 %v2241
        %3744 = vmatprep.subr.mxu0 0.0
        %3745 = vmatpush1.msra.mxu0 %v2242
        %3746 = vmatprep.subr.mxu0 0.0
        %3747 = vmatpush1.msra.mxu0 %v2243
        %3748 = vmatprep.subr.mxu0 0.0
        %3749 = vmatpush1.msra.mxu0 %v2244
        %3750 = vmatprep.subr.mxu0 0.0
        %3751 = vmatpush1.msra.mxu0 %v2245
        %3752 = vmatprep.subr.mxu0 0.0
        %3753 = vmatpush1.msra.mxu0 %v2246
        %3754 = vmatprep.subr.mxu0 0.0
        %3755 = vmatpush1.msra.mxu0 %v2247
        %3756 = vmatprep.subr.mxu0 0.0
        %3757 = vmatpush1.msra.mxu0 %v2248
        %3758 = vmatprep.subr.mxu0 0.0
        %3759 = vmatpush1.msra.mxu0 %v2249
        %3760 = vmatprep.subr.mxu0 0.0
        %3761 = vmatpush1.msra.mxu0 %v2250
        %3762 = vmatprep.subr.mxu0 0.0
        %3763 = vmatpush1.msra.mxu0 %v2251
        %3764 = vmatprep.subr.mxu0 0.0
        %3765 = vmatpush1.msra.mxu0 %v2252
        %3766 = vmatprep.subr.mxu0 0.0
        %3767 = vmatpush1.msra.mxu0 %v2253
        %3768 = vmatprep.subr.mxu0 0.0
        %3769 = vmatpush1.msra.mxu0 %v2254
        %3770 = vmatprep.subr.mxu0 0.0
        %3771 = vmatpush1.msra.mxu0 0.0
        %3772 = vmatprep.subr.mxu0 0.0
        %3773 = vmatpush1.msra.mxu0 0.0
        %3774 = vmatprep.subr.mxu0 0.0
        %3775 = vmatpush1.msra.mxu0 0.0
        %3776 = vmatprep.subr.mxu0 0.0
        %3777 = vmatpush1.msra.mxu0 0.0
        %3778 = vmatprep.subr.mxu0 0.0
        %3779 = vmatpush1.msra.mxu0 0.0
        %3780 = vmatprep.subr.mxu0 0.0
        %3781 = vmatpush1.msra.mxu0 0.0
        %3782 = vmatprep.subr.mxu0 0.0
        %3783 = vmatpush1.msra.mxu0 0.0
        %3784 = vmatprep.subr.mxu0 0.0
        %3785 = vmatpush1.msra.mxu0 0.0
        %3786 = vmatprep.subr.mxu0 0.0
        %3787 = vmatpush1.msra.mxu0 0.0
        %3788 = vmatprep.subr.mxu0 0.0
        %3789 = vmatpush1.msra.mxu0 0.0
        %3790 = vmatprep.subr.mxu0 0.0
        %3791 = vmatpush1.msra.mxu0 0.0
        %3792 = vmatprep.subr.mxu0 0.0
        %3793 = vmatpush1.msra.mxu0 0.0
        %3794 = vmatprep.subr.mxu0 0.0
        %3795 = vmatpush1.msra.mxu0 0.0
        %3796 = vmatprep.subr.mxu0 0.0
        %3797 = vmatpush1.msra.mxu0 0.0
        %3798 = vmatprep.mubr.f32.mxu0 %v3639
        %3799 = vmatmul.mubr.f32.gmra.mrb[0].mxu0 %v3568
        %v3800 = vpop.f32.mrb[0].mxu0
        %v3801 = vadd.f32 %v3636, %v3800
        %v3802 = vpop.f32.mrb[0].mxu0
        %3803 = vmatprep.mubr.f32.mxu0 %v3642
        %3804 = vmatmul.mubr.f32.gmra.mrb[0].mxu0 %v3570
        %v3805 = vpop.f32.mrb[0].mxu0
        %v3806 = vadd.f32 %v3636, %v3805
        %v3807 = vpop.f32.mrb[0].mxu0
        %3808 = vmatprep.mubr.f32.mxu0 %v3645
        %3809 = vmatmul.mubr.f32.gmra.mrb[0].mxu0 %v3572
        %v3810 = vpop.f32.mrb[0].mxu0
        %v3811 = vadd.f32 %v3636, %v3810
        %v3812 = vpop.f32.mrb[0].mxu0
        %3813 = vmatprep.mubr.f32.mxu0 %v3648
        %3814 = vmatmul.mubr.f32.gmra.mrb[0].mxu0 %v3574
        %v3815 = vpop.f32.mrb[0].mxu0
        %v3816 = vadd.f32 %v3636, %v3815
        %v3817 = vpop.f32.mrb[0].mxu0
        %3818 = vmatprep.mubr.f32.mxu0 %v3651
        %3819 = vmatmul.mubr.f32.gmra.mrb[0].mxu0 %v3576
        %v3820 = vpop.f32.mrb[0].mxu0
        %v3821 = vadd.f32 %v3636, %v3820
        %v3822 = vpop.f32.mrb[0].mxu0
        %3823 = vmatprep.mubr.f32.mxu0 %v3654
        %3824 = vmatmul.mubr.f32.gmra.mrb[0].mxu0 %v3578
        %v3825 = vpop.f32.mrb[0].mxu0
        %v3826 = vadd.f32 %v3636, %v3825
        %v3827 = vpop.f32.mrb[0].mxu0
        %3828 = vmatprep.mubr.f32.mxu0 %v3657
        %3829 = vmatmul.mubr.f32.gmra.mrb[0].mxu0 %v3580
        %v3830 = vpop.f32.mrb[0].mxu0
        %v3831 = vadd.f32 %v3636, %v3830
        %v3832 = vpop.f32.mrb[0].mxu0
        %3833 = vmatprep.mubr.f32.mxu0 %v3660
        %3834 = vmatmul.mubr.f32.gmra.mrb[0].mxu0 %v3582
        %v3835 = vpop.f32.mrb[0].mxu0
        %v3836 = vadd.f32 %v3636, %v3835
        %v3837 = vpop.f32.mrb[0].mxu0
        %3838 = vmatprep.mubr.f32.mxu0 %v3663
        %3839 = vmatmul.mubr.f32.gmra.mrb[0].mxu0 %v3584
        %v3840 = vpop.f32.mrb[0].mxu0
        %v3841 = vadd.f32 %v3636, %v3840
        %v3842 = vpop.f32.mrb[0].mxu0
        %3843 = vmatprep.mubr.f32.mxu0 %v3666
        %3844 = vmatmul.mubr.f32.gmra.mrb[0].mxu0 %v3586
        %v3845 = vpop.f32.mrb[0].mxu0
        %v3846 = vadd.f32 %v3636, %v3845
        %v3847 = vpop.f32.mrb[0].mxu0
        %3848 = vmatprep.mubr.f32.mxu0 %v3669
        %3849 = vmatmul.mubr.f32.gmra.mrb[0].mxu0 %v3588
        %v3850 = vpop.f32.mrb[0].mxu0
        %v3851 = vadd.f32 %v3636, %v3850
        %v3852 = vpop.f32.mrb[0].mxu0
        %3853 = vmatprep.mubr.f32.mxu0 %v3672
        %3854 = vmatmul.mubr.f32.gmra.mrb[0].mxu0 %v3590
        %v3855 = vpop.f32.mrb[0].mxu0
        %v3856 = vadd.f32 %v3636, %v3855
        %v3857 = vpop.f32.mrb[0].mxu0
        %3858 = vmatprep.mubr.f32.mxu0 %v3675
        %3859 = vmatmul.mubr.f32.gmra.mrb[0].mxu0 %v3592
        %v3860 = vpop.f32.mrb[0].mxu0
        %v3861 = vadd.f32 %v3636, %v3860
        %v3862 = vpop.f32.mrb[0].mxu0
        %3863 = vmatprep.mubr.f32.mxu0 %v3678
        %3864 = vmatmul.mubr.f32.gmra.mrb[0].mxu0 %v3594
        %v3865 = vpop.f32.mrb[0].mxu0
        %v3866 = vadd.f32 %v3636, %v3865
        %v3867 = vpop.f32.mrb[0].mxu0
        %3868 = vmatprep.mubr.f32.mxu0 %v3681
        %3869 = vmatmul.mubr.f32.gmra.mrb[0].mxu0 %v3596
        %v3870 = vpop.f32.mrb[0].mxu0
        %v3871 = vadd.f32 %v3636, %v3870
        %v3872 = vpop.f32.mrb[0].mxu0
        %3873 = vmatprep.mubr.f32.mxu0 %v3684
        %3874 = vmatmul.mubr.f32.gmra.mrb[0].mxu0 %v3598
        %v3875 = vpop.f32.mrb[0].mxu0
        %v3876 = vadd.f32 %v3636, %v3875
        %v3877 = vpop.f32.mrb[0].mxu0
        %3878 = vmatprep.mubr.f32.mxu0 %v3687
        %3879 = vmatmul.mubr.f32.gmra.mrb[0].mxu0 %v3600
        %v3880 = vpop.f32.mrb[0].mxu0
        %v3881 = vadd.f32 %v3636, %v3880
        %v3882 = vpop.f32.mrb[0].mxu0
        %3883 = vmatprep.mubr.f32.mxu0 %v3690
        %3884 = vmatmul.mubr.f32.gmra.mrb[0].mxu0 %v3602
        %v3885 = vpop.f32.mrb[0].mxu0
        %v3886 = vadd.f32 %v3636, %v3885
        %v3887 = vpop.f32.mrb[0].mxu0
        %3888 = vmatprep.mubr.f32.mxu0 %v3693
        %3889 = vmatmul.mubr.f32.gmra.mrb[0].mxu0 %v3604
        %v3890 = vpop.f32.mrb[0].mxu0
        %v3891 = vadd.f32 %v3636, %v3890
        %v3892 = vpop.f32.mrb[0].mxu0
        %3893 = vmatprep.mubr.f32.mxu0 %v3696
        %3894 = vmatmul.mubr.f32.gmra.mrb[0].mxu0 %v3606
        %v3895 = vpop.f32.mrb[0].mxu0
        %v3896 = vadd.f32 %v3636, %v3895
        %v3897 = vpop.f32.mrb[0].mxu0
        %3898 = vmatprep.mubr.f32.mxu0 %v3699
        %3899 = vmatmul.mubr.f32.gmra.mrb[0].mxu0 %v3608
        %v3900 = vpop.f32.mrb[0].mxu0
        %v3901 = vadd.f32 %v3636, %v3900
        %v3902 = vpop.f32.mrb[0].mxu0
        %3903 = vmatprep.mubr.f32.mxu0 %v3702
        %3904 = vmatmul.mubr.f32.gmra.mrb[0].mxu0 %v3610
        %v3905 = vpop.f32.mrb[0].mxu0
        %v3906 = vadd.f32 %v3636, %v3905
        %v3907 = vpop.f32.mrb[0].mxu0
        %3908 = vmatprep.mubr.f32.mxu0 %v3705
        %3909 = vmatmul.mubr.f32.gmra.mrb[0].mxu0 %v3612
        %v3910 = vpop.f32.mrb[0].mxu0
        %v3911 = vadd.f32 %v3636, %v3910
        %v3912 = vpop.f32.mrb[0].mxu0
        %3913 = vmatprep.mubr.f32.mxu0 %v3708
        %3914 = vmatmul.mubr.f32.gmra.mrb[0].mxu0 %v3614
        %v3915 = vpop.f32.mrb[0].mxu0
        %v3916 = vadd.f32 %v3636, %v3915
        %v3917 = vpop.f32.mrb[0].mxu0
        %3918 = vmatprep.mubr.f32.mxu0 %v3711
        %3919 = vmatmul.mubr.f32.gmra.mrb[0].mxu0 %v3616
        %v3920 = vpop.f32.mrb[0].mxu0
        %v3921 = vadd.f32 %v3636, %v3920
        %v3922 = vpop.f32.mrb[0].mxu0
        %3923 = vmatprep.mubr.f32.mxu0 %v3714
        %3924 = vmatmul.mubr.f32.gmra.mrb[0].mxu0 %v3618
        %v3925 = vpop.f32.mrb[0].mxu0
        %v3926 = vadd.f32 %v3636, %v3925
        %v3927 = vpop.f32.mrb[0].mxu0
        %3928 = vmatprep.mubr.f32.mxu0 %v3717
        %3929 = vmatmul.mubr.f32.gmra.mrb[0].mxu0 %v3620
        %v3930 = vpop.f32.mrb[0].mxu0
        %v3931 = vadd.f32 %v3636, %v3930
        %v3932 = vpop.f32.mrb[0].mxu0
        %3933 = vmatprep.mubr.f32.mxu0 %v3720
        %3934 = vmatmul.mubr.f32.gmra.mrb[0].mxu0 %v3622
        %v3935 = vpop.f32.mrb[0].mxu0
        %v3936 = vadd.f32 %v3636, %v3935
        %v3937 = vpop.f32.mrb[0].mxu0
        %3938 = vmatprep.mubr.f32.mxu0 %v3723
        %3939 = vmatmul.mubr.f32.gmra.mrb[0].mxu0 %v3624
        %v3940 = vpop.f32.mrb[0].mxu0
        %v3941 = vadd.f32 %v3636, %v3940
        %v3942 = vpop.f32.mrb[0].mxu0
        %3943 = vmatprep.mubr.f32.mxu0 %v3726
        %3944 = vmatmul.mubr.f32.gmra.mrb[0].mxu0 %v3626
        %v3945 = vpop.f32.mrb[0].mxu0
        %v3946 = vadd.f32 %v3636, %v3945
        %v3947 = vpop.f32.mrb[0].mxu0
        %3948 = vmatprep.mubr.f32.mxu0 %v3729
        %3949 = vmatmul.mubr.f32.gmra.mrb[0].mxu0 %v3628
        %v3950 = vpop.f32.mrb[0].mxu0
        %v3951 = vadd.f32 %v3636, %v3950
        %v3952 = vpop.f32.mrb[0].mxu0
        %3953 = vmatprep.mubr.f32.mxu0 %v3732
        %3954 = vmatmul.mubr.f32.gmra.mrb[0].mxu0 %v3630
        %v3955 = vpop.f32.mrb[0].mxu0
        %v3956 = vadd.f32 %v3636, %v3955
        %v3957 = vpop.f32.mrb[0].mxu0
        %3958 = vdwg.mxu0
        %v3959 = vsel %vm417, %v3801, 0.0
        %v3960 = vsel %vm417, %v3806, 0.0
        %v3961 = vadd.f32 %v3959, %v3960
        %v3962 = vsel %vm417, %v3811, 0.0
        %v3963 = vadd.f32 %v3961, %v3962
        %v3964 = vsel %vm417, %v3816, 0.0
        %v3965 = vadd.f32 %v3963, %v3964
        %v3966 = vsel %vm417, %v3821, 0.0
        %v3967 = vadd.f32 %v3965, %v3966
        %v3968 = vsel %vm417, %v3826, 0.0
        %v3969 = vadd.f32 %v3967, %v3968
        %v3970 = vsel %vm417, %v3831, 0.0
        %v3971 = vadd.f32 %v3969, %v3970
        %v3972 = vsel %vm417, %v3836, 0.0
        %v3973 = vadd.f32 %v3971, %v3972
        %v3974 = vsel %vm417, %v3841, 0.0
        %v3975 = vadd.f32 %v3973, %v3974
        %v3976 = vsel %vm417, %v3846, 0.0
        %v3977 = vadd.f32 %v3975, %v3976
        %v3978 = vsel %vm417, %v3851, 0.0
        %v3979 = vadd.f32 %v3977, %v3978
        %v3980 = vsel %vm417, %v3856, 0.0
        %v3981 = vadd.f32 %v3979, %v3980
        %v3982 = vsel %vm417, %v3861, 0.0
        %v3983 = vadd.f32 %v3981, %v3982
        %v3984 = vsel %vm417, %v3866, 0.0
        %v3985 = vadd.f32 %v3983, %v3984
        %v3986 = vsel %vm417, %v3871, 0.0
        %v3987 = vadd.f32 %v3985, %v3986
        %v3988 = vsel %vm417, %v3876, 0.0
        %v3989 = vadd.f32 %v3987, %v3988
        %v3990 = vsel %vm417, %v3881, 0.0
        %v3991 = vadd.f32 %v3989, %v3990
        %v3992 = vsel %vm417, %v3886, 0.0
        %v3993 = vadd.f32 %v3991, %v3992
        %v3994 = vsel %vm417, %v3891, 0.0
        %v3995 = vadd.f32 %v3993, %v3994
        %v3996 = vsel %vm417, %v3896, 0.0
        %v3997 = vadd.f32 %v3995, %v3996
        %v3998 = vsel %vm417, %v3901, 0.0
        %v3999 = vadd.f32 %v3997, %v3998
        %v4000 = vsel %vm417, %v3906, 0.0
        %v4001 = vadd.f32 %v3999, %v4000
        %v4002 = vsel %vm417, %v3911, 0.0
        %v4003 = vadd.f32 %v4001, %v4002
        %v4004 = vsel %vm417, %v3916, 0.0
        %v4005 = vadd.f32 %v4003, %v4004
        %v4006 = vsel %vm417, %v3921, 0.0
        %v4007 = vadd.f32 %v4005, %v4006
        %v4008 = vsel %vm417, %v3926, 0.0
        %v4009 = vadd.f32 %v4007, %v4008
        %v4010 = vsel %vm417, %v3931, 0.0
        %v4011 = vadd.f32 %v4009, %v4010
        %v4012 = vsel %vm417, %v3936, 0.0
        %v4013 = vadd.f32 %v4011, %v4012
        %v4014 = vsel %vm417, %v3941, 0.0
        %v4015 = vadd.f32 %v4013, %v4014
        %v4016 = vsel %vm417, %v3946, 0.0
        %v4017 = vadd.f32 %v4015, %v4016
        %v4018 = vsel %vm417, %v3951, 0.0
        %v4019 = vadd.f32 %v4017, %v4018
        %v4020 = vsel %vm417, %v3956, 0.0
        %v4021 = vadd.f32 %v4019, %v4020
        %v4022 = vrot.slane %v4021, 4
        %v4023 = vadd.f32 %v4021, %v4022
        %v4024 = vrot.slane %v4023, 2
        %v4025 = vadd.f32 %v4023, %v4024
        %v4026 = vrot.slane %v4025, 1
        %v4027 = vadd.f32 %v4025, %v4026
        %v4028 = vrcp.pop 256.0
        %v4029 = vmul.f32 %v4027, %v4028
        %v4030 = vld [vmem:[%s5] sm:$0xf]
        %v4031 = vmul.f32 %v4030, %v4029
        %vm4032 = vcmask 125952
        %v4033 = vsel %vm4032, %v4031, 0.0
        %4034 = vadd.xlane.f32.xlu0 %v4033
        %v4035 = vpop.xlane.xlu0 %4034
        %v4036 = vld [vmem:[%s6] sm:$0xf]
        %v4037 = vadd.f32 %v4035, %v4036
        %v4038 = vmax.f32 %v4037, 0.0
        %v4039 = vld [vmem:[%s7] sm:$0xf]
        %4041 = vset.pattern.permute.xlu0 0
        %4042 = vperm.xlu0 %4041, %v4038
        %v4043 = vpop.permute.xlu0 %4042
        %v4045 = vmul.f32 %v4039, %v4043
        %v4046 = vsel %vm4032, %v4045, 0.0
        %v4047 = vrot.slane %v4046, 4
        %v4048 = vadd.f32 %v4046, %v4047
        %v4049 = vrot.slane %v4048, 2
        %v4050 = vadd.f32 %v4048, %v4049
        %v4051 = vrot.slane %v4050, 1
        %v4052 = vadd.f32 %v4050, %v4051
        %v4053 = vld [vmem:[%s8] sm:$0x1]
        %v4054 = vadd.f32 %v4052, %v4053
        %v4055 = vxor.u32 %v4054, 2147483648
        %v4056 = vmul.f32 %v4055, 1.442695
        %v4057 = vpow.pop %v4056
        %v4058 = vadd.f32 %v4057, 1.0
        %v4059 = vrcp.pop %v4058
        %v4060 = vmul.f32 1.0, %v4059
        %v4061 = vlaneseq
        %v4062 = vshrl.u32 %v4061, 7
        %v4063 = vsub.s32 0, %v4062
        %v4064 = vrot.slane %v4060, %v4063
        %v4065 = vmul.f32 %v3801, %v4064
        %v4066 = vmul.f32 %v3806, %v4064
        %v4067 = vmul.f32 %v3811, %v4064
        %v4068 = vmul.f32 %v3816, %v4064
        %v4069 = vmul.f32 %v3821, %v4064
        %v4070 = vmul.f32 %v3826, %v4064
        %v4071 = vmul.f32 %v3831, %v4064
        %v4072 = vmul.f32 %v3836, %v4064
        %v4073 = vmul.f32 %v3841, %v4064
        %v4074 = vmul.f32 %v3846, %v4064
        %v4075 = vmul.f32 %v3851, %v4064
        %v4076 = vmul.f32 %v3856, %v4064
        %v4077 = vmul.f32 %v3861, %v4064
        %v4078 = vmul.f32 %v3866, %v4064
        %v4079 = vmul.f32 %v3871, %v4064
        %v4080 = vmul.f32 %v3876, %v4064
        %v4081 = vmul.f32 %v3881, %v4064
        %v4082 = vmul.f32 %v3886, %v4064
        %v4083 = vmul.f32 %v3891, %v4064
        %v4084 = vmul.f32 %v3896, %v4064
        %v4085 = vmul.f32 %v3901, %v4064
        %v4086 = vmul.f32 %v3906, %v4064
        %v4087 = vmul.f32 %v3911, %v4064
        %v4088 = vmul.f32 %v3916, %v4064
        %v4089 = vmul.f32 %v3921, %v4064
        %v4090 = vmul.f32 %v3926, %v4064
        %v4091 = vmul.f32 %v3931, %v4064
        %v4092 = vmul.f32 %v3936, %v4064
        %v4093 = vmul.f32 %v3941, %v4064
        %v4094 = vmul.f32 %v3946, %v4064
        %v4095 = vmul.f32 %v3951, %v4064
        %v4096 = vmul.f32 %v3956, %v4064
        %v4097 = vadd.f32 %v4065, %v385
        %v4098 = vadd.f32 %v4066, %v386
        %v4099 = vadd.f32 %v4067, %v387
        %v4100 = vadd.f32 %v4068, %v388
        %v4101 = vadd.f32 %v4069, %v389
        %v4102 = vadd.f32 %v4070, %v390
        %v4103 = vadd.f32 %v4071, %v391
        %v4104 = vadd.f32 %v4072, %v392
        %v4105 = vadd.f32 %v4073, %v393
        %v4106 = vadd.f32 %v4074, %v394
        %v4107 = vadd.f32 %v4075, %v395
        %v4108 = vadd.f32 %v4076, %v396
        %v4109 = vadd.f32 %v4077, %v397
        %v4110 = vadd.f32 %v4078, %v398
        %v4111 = vadd.f32 %v4079, %v399
        %v4112 = vadd.f32 %v4080, %v400
        %v4113 = vadd.f32 %v4081, %v401
        %v4114 = vadd.f32 %v4082, %v402
        %v4115 = vadd.f32 %v4083, %v403
        %v4116 = vadd.f32 %v4084, %v404
        %v4117 = vadd.f32 %v4085, %v405
        %v4118 = vadd.f32 %v4086, %v406
        %v4119 = vadd.f32 %v4087, %v407
        %v4120 = vadd.f32 %v4088, %v408
        %v4121 = vadd.f32 %v4089, %v409
        %v4122 = vadd.f32 %v4090, %v410
        %v4123 = vadd.f32 %v4091, %v411
        %v4124 = vadd.f32 %v4092, %v412
        %v4125 = vadd.f32 %v4093, %v413
        %v4126 = vadd.f32 %v4094, %v414
        %v4127 = vadd.f32 %v4095, %v415
        %v4128 = vadd.f32 %v4096, %v416
        %s4129 = scalar_lea.vmem %s1, 144
        %v4130 = vld [vmem:[%s4129] sm:$0xff]
        %v4131 = vld [vmem:[%s4129 + $0x8] sm:$0xff]
        %v4132 = vld [vmem:[%s4129 + $0x10] sm:$0xff]
        %v4133 = vld [vmem:[%s4129 + $0x18] sm:$0xff]
        %v4134 = vld [vmem:[%s4129 + $0x20] sm:$0xff]
        %v4135 = vld [vmem:[%s4129 + $0x28] sm:$0xff]
        %v4136 = vld [vmem:[%s4129 + $0x30] sm:$0xff]
        %v4137 = vld [vmem:[%s4129 + $0x38] sm:$0xff]
        %v4138 = vld [vmem:[%s4129 + $0x40] sm:$0xff]
        %v4139 = vld [vmem:[%s4129 + $0x48] sm:$0xff]
        %v4140 = vld [vmem:[%s4129 + $0x50] sm:$0xff]
        %v4141 = vld [vmem:[%s4129 + $0x58] sm:$0xff]
        %v4142 = vld [vmem:[%s4129 + $0x60] sm:$0xff]
        %v4143 = vld [vmem:[%s4129 + $0x68] sm:$0xff]
        %v4144 = vld [vmem:[%s4129 + $0x70] sm:$0xff]
        %v4145 = vld [vmem:[%s4129 + $0x78] sm:$0xff]
        %v4146 = vld [vmem:[%s4129 + $0x80] sm:$0xff]
        %v4147 = vld [vmem:[%s4129 + $0x88] sm:$0xff]
        %s4148 = scalar_lea.vmem %s2, 1
        %v4149 = vld [vmem:[%s4148] sm:$0x1]
        %4150 = vst.msk [vmem:[%s492 + $0x1] sm:$0xff] %vm417, %v4097
        %4151 = vst.msk [vmem:[%s492 + $0x9] sm:$0xff] %vm417, %v4098
        %4152 = vst.msk [vmem:[%s492 + $0x19] sm:$0xff] %vm417, %v4099
        %4153 = vst.msk [vmem:[%s492 + $0x21] sm:$0xff] %vm417, %v4100
        %4154 = vst.msk [vmem:[%s492 + $0x31] sm:$0xff] %vm417, %v4101
        %4155 = vst.msk [vmem:[%s492 + $0x39] sm:$0xff] %vm417, %v4102
        %4156 = vst.msk [vmem:[%s492 + $0x49] sm:$0xff] %vm417, %v4103
        %4157 = vst.msk [vmem:[%s492 + $0x51] sm:$0xff] %vm417, %v4104
        %4158 = vst.msk [vmem:[%s492 + $0x61] sm:$0xff] %vm417, %v4105
        %4159 = vst.msk [vmem:[%s492 + $0x69] sm:$0xff] %vm417, %v4106
        %4160 = vst.msk [vmem:[%s492 + $0x79] sm:$0xff] %vm417, %v4107
        %4161 = vst.msk [vmem:[%s492 + $0x81] sm:$0xff] %vm417, %v4108
        %4162 = vst.msk [vmem:[%s492 + $0x91] sm:$0xff] %vm417, %v4109
        %4163 = vst.msk [vmem:[%s492 + $0x99] sm:$0xff] %vm417, %v4110
        %4164 = vst.msk [vmem:[%s492 + $0xa9] sm:$0xff] %vm417, %v4111
        %4165 = vst.msk [vmem:[%s492 + $0xb1] sm:$0xff] %vm417, %v4112
        %4166 = vst.msk [vmem:[%s492 + $0xc1] sm:$0xff] %vm417, %v4113
        %4167 = vst.msk [vmem:[%s492 + $0xc9] sm:$0xff] %vm417, %v4114
        %4168 = vst.msk [vmem:[%s492 + $0xd9] sm:$0xff] %vm417, %v4115
        %4169 = vst.msk [vmem:[%s492 + $0xe1] sm:$0xff] %vm417, %v4116
        %4170 = vst.msk [vmem:[%s492 + $0xf1] sm:$0xff] %vm417, %v4117
        %4171 = vst.msk [vmem:[%s492 + $0xf9] sm:$0xff] %vm417, %v4118
        %4172 = vst.msk [vmem:[%s492 + $0x109] sm:$0xff] %vm417, %v4119
        %4173 = vst.msk [vmem:[%s492 + $0x111] sm:$0xff] %vm417, %v4120
        %4174 = vst.msk [vmem:[%s492 + $0x121] sm:$0xff] %vm417, %v4121
        %4175 = vst.msk [vmem:[%s492 + $0x129] sm:$0xff] %vm417, %v4122
        %4176 = vst.msk [vmem:[%s492 + $0x139] sm:$0xff] %vm417, %v4123
        %4177 = vst.msk [vmem:[%s492 + $0x141] sm:$0xff] %vm417, %v4124
        %4178 = vst.msk [vmem:[%s492 + $0x151] sm:$0xff] %vm417, %v4125
        %4179 = vst.msk [vmem:[%s492 + $0x159] sm:$0xff] %vm417, %v4126
        %4180 = vst.msk [vmem:[%s492 + $0x169] sm:$0xff] %vm417, %v4127
        %4181 = vst.msk [vmem:[%s492 + $0x171] sm:$0xff] %vm417, %v4128
        %v4182 = vld [vmem:[#allocation2] sm:$0xff]
        %v4183 = vld [vmem:[#allocation2 + $0x8] sm:$0xff]
        %v4184 = vld [vmem:[#allocation2 + $0x10] sm:$0x3]
        %v4185 = vld [vmem:[#allocation2 + $0x18] sm:$0xff]
        %v4186 = vld [vmem:[#allocation2 + $0x20] sm:$0xff]
        %v4187 = vld [vmem:[#allocation2 + $0x28] sm:$0x3]
        %v4188 = vld [vmem:[#allocation2 + $0x30] sm:$0xff]
        %v4189 = vld [vmem:[#allocation2 + $0x38] sm:$0xff]
        %v4190 = vld [vmem:[#allocation2 + $0x40] sm:$0x3]
        %v4191 = vld [vmem:[#allocation2 + $0x48] sm:$0xff]
        %v4192 = vld [vmem:[#allocation2 + $0x50] sm:$0xff]
        %v4193 = vld [vmem:[#allocation2 + $0x58] sm:$0x3]
        %v4194 = vld [vmem:[#allocation2 + $0x60] sm:$0xff]
        %v4195 = vld [vmem:[#allocation2 + $0x68] sm:$0xff]
        %v4196 = vld [vmem:[#allocation2 + $0x70] sm:$0x3]
        %v4197 = vld [vmem:[#allocation2 + $0x78] sm:$0xff]
        %v4198 = vld [vmem:[#allocation2 + $0x80] sm:$0xff]
        %v4199 = vld [vmem:[#allocation2 + $0x88] sm:$0x3]
        %v4200 = vld [vmem:[#allocation2 + $0x90] sm:$0xff]
        %v4201 = vld [vmem:[#allocation2 + $0x98] sm:$0xff]
        %v4202 = vld [vmem:[#allocation2 + $0xa0] sm:$0x3]
        %v4203 = vld [vmem:[#allocation2 + $0xa8] sm:$0xff]
        %v4204 = vld [vmem:[#allocation2 + $0xb0] sm:$0xff]
        %v4205 = vld [vmem:[#allocation2 + $0xb8] sm:$0x3]
        %v4206 = vld [vmem:[#allocation2 + $0xc0] sm:$0xff]
        %v4207 = vld [vmem:[#allocation2 + $0xc8] sm:$0xff]
        %v4208 = vld [vmem:[#allocation2 + $0xd0] sm:$0x3]
        %v4209 = vld [vmem:[#allocation2 + $0xd8] sm:$0xff]
        %v4210 = vld [vmem:[#allocation2 + $0xe0] sm:$0xff]
        %v4211 = vld [vmem:[#allocation2 + $0xe8] sm:$0x3]
        %v4212 = vld [vmem:[#allocation2 + $0xf0] sm:$0xff]
        %v4213 = vld [vmem:[#allocation2 + $0xf8] sm:$0xff]
        %v4214 = vld [vmem:[#allocation2 + $0x100] sm:$0x3]
        %v4215 = vld [vmem:[#allocation2 + $0x108] sm:$0xff]
        %v4216 = vld [vmem:[#allocation2 + $0x110] sm:$0xff]
        %v4217 = vld [vmem:[#allocation2 + $0x118] sm:$0x3]
        %v4218 = vld [vmem:[#allocation2 + $0x120] sm:$0xff]
        %v4219 = vld [vmem:[#allocation2 + $0x128] sm:$0xff]
        %v4220 = vld [vmem:[#allocation2 + $0x130] sm:$0x3]
        %v4221 = vld [vmem:[#allocation2 + $0x138] sm:$0xff]
        %v4222 = vld [vmem:[#allocation2 + $0x140] sm:$0xff]
        %v4223 = vld [vmem:[#allocation2 + $0x148] sm:$0x3]
        %v4224 = vld [vmem:[#allocation2 + $0x150] sm:$0xff]
        %v4225 = vld [vmem:[#allocation2 + $0x158] sm:$0xff]
        %v4226 = vld [vmem:[#allocation2 + $0x160] sm:$0x3]
        %v4227 = vld [vmem:[#allocation2 + $0x168] sm:$0xff]
        %v4228 = vld [vmem:[#allocation2 + $0x170] sm:$0xff]
        %v4229 = vld [vmem:[#allocation2 + $0x178] sm:$0x3]
        %v4230 = vld [vmem:[#allocation2 + $0x180] sm:$0xff]
        %v4231 = vld [vmem:[#allocation2 + $0x188] sm:$0xff]
        %v4232 = vld [vmem:[#allocation2 + $0x190] sm:$0x3]
        %v4233 = vld [vmem:[#allocation2 + $0x198] sm:$0xff]
        %v4234 = vld [vmem:[#allocation2 + $0x1a0] sm:$0xff]
        %v4235 = vld [vmem:[#allocation2 + $0x1a8] sm:$0x3]
        %4236 = vst.msk [vmem:[#allocation3] sm:$0xff] %vm417, %v4182
        %4237 = vst.msk [vmem:[#allocation3 + $0x10] sm:$0xff] %vm417, %v4183
        %4238 = vst.msk [vmem:[#allocation3 + $0x20] sm:$0xff] %vm417, %v4185
        %4239 = vst.msk [vmem:[#allocation3 + $0x30] sm:$0xff] %vm417, %v4186
        %4240 = vst.msk [vmem:[#allocation3 + $0x40] sm:$0xff] %vm417, %v4188
        %4241 = vst.msk [vmem:[#allocation3 + $0x50] sm:$0xff] %vm417, %v4189
        %4242 = vst.msk [vmem:[#allocation3 + $0x60] sm:$0xff] %vm417, %v4191
        %4243 = vst.msk [vmem:[#allocation3 + $0x70] sm:$0xff] %vm417, %v4192
        %4244 = vst.msk [vmem:[#allocation3 + $0x80] sm:$0xff] %vm417, %v4194
        %4245 = vst.msk [vmem:[#allocation3 + $0x90] sm:$0xff] %vm417, %v4195
        %4246 = vst.msk [vmem:[#allocation3 + $0xa0] sm:$0xff] %vm417, %v4197
        %4247 = vst.msk [vmem:[#allocation3 + $0xb0] sm:$0xff] %vm417, %v4198
        %4248 = vst.msk [vmem:[#allocation3 + $0xc0] sm:$0xff] %vm417, %v4200
        %4249 = vst.msk [vmem:[#allocation3 + $0xd0] sm:$0xff] %vm417, %v4201
        %4250 = vst.msk [vmem:[#allocation3 + $0xe0] sm:$0xff] %vm417, %v4203
        %4251 = vst.msk [vmem:[#allocation3 + $0xf0] sm:$0xff] %vm417, %v4204
        %4252 = vst.msk [vmem:[#allocation3 + $0x100] sm:$0xff] %vm417, %v4206
        %4253 = vst.msk [vmem:[#allocation3 + $0x110] sm:$0xff] %vm417, %v4207
        %4254 = vst.msk [vmem:[#allocation3 + $0x120] sm:$0xff] %vm417, %v4209
        %4255 = vst.msk [vmem:[#allocation3 + $0x130] sm:$0xff] %vm417, %v4210
        %4256 = vst.msk [vmem:[#allocation3 + $0x140] sm:$0xff] %vm417, %v4212
        %4257 = vst.msk [vmem:[#allocation3 + $0x150] sm:$0xff] %vm417, %v4213
        %4258 = vst.msk [vmem:[#allocation3 + $0x160] sm:$0xff] %vm417, %v4215
        %4259 = vst.msk [vmem:[#allocation3 + $0x170] sm:$0xff] %vm417, %v4216
        %4260 = vst.msk [vmem:[#allocation3 + $0x180] sm:$0xff] %vm417, %v4218
        %4261 = vst.msk [vmem:[#allocation3 + $0x190] sm:$0xff] %vm417, %v4219
        %4262 = vst.msk [vmem:[#allocation3 + $0x1a0] sm:$0xff] %vm417, %v4221
        %4263 = vst.msk [vmem:[#allocation3 + $0x1b0] sm:$0xff] %vm417, %v4222
        %4264 = vst.msk [vmem:[#allocation3 + $0x1c0] sm:$0xff] %vm417, %v4224
        %4265 = vst.msk [vmem:[#allocation3 + $0x1d0] sm:$0xff] %vm417, %v4225
        %4266 = vst.msk [vmem:[#allocation3 + $0x1e0] sm:$0xff] %vm417, %v4227
        %4267 = vst.msk [vmem:[#allocation3 + $0x1f0] sm:$0xff] %vm417, %v4228
        %v4316 = vrot.slane %v4182, 1
        %v4317 = vrot.slane %v4183, 1
        %v4318 = vsel %vm659, %v4316, %v4317
        %v4319 = vrot.slane %v4184, 1
        %v4320 = vsel %vm659, %v4317, %v4319
        %v4321 = vrot.slane %v4185, 1
        %v4322 = vrot.slane %v4186, 1
        %v4323 = vsel %vm659, %v4321, %v4322
        %v4324 = vrot.slane %v4187, 1
        %v4325 = vsel %vm659, %v4322, %v4324
        %v4326 = vrot.slane %v4188, 1
        %v4327 = vrot.slane %v4189, 1
        %v4328 = vsel %vm659, %v4326, %v4327
        %v4329 = vrot.slane %v4190, 1
        %v4330 = vsel %vm659, %v4327, %v4329
        %v4331 = vrot.slane %v4191, 1
        %v4332 = vrot.slane %v4192, 1
        %v4333 = vsel %vm659, %v4331, %v4332
        %v4334 = vrot.slane %v4193, 1
        %v4335 = vsel %vm659, %v4332, %v4334
        %v4336 = vrot.slane %v4194, 1
        %v4337 = vrot.slane %v4195, 1
        %v4338 = vsel %vm659, %v4336, %v4337
        %v4339 = vrot.slane %v4196, 1
        %v4340 = vsel %vm659, %v4337, %v4339
        %v4341 = vrot.slane %v4197, 1
        %v4342 = vrot.slane %v4198, 1
        %v4343 = vsel %vm659, %v4341, %v4342
        %v4344 = vrot.slane %v4199, 1
        %v4345 = vsel %vm659, %v4342, %v4344
        %v4346 = vrot.slane %v4200, 1
        %v4347 = vrot.slane %v4201, 1
        %v4348 = vsel %vm659, %v4346, %v4347
        %v4349 = vrot.slane %v4202, 1
        %v4350 = vsel %vm659, %v4347, %v4349
        %v4351 = vrot.slane %v4203, 1
        %v4352 = vrot.slane %v4204, 1
        %v4353 = vsel %vm659, %v4351, %v4352
        %v4354 = vrot.slane %v4205, 1
        %v4355 = vsel %vm659, %v4352, %v4354
        %v4356 = vrot.slane %v4206, 1
        %v4357 = vrot.slane %v4207, 1
        %v4358 = vsel %vm659, %v4356, %v4357
        %v4359 = vrot.slane %v4208, 1
        %v4360 = vsel %vm659, %v4357, %v4359
        %v4361 = vrot.slane %v4209, 1
        %v4362 = vrot.slane %v4210, 1
        %v4363 = vsel %vm659, %v4361, %v4362
        %v4364 = vrot.slane %v4211, 1
        %v4365 = vsel %vm659, %v4362, %v4364
        %v4366 = vrot.slane %v4212, 1
        %v4367 = vrot.slane %v4213, 1
        %v4368 = vsel %vm659, %v4366, %v4367
        %v4369 = vrot.slane %v4214, 1
        %v4370 = vsel %vm659, %v4367, %v4369
        %v4371 = vrot.slane %v4215, 1
        %v4372 = vrot.slane %v4216, 1
        %v4373 = vsel %vm659, %v4371, %v4372
        %v4374 = vrot.slane %v4217, 1
        %v4375 = vsel %vm659, %v4372, %v4374
        %v4376 = vrot.slane %v4218, 1
        %v4377 = vrot.slane %v4219, 1
        %v4378 = vsel %vm659, %v4376, %v4377
        %v4379 = vrot.slane %v4220, 1
        %v4380 = vsel %vm659, %v4377, %v4379
        %v4381 = vrot.slane %v4221, 1
        %v4382 = vrot.slane %v4222, 1
        %v4383 = vsel %vm659, %v4381, %v4382
        %v4384 = vrot.slane %v4223, 1
        %v4385 = vsel %vm659, %v4382, %v4384
        %v4386 = vrot.slane %v4224, 1
        %v4387 = vrot.slane %v4225, 1
        %v4388 = vsel %vm659, %v4386, %v4387
        %v4389 = vrot.slane %v4226, 1
        %v4390 = vsel %vm659, %v4387, %v4389
        %v4391 = vrot.slane %v4227, 1
        %v4392 = vrot.slane %v4228, 1
        %v4393 = vsel %vm659, %v4391, %v4392
        %v4394 = vrot.slane %v4229, 1
        %v4395 = vsel %vm659, %v4392, %v4394
        %4396 = vrot.lane.b32.xlu0 %v4318, 16
        %v4397 = vpop.permute.xlu0 %4396
        %4398 = vrot.lane.b32.xlu0 %v4320, 16
        %v4399 = vpop.permute.xlu0 %4398
        %4400 = vrot.lane.b32.xlu0 %v4323, 16
        %v4401 = vpop.permute.xlu0 %4400
        %4402 = vrot.lane.b32.xlu0 %v4325, 16
        %v4403 = vpop.permute.xlu0 %4402
        %4404 = vrot.lane.b32.xlu0 %v4328, 16
        %v4405 = vpop.permute.xlu0 %4404
        %4406 = vrot.lane.b32.xlu0 %v4330, 16
        %v4407 = vpop.permute.xlu0 %4406
        %4408 = vrot.lane.b32.xlu0 %v4333, 16
        %v4409 = vpop.permute.xlu0 %4408
        %4410 = vrot.lane.b32.xlu0 %v4335, 16
        %v4411 = vpop.permute.xlu0 %4410
        %4412 = vrot.lane.b32.xlu0 %v4338, 16
        %v4413 = vpop.permute.xlu0 %4412
        %4414 = vrot.lane.b32.xlu0 %v4340, 16
        %v4415 = vpop.permute.xlu0 %4414
        %4416 = vrot.lane.b32.xlu0 %v4343, 16
        %v4417 = vpop.permute.xlu0 %4416
        %4418 = vrot.lane.b32.xlu0 %v4345, 16
        %v4419 = vpop.permute.xlu0 %4418
        %4420 = vrot.lane.b32.xlu0 %v4348, 16
        %v4421 = vpop.permute.xlu0 %4420
        %4422 = vrot.lane.b32.xlu0 %v4350, 16
        %v4423 = vpop.permute.xlu0 %4422
        %4424 = vrot.lane.b32.xlu0 %v4353, 16
        %v4425 = vpop.permute.xlu0 %4424
        %4426 = vrot.lane.b32.xlu0 %v4355, 16
        %v4427 = vpop.permute.xlu0 %4426
        %4428 = vrot.lane.b32.xlu0 %v4358, 16
        %v4429 = vpop.permute.xlu0 %4428
        %4430 = vrot.lane.b32.xlu0 %v4360, 16
        %v4431 = vpop.permute.xlu0 %4430
        %4432 = vrot.lane.b32.xlu0 %v4363, 16
        %v4433 = vpop.permute.xlu0 %4432
        %4434 = vrot.lane.b32.xlu0 %v4365, 16
        %v4435 = vpop.permute.xlu0 %4434
        %4436 = vrot.lane.b32.xlu0 %v4368, 16
        %v4437 = vpop.permute.xlu0 %4436
        %4438 = vrot.lane.b32.xlu0 %v4370, 16
        %v4439 = vpop.permute.xlu0 %4438
        %4440 = vrot.lane.b32.xlu0 %v4373, 16
        %v4441 = vpop.permute.xlu0 %4440
        %4442 = vrot.lane.b32.xlu0 %v4375, 16
        %v4443 = vpop.permute.xlu0 %4442
        %4444 = vrot.lane.b32.xlu0 %v4378, 16
        %v4445 = vpop.permute.xlu0 %4444
        %4446 = vrot.lane.b32.xlu0 %v4380, 16
        %v4447 = vpop.permute.xlu0 %4446
        %4448 = vrot.lane.b32.xlu0 %v4383, 16
        %v4449 = vpop.permute.xlu0 %4448
        %4450 = vrot.lane.b32.xlu0 %v4385, 16
        %v4451 = vpop.permute.xlu0 %4450
        %4452 = vrot.lane.b32.xlu0 %v4388, 16
        %v4453 = vpop.permute.xlu0 %4452
        %4454 = vrot.lane.b32.xlu0 %v4390, 16
        %v4455 = vpop.permute.xlu0 %4454
        %4456 = vrot.lane.b32.xlu0 %v4393, 16
        %v4457 = vpop.permute.xlu0 %4456
        %4458 = vrot.lane.b32.xlu0 %v4395, 16
        %v4459 = vpop.permute.xlu0 %4458
        %4492 = vst.msk [vmem:[#allocation3] sm:$0xff] %vm836, %v4397
        %4493 = vst.msk [vmem:[#allocation3 + $0x10] sm:$0xff] %vm836, %v4399
        %4494 = vst.msk [vmem:[#allocation3 + $0x20] sm:$0xff] %vm836, %v4401
        %4495 = vst.msk [vmem:[#allocation3 + $0x30] sm:$0xff] %vm836, %v4403
        %4496 = vst.msk [vmem:[#allocation3 + $0x40] sm:$0xff] %vm836, %v4405
        %4497 = vst.msk [vmem:[#allocation3 + $0x50] sm:$0xff] %vm836, %v4407
        %4498 = vst.msk [vmem:[#allocation3 + $0x60] sm:$0xff] %vm836, %v4409
        %4499 = vst.msk [vmem:[#allocation3 + $0x70] sm:$0xff] %vm836, %v4411
        %4500 = vst.msk [vmem:[#allocation3 + $0x80] sm:$0xff] %vm836, %v4413
        %4501 = vst.msk [vmem:[#allocation3 + $0x90] sm:$0xff] %vm836, %v4415
        %4502 = vst.msk [vmem:[#allocation3 + $0xa0] sm:$0xff] %vm836, %v4417
        %4503 = vst.msk [vmem:[#allocation3 + $0xb0] sm:$0xff] %vm836, %v4419
        %4504 = vst.msk [vmem:[#allocation3 + $0xc0] sm:$0xff] %vm836, %v4421
        %4505 = vst.msk [vmem:[#allocation3 + $0xd0] sm:$0xff] %vm836, %v4423
        %4506 = vst.msk [vmem:[#allocation3 + $0xe0] sm:$0xff] %vm836, %v4425
        %4507 = vst.msk [vmem:[#allocation3 + $0xf0] sm:$0xff] %vm836, %v4427
        %4508 = vst.msk [vmem:[#allocation3 + $0x100] sm:$0xff] %vm836, %v4429
        %4509 = vst.msk [vmem:[#allocation3 + $0x110] sm:$0xff] %vm836, %v4431
        %4510 = vst.msk [vmem:[#allocation3 + $0x120] sm:$0xff] %vm836, %v4433
        %4511 = vst.msk [vmem:[#allocation3 + $0x130] sm:$0xff] %vm836, %v4435
        %4512 = vst.msk [vmem:[#allocation3 + $0x140] sm:$0xff] %vm836, %v4437
        %4513 = vst.msk [vmem:[#allocation3 + $0x150] sm:$0xff] %vm836, %v4439
        %4514 = vst.msk [vmem:[#allocation3 + $0x160] sm:$0xff] %vm836, %v4441
        %4515 = vst.msk [vmem:[#allocation3 + $0x170] sm:$0xff] %vm836, %v4443
        %4516 = vst.msk [vmem:[#allocation3 + $0x180] sm:$0xff] %vm836, %v4445
        %4517 = vst.msk [vmem:[#allocation3 + $0x190] sm:$0xff] %vm836, %v4447
        %4518 = vst.msk [vmem:[#allocation3 + $0x1a0] sm:$0xff] %vm836, %v4449
        %4519 = vst.msk [vmem:[#allocation3 + $0x1b0] sm:$0xff] %vm836, %v4451
        %4520 = vst.msk [vmem:[#allocation3 + $0x1c0] sm:$0xff] %vm836, %v4453
        %4521 = vst.msk [vmem:[#allocation3 + $0x1d0] sm:$0xff] %vm836, %v4455
        %4522 = vst.msk [vmem:[#allocation3 + $0x1e0] sm:$0xff] %vm836, %v4457
        %4523 = vst.msk [vmem:[#allocation3 + $0x1f0] sm:$0xff] %vm836, %v4459
        %v4524 = vrot.slane %v4182, 2
        %v4525 = vrot.slane %v4183, 2
        %v4526 = vsel %vm869, %v4524, %v4525
        %v4527 = vrot.slane %v4184, 2
        %v4528 = vsel %vm869, %v4525, %v4527
        %v4529 = vrot.slane %v4185, 2
        %v4530 = vrot.slane %v4186, 2
        %v4531 = vsel %vm869, %v4529, %v4530
        %v4532 = vrot.slane %v4187, 2
        %v4533 = vsel %vm869, %v4530, %v4532
        %v4534 = vrot.slane %v4188, 2
        %v4535 = vrot.slane %v4189, 2
        %v4536 = vsel %vm869, %v4534, %v4535
        %v4537 = vrot.slane %v4190, 2
        %v4538 = vsel %vm869, %v4535, %v4537
        %v4539 = vrot.slane %v4191, 2
        %v4540 = vrot.slane %v4192, 2
        %v4541 = vsel %vm869, %v4539, %v4540
        %v4542 = vrot.slane %v4193, 2
        %v4543 = vsel %vm869, %v4540, %v4542
        %v4544 = vrot.slane %v4194, 2
        %v4545 = vrot.slane %v4195, 2
        %v4546 = vsel %vm869, %v4544, %v4545
        %v4547 = vrot.slane %v4196, 2
        %v4548 = vsel %vm869, %v4545, %v4547
        %v4549 = vrot.slane %v4197, 2
        %v4550 = vrot.slane %v4198, 2
        %v4551 = vsel %vm869, %v4549, %v4550
        %v4552 = vrot.slane %v4199, 2
        %v4553 = vsel %vm869, %v4550, %v4552
        %v4554 = vrot.slane %v4200, 2
        %v4555 = vrot.slane %v4201, 2
        %v4556 = vsel %vm869, %v4554, %v4555
        %v4557 = vrot.slane %v4202, 2
        %v4558 = vsel %vm869, %v4555, %v4557
        %v4559 = vrot.slane %v4203, 2
        %v4560 = vrot.slane %v4204, 2
        %v4561 = vsel %vm869, %v4559, %v4560
        %v4562 = vrot.slane %v4205, 2
        %v4563 = vsel %vm869, %v4560, %v4562
        %v4564 = vrot.slane %v4206, 2
        %v4565 = vrot.slane %v4207, 2
        %v4566 = vsel %vm869, %v4564, %v4565
        %v4567 = vrot.slane %v4208, 2
        %v4568 = vsel %vm869, %v4565, %v4567
        %v4569 = vrot.slane %v4209, 2
        %v4570 = vrot.slane %v4210, 2
        %v4571 = vsel %vm869, %v4569, %v4570
        %v4572 = vrot.slane %v4211, 2
        %v4573 = vsel %vm869, %v4570, %v4572
        %v4574 = vrot.slane %v4212, 2
        %v4575 = vrot.slane %v4213, 2
        %v4576 = vsel %vm869, %v4574, %v4575
        %v4577 = vrot.slane %v4214, 2
        %v4578 = vsel %vm869, %v4575, %v4577
        %v4579 = vrot.slane %v4215, 2
        %v4580 = vrot.slane %v4216, 2
        %v4581 = vsel %vm869, %v4579, %v4580
        %v4582 = vrot.slane %v4217, 2
        %v4583 = vsel %vm869, %v4580, %v4582
        %v4584 = vrot.slane %v4218, 2
        %v4585 = vrot.slane %v4219, 2
        %v4586 = vsel %vm869, %v4584, %v4585
        %v4587 = vrot.slane %v4220, 2
        %v4588 = vsel %vm869, %v4585, %v4587
        %v4589 = vrot.slane %v4221, 2
        %v4590 = vrot.slane %v4222, 2
        %v4591 = vsel %vm869, %v4589, %v4590
        %v4592 = vrot.slane %v4223, 2
        %v4593 = vsel %vm869, %v4590, %v4592
        %v4594 = vrot.slane %v4224, 2
        %v4595 = vrot.slane %v4225, 2
        %v4596 = vsel %vm869, %v4594, %v4595
        %v4597 = vrot.slane %v4226, 2
        %v4598 = vsel %vm869, %v4595, %v4597
        %v4599 = vrot.slane %v4227, 2
        %v4600 = vrot.slane %v4228, 2
        %v4601 = vsel %vm869, %v4599, %v4600
        %v4602 = vrot.slane %v4229, 2
        %v4603 = vsel %vm869, %v4600, %v4602
        %4604 = vrot.lane.b32.xlu0 %v4526, 32
        %v4605 = vpop.permute.xlu0 %4604
        %4606 = vrot.lane.b32.xlu0 %v4528, 32
        %v4607 = vpop.permute.xlu0 %4606
        %4608 = vrot.lane.b32.xlu0 %v4531, 32
        %v4609 = vpop.permute.xlu0 %4608
        %4610 = vrot.lane.b32.xlu0 %v4533, 32
        %v4611 = vpop.permute.xlu0 %4610
        %4612 = vrot.lane.b32.xlu0 %v4536, 32
        %v4613 = vpop.permute.xlu0 %4612
        %4614 = vrot.lane.b32.xlu0 %v4538, 32
        %v4615 = vpop.permute.xlu0 %4614
        %4616 = vrot.lane.b32.xlu0 %v4541, 32
        %v4617 = vpop.permute.xlu0 %4616
        %4618 = vrot.lane.b32.xlu0 %v4543, 32
        %v4619 = vpop.permute.xlu0 %4618
        %4620 = vrot.lane.b32.xlu0 %v4546, 32
        %v4621 = vpop.permute.xlu0 %4620
        %4622 = vrot.lane.b32.xlu0 %v4548, 32
        %v4623 = vpop.permute.xlu0 %4622
        %4624 = vrot.lane.b32.xlu0 %v4551, 32
        %v4625 = vpop.permute.xlu0 %4624
        %4626 = vrot.lane.b32.xlu0 %v4553, 32
        %v4627 = vpop.permute.xlu0 %4626
        %4628 = vrot.lane.b32.xlu0 %v4556, 32
        %v4629 = vpop.permute.xlu0 %4628
        %4630 = vrot.lane.b32.xlu0 %v4558, 32
        %v4631 = vpop.permute.xlu0 %4630
        %4632 = vrot.lane.b32.xlu0 %v4561, 32
        %v4633 = vpop.permute.xlu0 %4632
        %4634 = vrot.lane.b32.xlu0 %v4563, 32
        %v4635 = vpop.permute.xlu0 %4634
        %4636 = vrot.lane.b32.xlu0 %v4566, 32
        %v4637 = vpop.permute.xlu0 %4636
        %4638 = vrot.lane.b32.xlu0 %v4568, 32
        %v4639 = vpop.permute.xlu0 %4638
        %4640 = vrot.lane.b32.xlu0 %v4571, 32
        %v4641 = vpop.permute.xlu0 %4640
        %4642 = vrot.lane.b32.xlu0 %v4573, 32
        %v4643 = vpop.permute.xlu0 %4642
        %4644 = vrot.lane.b32.xlu0 %v4576, 32
        %v4645 = vpop.permute.xlu0 %4644
        %4646 = vrot.lane.b32.xlu0 %v4578, 32
        %v4647 = vpop.permute.xlu0 %4646
        %4648 = vrot.lane.b32.xlu0 %v4581, 32
        %v4649 = vpop.permute.xlu0 %4648
        %4650 = vrot.lane.b32.xlu0 %v4583, 32
        %v4651 = vpop.permute.xlu0 %4650
        %4652 = vrot.lane.b32.xlu0 %v4586, 32
        %v4653 = vpop.permute.xlu0 %4652
        %4654 = vrot.lane.b32.xlu0 %v4588, 32
        %v4655 = vpop.permute.xlu0 %4654
        %4656 = vrot.lane.b32.xlu0 %v4591, 32
        %v4657 = vpop.permute.xlu0 %4656
        %4658 = vrot.lane.b32.xlu0 %v4593, 32
        %v4659 = vpop.permute.xlu0 %4658
        %4660 = vrot.lane.b32.xlu0 %v4596, 32
        %v4661 = vpop.permute.xlu0 %4660
        %4662 = vrot.lane.b32.xlu0 %v4598, 32
        %v4663 = vpop.permute.xlu0 %4662
        %4664 = vrot.lane.b32.xlu0 %v4601, 32
        %v4665 = vpop.permute.xlu0 %4664
        %4666 = vrot.lane.b32.xlu0 %v4603, 32
        %v4667 = vpop.permute.xlu0 %4666
        %4700 = vst.msk [vmem:[#allocation3] sm:$0xff] %vm1046, %v4605
        %4701 = vst.msk [vmem:[#allocation3 + $0x10] sm:$0xff] %vm1046, %v4607
        %4702 = vst.msk [vmem:[#allocation3 + $0x20] sm:$0xff] %vm1046, %v4609
        %4703 = vst.msk [vmem:[#allocation3 + $0x30] sm:$0xff] %vm1046, %v4611
        %4704 = vst.msk [vmem:[#allocation3 + $0x40] sm:$0xff] %vm1046, %v4613
        %4705 = vst.msk [vmem:[#allocation3 + $0x50] sm:$0xff] %vm1046, %v4615
        %4706 = vst.msk [vmem:[#allocation3 + $0x60] sm:$0xff] %vm1046, %v4617
        %4707 = vst.msk [vmem:[#allocation3 + $0x70] sm:$0xff] %vm1046, %v4619
        %4708 = vst.msk [vmem:[#allocation3 + $0x80] sm:$0xff] %vm1046, %v4621
        %4709 = vst.msk [vmem:[#allocation3 + $0x90] sm:$0xff] %vm1046, %v4623
        %4710 = vst.msk [vmem:[#allocation3 + $0xa0] sm:$0xff] %vm1046, %v4625
        %4711 = vst.msk [vmem:[#allocation3 + $0xb0] sm:$0xff] %vm1046, %v4627
        %4712 = vst.msk [vmem:[#allocation3 + $0xc0] sm:$0xff] %vm1046, %v4629
        %4713 = vst.msk [vmem:[#allocation3 + $0xd0] sm:$0xff] %vm1046, %v4631
        %4714 = vst.msk [vmem:[#allocation3 + $0xe0] sm:$0xff] %vm1046, %v4633
        %4715 = vst.msk [vmem:[#allocation3 + $0xf0] sm:$0xff] %vm1046, %v4635
        %4716 = vst.msk [vmem:[#allocation3 + $0x100] sm:$0xff] %vm1046, %v4637
        %4717 = vst.msk [vmem:[#allocation3 + $0x110] sm:$0xff] %vm1046, %v4639
        %4718 = vst.msk [vmem:[#allocation3 + $0x120] sm:$0xff] %vm1046, %v4641
        %4719 = vst.msk [vmem:[#allocation3 + $0x130] sm:$0xff] %vm1046, %v4643
        %4720 = vst.msk [vmem:[#allocation3 + $0x140] sm:$0xff] %vm1046, %v4645
        %4721 = vst.msk [vmem:[#allocation3 + $0x150] sm:$0xff] %vm1046, %v4647
        %4722 = vst.msk [vmem:[#allocation3 + $0x160] sm:$0xff] %vm1046, %v4649
        %4723 = vst.msk [vmem:[#allocation3 + $0x170] sm:$0xff] %vm1046, %v4651
        %4724 = vst.msk [vmem:[#allocation3 + $0x180] sm:$0xff] %vm1046, %v4653
        %4725 = vst.msk [vmem:[#allocation3 + $0x190] sm:$0xff] %vm1046, %v4655
        %4726 = vst.msk [vmem:[#allocation3 + $0x1a0] sm:$0xff] %vm1046, %v4657
        %4727 = vst.msk [vmem:[#allocation3 + $0x1b0] sm:$0xff] %vm1046, %v4659
        %4728 = vst.msk [vmem:[#allocation3 + $0x1c0] sm:$0xff] %vm1046, %v4661
        %4729 = vst.msk [vmem:[#allocation3 + $0x1d0] sm:$0xff] %vm1046, %v4663
        %4730 = vst.msk [vmem:[#allocation3 + $0x1e0] sm:$0xff] %vm1046, %v4665
        %4731 = vst.msk [vmem:[#allocation3 + $0x1f0] sm:$0xff] %vm1046, %v4667
        %4734 = vrot.lane.b32.xlu0 %v4185, 48
        %v4735 = vpop.permute.xlu0 %4734
        %4736 = vrot.lane.b32.xlu0 %v4186, 48
        %v4737 = vpop.permute.xlu0 %4736
        %4738 = vrot.lane.b32.xlu0 %v4188, 48
        %v4739 = vpop.permute.xlu0 %4738
        %4740 = vrot.lane.b32.xlu0 %v4189, 48
        %v4741 = vpop.permute.xlu0 %4740
        %4742 = vrot.lane.b32.xlu0 %v4191, 48
        %v4743 = vpop.permute.xlu0 %4742
        %4744 = vrot.lane.b32.xlu0 %v4192, 48
        %v4745 = vpop.permute.xlu0 %4744
        %4746 = vrot.lane.b32.xlu0 %v4194, 48
        %v4747 = vpop.permute.xlu0 %4746
        %4748 = vrot.lane.b32.xlu0 %v4195, 48
        %v4749 = vpop.permute.xlu0 %4748
        %4750 = vrot.lane.b32.xlu0 %v4197, 48
        %v4751 = vpop.permute.xlu0 %4750
        %4752 = vrot.lane.b32.xlu0 %v4198, 48
        %v4753 = vpop.permute.xlu0 %4752
        %4754 = vrot.lane.b32.xlu0 %v4200, 48
        %v4755 = vpop.permute.xlu0 %4754
        %4756 = vrot.lane.b32.xlu0 %v4201, 48
        %v4757 = vpop.permute.xlu0 %4756
        %4758 = vrot.lane.b32.xlu0 %v4203, 48
        %v4759 = vpop.permute.xlu0 %4758
        %4760 = vrot.lane.b32.xlu0 %v4204, 48
        %v4761 = vpop.permute.xlu0 %4760
        %4762 = vrot.lane.b32.xlu0 %v4206, 48
        %v4763 = vpop.permute.xlu0 %4762
        %4764 = vrot.lane.b32.xlu0 %v4207, 48
        %v4765 = vpop.permute.xlu0 %4764
        %4766 = vrot.lane.b32.xlu0 %v4209, 48
        %v4767 = vpop.permute.xlu0 %4766
        %4768 = vrot.lane.b32.xlu0 %v4210, 48
        %v4769 = vpop.permute.xlu0 %4768
        %4770 = vrot.lane.b32.xlu0 %v4212, 48
        %v4771 = vpop.permute.xlu0 %4770
        %4772 = vrot.lane.b32.xlu0 %v4213, 48
        %v4773 = vpop.permute.xlu0 %4772
        %4774 = vrot.lane.b32.xlu0 %v4215, 48
        %v4775 = vpop.permute.xlu0 %4774
        %4776 = vrot.lane.b32.xlu0 %v4216, 48
        %v4777 = vpop.permute.xlu0 %4776
        %4778 = vrot.lane.b32.xlu0 %v4218, 48
        %v4779 = vpop.permute.xlu0 %4778
        %4780 = vrot.lane.b32.xlu0 %v4219, 48
        %v4781 = vpop.permute.xlu0 %4780
        %4782 = vrot.lane.b32.xlu0 %v4221, 48
        %v4783 = vpop.permute.xlu0 %4782
        %4784 = vrot.lane.b32.xlu0 %v4222, 48
        %v4785 = vpop.permute.xlu0 %4784
        %4786 = vrot.lane.b32.xlu0 %v4224, 48
        %v4787 = vpop.permute.xlu0 %4786
        %4788 = vrot.lane.b32.xlu0 %v4225, 48
        %v4789 = vpop.permute.xlu0 %4788
        %4790 = vrot.lane.b32.xlu0 %v4227, 48
        %v4791 = vpop.permute.xlu0 %4790
        %4792 = vrot.lane.b32.xlu0 %v4228, 48
        %v4793 = vpop.permute.xlu0 %4792
        %4794 = vrot.lane.b32.xlu0 %v4230, 48
        %v4795 = vpop.permute.xlu0 %4794
        %4796 = vrot.lane.b32.xlu0 %v4231, 48
        %v4797 = vpop.permute.xlu0 %4796
        %4830 = vst.msk [vmem:[#allocation3] sm:$0xff] %vm1177, %v4735
        %4831 = vst.msk [vmem:[#allocation3 + $0x10] sm:$0xff] %vm1177, %v4737
        %4832 = vst.msk [vmem:[#allocation3 + $0x20] sm:$0xff] %vm1177, %v4739
        %4833 = vst.msk [vmem:[#allocation3 + $0x30] sm:$0xff] %vm1177, %v4741
        %4834 = vst.msk [vmem:[#allocation3 + $0x40] sm:$0xff] %vm1177, %v4743
        %4835 = vst.msk [vmem:[#allocation3 + $0x50] sm:$0xff] %vm1177, %v4745
        %4836 = vst.msk [vmem:[#allocation3 + $0x60] sm:$0xff] %vm1177, %v4747
        %4837 = vst.msk [vmem:[#allocation3 + $0x70] sm:$0xff] %vm1177, %v4749
        %4838 = vst.msk [vmem:[#allocation3 + $0x80] sm:$0xff] %vm1177, %v4751
        %4839 = vst.msk [vmem:[#allocation3 + $0x90] sm:$0xff] %vm1177, %v4753
        %4840 = vst.msk [vmem:[#allocation3 + $0xa0] sm:$0xff] %vm1177, %v4755
        %4841 = vst.msk [vmem:[#allocation3 + $0xb0] sm:$0xff] %vm1177, %v4757
        %4842 = vst.msk [vmem:[#allocation3 + $0xc0] sm:$0xff] %vm1177, %v4759
        %4843 = vst.msk [vmem:[#allocation3 + $0xd0] sm:$0xff] %vm1177, %v4761
        %4844 = vst.msk [vmem:[#allocation3 + $0xe0] sm:$0xff] %vm1177, %v4763
        %4845 = vst.msk [vmem:[#allocation3 + $0xf0] sm:$0xff] %vm1177, %v4765
        %4846 = vst.msk [vmem:[#allocation3 + $0x100] sm:$0xff] %vm1177, %v4767
        %4847 = vst.msk [vmem:[#allocation3 + $0x110] sm:$0xff] %vm1177, %v4769
        %4848 = vst.msk [vmem:[#allocation3 + $0x120] sm:$0xff] %vm1177, %v4771
        %4849 = vst.msk [vmem:[#allocation3 + $0x130] sm:$0xff] %vm1177, %v4773
        %4850 = vst.msk [vmem:[#allocation3 + $0x140] sm:$0xff] %vm1177, %v4775
        %4851 = vst.msk [vmem:[#allocation3 + $0x150] sm:$0xff] %vm1177, %v4777
        %4852 = vst.msk [vmem:[#allocation3 + $0x160] sm:$0xff] %vm1177, %v4779
        %4853 = vst.msk [vmem:[#allocation3 + $0x170] sm:$0xff] %vm1177, %v4781
        %4854 = vst.msk [vmem:[#allocation3 + $0x180] sm:$0xff] %vm1177, %v4783
        %4855 = vst.msk [vmem:[#allocation3 + $0x190] sm:$0xff] %vm1177, %v4785
        %4856 = vst.msk [vmem:[#allocation3 + $0x1a0] sm:$0xff] %vm1177, %v4787
        %4857 = vst.msk [vmem:[#allocation3 + $0x1b0] sm:$0xff] %vm1177, %v4789
        %4858 = vst.msk [vmem:[#allocation3 + $0x1c0] sm:$0xff] %vm1177, %v4791
        %4859 = vst.msk [vmem:[#allocation3 + $0x1d0] sm:$0xff] %vm1177, %v4793
        %4860 = vst.msk [vmem:[#allocation3 + $0x1e0] sm:$0xff] %vm1177, %v4795
        %4861 = vst.msk [vmem:[#allocation3 + $0x1f0] sm:$0xff] %vm1177, %v4797
        %v4863 = vrot.slane %v4230, 1
        %v4864 = vrot.slane %v4231, 1
        %v4865 = vsel %vm659, %v4863, %v4864
        %v4866 = vrot.slane %v4232, 1
        %v4867 = vsel %vm659, %v4864, %v4866
        %4868 = vrot.lane.b32.xlu0 %v4323, 64
        %v4869 = vpop.permute.xlu0 %4868
        %4870 = vrot.lane.b32.xlu0 %v4325, 64
        %v4871 = vpop.permute.xlu0 %4870
        %4872 = vrot.lane.b32.xlu0 %v4328, 64
        %v4873 = vpop.permute.xlu0 %4872
        %4874 = vrot.lane.b32.xlu0 %v4330, 64
        %v4875 = vpop.permute.xlu0 %4874
        %4876 = vrot.lane.b32.xlu0 %v4333, 64
        %v4877 = vpop.permute.xlu0 %4876
        %4878 = vrot.lane.b32.xlu0 %v4335, 64
        %v4879 = vpop.permute.xlu0 %4878
        %4880 = vrot.lane.b32.xlu0 %v4338, 64
        %v4881 = vpop.permute.xlu0 %4880
        %4882 = vrot.lane.b32.xlu0 %v4340, 64
        %v4883 = vpop.permute.xlu0 %4882
        %4884 = vrot.lane.b32.xlu0 %v4343, 64
        %v4885 = vpop.permute.xlu0 %4884
        %4886 = vrot.lane.b32.xlu0 %v4345, 64
        %v4887 = vpop.permute.xlu0 %4886
        %4888 = vrot.lane.b32.xlu0 %v4348, 64
        %v4889 = vpop.permute.xlu0 %4888
        %4890 = vrot.lane.b32.xlu0 %v4350, 64
        %v4891 = vpop.permute.xlu0 %4890
        %4892 = vrot.lane.b32.xlu0 %v4353, 64
        %v4893 = vpop.permute.xlu0 %4892
        %4894 = vrot.lane.b32.xlu0 %v4355, 64
        %v4895 = vpop.permute.xlu0 %4894
        %4896 = vrot.lane.b32.xlu0 %v4358, 64
        %v4897 = vpop.permute.xlu0 %4896
        %4898 = vrot.lane.b32.xlu0 %v4360, 64
        %v4899 = vpop.permute.xlu0 %4898
        %4900 = vrot.lane.b32.xlu0 %v4363, 64
        %v4901 = vpop.permute.xlu0 %4900
        %4902 = vrot.lane.b32.xlu0 %v4365, 64
        %v4903 = vpop.permute.xlu0 %4902
        %4904 = vrot.lane.b32.xlu0 %v4368, 64
        %v4905 = vpop.permute.xlu0 %4904
        %4906 = vrot.lane.b32.xlu0 %v4370, 64
        %v4907 = vpop.permute.xlu0 %4906
        %4908 = vrot.lane.b32.xlu0 %v4373, 64
        %v4909 = vpop.permute.xlu0 %4908
        %4910 = vrot.lane.b32.xlu0 %v4375, 64
        %v4911 = vpop.permute.xlu0 %4910
        %4912 = vrot.lane.b32.xlu0 %v4378, 64
        %v4913 = vpop.permute.xlu0 %4912
        %4914 = vrot.lane.b32.xlu0 %v4380, 64
        %v4915 = vpop.permute.xlu0 %4914
        %4916 = vrot.lane.b32.xlu0 %v4383, 64
        %v4917 = vpop.permute.xlu0 %4916
        %4918 = vrot.lane.b32.xlu0 %v4385, 64
        %v4919 = vpop.permute.xlu0 %4918
        %4920 = vrot.lane.b32.xlu0 %v4388, 64
        %v4921 = vpop.permute.xlu0 %4920
        %4922 = vrot.lane.b32.xlu0 %v4390, 64
        %v4923 = vpop.permute.xlu0 %4922
        %4924 = vrot.lane.b32.xlu0 %v4393, 64
        %v4925 = vpop.permute.xlu0 %4924
        %4926 = vrot.lane.b32.xlu0 %v4395, 64
        %v4927 = vpop.permute.xlu0 %4926
        %4928 = vrot.lane.b32.xlu0 %v4865, 64
        %v4929 = vpop.permute.xlu0 %4928
        %4930 = vrot.lane.b32.xlu0 %v4867, 64
        %v4931 = vpop.permute.xlu0 %4930
        %4964 = vst.msk [vmem:[#allocation3] sm:$0xff] %vm1312, %v4869
        %4965 = vst.msk [vmem:[#allocation3 + $0x10] sm:$0xff] %vm1312, %v4871
        %4966 = vst.msk [vmem:[#allocation3 + $0x20] sm:$0xff] %vm1312, %v4873
        %4967 = vst.msk [vmem:[#allocation3 + $0x30] sm:$0xff] %vm1312, %v4875
        %4968 = vst.msk [vmem:[#allocation3 + $0x40] sm:$0xff] %vm1312, %v4877
        %4969 = vst.msk [vmem:[#allocation3 + $0x50] sm:$0xff] %vm1312, %v4879
        %4970 = vst.msk [vmem:[#allocation3 + $0x60] sm:$0xff] %vm1312, %v4881
        %4971 = vst.msk [vmem:[#allocation3 + $0x70] sm:$0xff] %vm1312, %v4883
        %4972 = vst.msk [vmem:[#allocation3 + $0x80] sm:$0xff] %vm1312, %v4885
        %4973 = vst.msk [vmem:[#allocation3 + $0x90] sm:$0xff] %vm1312, %v4887
        %4974 = vst.msk [vmem:[#allocation3 + $0xa0] sm:$0xff] %vm1312, %v4889
        %4975 = vst.msk [vmem:[#allocation3 + $0xb0] sm:$0xff] %vm1312, %v4891
        %4976 = vst.msk [vmem:[#allocation3 + $0xc0] sm:$0xff] %vm1312, %v4893
        %4977 = vst.msk [vmem:[#allocation3 + $0xd0] sm:$0xff] %vm1312, %v4895
        %4978 = vst.msk [vmem:[#allocation3 + $0xe0] sm:$0xff] %vm1312, %v4897
        %4979 = vst.msk [vmem:[#allocation3 + $0xf0] sm:$0xff] %vm1312, %v4899
        %4980 = vst.msk [vmem:[#allocation3 + $0x100] sm:$0xff] %vm1312, %v4901
        %4981 = vst.msk [vmem:[#allocation3 + $0x110] sm:$0xff] %vm1312, %v4903
        %4982 = vst.msk [vmem:[#allocation3 + $0x120] sm:$0xff] %vm1312, %v4905
        %4983 = vst.msk [vmem:[#allocation3 + $0x130] sm:$0xff] %vm1312, %v4907
        %4984 = vst.msk [vmem:[#allocation3 + $0x140] sm:$0xff] %vm1312, %v4909
        %4985 = vst.msk [vmem:[#allocation3 + $0x150] sm:$0xff] %vm1312, %v4911
        %4986 = vst.msk [vmem:[#allocation3 + $0x160] sm:$0xff] %vm1312, %v4913
        %4987 = vst.msk [vmem:[#allocation3 + $0x170] sm:$0xff] %vm1312, %v4915
        %4988 = vst.msk [vmem:[#allocation3 + $0x180] sm:$0xff] %vm1312, %v4917
        %4989 = vst.msk [vmem:[#allocation3 + $0x190] sm:$0xff] %vm1312, %v4919
        %4990 = vst.msk [vmem:[#allocation3 + $0x1a0] sm:$0xff] %vm1312, %v4921
        %4991 = vst.msk [vmem:[#allocation3 + $0x1b0] sm:$0xff] %vm1312, %v4923
        %4992 = vst.msk [vmem:[#allocation3 + $0x1c0] sm:$0xff] %vm1312, %v4925
        %4993 = vst.msk [vmem:[#allocation3 + $0x1d0] sm:$0xff] %vm1312, %v4927
        %4994 = vst.msk [vmem:[#allocation3 + $0x1e0] sm:$0xff] %vm1312, %v4929
        %4995 = vst.msk [vmem:[#allocation3 + $0x1f0] sm:$0xff] %vm1312, %v4931
        %v4996 = vrot.slane %v4230, 2
        %v4997 = vrot.slane %v4231, 2
        %v4998 = vsel %vm869, %v4996, %v4997
        %v4999 = vrot.slane %v4232, 2
        %v5000 = vsel %vm869, %v4997, %v4999
        %5001 = vrot.lane.b32.xlu0 %v4531, 80
        %v5002 = vpop.permute.xlu0 %5001
        %5003 = vrot.lane.b32.xlu0 %v4533, 80
        %v5004 = vpop.permute.xlu0 %5003
        %5005 = vrot.lane.b32.xlu0 %v4536, 80
        %v5006 = vpop.permute.xlu0 %5005
        %5007 = vrot.lane.b32.xlu0 %v4538, 80
        %v5008 = vpop.permute.xlu0 %5007
        %5009 = vrot.lane.b32.xlu0 %v4541, 80
        %v5010 = vpop.permute.xlu0 %5009
        %5011 = vrot.lane.b32.xlu0 %v4543, 80
        %v5012 = vpop.permute.xlu0 %5011
        %5013 = vrot.lane.b32.xlu0 %v4546, 80
        %v5014 = vpop.permute.xlu0 %5013
        %5015 = vrot.lane.b32.xlu0 %v4548, 80
        %v5016 = vpop.permute.xlu0 %5015
        %5017 = vrot.lane.b32.xlu0 %v4551, 80
        %v5018 = vpop.permute.xlu0 %5017
        %5019 = vrot.lane.b32.xlu0 %v4553, 80
        %v5020 = vpop.permute.xlu0 %5019
        %5021 = vrot.lane.b32.xlu0 %v4556, 80
        %v5022 = vpop.permute.xlu0 %5021
        %5023 = vrot.lane.b32.xlu0 %v4558, 80
        %v5024 = vpop.permute.xlu0 %5023
        %5025 = vrot.lane.b32.xlu0 %v4561, 80
        %v5026 = vpop.permute.xlu0 %5025
        %5027 = vrot.lane.b32.xlu0 %v4563, 80
        %v5028 = vpop.permute.xlu0 %5027
        %5029 = vrot.lane.b32.xlu0 %v4566, 80
        %v5030 = vpop.permute.xlu0 %5029
        %5031 = vrot.lane.b32.xlu0 %v4568, 80
        %v5032 = vpop.permute.xlu0 %5031
        %5033 = vrot.lane.b32.xlu0 %v4571, 80
        %v5034 = vpop.permute.xlu0 %5033
        %5035 = vrot.lane.b32.xlu0 %v4573, 80
        %v5036 = vpop.permute.xlu0 %5035
        %5037 = vrot.lane.b32.xlu0 %v4576, 80
        %v5038 = vpop.permute.xlu0 %5037
        %5039 = vrot.lane.b32.xlu0 %v4578, 80
        %v5040 = vpop.permute.xlu0 %5039
        %5041 = vrot.lane.b32.xlu0 %v4581, 80
        %v5042 = vpop.permute.xlu0 %5041
        %5043 = vrot.lane.b32.xlu0 %v4583, 80
        %v5044 = vpop.permute.xlu0 %5043
        %5045 = vrot.lane.b32.xlu0 %v4586, 80
        %v5046 = vpop.permute.xlu0 %5045
        %5047 = vrot.lane.b32.xlu0 %v4588, 80
        %v5048 = vpop.permute.xlu0 %5047
        %5049 = vrot.lane.b32.xlu0 %v4591, 80
        %v5050 = vpop.permute.xlu0 %5049
        %5051 = vrot.lane.b32.xlu0 %v4593, 80
        %v5052 = vpop.permute.xlu0 %5051
        %5053 = vrot.lane.b32.xlu0 %v4596, 80
        %v5054 = vpop.permute.xlu0 %5053
        %5055 = vrot.lane.b32.xlu0 %v4598, 80
        %v5056 = vpop.permute.xlu0 %5055
        %5057 = vrot.lane.b32.xlu0 %v4601, 80
        %v5058 = vpop.permute.xlu0 %5057
        %5059 = vrot.lane.b32.xlu0 %v4603, 80
        %v5060 = vpop.permute.xlu0 %5059
        %5061 = vrot.lane.b32.xlu0 %v4998, 80
        %v5062 = vpop.permute.xlu0 %5061
        %5063 = vrot.lane.b32.xlu0 %v5000, 80
        %v5064 = vpop.permute.xlu0 %5063
        %5097 = vst.msk [vmem:[#allocation3] sm:$0xff] %vm1446, %v5002
        %5098 = vst.msk [vmem:[#allocation3 + $0x10] sm:$0xff] %vm1446, %v5004
        %5099 = vst.msk [vmem:[#allocation3 + $0x20] sm:$0xff] %vm1446, %v5006
        %5100 = vst.msk [vmem:[#allocation3 + $0x30] sm:$0xff] %vm1446, %v5008
        %5101 = vst.msk [vmem:[#allocation3 + $0x40] sm:$0xff] %vm1446, %v5010
        %5102 = vst.msk [vmem:[#allocation3 + $0x50] sm:$0xff] %vm1446, %v5012
        %5103 = vst.msk [vmem:[#allocation3 + $0x60] sm:$0xff] %vm1446, %v5014
        %5104 = vst.msk [vmem:[#allocation3 + $0x70] sm:$0xff] %vm1446, %v5016
        %5105 = vst.msk [vmem:[#allocation3 + $0x80] sm:$0xff] %vm1446, %v5018
        %5106 = vst.msk [vmem:[#allocation3 + $0x90] sm:$0xff] %vm1446, %v5020
        %5107 = vst.msk [vmem:[#allocation3 + $0xa0] sm:$0xff] %vm1446, %v5022
        %5108 = vst.msk [vmem:[#allocation3 + $0xb0] sm:$0xff] %vm1446, %v5024
        %5109 = vst.msk [vmem:[#allocation3 + $0xc0] sm:$0xff] %vm1446, %v5026
        %5110 = vst.msk [vmem:[#allocation3 + $0xd0] sm:$0xff] %vm1446, %v5028
        %5111 = vst.msk [vmem:[#allocation3 + $0xe0] sm:$0xff] %vm1446, %v5030
        %5112 = vst.msk [vmem:[#allocation3 + $0xf0] sm:$0xff] %vm1446, %v5032
        %5113 = vst.msk [vmem:[#allocation3 + $0x100] sm:$0xff] %vm1446, %v5034
        %5114 = vst.msk [vmem:[#allocation3 + $0x110] sm:$0xff] %vm1446, %v5036
        %5115 = vst.msk [vmem:[#allocation3 + $0x120] sm:$0xff] %vm1446, %v5038
        %5116 = vst.msk [vmem:[#allocation3 + $0x130] sm:$0xff] %vm1446, %v5040
        %5117 = vst.msk [vmem:[#allocation3 + $0x140] sm:$0xff] %vm1446, %v5042
        %5118 = vst.msk [vmem:[#allocation3 + $0x150] sm:$0xff] %vm1446, %v5044
        %5119 = vst.msk [vmem:[#allocation3 + $0x160] sm:$0xff] %vm1446, %v5046
        %5120 = vst.msk [vmem:[#allocation3 + $0x170] sm:$0xff] %vm1446, %v5048
        %5121 = vst.msk [vmem:[#allocation3 + $0x180] sm:$0xff] %vm1446, %v5050
        %5122 = vst.msk [vmem:[#allocation3 + $0x190] sm:$0xff] %vm1446, %v5052
        %5123 = vst.msk [vmem:[#allocation3 + $0x1a0] sm:$0xff] %vm1446, %v5054
        %5124 = vst.msk [vmem:[#allocation3 + $0x1b0] sm:$0xff] %vm1446, %v5056
        %5125 = vst.msk [vmem:[#allocation3 + $0x1c0] sm:$0xff] %vm1446, %v5058
        %5126 = vst.msk [vmem:[#allocation3 + $0x1d0] sm:$0xff] %vm1446, %v5060
        %5127 = vst.msk [vmem:[#allocation3 + $0x1e0] sm:$0xff] %vm1446, %v5062
        %5128 = vst.msk [vmem:[#allocation3 + $0x1f0] sm:$0xff] %vm1446, %v5064
        %5131 = vrot.lane.b32.xlu0 %v4188, 96
        %v5132 = vpop.permute.xlu0 %5131
        %5133 = vrot.lane.b32.xlu0 %v4189, 96
        %v5134 = vpop.permute.xlu0 %5133
        %5135 = vrot.lane.b32.xlu0 %v4191, 96
        %v5136 = vpop.permute.xlu0 %5135
        %5137 = vrot.lane.b32.xlu0 %v4192, 96
        %v5138 = vpop.permute.xlu0 %5137
        %5139 = vrot.lane.b32.xlu0 %v4194, 96
        %v5140 = vpop.permute.xlu0 %5139
        %5141 = vrot.lane.b32.xlu0 %v4195, 96
        %v5142 = vpop.permute.xlu0 %5141
        %5143 = vrot.lane.b32.xlu0 %v4197, 96
        %v5144 = vpop.permute.xlu0 %5143
        %5145 = vrot.lane.b32.xlu0 %v4198, 96
        %v5146 = vpop.permute.xlu0 %5145
        %5147 = vrot.lane.b32.xlu0 %v4200, 96
        %v5148 = vpop.permute.xlu0 %5147
        %5149 = vrot.lane.b32.xlu0 %v4201, 96
        %v5150 = vpop.permute.xlu0 %5149
        %5151 = vrot.lane.b32.xlu0 %v4203, 96
        %v5152 = vpop.permute.xlu0 %5151
        %5153 = vrot.lane.b32.xlu0 %v4204, 96
        %v5154 = vpop.permute.xlu0 %5153
        %5155 = vrot.lane.b32.xlu0 %v4206, 96
        %v5156 = vpop.permute.xlu0 %5155
        %5157 = vrot.lane.b32.xlu0 %v4207, 96
        %v5158 = vpop.permute.xlu0 %5157
        %5159 = vrot.lane.b32.xlu0 %v4209, 96
        %v5160 = vpop.permute.xlu0 %5159
        %5161 = vrot.lane.b32.xlu0 %v4210, 96
        %v5162 = vpop.permute.xlu0 %5161
        %5163 = vrot.lane.b32.xlu0 %v4212, 96
        %v5164 = vpop.permute.xlu0 %5163
        %5165 = vrot.lane.b32.xlu0 %v4213, 96
        %v5166 = vpop.permute.xlu0 %5165
        %5167 = vrot.lane.b32.xlu0 %v4215, 96
        %v5168 = vpop.permute.xlu0 %5167
        %5169 = vrot.lane.b32.xlu0 %v4216, 96
        %v5170 = vpop.permute.xlu0 %5169
        %5171 = vrot.lane.b32.xlu0 %v4218, 96
        %v5172 = vpop.permute.xlu0 %5171
        %5173 = vrot.lane.b32.xlu0 %v4219, 96
        %v5174 = vpop.permute.xlu0 %5173
        %5175 = vrot.lane.b32.xlu0 %v4221, 96
        %v5176 = vpop.permute.xlu0 %5175
        %5177 = vrot.lane.b32.xlu0 %v4222, 96
        %v5178 = vpop.permute.xlu0 %5177
        %5179 = vrot.lane.b32.xlu0 %v4224, 96
        %v5180 = vpop.permute.xlu0 %5179
        %5181 = vrot.lane.b32.xlu0 %v4225, 96
        %v5182 = vpop.permute.xlu0 %5181
        %5183 = vrot.lane.b32.xlu0 %v4227, 96
        %v5184 = vpop.permute.xlu0 %5183
        %5185 = vrot.lane.b32.xlu0 %v4228, 96
        %v5186 = vpop.permute.xlu0 %5185
        %5187 = vrot.lane.b32.xlu0 %v4230, 96
        %v5188 = vpop.permute.xlu0 %5187
        %5189 = vrot.lane.b32.xlu0 %v4231, 96
        %v5190 = vpop.permute.xlu0 %5189
        %5191 = vrot.lane.b32.xlu0 %v4233, 96
        %v5192 = vpop.permute.xlu0 %5191
        %5193 = vrot.lane.b32.xlu0 %v4234, 96
        %v5194 = vpop.permute.xlu0 %5193
        %5227 = vst.msk [vmem:[#allocation3] sm:$0xff] %vm1577, %v5132
        %5228 = vst.msk [vmem:[#allocation3 + $0x10] sm:$0xff] %vm1577, %v5134
        %5229 = vst.msk [vmem:[#allocation3 + $0x20] sm:$0xff] %vm1577, %v5136
        %5230 = vst.msk [vmem:[#allocation3 + $0x30] sm:$0xff] %vm1577, %v5138
        %5231 = vst.msk [vmem:[#allocation3 + $0x40] sm:$0xff] %vm1577, %v5140
        %5232 = vst.msk [vmem:[#allocation3 + $0x50] sm:$0xff] %vm1577, %v5142
        %5233 = vst.msk [vmem:[#allocation3 + $0x60] sm:$0xff] %vm1577, %v5144
        %5234 = vst.msk [vmem:[#allocation3 + $0x70] sm:$0xff] %vm1577, %v5146
        %5235 = vst.msk [vmem:[#allocation3 + $0x80] sm:$0xff] %vm1577, %v5148
        %5236 = vst.msk [vmem:[#allocation3 + $0x90] sm:$0xff] %vm1577, %v5150
        %5237 = vst.msk [vmem:[#allocation3 + $0xa0] sm:$0xff] %vm1577, %v5152
        %5238 = vst.msk [vmem:[#allocation3 + $0xb0] sm:$0xff] %vm1577, %v5154
        %5239 = vst.msk [vmem:[#allocation3 + $0xc0] sm:$0xff] %vm1577, %v5156
        %5240 = vst.msk [vmem:[#allocation3 + $0xd0] sm:$0xff] %vm1577, %v5158
        %5241 = vst.msk [vmem:[#allocation3 + $0xe0] sm:$0xff] %vm1577, %v5160
        %5242 = vst.msk [vmem:[#allocation3 + $0xf0] sm:$0xff] %vm1577, %v5162
        %5243 = vst.msk [vmem:[#allocation3 + $0x100] sm:$0xff] %vm1577, %v5164
        %5244 = vst.msk [vmem:[#allocation3 + $0x110] sm:$0xff] %vm1577, %v5166
        %5245 = vst.msk [vmem:[#allocation3 + $0x120] sm:$0xff] %vm1577, %v5168
        %5246 = vst.msk [vmem:[#allocation3 + $0x130] sm:$0xff] %vm1577, %v5170
        %5247 = vst.msk [vmem:[#allocation3 + $0x140] sm:$0xff] %vm1577, %v5172
        %5248 = vst.msk [vmem:[#allocation3 + $0x150] sm:$0xff] %vm1577, %v5174
        %5249 = vst.msk [vmem:[#allocation3 + $0x160] sm:$0xff] %vm1577, %v5176
        %5250 = vst.msk [vmem:[#allocation3 + $0x170] sm:$0xff] %vm1577, %v5178
        %5251 = vst.msk [vmem:[#allocation3 + $0x180] sm:$0xff] %vm1577, %v5180
        %5252 = vst.msk [vmem:[#allocation3 + $0x190] sm:$0xff] %vm1577, %v5182
        %5253 = vst.msk [vmem:[#allocation3 + $0x1a0] sm:$0xff] %vm1577, %v5184
        %5254 = vst.msk [vmem:[#allocation3 + $0x1b0] sm:$0xff] %vm1577, %v5186
        %5255 = vst.msk [vmem:[#allocation3 + $0x1c0] sm:$0xff] %vm1577, %v5188
        %5256 = vst.msk [vmem:[#allocation3 + $0x1d0] sm:$0xff] %vm1577, %v5190
        %5257 = vst.msk [vmem:[#allocation3 + $0x1e0] sm:$0xff] %vm1577, %v5192
        %5258 = vst.msk [vmem:[#allocation3 + $0x1f0] sm:$0xff] %vm1577, %v5194
        %v5260 = vrot.slane %v4233, 1
        %v5261 = vrot.slane %v4234, 1
        %v5262 = vsel %vm659, %v5260, %v5261
        %v5263 = vrot.slane %v4235, 1
        %v5264 = vsel %vm659, %v5261, %v5263
        %5265 = vrot.lane.b32.xlu0 %v4328, 112
        %v5266 = vpop.permute.xlu0 %5265
        %5267 = vrot.lane.b32.xlu0 %v4330, 112
        %v5268 = vpop.permute.xlu0 %5267
        %5269 = vrot.lane.b32.xlu0 %v4333, 112
        %v5270 = vpop.permute.xlu0 %5269
        %5271 = vrot.lane.b32.xlu0 %v4335, 112
        %v5272 = vpop.permute.xlu0 %5271
        %5273 = vrot.lane.b32.xlu0 %v4338, 112
        %v5274 = vpop.permute.xlu0 %5273
        %5275 = vrot.lane.b32.xlu0 %v4340, 112
        %v5276 = vpop.permute.xlu0 %5275
        %5277 = vrot.lane.b32.xlu0 %v4343, 112
        %v5278 = vpop.permute.xlu0 %5277
        %5279 = vrot.lane.b32.xlu0 %v4345, 112
        %v5280 = vpop.permute.xlu0 %5279
        %5281 = vrot.lane.b32.xlu0 %v4348, 112
        %v5282 = vpop.permute.xlu0 %5281
        %5283 = vrot.lane.b32.xlu0 %v4350, 112
        %v5284 = vpop.permute.xlu0 %5283
        %5285 = vrot.lane.b32.xlu0 %v4353, 112
        %v5286 = vpop.permute.xlu0 %5285
        %5287 = vrot.lane.b32.xlu0 %v4355, 112
        %v5288 = vpop.permute.xlu0 %5287
        %5289 = vrot.lane.b32.xlu0 %v4358, 112
        %v5290 = vpop.permute.xlu0 %5289
        %5291 = vrot.lane.b32.xlu0 %v4360, 112
        %v5292 = vpop.permute.xlu0 %5291
        %5293 = vrot.lane.b32.xlu0 %v4363, 112
        %v5294 = vpop.permute.xlu0 %5293
        %5295 = vrot.lane.b32.xlu0 %v4365, 112
        %v5296 = vpop.permute.xlu0 %5295
        %5297 = vrot.lane.b32.xlu0 %v4368, 112
        %v5298 = vpop.permute.xlu0 %5297
        %5299 = vrot.lane.b32.xlu0 %v4370, 112
        %v5300 = vpop.permute.xlu0 %5299
        %5301 = vrot.lane.b32.xlu0 %v4373, 112
        %v5302 = vpop.permute.xlu0 %5301
        %5303 = vrot.lane.b32.xlu0 %v4375, 112
        %v5304 = vpop.permute.xlu0 %5303
        %5305 = vrot.lane.b32.xlu0 %v4378, 112
        %v5306 = vpop.permute.xlu0 %5305
        %5307 = vrot.lane.b32.xlu0 %v4380, 112
        %v5308 = vpop.permute.xlu0 %5307
        %5309 = vrot.lane.b32.xlu0 %v4383, 112
        %v5310 = vpop.permute.xlu0 %5309
        %5311 = vrot.lane.b32.xlu0 %v4385, 112
        %v5312 = vpop.permute.xlu0 %5311
        %5313 = vrot.lane.b32.xlu0 %v4388, 112
        %v5314 = vpop.permute.xlu0 %5313
        %5315 = vrot.lane.b32.xlu0 %v4390, 112
        %v5316 = vpop.permute.xlu0 %5315
        %5317 = vrot.lane.b32.xlu0 %v4393, 112
        %v5318 = vpop.permute.xlu0 %5317
        %5319 = vrot.lane.b32.xlu0 %v4395, 112
        %v5320 = vpop.permute.xlu0 %5319
        %5321 = vrot.lane.b32.xlu0 %v4865, 112
        %v5322 = vpop.permute.xlu0 %5321
        %5323 = vrot.lane.b32.xlu0 %v4867, 112
        %v5324 = vpop.permute.xlu0 %5323
        %5325 = vrot.lane.b32.xlu0 %v5262, 112
        %v5326 = vpop.permute.xlu0 %5325
        %5327 = vrot.lane.b32.xlu0 %v5264, 112
        %v5328 = vpop.permute.xlu0 %5327
        %5361 = vst.msk [vmem:[#allocation3] sm:$0xff] %vm1712, %v5266
        %5362 = vst.msk [vmem:[#allocation3 + $0x10] sm:$0xff] %vm1712, %v5268
        %5363 = vst.msk [vmem:[#allocation3 + $0x20] sm:$0xff] %vm1712, %v5270
        %5364 = vst.msk [vmem:[#allocation3 + $0x30] sm:$0xff] %vm1712, %v5272
        %5365 = vst.msk [vmem:[#allocation3 + $0x40] sm:$0xff] %vm1712, %v5274
        %5366 = vst.msk [vmem:[#allocation3 + $0x50] sm:$0xff] %vm1712, %v5276
        %5367 = vst.msk [vmem:[#allocation3 + $0x60] sm:$0xff] %vm1712, %v5278
        %5368 = vst.msk [vmem:[#allocation3 + $0x70] sm:$0xff] %vm1712, %v5280
        %5369 = vst.msk [vmem:[#allocation3 + $0x80] sm:$0xff] %vm1712, %v5282
        %5370 = vst.msk [vmem:[#allocation3 + $0x90] sm:$0xff] %vm1712, %v5284
        %5371 = vst.msk [vmem:[#allocation3 + $0xa0] sm:$0xff] %vm1712, %v5286
        %5372 = vst.msk [vmem:[#allocation3 + $0xb0] sm:$0xff] %vm1712, %v5288
        %5373 = vst.msk [vmem:[#allocation3 + $0xc0] sm:$0xff] %vm1712, %v5290
        %5374 = vst.msk [vmem:[#allocation3 + $0xd0] sm:$0xff] %vm1712, %v5292
        %5375 = vst.msk [vmem:[#allocation3 + $0xe0] sm:$0xff] %vm1712, %v5294
        %5376 = vst.msk [vmem:[#allocation3 + $0xf0] sm:$0xff] %vm1712, %v5296
        %5377 = vst.msk [vmem:[#allocation3 + $0x100] sm:$0xff] %vm1712, %v5298
        %5378 = vst.msk [vmem:[#allocation3 + $0x110] sm:$0xff] %vm1712, %v5300
        %5379 = vst.msk [vmem:[#allocation3 + $0x120] sm:$0xff] %vm1712, %v5302
        %5380 = vst.msk [vmem:[#allocation3 + $0x130] sm:$0xff] %vm1712, %v5304
        %5381 = vst.msk [vmem:[#allocation3 + $0x140] sm:$0xff] %vm1712, %v5306
        %5382 = vst.msk [vmem:[#allocation3 + $0x150] sm:$0xff] %vm1712, %v5308
        %5383 = vst.msk [vmem:[#allocation3 + $0x160] sm:$0xff] %vm1712, %v5310
        %5384 = vst.msk [vmem:[#allocation3 + $0x170] sm:$0xff] %vm1712, %v5312
        %5385 = vst.msk [vmem:[#allocation3 + $0x180] sm:$0xff] %vm1712, %v5314
        %5386 = vst.msk [vmem:[#allocation3 + $0x190] sm:$0xff] %vm1712, %v5316
        %5387 = vst.msk [vmem:[#allocation3 + $0x1a0] sm:$0xff] %vm1712, %v5318
        %5388 = vst.msk [vmem:[#allocation3 + $0x1b0] sm:$0xff] %vm1712, %v5320
        %5389 = vst.msk [vmem:[#allocation3 + $0x1c0] sm:$0xff] %vm1712, %v5322
        %5390 = vst.msk [vmem:[#allocation3 + $0x1d0] sm:$0xff] %vm1712, %v5324
        %5391 = vst.msk [vmem:[#allocation3 + $0x1e0] sm:$0xff] %vm1712, %v5326
        %5392 = vst.msk [vmem:[#allocation3 + $0x1f0] sm:$0xff] %vm1712, %v5328
        %v5393 = vrot.slane %v4233, 2
        %v5394 = vrot.slane %v4234, 2
        %v5395 = vsel %vm869, %v5393, %v5394
        %v5396 = vrot.slane %v4235, 2
        %v5397 = vsel %vm869, %v5394, %v5396
        %5430 = vst.msk [vmem:[#allocation3 + $0x8] sm:$0xff] %vm417, %v4536
        %5431 = vst.msk [vmem:[#allocation3 + $0x18] sm:$0xff] %vm417, %v4538
        %5432 = vst.msk [vmem:[#allocation3 + $0x28] sm:$0xff] %vm417, %v4541
        %5433 = vst.msk [vmem:[#allocation3 + $0x38] sm:$0xff] %vm417, %v4543
        %5434 = vst.msk [vmem:[#allocation3 + $0x48] sm:$0xff] %vm417, %v4546
        %5435 = vst.msk [vmem:[#allocation3 + $0x58] sm:$0xff] %vm417, %v4548
        %5436 = vst.msk [vmem:[#allocation3 + $0x68] sm:$0xff] %vm417, %v4551
        %5437 = vst.msk [vmem:[#allocation3 + $0x78] sm:$0xff] %vm417, %v4553
        %5438 = vst.msk [vmem:[#allocation3 + $0x88] sm:$0xff] %vm417, %v4556
        %5439 = vst.msk [vmem:[#allocation3 + $0x98] sm:$0xff] %vm417, %v4558
        %5440 = vst.msk [vmem:[#allocation3 + $0xa8] sm:$0xff] %vm417, %v4561
        %5441 = vst.msk [vmem:[#allocation3 + $0xb8] sm:$0xff] %vm417, %v4563
        %5442 = vst.msk [vmem:[#allocation3 + $0xc8] sm:$0xff] %vm417, %v4566
        %5443 = vst.msk [vmem:[#allocation3 + $0xd8] sm:$0xff] %vm417, %v4568
        %5444 = vst.msk [vmem:[#allocation3 + $0xe8] sm:$0xff] %vm417, %v4571
        %5445 = vst.msk [vmem:[#allocation3 + $0xf8] sm:$0xff] %vm417, %v4573
        %5446 = vst.msk [vmem:[#allocation3 + $0x108] sm:$0xff] %vm417, %v4576
        %5447 = vst.msk [vmem:[#allocation3 + $0x118] sm:$0xff] %vm417, %v4578
        %5448 = vst.msk [vmem:[#allocation3 + $0x128] sm:$0xff] %vm417, %v4581
        %5449 = vst.msk [vmem:[#allocation3 + $0x138] sm:$0xff] %vm417, %v4583
        %5450 = vst.msk [vmem:[#allocation3 + $0x148] sm:$0xff] %vm417, %v4586
        %5451 = vst.msk [vmem:[#allocation3 + $0x158] sm:$0xff] %vm417, %v4588
        %5452 = vst.msk [vmem:[#allocation3 + $0x168] sm:$0xff] %vm417, %v4591
        %5453 = vst.msk [vmem:[#allocation3 + $0x178] sm:$0xff] %vm417, %v4593
        %5454 = vst.msk [vmem:[#allocation3 + $0x188] sm:$0xff] %vm417, %v4596
        %5455 = vst.msk [vmem:[#allocation3 + $0x198] sm:$0xff] %vm417, %v4598
        %5456 = vst.msk [vmem:[#allocation3 + $0x1a8] sm:$0xff] %vm417, %v4601
        %5457 = vst.msk [vmem:[#allocation3 + $0x1b8] sm:$0xff] %vm417, %v4603
        %5458 = vst.msk [vmem:[#allocation3 + $0x1c8] sm:$0xff] %vm417, %v4998
        %5459 = vst.msk [vmem:[#allocation3 + $0x1d8] sm:$0xff] %vm417, %v5000
        %5460 = vst.msk [vmem:[#allocation3 + $0x1e8] sm:$0xff] %vm417, %v5395
        %5461 = vst.msk [vmem:[#allocation3 + $0x1f8] sm:$0xff] %vm417, %v5397
        %v5462 = vld [vmem:[#allocation3] sm:$0xff]
        %v5463 = vld [vmem:[#allocation3 + $0x8] sm:$0xff]
        %v5464 = vld [vmem:[#allocation3 + $0x10] sm:$0xff]
        %v5465 = vld [vmem:[#allocation3 + $0x18] sm:$0xff]
        %v5466 = vld [vmem:[#allocation3 + $0x20] sm:$0xff]
        %v5467 = vld [vmem:[#allocation3 + $0x28] sm:$0xff]
        %v5468 = vld [vmem:[#allocation3 + $0x30] sm:$0xff]
        %v5469 = vld [vmem:[#allocation3 + $0x38] sm:$0xff]
        %v5470 = vld [vmem:[#allocation3 + $0x40] sm:$0xff]
        %v5471 = vld [vmem:[#allocation3 + $0x48] sm:$0xff]
        %v5472 = vld [vmem:[#allocation3 + $0x50] sm:$0xff]
        %v5473 = vld [vmem:[#allocation3 + $0x58] sm:$0xff]
        %v5474 = vld [vmem:[#allocation3 + $0x60] sm:$0xff]
        %v5475 = vld [vmem:[#allocation3 + $0x68] sm:$0xff]
        %v5476 = vld [vmem:[#allocation3 + $0x70] sm:$0xff]
        %v5477 = vld [vmem:[#allocation3 + $0x78] sm:$0xff]
        %v5478 = vld [vmem:[#allocation3 + $0x80] sm:$0xff]
        %v5479 = vld [vmem:[#allocation3 + $0x88] sm:$0xff]
        %v5480 = vld [vmem:[#allocation3 + $0x90] sm:$0xff]
        %v5481 = vld [vmem:[#allocation3 + $0x98] sm:$0xff]
        %v5482 = vld [vmem:[#allocation3 + $0xa0] sm:$0xff]
        %v5483 = vld [vmem:[#allocation3 + $0xa8] sm:$0xff]
        %v5484 = vld [vmem:[#allocation3 + $0xb0] sm:$0xff]
        %v5485 = vld [vmem:[#allocation3 + $0xb8] sm:$0xff]
        %v5486 = vld [vmem:[#allocation3 + $0xc0] sm:$0xff]
        %v5487 = vld [vmem:[#allocation3 + $0xc8] sm:$0xff]
        %v5488 = vld [vmem:[#allocation3 + $0xd0] sm:$0xff]
        %v5489 = vld [vmem:[#allocation3 + $0xd8] sm:$0xff]
        %v5490 = vld [vmem:[#allocation3 + $0xe0] sm:$0xff]
        %v5491 = vld [vmem:[#allocation3 + $0xe8] sm:$0xff]
        %v5492 = vld [vmem:[#allocation3 + $0xf0] sm:$0xff]
        %v5493 = vld [vmem:[#allocation3 + $0xf8] sm:$0xff]
        %v5494 = vld [vmem:[#allocation3 + $0x100] sm:$0xff]
        %v5495 = vld [vmem:[#allocation3 + $0x108] sm:$0xff]
        %v5496 = vld [vmem:[#allocation3 + $0x110] sm:$0xff]
        %v5497 = vld [vmem:[#allocation3 + $0x118] sm:$0xff]
        %v5498 = vld [vmem:[#allocation3 + $0x120] sm:$0xff]
        %v5499 = vld [vmem:[#allocation3 + $0x128] sm:$0xff]
        %v5500 = vld [vmem:[#allocation3 + $0x130] sm:$0xff]
        %v5501 = vld [vmem:[#allocation3 + $0x138] sm:$0xff]
        %v5502 = vld [vmem:[#allocation3 + $0x140] sm:$0xff]
        %v5503 = vld [vmem:[#allocation3 + $0x148] sm:$0xff]
        %v5504 = vld [vmem:[#allocation3 + $0x150] sm:$0xff]
        %v5505 = vld [vmem:[#allocation3 + $0x158] sm:$0xff]
        %v5506 = vld [vmem:[#allocation3 + $0x160] sm:$0xff]
        %v5507 = vld [vmem:[#allocation3 + $0x168] sm:$0xff]
        %v5508 = vld [vmem:[#allocation3 + $0x170] sm:$0xff]
        %v5509 = vld [vmem:[#allocation3 + $0x178] sm:$0xff]
        %v5510 = vld [vmem:[#allocation3 + $0x180] sm:$0xff]
        %v5511 = vld [vmem:[#allocation3 + $0x188] sm:$0xff]
        %v5512 = vld [vmem:[#allocation3 + $0x190] sm:$0xff]
        %v5513 = vld [vmem:[#allocation3 + $0x198] sm:$0xff]
        %v5514 = vld [vmem:[#allocation3 + $0x1a0] sm:$0xff]
        %v5515 = vld [vmem:[#allocation3 + $0x1a8] sm:$0xff]
        %v5516 = vld [vmem:[#allocation3 + $0x1b0] sm:$0xff]
        %v5517 = vld [vmem:[#allocation3 + $0x1b8] sm:$0xff]
        %v5518 = vld [vmem:[#allocation3 + $0x1c0] sm:$0xff]
        %v5519 = vld [vmem:[#allocation3 + $0x1c8] sm:$0xff]
        %v5520 = vld [vmem:[#allocation3 + $0x1d0] sm:$0xff]
        %v5521 = vld [vmem:[#allocation3 + $0x1d8] sm:$0xff]
        %v5522 = vld [vmem:[#allocation3 + $0x1e0] sm:$0xff]
        %v5523 = vld [vmem:[#allocation3 + $0x1e8] sm:$0xff]
        %v5524 = vld [vmem:[#allocation3 + $0x1f0] sm:$0xff]
        %v5525 = vld [vmem:[#allocation3 + $0x1f8] sm:$0xff]
        %v5527 = vlaneseq
        %v5528 = vshrl.u32 %v5527, 7
        %v5529 = vsub.s32 0, %v5528
        %v5530 = vrot.slane %v4149, %v5529
        %v5533 = vsel %vm417, %v5463, 0
        %v5536 = vsel %vm417, %v5465, 0
        %v5539 = vsel %vm417, %v5467, 0
        %v5542 = vsel %vm417, %v5469, 0
        %v5545 = vsel %vm417, %v5471, 0
        %v5548 = vsel %vm417, %v5473, 0
        %v5551 = vsel %vm417, %v5475, 0
        %v5554 = vsel %vm417, %v5477, 0
        %v5557 = vsel %vm417, %v5479, 0
        %v5560 = vsel %vm417, %v5481, 0
        %v5563 = vsel %vm417, %v5483, 0
        %v5566 = vsel %vm417, %v5485, 0
        %v5569 = vsel %vm417, %v5487, 0
        %v5572 = vsel %vm417, %v5489, 0
        %v5575 = vsel %vm417, %v5491, 0
        %v5578 = vsel %vm417, %v5493, 0
        %v5581 = vsel %vm417, %v5495, 0
        %v5584 = vsel %vm417, %v5497, 0
        %v5587 = vsel %vm417, %v5499, 0
        %v5590 = vsel %vm417, %v5501, 0
        %v5593 = vsel %vm417, %v5503, 0
        %v5596 = vsel %vm417, %v5505, 0
        %v5599 = vsel %vm417, %v5507, 0
        %v5602 = vsel %vm417, %v5509, 0
        %v5605 = vsel %vm417, %v5511, 0
        %v5608 = vsel %vm417, %v5513, 0
        %v5611 = vsel %vm417, %v5515, 0
        %v5614 = vsel %vm417, %v5517, 0
        %v5617 = vsel %vm417, %v5519, 0
        %v5620 = vsel %vm417, %v5521, 0
        %v5623 = vsel %vm417, %v5523, 0
        %v5626 = vsel %vm417, %v5525, 0
        %5628 = vmatprep.subr.mxu0 0.0
        %5629 = vmatpush1.msra.mxu0 %v4130
        %5630 = vmatprep.subr.mxu0 0.0
        %5631 = vmatpush1.msra.mxu0 %v4131
        %5632 = vmatprep.subr.mxu0 0.0
        %5633 = vmatpush1.msra.mxu0 %v4132
        %5634 = vmatprep.subr.mxu0 0.0
        %5635 = vmatpush1.msra.mxu0 %v4133
        %5636 = vmatprep.subr.mxu0 0.0
        %5637 = vmatpush1.msra.mxu0 %v4134
        %5638 = vmatprep.subr.mxu0 0.0
        %5639 = vmatpush1.msra.mxu0 %v4135
        %5640 = vmatprep.subr.mxu0 0.0
        %5641 = vmatpush1.msra.mxu0 %v4136
        %5642 = vmatprep.subr.mxu0 0.0
        %5643 = vmatpush1.msra.mxu0 %v4137
        %5644 = vmatprep.subr.mxu0 0.0
        %5645 = vmatpush1.msra.mxu0 %v4138
        %5646 = vmatprep.subr.mxu0 0.0
        %5647 = vmatpush1.msra.mxu0 %v4139
        %5648 = vmatprep.subr.mxu0 0.0
        %5649 = vmatpush1.msra.mxu0 %v4140
        %5650 = vmatprep.subr.mxu0 0.0
        %5651 = vmatpush1.msra.mxu0 %v4141
        %5652 = vmatprep.subr.mxu0 0.0
        %5653 = vmatpush1.msra.mxu0 %v4142
        %5654 = vmatprep.subr.mxu0 0.0
        %5655 = vmatpush1.msra.mxu0 %v4143
        %5656 = vmatprep.subr.mxu0 0.0
        %5657 = vmatpush1.msra.mxu0 %v4144
        %5658 = vmatprep.subr.mxu0 0.0
        %5659 = vmatpush1.msra.mxu0 %v4145
        %5660 = vmatprep.subr.mxu0 0.0
        %5661 = vmatpush1.msra.mxu0 %v4146
        %5662 = vmatprep.subr.mxu0 0.0
        %5663 = vmatpush1.msra.mxu0 %v4147
        %5664 = vmatprep.subr.mxu0 0.0
        %5665 = vmatpush1.msra.mxu0 0.0
        %5666 = vmatprep.subr.mxu0 0.0
        %5667 = vmatpush1.msra.mxu0 0.0
        %5668 = vmatprep.subr.mxu0 0.0
        %5669 = vmatpush1.msra.mxu0 0.0
        %5670 = vmatprep.subr.mxu0 0.0
        %5671 = vmatpush1.msra.mxu0 0.0
        %5672 = vmatprep.subr.mxu0 0.0
        %5673 = vmatpush1.msra.mxu0 0.0
        %5674 = vmatprep.subr.mxu0 0.0
        %5675 = vmatpush1.msra.mxu0 0.0
        %5676 = vmatprep.subr.mxu0 0.0
        %5677 = vmatpush1.msra.mxu0 0.0
        %5678 = vmatprep.subr.mxu0 0.0
        %5679 = vmatpush1.msra.mxu0 0.0
        %5680 = vmatprep.subr.mxu0 0.0
        %5681 = vmatpush1.msra.mxu0 0.0
        %5682 = vmatprep.subr.mxu0 0.0
        %5683 = vmatpush1.msra.mxu0 0.0
        %5684 = vmatprep.subr.mxu0 0.0
        %5685 = vmatpush1.msra.mxu0 0.0
        %5686 = vmatprep.subr.mxu0 0.0
        %5687 = vmatpush1.msra.mxu0 0.0
        %5688 = vmatprep.subr.mxu0 0.0
        %5689 = vmatpush1.msra.mxu0 0.0
        %5690 = vmatprep.subr.mxu0 0.0
        %5691 = vmatpush1.msra.mxu0 0.0
        %5692 = vmatprep.mubr.f32.mxu0 %v5533
        %5693 = vmatmul.mubr.f32.gmra.mrb[0].mxu0 %v5462
        %v5694 = vpop.f32.mrb[0].mxu0
        %v5695 = vadd.f32 %v5530, %v5694
        %v5696 = vpop.f32.mrb[0].mxu0
        %5697 = vmatprep.mubr.f32.mxu0 %v5536
        %5698 = vmatmul.mubr.f32.gmra.mrb[0].mxu0 %v5464
        %v5699 = vpop.f32.mrb[0].mxu0
        %v5700 = vadd.f32 %v5530, %v5699
        %v5701 = vpop.f32.mrb[0].mxu0
        %5702 = vmatprep.mubr.f32.mxu0 %v5539
        %5703 = vmatmul.mubr.f32.gmra.mrb[0].mxu0 %v5466
        %v5704 = vpop.f32.mrb[0].mxu0
        %v5705 = vadd.f32 %v5530, %v5704
        %v5706 = vpop.f32.mrb[0].mxu0
        %5707 = vmatprep.mubr.f32.mxu0 %v5542
        %5708 = vmatmul.mubr.f32.gmra.mrb[0].mxu0 %v5468
        %v5709 = vpop.f32.mrb[0].mxu0
        %v5710 = vadd.f32 %v5530, %v5709
        %v5711 = vpop.f32.mrb[0].mxu0
        %5712 = vmatprep.mubr.f32.mxu0 %v5545
        %5713 = vmatmul.mubr.f32.gmra.mrb[0].mxu0 %v5470
        %v5714 = vpop.f32.mrb[0].mxu0
        %v5715 = vadd.f32 %v5530, %v5714
        %v5716 = vpop.f32.mrb[0].mxu0
        %5717 = vmatprep.mubr.f32.mxu0 %v5548
        %5718 = vmatmul.mubr.f32.gmra.mrb[0].mxu0 %v5472
        %v5719 = vpop.f32.mrb[0].mxu0
        %v5720 = vadd.f32 %v5530, %v5719
        %v5721 = vpop.f32.mrb[0].mxu0
        %5722 = vmatprep.mubr.f32.mxu0 %v5551
        %5723 = vmatmul.mubr.f32.gmra.mrb[0].mxu0 %v5474
        %v5724 = vpop.f32.mrb[0].mxu0
        %v5725 = vadd.f32 %v5530, %v5724
        %v5726 = vpop.f32.mrb[0].mxu0
        %5727 = vmatprep.mubr.f32.mxu0 %v5554
        %5728 = vmatmul.mubr.f32.gmra.mrb[0].mxu0 %v5476
        %v5729 = vpop.f32.mrb[0].mxu0
        %v5730 = vadd.f32 %v5530, %v5729
        %v5731 = vpop.f32.mrb[0].mxu0
        %5732 = vmatprep.mubr.f32.mxu0 %v5557
        %5733 = vmatmul.mubr.f32.gmra.mrb[0].mxu0 %v5478
        %v5734 = vpop.f32.mrb[0].mxu0
        %v5735 = vadd.f32 %v5530, %v5734
        %v5736 = vpop.f32.mrb[0].mxu0
        %5737 = vmatprep.mubr.f32.mxu0 %v5560
        %5738 = vmatmul.mubr.f32.gmra.mrb[0].mxu0 %v5480
        %v5739 = vpop.f32.mrb[0].mxu0
        %v5740 = vadd.f32 %v5530, %v5739
        %v5741 = vpop.f32.mrb[0].mxu0
        %5742 = vmatprep.mubr.f32.mxu0 %v5563
        %5743 = vmatmul.mubr.f32.gmra.mrb[0].mxu0 %v5482
        %v5744 = vpop.f32.mrb[0].mxu0
        %v5745 = vadd.f32 %v5530, %v5744
        %v5746 = vpop.f32.mrb[0].mxu0
        %5747 = vmatprep.mubr.f32.mxu0 %v5566
        %5748 = vmatmul.mubr.f32.gmra.mrb[0].mxu0 %v5484
        %v5749 = vpop.f32.mrb[0].mxu0
        %v5750 = vadd.f32 %v5530, %v5749
        %v5751 = vpop.f32.mrb[0].mxu0
        %5752 = vmatprep.mubr.f32.mxu0 %v5569
        %5753 = vmatmul.mubr.f32.gmra.mrb[0].mxu0 %v5486
        %v5754 = vpop.f32.mrb[0].mxu0
        %v5755 = vadd.f32 %v5530, %v5754
        %v5756 = vpop.f32.mrb[0].mxu0
        %5757 = vmatprep.mubr.f32.mxu0 %v5572
        %5758 = vmatmul.mubr.f32.gmra.mrb[0].mxu0 %v5488
        %v5759 = vpop.f32.mrb[0].mxu0
        %v5760 = vadd.f32 %v5530, %v5759
        %v5761 = vpop.f32.mrb[0].mxu0
        %5762 = vmatprep.mubr.f32.mxu0 %v5575
        %5763 = vmatmul.mubr.f32.gmra.mrb[0].mxu0 %v5490
        %v5764 = vpop.f32.mrb[0].mxu0
        %v5765 = vadd.f32 %v5530, %v5764
        %v5766 = vpop.f32.mrb[0].mxu0
        %5767 = vmatprep.mubr.f32.mxu0 %v5578
        %5768 = vmatmul.mubr.f32.gmra.mrb[0].mxu0 %v5492
        %v5769 = vpop.f32.mrb[0].mxu0
        %v5770 = vadd.f32 %v5530, %v5769
        %v5771 = vpop.f32.mrb[0].mxu0
        %5772 = vmatprep.mubr.f32.mxu0 %v5581
        %5773 = vmatmul.mubr.f32.gmra.mrb[0].mxu0 %v5494
        %v5774 = vpop.f32.mrb[0].mxu0
        %v5775 = vadd.f32 %v5530, %v5774
        %v5776 = vpop.f32.mrb[0].mxu0
        %5777 = vmatprep.mubr.f32.mxu0 %v5584
        %5778 = vmatmul.mubr.f32.gmra.mrb[0].mxu0 %v5496
        %v5779 = vpop.f32.mrb[0].mxu0
        %v5780 = vadd.f32 %v5530, %v5779
        %v5781 = vpop.f32.mrb[0].mxu0
        %5782 = vmatprep.mubr.f32.mxu0 %v5587
        %5783 = vmatmul.mubr.f32.gmra.mrb[0].mxu0 %v5498
        %v5784 = vpop.f32.mrb[0].mxu0
        %v5785 = vadd.f32 %v5530, %v5784
        %v5786 = vpop.f32.mrb[0].mxu0
        %5787 = vmatprep.mubr.f32.mxu0 %v5590
        %5788 = vmatmul.mubr.f32.gmra.mrb[0].mxu0 %v5500
        %v5789 = vpop.f32.mrb[0].mxu0
        %v5790 = vadd.f32 %v5530, %v5789
        %v5791 = vpop.f32.mrb[0].mxu0
        %5792 = vmatprep.mubr.f32.mxu0 %v5593
        %5793 = vmatmul.mubr.f32.gmra.mrb[0].mxu0 %v5502
        %v5794 = vpop.f32.mrb[0].mxu0
        %v5795 = vadd.f32 %v5530, %v5794
        %v5796 = vpop.f32.mrb[0].mxu0
        %5797 = vmatprep.mubr.f32.mxu0 %v5596
        %5798 = vmatmul.mubr.f32.gmra.mrb[0].mxu0 %v5504
        %v5799 = vpop.f32.mrb[0].mxu0
        %v5800 = vadd.f32 %v5530, %v5799
        %v5801 = vpop.f32.mrb[0].mxu0
        %5802 = vmatprep.mubr.f32.mxu0 %v5599
        %5803 = vmatmul.mubr.f32.gmra.mrb[0].mxu0 %v5506
        %v5804 = vpop.f32.mrb[0].mxu0
        %v5805 = vadd.f32 %v5530, %v5804
        %v5806 = vpop.f32.mrb[0].mxu0
        %5807 = vmatprep.mubr.f32.mxu0 %v5602
        %5808 = vmatmul.mubr.f32.gmra.mrb[0].mxu0 %v5508
        %v5809 = vpop.f32.mrb[0].mxu0
        %v5810 = vadd.f32 %v5530, %v5809
        %v5811 = vpop.f32.mrb[0].mxu0
        %5812 = vmatprep.mubr.f32.mxu0 %v5605
        %5813 = vmatmul.mubr.f32.gmra.mrb[0].mxu0 %v5510
        %v5814 = vpop.f32.mrb[0].mxu0
        %v5815 = vadd.f32 %v5530, %v5814
        %v5816 = vpop.f32.mrb[0].mxu0
        %5817 = vmatprep.mubr.f32.mxu0 %v5608
        %5818 = vmatmul.mubr.f32.gmra.mrb[0].mxu0 %v5512
        %v5819 = vpop.f32.mrb[0].mxu0
        %v5820 = vadd.f32 %v5530, %v5819
        %v5821 = vpop.f32.mrb[0].mxu0
        %5822 = vmatprep.mubr.f32.mxu0 %v5611
        %5823 = vmatmul.mubr.f32.gmra.mrb[0].mxu0 %v5514
        %v5824 = vpop.f32.mrb[0].mxu0
        %v5825 = vadd.f32 %v5530, %v5824
        %v5826 = vpop.f32.mrb[0].mxu0
        %5827 = vmatprep.mubr.f32.mxu0 %v5614
        %5828 = vmatmul.mubr.f32.gmra.mrb[0].mxu0 %v5516
        %v5829 = vpop.f32.mrb[0].mxu0
        %v5830 = vadd.f32 %v5530, %v5829
        %v5831 = vpop.f32.mrb[0].mxu0
        %5832 = vmatprep.mubr.f32.mxu0 %v5617
        %5833 = vmatmul.mubr.f32.gmra.mrb[0].mxu0 %v5518
        %v5834 = vpop.f32.mrb[0].mxu0
        %v5835 = vadd.f32 %v5530, %v5834
        %v5836 = vpop.f32.mrb[0].mxu0
        %5837 = vmatprep.mubr.f32.mxu0 %v5620
        %5838 = vmatmul.mubr.f32.gmra.mrb[0].mxu0 %v5520
        %v5839 = vpop.f32.mrb[0].mxu0
        %v5840 = vadd.f32 %v5530, %v5839
        %v5841 = vpop.f32.mrb[0].mxu0
        %5842 = vmatprep.mubr.f32.mxu0 %v5623
        %5843 = vmatmul.mubr.f32.gmra.mrb[0].mxu0 %v5522
        %v5844 = vpop.f32.mrb[0].mxu0
        %v5845 = vadd.f32 %v5530, %v5844
        %v5846 = vpop.f32.mrb[0].mxu0
        %5847 = vmatprep.mubr.f32.mxu0 %v5626
        %5848 = vmatmul.mubr.f32.gmra.mrb[0].mxu0 %v5524
        %v5849 = vpop.f32.mrb[0].mxu0
        %v5850 = vadd.f32 %v5530, %v5849
        %v5851 = vpop.f32.mrb[0].mxu0
        %5852 = vdwg.mxu0
        %v5853 = vmax.f32 %v5695, 0.0
        %v5854 = vmax.f32 %v5700, 0.0
        %v5855 = vmax.f32 %v5705, 0.0
        %v5856 = vmax.f32 %v5710, 0.0
        %v5857 = vmax.f32 %v5715, 0.0
        %v5858 = vmax.f32 %v5720, 0.0
        %v5859 = vmax.f32 %v5725, 0.0
        %v5860 = vmax.f32 %v5730, 0.0
        %v5861 = vmax.f32 %v5735, 0.0
        %v5862 = vmax.f32 %v5740, 0.0
        %v5863 = vmax.f32 %v5745, 0.0
        %v5864 = vmax.f32 %v5750, 0.0
        %v5865 = vmax.f32 %v5755, 0.0
        %v5866 = vmax.f32 %v5760, 0.0
        %v5867 = vmax.f32 %v5765, 0.0
        %v5868 = vmax.f32 %v5770, 0.0
        %v5869 = vmax.f32 %v5775, 0.0
        %v5870 = vmax.f32 %v5780, 0.0
        %v5871 = vmax.f32 %v5785, 0.0
        %v5872 = vmax.f32 %v5790, 0.0
        %v5873 = vmax.f32 %v5795, 0.0
        %v5874 = vmax.f32 %v5800, 0.0
        %v5875 = vmax.f32 %v5805, 0.0
        %v5876 = vmax.f32 %v5810, 0.0
        %v5877 = vmax.f32 %v5815, 0.0
        %v5878 = vmax.f32 %v5820, 0.0
        %v5879 = vmax.f32 %v5825, 0.0
        %v5880 = vmax.f32 %v5830, 0.0
        %v5881 = vmax.f32 %v5835, 0.0
        %v5882 = vmax.f32 %v5840, 0.0
        %v5883 = vmax.f32 %v5845, 0.0
        %v5884 = vmax.f32 %v5850, 0.0
        %s5885 = scalar_lea.vmem %s3, 144
        %v5886 = vld [vmem:[%s5885] sm:$0xff]
        %v5887 = vld [vmem:[%s5885 + $0x8] sm:$0xff]
        %v5888 = vld [vmem:[%s5885 + $0x10] sm:$0xff]
        %v5889 = vld [vmem:[%s5885 + $0x18] sm:$0xff]
        %v5890 = vld [vmem:[%s5885 + $0x20] sm:$0xff]
        %v5891 = vld [vmem:[%s5885 + $0x28] sm:$0xff]
        %v5892 = vld [vmem:[%s5885 + $0x30] sm:$0xff]
        %v5893 = vld [vmem:[%s5885 + $0x38] sm:$0xff]
        %v5894 = vld [vmem:[%s5885 + $0x40] sm:$0xff]
        %v5895 = vld [vmem:[%s5885 + $0x48] sm:$0xff]
        %v5896 = vld [vmem:[%s5885 + $0x50] sm:$0xff]
        %v5897 = vld [vmem:[%s5885 + $0x58] sm:$0xff]
        %v5898 = vld [vmem:[%s5885 + $0x60] sm:$0xff]
        %v5899 = vld [vmem:[%s5885 + $0x68] sm:$0xff]
        %v5900 = vld [vmem:[%s5885 + $0x70] sm:$0xff]
        %v5901 = vld [vmem:[%s5885 + $0x78] sm:$0xff]
        %v5902 = vld [vmem:[%s5885 + $0x80] sm:$0xff]
        %v5903 = vld [vmem:[%s5885 + $0x88] sm:$0xff]
        %s5904 = scalar_lea.vmem %s4, 1
        %v5905 = vld [vmem:[%s5904] sm:$0x1]
        %5906 = vst.msk [vmem:[%s492 + $0x1] sm:$0xff] %vm417, %v5853
        %5907 = vst.msk [vmem:[%s492 + $0x9] sm:$0xff] %vm417, %v5854
        %5908 = vst.msk [vmem:[%s492 + $0x19] sm:$0xff] %vm417, %v5855
        %5909 = vst.msk [vmem:[%s492 + $0x21] sm:$0xff] %vm417, %v5856
        %5910 = vst.msk [vmem:[%s492 + $0x31] sm:$0xff] %vm417, %v5857
        %5911 = vst.msk [vmem:[%s492 + $0x39] sm:$0xff] %vm417, %v5858
        %5912 = vst.msk [vmem:[%s492 + $0x49] sm:$0xff] %vm417, %v5859
        %5913 = vst.msk [vmem:[%s492 + $0x51] sm:$0xff] %vm417, %v5860
        %5914 = vst.msk [vmem:[%s492 + $0x61] sm:$0xff] %vm417, %v5861
        %5915 = vst.msk [vmem:[%s492 + $0x69] sm:$0xff] %vm417, %v5862
        %5916 = vst.msk [vmem:[%s492 + $0x79] sm:$0xff] %vm417, %v5863
        %5917 = vst.msk [vmem:[%s492 + $0x81] sm:$0xff] %vm417, %v5864
        %5918 = vst.msk [vmem:[%s492 + $0x91] sm:$0xff] %vm417, %v5865
        %5919 = vst.msk [vmem:[%s492 + $0x99] sm:$0xff] %vm417, %v5866
        %5920 = vst.msk [vmem:[%s492 + $0xa9] sm:$0xff] %vm417, %v5867
        %5921 = vst.msk [vmem:[%s492 + $0xb1] sm:$0xff] %vm417, %v5868
        %5922 = vst.msk [vmem:[%s492 + $0xc1] sm:$0xff] %vm417, %v5869
        %5923 = vst.msk [vmem:[%s492 + $0xc9] sm:$0xff] %vm417, %v5870
        %5924 = vst.msk [vmem:[%s492 + $0xd9] sm:$0xff] %vm417, %v5871
        %5925 = vst.msk [vmem:[%s492 + $0xe1] sm:$0xff] %vm417, %v5872
        %5926 = vst.msk [vmem:[%s492 + $0xf1] sm:$0xff] %vm417, %v5873
        %5927 = vst.msk [vmem:[%s492 + $0xf9] sm:$0xff] %vm417, %v5874
        %5928 = vst.msk [vmem:[%s492 + $0x109] sm:$0xff] %vm417, %v5875
        %5929 = vst.msk [vmem:[%s492 + $0x111] sm:$0xff] %vm417, %v5876
        %5930 = vst.msk [vmem:[%s492 + $0x121] sm:$0xff] %vm417, %v5877
        %5931 = vst.msk [vmem:[%s492 + $0x129] sm:$0xff] %vm417, %v5878
        %5932 = vst.msk [vmem:[%s492 + $0x139] sm:$0xff] %vm417, %v5879
        %5933 = vst.msk [vmem:[%s492 + $0x141] sm:$0xff] %vm417, %v5880
        %5934 = vst.msk [vmem:[%s492 + $0x151] sm:$0xff] %vm417, %v5881
        %5935 = vst.msk [vmem:[%s492 + $0x159] sm:$0xff] %vm417, %v5882
        %5936 = vst.msk [vmem:[%s492 + $0x169] sm:$0xff] %vm417, %v5883
        %5937 = vst.msk [vmem:[%s492 + $0x171] sm:$0xff] %vm417, %v5884
        %v5938 = vld [vmem:[#allocation2] sm:$0xff]
        %v5939 = vld [vmem:[#allocation2 + $0x8] sm:$0xff]
        %v5940 = vld [vmem:[#allocation2 + $0x10] sm:$0x3]
        %v5941 = vld [vmem:[#allocation2 + $0x18] sm:$0xff]
        %v5942 = vld [vmem:[#allocation2 + $0x20] sm:$0xff]
        %v5943 = vld [vmem:[#allocation2 + $0x28] sm:$0x3]
        %v5944 = vld [vmem:[#allocation2 + $0x30] sm:$0xff]
        %v5945 = vld [vmem:[#allocation2 + $0x38] sm:$0xff]
        %v5946 = vld [vmem:[#allocation2 + $0x40] sm:$0x3]
        %v5947 = vld [vmem:[#allocation2 + $0x48] sm:$0xff]
        %v5948 = vld [vmem:[#allocation2 + $0x50] sm:$0xff]
        %v5949 = vld [vmem:[#allocation2 + $0x58] sm:$0x3]
        %v5950 = vld [vmem:[#allocation2 + $0x60] sm:$0xff]
        %v5951 = vld [vmem:[#allocation2 + $0x68] sm:$0xff]
        %v5952 = vld [vmem:[#allocation2 + $0x70] sm:$0x3]
        %v5953 = vld [vmem:[#allocation2 + $0x78] sm:$0xff]
        %v5954 = vld [vmem:[#allocation2 + $0x80] sm:$0xff]
        %v5955 = vld [vmem:[#allocation2 + $0x88] sm:$0x3]
        %v5956 = vld [vmem:[#allocation2 + $0x90] sm:$0xff]
        %v5957 = vld [vmem:[#allocation2 + $0x98] sm:$0xff]
        %v5958 = vld [vmem:[#allocation2 + $0xa0] sm:$0x3]
        %v5959 = vld [vmem:[#allocation2 + $0xa8] sm:$0xff]
        %v5960 = vld [vmem:[#allocation2 + $0xb0] sm:$0xff]
        %v5961 = vld [vmem:[#allocation2 + $0xb8] sm:$0x3]
        %v5962 = vld [vmem:[#allocation2 + $0xc0] sm:$0xff]
        %v5963 = vld [vmem:[#allocation2 + $0xc8] sm:$0xff]
        %v5964 = vld [vmem:[#allocation2 + $0xd0] sm:$0x3]
        %v5965 = vld [vmem:[#allocation2 + $0xd8] sm:$0xff]
        %v5966 = vld [vmem:[#allocation2 + $0xe0] sm:$0xff]
        %v5967 = vld [vmem:[#allocation2 + $0xe8] sm:$0x3]
        %v5968 = vld [vmem:[#allocation2 + $0xf0] sm:$0xff]
        %v5969 = vld [vmem:[#allocation2 + $0xf8] sm:$0xff]
        %v5970 = vld [vmem:[#allocation2 + $0x100] sm:$0x3]
        %v5971 = vld [vmem:[#allocation2 + $0x108] sm:$0xff]
        %v5972 = vld [vmem:[#allocation2 + $0x110] sm:$0xff]
        %v5973 = vld [vmem:[#allocation2 + $0x118] sm:$0x3]
        %v5974 = vld [vmem:[#allocation2 + $0x120] sm:$0xff]
        %v5975 = vld [vmem:[#allocation2 + $0x128] sm:$0xff]
        %v5976 = vld [vmem:[#allocation2 + $0x130] sm:$0x3]
        %v5977 = vld [vmem:[#allocation2 + $0x138] sm:$0xff]
        %v5978 = vld [vmem:[#allocation2 + $0x140] sm:$0xff]
        %v5979 = vld [vmem:[#allocation2 + $0x148] sm:$0x3]
        %v5980 = vld [vmem:[#allocation2 + $0x150] sm:$0xff]
        %v5981 = vld [vmem:[#allocation2 + $0x158] sm:$0xff]
        %v5982 = vld [vmem:[#allocation2 + $0x160] sm:$0x3]
        %v5983 = vld [vmem:[#allocation2 + $0x168] sm:$0xff]
        %v5984 = vld [vmem:[#allocation2 + $0x170] sm:$0xff]
        %v5985 = vld [vmem:[#allocation2 + $0x178] sm:$0x3]
        %v5986 = vld [vmem:[#allocation2 + $0x180] sm:$0xff]
        %v5987 = vld [vmem:[#allocation2 + $0x188] sm:$0xff]
        %v5988 = vld [vmem:[#allocation2 + $0x190] sm:$0x3]
        %v5989 = vld [vmem:[#allocation2 + $0x198] sm:$0xff]
        %v5990 = vld [vmem:[#allocation2 + $0x1a0] sm:$0xff]
        %v5991 = vld [vmem:[#allocation2 + $0x1a8] sm:$0x3]
        %5992 = vst.msk [vmem:[#allocation3] sm:$0xff] %vm417, %v5938
        %5993 = vst.msk [vmem:[#allocation3 + $0x10] sm:$0xff] %vm417, %v5939
        %5994 = vst.msk [vmem:[#allocation3 + $0x20] sm:$0xff] %vm417, %v5941
        %5995 = vst.msk [vmem:[#allocation3 + $0x30] sm:$0xff] %vm417, %v5942
        %5996 = vst.msk [vmem:[#allocation3 + $0x40] sm:$0xff] %vm417, %v5944
        %5997 = vst.msk [vmem:[#allocation3 + $0x50] sm:$0xff] %vm417, %v5945
        %5998 = vst.msk [vmem:[#allocation3 + $0x60] sm:$0xff] %vm417, %v5947
        %5999 = vst.msk [vmem:[#allocation3 + $0x70] sm:$0xff] %vm417, %v5948
        %6000 = vst.msk [vmem:[#allocation3 + $0x80] sm:$0xff] %vm417, %v5950
        %6001 = vst.msk [vmem:[#allocation3 + $0x90] sm:$0xff] %vm417, %v5951
        %6002 = vst.msk [vmem:[#allocation3 + $0xa0] sm:$0xff] %vm417, %v5953
        %6003 = vst.msk [vmem:[#allocation3 + $0xb0] sm:$0xff] %vm417, %v5954
        %6004 = vst.msk [vmem:[#allocation3 + $0xc0] sm:$0xff] %vm417, %v5956
        %6005 = vst.msk [vmem:[#allocation3 + $0xd0] sm:$0xff] %vm417, %v5957
        %6006 = vst.msk [vmem:[#allocation3 + $0xe0] sm:$0xff] %vm417, %v5959
        %6007 = vst.msk [vmem:[#allocation3 + $0xf0] sm:$0xff] %vm417, %v5960
        %6008 = vst.msk [vmem:[#allocation3 + $0x100] sm:$0xff] %vm417, %v5962
        %6009 = vst.msk [vmem:[#allocation3 + $0x110] sm:$0xff] %vm417, %v5963
        %6010 = vst.msk [vmem:[#allocation3 + $0x120] sm:$0xff] %vm417, %v5965
        %6011 = vst.msk [vmem:[#allocation3 + $0x130] sm:$0xff] %vm417, %v5966
        %6012 = vst.msk [vmem:[#allocation3 + $0x140] sm:$0xff] %vm417, %v5968
        %6013 = vst.msk [vmem:[#allocation3 + $0x150] sm:$0xff] %vm417, %v5969
        %6014 = vst.msk [vmem:[#allocation3 + $0x160] sm:$0xff] %vm417, %v5971
        %6015 = vst.msk [vmem:[#allocation3 + $0x170] sm:$0xff] %vm417, %v5972
        %6016 = vst.msk [vmem:[#allocation3 + $0x180] sm:$0xff] %vm417, %v5974
        %6017 = vst.msk [vmem:[#allocation3 + $0x190] sm:$0xff] %vm417, %v5975
        %6018 = vst.msk [vmem:[#allocation3 + $0x1a0] sm:$0xff] %vm417, %v5977
        %6019 = vst.msk [vmem:[#allocation3 + $0x1b0] sm:$0xff] %vm417, %v5978
        %6020 = vst.msk [vmem:[#allocation3 + $0x1c0] sm:$0xff] %vm417, %v5980
        %6021 = vst.msk [vmem:[#allocation3 + $0x1d0] sm:$0xff] %vm417, %v5981
        %6022 = vst.msk [vmem:[#allocation3 + $0x1e0] sm:$0xff] %vm417, %v5983
        %6023 = vst.msk [vmem:[#allocation3 + $0x1f0] sm:$0xff] %vm417, %v5984
        %v6072 = vrot.slane %v5938, 1
        %v6073 = vrot.slane %v5939, 1
        %v6074 = vsel %vm659, %v6072, %v6073
        %v6075 = vrot.slane %v5940, 1
        %v6076 = vsel %vm659, %v6073, %v6075
        %v6077 = vrot.slane %v5941, 1
        %v6078 = vrot.slane %v5942, 1
        %v6079 = vsel %vm659, %v6077, %v6078
        %v6080 = vrot.slane %v5943, 1
        %v6081 = vsel %vm659, %v6078, %v6080
        %v6082 = vrot.slane %v5944, 1
        %v6083 = vrot.slane %v5945, 1
        %v6084 = vsel %vm659, %v6082, %v6083
        %v6085 = vrot.slane %v5946, 1
        %v6086 = vsel %vm659, %v6083, %v6085
        %v6087 = vrot.slane %v5947, 1
        %v6088 = vrot.slane %v5948, 1
        %v6089 = vsel %vm659, %v6087, %v6088
        %v6090 = vrot.slane %v5949, 1
        %v6091 = vsel %vm659, %v6088, %v6090
        %v6092 = vrot.slane %v5950, 1
        %v6093 = vrot.slane %v5951, 1
        %v6094 = vsel %vm659, %v6092, %v6093
        %v6095 = vrot.slane %v5952, 1
        %v6096 = vsel %vm659, %v6093, %v6095
        %v6097 = vrot.slane %v5953, 1
        %v6098 = vrot.slane %v5954, 1
        %v6099 = vsel %vm659, %v6097, %v6098
        %v6100 = vrot.slane %v5955, 1
        %v6101 = vsel %vm659, %v6098, %v6100
        %v6102 = vrot.slane %v5956, 1
        %v6103 = vrot.slane %v5957, 1
        %v6104 = vsel %vm659, %v6102, %v6103
        %v6105 = vrot.slane %v5958, 1
        %v6106 = vsel %vm659, %v6103, %v6105
        %v6107 = vrot.slane %v5959, 1
        %v6108 = vrot.slane %v5960, 1
        %v6109 = vsel %vm659, %v6107, %v6108
        %v6110 = vrot.slane %v5961, 1
        %v6111 = vsel %vm659, %v6108, %v6110
        %v6112 = vrot.slane %v5962, 1
        %v6113 = vrot.slane %v5963, 1
        %v6114 = vsel %vm659, %v6112, %v6113
        %v6115 = vrot.slane %v5964, 1
        %v6116 = vsel %vm659, %v6113, %v6115
        %v6117 = vrot.slane %v5965, 1
        %v6118 = vrot.slane %v5966, 1
        %v6119 = vsel %vm659, %v6117, %v6118
        %v6120 = vrot.slane %v5967, 1
        %v6121 = vsel %vm659, %v6118, %v6120
        %v6122 = vrot.slane %v5968, 1
        %v6123 = vrot.slane %v5969, 1
        %v6124 = vsel %vm659, %v6122, %v6123
        %v6125 = vrot.slane %v5970, 1
        %v6126 = vsel %vm659, %v6123, %v6125
        %v6127 = vrot.slane %v5971, 1
        %v6128 = vrot.slane %v5972, 1
        %v6129 = vsel %vm659, %v6127, %v6128
        %v6130 = vrot.slane %v5973, 1
        %v6131 = vsel %vm659, %v6128, %v6130
        %v6132 = vrot.slane %v5974, 1
        %v6133 = vrot.slane %v5975, 1
        %v6134 = vsel %vm659, %v6132, %v6133
        %v6135 = vrot.slane %v5976, 1
        %v6136 = vsel %vm659, %v6133, %v6135
        %v6137 = vrot.slane %v5977, 1
        %v6138 = vrot.slane %v5978, 1
        %v6139 = vsel %vm659, %v6137, %v6138
        %v6140 = vrot.slane %v5979, 1
        %v6141 = vsel %vm659, %v6138, %v6140
        %v6142 = vrot.slane %v5980, 1
        %v6143 = vrot.slane %v5981, 1
        %v6144 = vsel %vm659, %v6142, %v6143
        %v6145 = vrot.slane %v5982, 1
        %v6146 = vsel %vm659, %v6143, %v6145
        %v6147 = vrot.slane %v5983, 1
        %v6148 = vrot.slane %v5984, 1
        %v6149 = vsel %vm659, %v6147, %v6148
        %v6150 = vrot.slane %v5985, 1
        %v6151 = vsel %vm659, %v6148, %v6150
        %6152 = vrot.lane.b32.xlu0 %v6074, 16
        %v6153 = vpop.permute.xlu0 %6152
        %6154 = vrot.lane.b32.xlu0 %v6076, 16
        %v6155 = vpop.permute.xlu0 %6154
        %6156 = vrot.lane.b32.xlu0 %v6079, 16
        %v6157 = vpop.permute.xlu0 %6156
        %6158 = vrot.lane.b32.xlu0 %v6081, 16
        %v6159 = vpop.permute.xlu0 %6158
        %6160 = vrot.lane.b32.xlu0 %v6084, 16
        %v6161 = vpop.permute.xlu0 %6160
        %6162 = vrot.lane.b32.xlu0 %v6086, 16
        %v6163 = vpop.permute.xlu0 %6162
        %6164 = vrot.lane.b32.xlu0 %v6089, 16
        %v6165 = vpop.permute.xlu0 %6164
        %6166 = vrot.lane.b32.xlu0 %v6091, 16
        %v6167 = vpop.permute.xlu0 %6166
        %6168 = vrot.lane.b32.xlu0 %v6094, 16
        %v6169 = vpop.permute.xlu0 %6168
        %6170 = vrot.lane.b32.xlu0 %v6096, 16
        %v6171 = vpop.permute.xlu0 %6170
        %6172 = vrot.lane.b32.xlu0 %v6099, 16
        %v6173 = vpop.permute.xlu0 %6172
        %6174 = vrot.lane.b32.xlu0 %v6101, 16
        %v6175 = vpop.permute.xlu0 %6174
        %6176 = vrot.lane.b32.xlu0 %v6104, 16
        %v6177 = vpop.permute.xlu0 %6176
        %6178 = vrot.lane.b32.xlu0 %v6106, 16
        %v6179 = vpop.permute.xlu0 %6178
        %6180 = vrot.lane.b32.xlu0 %v6109, 16
        %v6181 = vpop.permute.xlu0 %6180
        %6182 = vrot.lane.b32.xlu0 %v6111, 16
        %v6183 = vpop.permute.xlu0 %6182
        %6184 = vrot.lane.b32.xlu0 %v6114, 16
        %v6185 = vpop.permute.xlu0 %6184
        %6186 = vrot.lane.b32.xlu0 %v6116, 16
        %v6187 = vpop.permute.xlu0 %6186
        %6188 = vrot.lane.b32.xlu0 %v6119, 16
        %v6189 = vpop.permute.xlu0 %6188
        %6190 = vrot.lane.b32.xlu0 %v6121, 16
        %v6191 = vpop.permute.xlu0 %6190
        %6192 = vrot.lane.b32.xlu0 %v6124, 16
        %v6193 = vpop.permute.xlu0 %6192
        %6194 = vrot.lane.b32.xlu0 %v6126, 16
        %v6195 = vpop.permute.xlu0 %6194
        %6196 = vrot.lane.b32.xlu0 %v6129, 16
        %v6197 = vpop.permute.xlu0 %6196
        %6198 = vrot.lane.b32.xlu0 %v6131, 16
        %v6199 = vpop.permute.xlu0 %6198
        %6200 = vrot.lane.b32.xlu0 %v6134, 16
        %v6201 = vpop.permute.xlu0 %6200
        %6202 = vrot.lane.b32.xlu0 %v6136, 16
        %v6203 = vpop.permute.xlu0 %6202
        %6204 = vrot.lane.b32.xlu0 %v6139, 16
        %v6205 = vpop.permute.xlu0 %6204
        %6206 = vrot.lane.b32.xlu0 %v6141, 16
        %v6207 = vpop.permute.xlu0 %6206
        %6208 = vrot.lane.b32.xlu0 %v6144, 16
        %v6209 = vpop.permute.xlu0 %6208
        %6210 = vrot.lane.b32.xlu0 %v6146, 16
        %v6211 = vpop.permute.xlu0 %6210
        %6212 = vrot.lane.b32.xlu0 %v6149, 16
        %v6213 = vpop.permute.xlu0 %6212
        %6214 = vrot.lane.b32.xlu0 %v6151, 16
        %v6215 = vpop.permute.xlu0 %6214
        %6248 = vst.msk [vmem:[#allocation3] sm:$0xff] %vm836, %v6153
        %6249 = vst.msk [vmem:[#allocation3 + $0x10] sm:$0xff] %vm836, %v6155
        %6250 = vst.msk [vmem:[#allocation3 + $0x20] sm:$0xff] %vm836, %v6157
        %6251 = vst.msk [vmem:[#allocation3 + $0x30] sm:$0xff] %vm836, %v6159
        %6252 = vst.msk [vmem:[#allocation3 + $0x40] sm:$0xff] %vm836, %v6161
        %6253 = vst.msk [vmem:[#allocation3 + $0x50] sm:$0xff] %vm836, %v6163
        %6254 = vst.msk [vmem:[#allocation3 + $0x60] sm:$0xff] %vm836, %v6165
        %6255 = vst.msk [vmem:[#allocation3 + $0x70] sm:$0xff] %vm836, %v6167
        %6256 = vst.msk [vmem:[#allocation3 + $0x80] sm:$0xff] %vm836, %v6169
        %6257 = vst.msk [vmem:[#allocation3 + $0x90] sm:$0xff] %vm836, %v6171
        %6258 = vst.msk [vmem:[#allocation3 + $0xa0] sm:$0xff] %vm836, %v6173
        %6259 = vst.msk [vmem:[#allocation3 + $0xb0] sm:$0xff] %vm836, %v6175
        %6260 = vst.msk [vmem:[#allocation3 + $0xc0] sm:$0xff] %vm836, %v6177
        %6261 = vst.msk [vmem:[#allocation3 + $0xd0] sm:$0xff] %vm836, %v6179
        %6262 = vst.msk [vmem:[#allocation3 + $0xe0] sm:$0xff] %vm836, %v6181
        %6263 = vst.msk [vmem:[#allocation3 + $0xf0] sm:$0xff] %vm836, %v6183
        %6264 = vst.msk [vmem:[#allocation3 + $0x100] sm:$0xff] %vm836, %v6185
        %6265 = vst.msk [vmem:[#allocation3 + $0x110] sm:$0xff] %vm836, %v6187
        %6266 = vst.msk [vmem:[#allocation3 + $0x120] sm:$0xff] %vm836, %v6189
        %6267 = vst.msk [vmem:[#allocation3 + $0x130] sm:$0xff] %vm836, %v6191
        %6268 = vst.msk [vmem:[#allocation3 + $0x140] sm:$0xff] %vm836, %v6193
        %6269 = vst.msk [vmem:[#allocation3 + $0x150] sm:$0xff] %vm836, %v6195
        %6270 = vst.msk [vmem:[#allocation3 + $0x160] sm:$0xff] %vm836, %v6197
        %6271 = vst.msk [vmem:[#allocation3 + $0x170] sm:$0xff] %vm836, %v6199
        %6272 = vst.msk [vmem:[#allocation3 + $0x180] sm:$0xff] %vm836, %v6201
        %6273 = vst.msk [vmem:[#allocation3 + $0x190] sm:$0xff] %vm836, %v6203
        %6274 = vst.msk [vmem:[#allocation3 + $0x1a0] sm:$0xff] %vm836, %v6205
        %6275 = vst.msk [vmem:[#allocation3 + $0x1b0] sm:$0xff] %vm836, %v6207
        %6276 = vst.msk [vmem:[#allocation3 + $0x1c0] sm:$0xff] %vm836, %v6209
        %6277 = vst.msk [vmem:[#allocation3 + $0x1d0] sm:$0xff] %vm836, %v6211
        %6278 = vst.msk [vmem:[#allocation3 + $0x1e0] sm:$0xff] %vm836, %v6213
        %6279 = vst.msk [vmem:[#allocation3 + $0x1f0] sm:$0xff] %vm836, %v6215
        %v6280 = vrot.slane %v5938, 2
        %v6281 = vrot.slane %v5939, 2
        %v6282 = vsel %vm869, %v6280, %v6281
        %v6283 = vrot.slane %v5940, 2
        %v6284 = vsel %vm869, %v6281, %v6283
        %v6285 = vrot.slane %v5941, 2
        %v6286 = vrot.slane %v5942, 2
        %v6287 = vsel %vm869, %v6285, %v6286
        %v6288 = vrot.slane %v5943, 2
        %v6289 = vsel %vm869, %v6286, %v6288
        %v6290 = vrot.slane %v5944, 2
        %v6291 = vrot.slane %v5945, 2
        %v6292 = vsel %vm869, %v6290, %v6291
        %v6293 = vrot.slane %v5946, 2
        %v6294 = vsel %vm869, %v6291, %v6293
        %v6295 = vrot.slane %v5947, 2
        %v6296 = vrot.slane %v5948, 2
        %v6297 = vsel %vm869, %v6295, %v6296
        %v6298 = vrot.slane %v5949, 2
        %v6299 = vsel %vm869, %v6296, %v6298
        %v6300 = vrot.slane %v5950, 2
        %v6301 = vrot.slane %v5951, 2
        %v6302 = vsel %vm869, %v6300, %v6301
        %v6303 = vrot.slane %v5952, 2
        %v6304 = vsel %vm869, %v6301, %v6303
        %v6305 = vrot.slane %v5953, 2
        %v6306 = vrot.slane %v5954, 2
        %v6307 = vsel %vm869, %v6305, %v6306
        %v6308 = vrot.slane %v5955, 2
        %v6309 = vsel %vm869, %v6306, %v6308
        %v6310 = vrot.slane %v5956, 2
        %v6311 = vrot.slane %v5957, 2
        %v6312 = vsel %vm869, %v6310, %v6311
        %v6313 = vrot.slane %v5958, 2
        %v6314 = vsel %vm869, %v6311, %v6313
        %v6315 = vrot.slane %v5959, 2
        %v6316 = vrot.slane %v5960, 2
        %v6317 = vsel %vm869, %v6315, %v6316
        %v6318 = vrot.slane %v5961, 2
        %v6319 = vsel %vm869, %v6316, %v6318
        %v6320 = vrot.slane %v5962, 2
        %v6321 = vrot.slane %v5963, 2
        %v6322 = vsel %vm869, %v6320, %v6321
        %v6323 = vrot.slane %v5964, 2
        %v6324 = vsel %vm869, %v6321, %v6323
        %v6325 = vrot.slane %v5965, 2
        %v6326 = vrot.slane %v5966, 2
        %v6327 = vsel %vm869, %v6325, %v6326
        %v6328 = vrot.slane %v5967, 2
        %v6329 = vsel %vm869, %v6326, %v6328
        %v6330 = vrot.slane %v5968, 2
        %v6331 = vrot.slane %v5969, 2
        %v6332 = vsel %vm869, %v6330, %v6331
        %v6333 = vrot.slane %v5970, 2
        %v6334 = vsel %vm869, %v6331, %v6333
        %v6335 = vrot.slane %v5971, 2
        %v6336 = vrot.slane %v5972, 2
        %v6337 = vsel %vm869, %v6335, %v6336
        %v6338 = vrot.slane %v5973, 2
        %v6339 = vsel %vm869, %v6336, %v6338
        %v6340 = vrot.slane %v5974, 2
        %v6341 = vrot.slane %v5975, 2
        %v6342 = vsel %vm869, %v6340, %v6341
        %v6343 = vrot.slane %v5976, 2
        %v6344 = vsel %vm869, %v6341, %v6343
        %v6345 = vrot.slane %v5977, 2
        %v6346 = vrot.slane %v5978, 2
        %v6347 = vsel %vm869, %v6345, %v6346
        %v6348 = vrot.slane %v5979, 2
        %v6349 = vsel %vm869, %v6346, %v6348
        %v6350 = vrot.slane %v5980, 2
        %v6351 = vrot.slane %v5981, 2
        %v6352 = vsel %vm869, %v6350, %v6351
        %v6353 = vrot.slane %v5982, 2
        %v6354 = vsel %vm869, %v6351, %v6353
        %v6355 = vrot.slane %v5983, 2
        %v6356 = vrot.slane %v5984, 2
        %v6357 = vsel %vm869, %v6355, %v6356
        %v6358 = vrot.slane %v5985, 2
        %v6359 = vsel %vm869, %v6356, %v6358
        %6360 = vrot.lane.b32.xlu0 %v6282, 32
        %v6361 = vpop.permute.xlu0 %6360
        %6362 = vrot.lane.b32.xlu0 %v6284, 32
        %v6363 = vpop.permute.xlu0 %6362
        %6364 = vrot.lane.b32.xlu0 %v6287, 32
        %v6365 = vpop.permute.xlu0 %6364
        %6366 = vrot.lane.b32.xlu0 %v6289, 32
        %v6367 = vpop.permute.xlu0 %6366
        %6368 = vrot.lane.b32.xlu0 %v6292, 32
        %v6369 = vpop.permute.xlu0 %6368
        %6370 = vrot.lane.b32.xlu0 %v6294, 32
        %v6371 = vpop.permute.xlu0 %6370
        %6372 = vrot.lane.b32.xlu0 %v6297, 32
        %v6373 = vpop.permute.xlu0 %6372
        %6374 = vrot.lane.b32.xlu0 %v6299, 32
        %v6375 = vpop.permute.xlu0 %6374
        %6376 = vrot.lane.b32.xlu0 %v6302, 32
        %v6377 = vpop.permute.xlu0 %6376
        %6378 = vrot.lane.b32.xlu0 %v6304, 32
        %v6379 = vpop.permute.xlu0 %6378
        %6380 = vrot.lane.b32.xlu0 %v6307, 32
        %v6381 = vpop.permute.xlu0 %6380
        %6382 = vrot.lane.b32.xlu0 %v6309, 32
        %v6383 = vpop.permute.xlu0 %6382
        %6384 = vrot.lane.b32.xlu0 %v6312, 32
        %v6385 = vpop.permute.xlu0 %6384
        %6386 = vrot.lane.b32.xlu0 %v6314, 32
        %v6387 = vpop.permute.xlu0 %6386
        %6388 = vrot.lane.b32.xlu0 %v6317, 32
        %v6389 = vpop.permute.xlu0 %6388
        %6390 = vrot.lane.b32.xlu0 %v6319, 32
        %v6391 = vpop.permute.xlu0 %6390
        %6392 = vrot.lane.b32.xlu0 %v6322, 32
        %v6393 = vpop.permute.xlu0 %6392
        %6394 = vrot.lane.b32.xlu0 %v6324, 32
        %v6395 = vpop.permute.xlu0 %6394
        %6396 = vrot.lane.b32.xlu0 %v6327, 32
        %v6397 = vpop.permute.xlu0 %6396
        %6398 = vrot.lane.b32.xlu0 %v6329, 32
        %v6399 = vpop.permute.xlu0 %6398
        %6400 = vrot.lane.b32.xlu0 %v6332, 32
        %v6401 = vpop.permute.xlu0 %6400
        %6402 = vrot.lane.b32.xlu0 %v6334, 32
        %v6403 = vpop.permute.xlu0 %6402
        %6404 = vrot.lane.b32.xlu0 %v6337, 32
        %v6405 = vpop.permute.xlu0 %6404
        %6406 = vrot.lane.b32.xlu0 %v6339, 32
        %v6407 = vpop.permute.xlu0 %6406
        %6408 = vrot.lane.b32.xlu0 %v6342, 32
        %v6409 = vpop.permute.xlu0 %6408
        %6410 = vrot.lane.b32.xlu0 %v6344, 32
        %v6411 = vpop.permute.xlu0 %6410
        %6412 = vrot.lane.b32.xlu0 %v6347, 32
        %v6413 = vpop.permute.xlu0 %6412
        %6414 = vrot.lane.b32.xlu0 %v6349, 32
        %v6415 = vpop.permute.xlu0 %6414
        %6416 = vrot.lane.b32.xlu0 %v6352, 32
        %v6417 = vpop.permute.xlu0 %6416
        %6418 = vrot.lane.b32.xlu0 %v6354, 32
        %v6419 = vpop.permute.xlu0 %6418
        %6420 = vrot.lane.b32.xlu0 %v6357, 32
        %v6421 = vpop.permute.xlu0 %6420
        %6422 = vrot.lane.b32.xlu0 %v6359, 32
        %v6423 = vpop.permute.xlu0 %6422
        %6456 = vst.msk [vmem:[#allocation3] sm:$0xff] %vm1046, %v6361
        %6457 = vst.msk [vmem:[#allocation3 + $0x10] sm:$0xff] %vm1046, %v6363
        %6458 = vst.msk [vmem:[#allocation3 + $0x20] sm:$0xff] %vm1046, %v6365
        %6459 = vst.msk [vmem:[#allocation3 + $0x30] sm:$0xff] %vm1046, %v6367
        %6460 = vst.msk [vmem:[#allocation3 + $0x40] sm:$0xff] %vm1046, %v6369
        %6461 = vst.msk [vmem:[#allocation3 + $0x50] sm:$0xff] %vm1046, %v6371
        %6462 = vst.msk [vmem:[#allocation3 + $0x60] sm:$0xff] %vm1046, %v6373
        %6463 = vst.msk [vmem:[#allocation3 + $0x70] sm:$0xff] %vm1046, %v6375
        %6464 = vst.msk [vmem:[#allocation3 + $0x80] sm:$0xff] %vm1046, %v6377
        %6465 = vst.msk [vmem:[#allocation3 + $0x90] sm:$0xff] %vm1046, %v6379
        %6466 = vst.msk [vmem:[#allocation3 + $0xa0] sm:$0xff] %vm1046, %v6381
        %6467 = vst.msk [vmem:[#allocation3 + $0xb0] sm:$0xff] %vm1046, %v6383
        %6468 = vst.msk [vmem:[#allocation3 + $0xc0] sm:$0xff] %vm1046, %v6385
        %6469 = vst.msk [vmem:[#allocation3 + $0xd0] sm:$0xff] %vm1046, %v6387
        %6470 = vst.msk [vmem:[#allocation3 + $0xe0] sm:$0xff] %vm1046, %v6389
        %6471 = vst.msk [vmem:[#allocation3 + $0xf0] sm:$0xff] %vm1046, %v6391
        %6472 = vst.msk [vmem:[#allocation3 + $0x100] sm:$0xff] %vm1046, %v6393
        %6473 = vst.msk [vmem:[#allocation3 + $0x110] sm:$0xff] %vm1046, %v6395
        %6474 = vst.msk [vmem:[#allocation3 + $0x120] sm:$0xff] %vm1046, %v6397
        %6475 = vst.msk [vmem:[#allocation3 + $0x130] sm:$0xff] %vm1046, %v6399
        %6476 = vst.msk [vmem:[#allocation3 + $0x140] sm:$0xff] %vm1046, %v6401
        %6477 = vst.msk [vmem:[#allocation3 + $0x150] sm:$0xff] %vm1046, %v6403
        %6478 = vst.msk [vmem:[#allocation3 + $0x160] sm:$0xff] %vm1046, %v6405
        %6479 = vst.msk [vmem:[#allocation3 + $0x170] sm:$0xff] %vm1046, %v6407
        %6480 = vst.msk [vmem:[#allocation3 + $0x180] sm:$0xff] %vm1046, %v6409
        %6481 = vst.msk [vmem:[#allocation3 + $0x190] sm:$0xff] %vm1046, %v6411
        %6482 = vst.msk [vmem:[#allocation3 + $0x1a0] sm:$0xff] %vm1046, %v6413
        %6483 = vst.msk [vmem:[#allocation3 + $0x1b0] sm:$0xff] %vm1046, %v6415
        %6484 = vst.msk [vmem:[#allocation3 + $0x1c0] sm:$0xff] %vm1046, %v6417
        %6485 = vst.msk [vmem:[#allocation3 + $0x1d0] sm:$0xff] %vm1046, %v6419
        %6486 = vst.msk [vmem:[#allocation3 + $0x1e0] sm:$0xff] %vm1046, %v6421
        %6487 = vst.msk [vmem:[#allocation3 + $0x1f0] sm:$0xff] %vm1046, %v6423
        %6490 = vrot.lane.b32.xlu0 %v5941, 48
        %v6491 = vpop.permute.xlu0 %6490
        %6492 = vrot.lane.b32.xlu0 %v5942, 48
        %v6493 = vpop.permute.xlu0 %6492
        %6494 = vrot.lane.b32.xlu0 %v5944, 48
        %v6495 = vpop.permute.xlu0 %6494
        %6496 = vrot.lane.b32.xlu0 %v5945, 48
        %v6497 = vpop.permute.xlu0 %6496
        %6498 = vrot.lane.b32.xlu0 %v5947, 48
        %v6499 = vpop.permute.xlu0 %6498
        %6500 = vrot.lane.b32.xlu0 %v5948, 48
        %v6501 = vpop.permute.xlu0 %6500
        %6502 = vrot.lane.b32.xlu0 %v5950, 48
        %v6503 = vpop.permute.xlu0 %6502
        %6504 = vrot.lane.b32.xlu0 %v5951, 48
        %v6505 = vpop.permute.xlu0 %6504
        %6506 = vrot.lane.b32.xlu0 %v5953, 48
        %v6507 = vpop.permute.xlu0 %6506
        %6508 = vrot.lane.b32.xlu0 %v5954, 48
        %v6509 = vpop.permute.xlu0 %6508
        %6510 = vrot.lane.b32.xlu0 %v5956, 48
        %v6511 = vpop.permute.xlu0 %6510
        %6512 = vrot.lane.b32.xlu0 %v5957, 48
        %v6513 = vpop.permute.xlu0 %6512
        %6514 = vrot.lane.b32.xlu0 %v5959, 48
        %v6515 = vpop.permute.xlu0 %6514
        %6516 = vrot.lane.b32.xlu0 %v5960, 48
        %v6517 = vpop.permute.xlu0 %6516
        %6518 = vrot.lane.b32.xlu0 %v5962, 48
        %v6519 = vpop.permute.xlu0 %6518
        %6520 = vrot.lane.b32.xlu0 %v5963, 48
        %v6521 = vpop.permute.xlu0 %6520
        %6522 = vrot.lane.b32.xlu0 %v5965, 48
        %v6523 = vpop.permute.xlu0 %6522
        %6524 = vrot.lane.b32.xlu0 %v5966, 48
        %v6525 = vpop.permute.xlu0 %6524
        %6526 = vrot.lane.b32.xlu0 %v5968, 48
        %v6527 = vpop.permute.xlu0 %6526
        %6528 = vrot.lane.b32.xlu0 %v5969, 48
        %v6529 = vpop.permute.xlu0 %6528
        %6530 = vrot.lane.b32.xlu0 %v5971, 48
        %v6531 = vpop.permute.xlu0 %6530
        %6532 = vrot.lane.b32.xlu0 %v5972, 48
        %v6533 = vpop.permute.xlu0 %6532
        %6534 = vrot.lane.b32.xlu0 %v5974, 48
        %v6535 = vpop.permute.xlu0 %6534
        %6536 = vrot.lane.b32.xlu0 %v5975, 48
        %v6537 = vpop.permute.xlu0 %6536
        %6538 = vrot.lane.b32.xlu0 %v5977, 48
        %v6539 = vpop.permute.xlu0 %6538
        %6540 = vrot.lane.b32.xlu0 %v5978, 48
        %v6541 = vpop.permute.xlu0 %6540
        %6542 = vrot.lane.b32.xlu0 %v5980, 48
        %v6543 = vpop.permute.xlu0 %6542
        %6544 = vrot.lane.b32.xlu0 %v5981, 48
        %v6545 = vpop.permute.xlu0 %6544
        %6546 = vrot.lane.b32.xlu0 %v5983, 48
        %v6547 = vpop.permute.xlu0 %6546
        %6548 = vrot.lane.b32.xlu0 %v5984, 48
        %v6549 = vpop.permute.xlu0 %6548
        %6550 = vrot.lane.b32.xlu0 %v5986, 48
        %v6551 = vpop.permute.xlu0 %6550
        %6552 = vrot.lane.b32.xlu0 %v5987, 48
        %v6553 = vpop.permute.xlu0 %6552
        %6586 = vst.msk [vmem:[#allocation3] sm:$0xff] %vm1177, %v6491
        %6587 = vst.msk [vmem:[#allocation3 + $0x10] sm:$0xff] %vm1177, %v6493
        %6588 = vst.msk [vmem:[#allocation3 + $0x20] sm:$0xff] %vm1177, %v6495
        %6589 = vst.msk [vmem:[#allocation3 + $0x30] sm:$0xff] %vm1177, %v6497
        %6590 = vst.msk [vmem:[#allocation3 + $0x40] sm:$0xff] %vm1177, %v6499
        %6591 = vst.msk [vmem:[#allocation3 + $0x50] sm:$0xff] %vm1177, %v6501
        %6592 = vst.msk [vmem:[#allocation3 + $0x60] sm:$0xff] %vm1177, %v6503
        %6593 = vst.msk [vmem:[#allocation3 + $0x70] sm:$0xff] %vm1177, %v6505
        %6594 = vst.msk [vmem:[#allocation3 + $0x80] sm:$0xff] %vm1177, %v6507
        %6595 = vst.msk [vmem:[#allocation3 + $0x90] sm:$0xff] %vm1177, %v6509
        %6596 = vst.msk [vmem:[#allocation3 + $0xa0] sm:$0xff] %vm1177, %v6511
        %6597 = vst.msk [vmem:[#allocation3 + $0xb0] sm:$0xff] %vm1177, %v6513
        %6598 = vst.msk [vmem:[#allocation3 + $0xc0] sm:$0xff] %vm1177, %v6515
        %6599 = vst.msk [vmem:[#allocation3 + $0xd0] sm:$0xff] %vm1177, %v6517
        %6600 = vst.msk [vmem:[#allocation3 + $0xe0] sm:$0xff] %vm1177, %v6519
        %6601 = vst.msk [vmem:[#allocation3 + $0xf0] sm:$0xff] %vm1177, %v6521
        %6602 = vst.msk [vmem:[#allocation3 + $0x100] sm:$0xff] %vm1177, %v6523
        %6603 = vst.msk [vmem:[#allocation3 + $0x110] sm:$0xff] %vm1177, %v6525
        %6604 = vst.msk [vmem:[#allocation3 + $0x120] sm:$0xff] %vm1177, %v6527
        %6605 = vst.msk [vmem:[#allocation3 + $0x130] sm:$0xff] %vm1177, %v6529
        %6606 = vst.msk [vmem:[#allocation3 + $0x140] sm:$0xff] %vm1177, %v6531
        %6607 = vst.msk [vmem:[#allocation3 + $0x150] sm:$0xff] %vm1177, %v6533
        %6608 = vst.msk [vmem:[#allocation3 + $0x160] sm:$0xff] %vm1177, %v6535
        %6609 = vst.msk [vmem:[#allocation3 + $0x170] sm:$0xff] %vm1177, %v6537
        %6610 = vst.msk [vmem:[#allocation3 + $0x180] sm:$0xff] %vm1177, %v6539
        %6611 = vst.msk [vmem:[#allocation3 + $0x190] sm:$0xff] %vm1177, %v6541
        %6612 = vst.msk [vmem:[#allocation3 + $0x1a0] sm:$0xff] %vm1177, %v6543
        %6613 = vst.msk [vmem:[#allocation3 + $0x1b0] sm:$0xff] %vm1177, %v6545
        %6614 = vst.msk [vmem:[#allocation3 + $0x1c0] sm:$0xff] %vm1177, %v6547
        %6615 = vst.msk [vmem:[#allocation3 + $0x1d0] sm:$0xff] %vm1177, %v6549
        %6616 = vst.msk [vmem:[#allocation3 + $0x1e0] sm:$0xff] %vm1177, %v6551
        %6617 = vst.msk [vmem:[#allocation3 + $0x1f0] sm:$0xff] %vm1177, %v6553
        %v6619 = vrot.slane %v5986, 1
        %v6620 = vrot.slane %v5987, 1
        %v6621 = vsel %vm659, %v6619, %v6620
        %v6622 = vrot.slane %v5988, 1
        %v6623 = vsel %vm659, %v6620, %v6622
        %6624 = vrot.lane.b32.xlu0 %v6079, 64
        %v6625 = vpop.permute.xlu0 %6624
        %6626 = vrot.lane.b32.xlu0 %v6081, 64
        %v6627 = vpop.permute.xlu0 %6626
        %6628 = vrot.lane.b32.xlu0 %v6084, 64
        %v6629 = vpop.permute.xlu0 %6628
        %6630 = vrot.lane.b32.xlu0 %v6086, 64
        %v6631 = vpop.permute.xlu0 %6630
        %6632 = vrot.lane.b32.xlu0 %v6089, 64
        %v6633 = vpop.permute.xlu0 %6632
        %6634 = vrot.lane.b32.xlu0 %v6091, 64
        %v6635 = vpop.permute.xlu0 %6634
        %6636 = vrot.lane.b32.xlu0 %v6094, 64
        %v6637 = vpop.permute.xlu0 %6636
        %6638 = vrot.lane.b32.xlu0 %v6096, 64
        %v6639 = vpop.permute.xlu0 %6638
        %6640 = vrot.lane.b32.xlu0 %v6099, 64
        %v6641 = vpop.permute.xlu0 %6640
        %6642 = vrot.lane.b32.xlu0 %v6101, 64
        %v6643 = vpop.permute.xlu0 %6642
        %6644 = vrot.lane.b32.xlu0 %v6104, 64
        %v6645 = vpop.permute.xlu0 %6644
        %6646 = vrot.lane.b32.xlu0 %v6106, 64
        %v6647 = vpop.permute.xlu0 %6646
        %6648 = vrot.lane.b32.xlu0 %v6109, 64
        %v6649 = vpop.permute.xlu0 %6648
        %6650 = vrot.lane.b32.xlu0 %v6111, 64
        %v6651 = vpop.permute.xlu0 %6650
        %6652 = vrot.lane.b32.xlu0 %v6114, 64
        %v6653 = vpop.permute.xlu0 %6652
        %6654 = vrot.lane.b32.xlu0 %v6116, 64
        %v6655 = vpop.permute.xlu0 %6654
        %6656 = vrot.lane.b32.xlu0 %v6119, 64
        %v6657 = vpop.permute.xlu0 %6656
        %6658 = vrot.lane.b32.xlu0 %v6121, 64
        %v6659 = vpop.permute.xlu0 %6658
        %6660 = vrot.lane.b32.xlu0 %v6124, 64
        %v6661 = vpop.permute.xlu0 %6660
        %6662 = vrot.lane.b32.xlu0 %v6126, 64
        %v6663 = vpop.permute.xlu0 %6662
        %6664 = vrot.lane.b32.xlu0 %v6129, 64
        %v6665 = vpop.permute.xlu0 %6664
        %6666 = vrot.lane.b32.xlu0 %v6131, 64
        %v6667 = vpop.permute.xlu0 %6666
        %6668 = vrot.lane.b32.xlu0 %v6134, 64
        %v6669 = vpop.permute.xlu0 %6668
        %6670 = vrot.lane.b32.xlu0 %v6136, 64
        %v6671 = vpop.permute.xlu0 %6670
        %6672 = vrot.lane.b32.xlu0 %v6139, 64
        %v6673 = vpop.permute.xlu0 %6672
        %6674 = vrot.lane.b32.xlu0 %v6141, 64
        %v6675 = vpop.permute.xlu0 %6674
        %6676 = vrot.lane.b32.xlu0 %v6144, 64
        %v6677 = vpop.permute.xlu0 %6676
        %6678 = vrot.lane.b32.xlu0 %v6146, 64
        %v6679 = vpop.permute.xlu0 %6678
        %6680 = vrot.lane.b32.xlu0 %v6149, 64
        %v6681 = vpop.permute.xlu0 %6680
        %6682 = vrot.lane.b32.xlu0 %v6151, 64
        %v6683 = vpop.permute.xlu0 %6682
        %6684 = vrot.lane.b32.xlu0 %v6621, 64
        %v6685 = vpop.permute.xlu0 %6684
        %6686 = vrot.lane.b32.xlu0 %v6623, 64
        %v6687 = vpop.permute.xlu0 %6686
        %6720 = vst.msk [vmem:[#allocation3] sm:$0xff] %vm1312, %v6625
        %6721 = vst.msk [vmem:[#allocation3 + $0x10] sm:$0xff] %vm1312, %v6627
        %6722 = vst.msk [vmem:[#allocation3 + $0x20] sm:$0xff] %vm1312, %v6629
        %6723 = vst.msk [vmem:[#allocation3 + $0x30] sm:$0xff] %vm1312, %v6631
        %6724 = vst.msk [vmem:[#allocation3 + $0x40] sm:$0xff] %vm1312, %v6633
        %6725 = vst.msk [vmem:[#allocation3 + $0x50] sm:$0xff] %vm1312, %v6635
        %6726 = vst.msk [vmem:[#allocation3 + $0x60] sm:$0xff] %vm1312, %v6637
        %6727 = vst.msk [vmem:[#allocation3 + $0x70] sm:$0xff] %vm1312, %v6639
        %6728 = vst.msk [vmem:[#allocation3 + $0x80] sm:$0xff] %vm1312, %v6641
        %6729 = vst.msk [vmem:[#allocation3 + $0x90] sm:$0xff] %vm1312, %v6643
        %6730 = vst.msk [vmem:[#allocation3 + $0xa0] sm:$0xff] %vm1312, %v6645
        %6731 = vst.msk [vmem:[#allocation3 + $0xb0] sm:$0xff] %vm1312, %v6647
        %6732 = vst.msk [vmem:[#allocation3 + $0xc0] sm:$0xff] %vm1312, %v6649
        %6733 = vst.msk [vmem:[#allocation3 + $0xd0] sm:$0xff] %vm1312, %v6651
        %6734 = vst.msk [vmem:[#allocation3 + $0xe0] sm:$0xff] %vm1312, %v6653
        %6735 = vst.msk [vmem:[#allocation3 + $0xf0] sm:$0xff] %vm1312, %v6655
        %6736 = vst.msk [vmem:[#allocation3 + $0x100] sm:$0xff] %vm1312, %v6657
        %6737 = vst.msk [vmem:[#allocation3 + $0x110] sm:$0xff] %vm1312, %v6659
        %6738 = vst.msk [vmem:[#allocation3 + $0x120] sm:$0xff] %vm1312, %v6661
        %6739 = vst.msk [vmem:[#allocation3 + $0x130] sm:$0xff] %vm1312, %v6663
        %6740 = vst.msk [vmem:[#allocation3 + $0x140] sm:$0xff] %vm1312, %v6665
        %6741 = vst.msk [vmem:[#allocation3 + $0x150] sm:$0xff] %vm1312, %v6667
        %6742 = vst.msk [vmem:[#allocation3 + $0x160] sm:$0xff] %vm1312, %v6669
        %6743 = vst.msk [vmem:[#allocation3 + $0x170] sm:$0xff] %vm1312, %v6671
        %6744 = vst.msk [vmem:[#allocation3 + $0x180] sm:$0xff] %vm1312, %v6673
        %6745 = vst.msk [vmem:[#allocation3 + $0x190] sm:$0xff] %vm1312, %v6675
        %6746 = vst.msk [vmem:[#allocation3 + $0x1a0] sm:$0xff] %vm1312, %v6677
        %6747 = vst.msk [vmem:[#allocation3 + $0x1b0] sm:$0xff] %vm1312, %v6679
        %6748 = vst.msk [vmem:[#allocation3 + $0x1c0] sm:$0xff] %vm1312, %v6681
        %6749 = vst.msk [vmem:[#allocation3 + $0x1d0] sm:$0xff] %vm1312, %v6683
        %6750 = vst.msk [vmem:[#allocation3 + $0x1e0] sm:$0xff] %vm1312, %v6685
        %6751 = vst.msk [vmem:[#allocation3 + $0x1f0] sm:$0xff] %vm1312, %v6687
        %v6752 = vrot.slane %v5986, 2
        %v6753 = vrot.slane %v5987, 2
        %v6754 = vsel %vm869, %v6752, %v6753
        %v6755 = vrot.slane %v5988, 2
        %v6756 = vsel %vm869, %v6753, %v6755
        %6757 = vrot.lane.b32.xlu0 %v6287, 80
        %v6758 = vpop.permute.xlu0 %6757
        %6759 = vrot.lane.b32.xlu0 %v6289, 80
        %v6760 = vpop.permute.xlu0 %6759
        %6761 = vrot.lane.b32.xlu0 %v6292, 80
        %v6762 = vpop.permute.xlu0 %6761
        %6763 = vrot.lane.b32.xlu0 %v6294, 80
        %v6764 = vpop.permute.xlu0 %6763
        %6765 = vrot.lane.b32.xlu0 %v6297, 80
        %v6766 = vpop.permute.xlu0 %6765
        %6767 = vrot.lane.b32.xlu0 %v6299, 80
        %v6768 = vpop.permute.xlu0 %6767
        %6769 = vrot.lane.b32.xlu0 %v6302, 80
        %v6770 = vpop.permute.xlu0 %6769
        %6771 = vrot.lane.b32.xlu0 %v6304, 80
        %v6772 = vpop.permute.xlu0 %6771
        %6773 = vrot.lane.b32.xlu0 %v6307, 80
        %v6774 = vpop.permute.xlu0 %6773
        %6775 = vrot.lane.b32.xlu0 %v6309, 80
        %v6776 = vpop.permute.xlu0 %6775
        %6777 = vrot.lane.b32.xlu0 %v6312, 80
        %v6778 = vpop.permute.xlu0 %6777
        %6779 = vrot.lane.b32.xlu0 %v6314, 80
        %v6780 = vpop.permute.xlu0 %6779
        %6781 = vrot.lane.b32.xlu0 %v6317, 80
        %v6782 = vpop.permute.xlu0 %6781
        %6783 = vrot.lane.b32.xlu0 %v6319, 80
        %v6784 = vpop.permute.xlu0 %6783
        %6785 = vrot.lane.b32.xlu0 %v6322, 80
        %v6786 = vpop.permute.xlu0 %6785
        %6787 = vrot.lane.b32.xlu0 %v6324, 80
        %v6788 = vpop.permute.xlu0 %6787
        %6789 = vrot.lane.b32.xlu0 %v6327, 80
        %v6790 = vpop.permute.xlu0 %6789
        %6791 = vrot.lane.b32.xlu0 %v6329, 80
        %v6792 = vpop.permute.xlu0 %6791
        %6793 = vrot.lane.b32.xlu0 %v6332, 80
        %v6794 = vpop.permute.xlu0 %6793
        %6795 = vrot.lane.b32.xlu0 %v6334, 80
        %v6796 = vpop.permute.xlu0 %6795
        %6797 = vrot.lane.b32.xlu0 %v6337, 80
        %v6798 = vpop.permute.xlu0 %6797
        %6799 = vrot.lane.b32.xlu0 %v6339, 80
        %v6800 = vpop.permute.xlu0 %6799
        %6801 = vrot.lane.b32.xlu0 %v6342, 80
        %v6802 = vpop.permute.xlu0 %6801
        %6803 = vrot.lane.b32.xlu0 %v6344, 80
        %v6804 = vpop.permute.xlu0 %6803
        %6805 = vrot.lane.b32.xlu0 %v6347, 80
        %v6806 = vpop.permute.xlu0 %6805
        %6807 = vrot.lane.b32.xlu0 %v6349, 80
        %v6808 = vpop.permute.xlu0 %6807
        %6809 = vrot.lane.b32.xlu0 %v6352, 80
        %v6810 = vpop.permute.xlu0 %6809
        %6811 = vrot.lane.b32.xlu0 %v6354, 80
        %v6812 = vpop.permute.xlu0 %6811
        %6813 = vrot.lane.b32.xlu0 %v6357, 80
        %v6814 = vpop.permute.xlu0 %6813
        %6815 = vrot.lane.b32.xlu0 %v6359, 80
        %v6816 = vpop.permute.xlu0 %6815
        %6817 = vrot.lane.b32.xlu0 %v6754, 80
        %v6818 = vpop.permute.xlu0 %6817
        %6819 = vrot.lane.b32.xlu0 %v6756, 80
        %v6820 = vpop.permute.xlu0 %6819
        %6853 = vst.msk [vmem:[#allocation3] sm:$0xff] %vm1446, %v6758
        %6854 = vst.msk [vmem:[#allocation3 + $0x10] sm:$0xff] %vm1446, %v6760
        %6855 = vst.msk [vmem:[#allocation3 + $0x20] sm:$0xff] %vm1446, %v6762
        %6856 = vst.msk [vmem:[#allocation3 + $0x30] sm:$0xff] %vm1446, %v6764
        %6857 = vst.msk [vmem:[#allocation3 + $0x40] sm:$0xff] %vm1446, %v6766
        %6858 = vst.msk [vmem:[#allocation3 + $0x50] sm:$0xff] %vm1446, %v6768
        %6859 = vst.msk [vmem:[#allocation3 + $0x60] sm:$0xff] %vm1446, %v6770
        %6860 = vst.msk [vmem:[#allocation3 + $0x70] sm:$0xff] %vm1446, %v6772
        %6861 = vst.msk [vmem:[#allocation3 + $0x80] sm:$0xff] %vm1446, %v6774
        %6862 = vst.msk [vmem:[#allocation3 + $0x90] sm:$0xff] %vm1446, %v6776
        %6863 = vst.msk [vmem:[#allocation3 + $0xa0] sm:$0xff] %vm1446, %v6778
        %6864 = vst.msk [vmem:[#allocation3 + $0xb0] sm:$0xff] %vm1446, %v6780
        %6865 = vst.msk [vmem:[#allocation3 + $0xc0] sm:$0xff] %vm1446, %v6782
        %6866 = vst.msk [vmem:[#allocation3 + $0xd0] sm:$0xff] %vm1446, %v6784
        %6867 = vst.msk [vmem:[#allocation3 + $0xe0] sm:$0xff] %vm1446, %v6786
        %6868 = vst.msk [vmem:[#allocation3 + $0xf0] sm:$0xff] %vm1446, %v6788
        %6869 = vst.msk [vmem:[#allocation3 + $0x100] sm:$0xff] %vm1446, %v6790
        %6870 = vst.msk [vmem:[#allocation3 + $0x110] sm:$0xff] %vm1446, %v6792
        %6871 = vst.msk [vmem:[#allocation3 + $0x120] sm:$0xff] %vm1446, %v6794
        %6872 = vst.msk [vmem:[#allocation3 + $0x130] sm:$0xff] %vm1446, %v6796
        %6873 = vst.msk [vmem:[#allocation3 + $0x140] sm:$0xff] %vm1446, %v6798
        %6874 = vst.msk [vmem:[#allocation3 + $0x150] sm:$0xff] %vm1446, %v6800
        %6875 = vst.msk [vmem:[#allocation3 + $0x160] sm:$0xff] %vm1446, %v6802
        %6876 = vst.msk [vmem:[#allocation3 + $0x170] sm:$0xff] %vm1446, %v6804
        %6877 = vst.msk [vmem:[#allocation3 + $0x180] sm:$0xff] %vm1446, %v6806
        %6878 = vst.msk [vmem:[#allocation3 + $0x190] sm:$0xff] %vm1446, %v6808
        %6879 = vst.msk [vmem:[#allocation3 + $0x1a0] sm:$0xff] %vm1446, %v6810
        %6880 = vst.msk [vmem:[#allocation3 + $0x1b0] sm:$0xff] %vm1446, %v6812
        %6881 = vst.msk [vmem:[#allocation3 + $0x1c0] sm:$0xff] %vm1446, %v6814
        %6882 = vst.msk [vmem:[#allocation3 + $0x1d0] sm:$0xff] %vm1446, %v6816
        %6883 = vst.msk [vmem:[#allocation3 + $0x1e0] sm:$0xff] %vm1446, %v6818
        %6884 = vst.msk [vmem:[#allocation3 + $0x1f0] sm:$0xff] %vm1446, %v6820
        %6887 = vrot.lane.b32.xlu0 %v5944, 96
        %v6888 = vpop.permute.xlu0 %6887
        %6889 = vrot.lane.b32.xlu0 %v5945, 96
        %v6890 = vpop.permute.xlu0 %6889
        %6891 = vrot.lane.b32.xlu0 %v5947, 96
        %v6892 = vpop.permute.xlu0 %6891
        %6893 = vrot.lane.b32.xlu0 %v5948, 96
        %v6894 = vpop.permute.xlu0 %6893
        %6895 = vrot.lane.b32.xlu0 %v5950, 96
        %v6896 = vpop.permute.xlu0 %6895
        %6897 = vrot.lane.b32.xlu0 %v5951, 96
        %v6898 = vpop.permute.xlu0 %6897
        %6899 = vrot.lane.b32.xlu0 %v5953, 96
        %v6900 = vpop.permute.xlu0 %6899
        %6901 = vrot.lane.b32.xlu0 %v5954, 96
        %v6902 = vpop.permute.xlu0 %6901
        %6903 = vrot.lane.b32.xlu0 %v5956, 96
        %v6904 = vpop.permute.xlu0 %6903
        %6905 = vrot.lane.b32.xlu0 %v5957, 96
        %v6906 = vpop.permute.xlu0 %6905
        %6907 = vrot.lane.b32.xlu0 %v5959, 96
        %v6908 = vpop.permute.xlu0 %6907
        %6909 = vrot.lane.b32.xlu0 %v5960, 96
        %v6910 = vpop.permute.xlu0 %6909
        %6911 = vrot.lane.b32.xlu0 %v5962, 96
        %v6912 = vpop.permute.xlu0 %6911
        %6913 = vrot.lane.b32.xlu0 %v5963, 96
        %v6914 = vpop.permute.xlu0 %6913
        %6915 = vrot.lane.b32.xlu0 %v5965, 96
        %v6916 = vpop.permute.xlu0 %6915
        %6917 = vrot.lane.b32.xlu0 %v5966, 96
        %v6918 = vpop.permute.xlu0 %6917
        %6919 = vrot.lane.b32.xlu0 %v5968, 96
        %v6920 = vpop.permute.xlu0 %6919
        %6921 = vrot.lane.b32.xlu0 %v5969, 96
        %v6922 = vpop.permute.xlu0 %6921
        %6923 = vrot.lane.b32.xlu0 %v5971, 96
        %v6924 = vpop.permute.xlu0 %6923
        %6925 = vrot.lane.b32.xlu0 %v5972, 96
        %v6926 = vpop.permute.xlu0 %6925
        %6927 = vrot.lane.b32.xlu0 %v5974, 96
        %v6928 = vpop.permute.xlu0 %6927
        %6929 = vrot.lane.b32.xlu0 %v5975, 96
        %v6930 = vpop.permute.xlu0 %6929
        %6931 = vrot.lane.b32.xlu0 %v5977, 96
        %v6932 = vpop.permute.xlu0 %6931
        %6933 = vrot.lane.b32.xlu0 %v5978, 96
        %v6934 = vpop.permute.xlu0 %6933
        %6935 = vrot.lane.b32.xlu0 %v5980, 96
        %v6936 = vpop.permute.xlu0 %6935
        %6937 = vrot.lane.b32.xlu0 %v5981, 96
        %v6938 = vpop.permute.xlu0 %6937
        %6939 = vrot.lane.b32.xlu0 %v5983, 96
        %v6940 = vpop.permute.xlu0 %6939
        %6941 = vrot.lane.b32.xlu0 %v5984, 96
        %v6942 = vpop.permute.xlu0 %6941
        %6943 = vrot.lane.b32.xlu0 %v5986, 96
        %v6944 = vpop.permute.xlu0 %6943
        %6945 = vrot.lane.b32.xlu0 %v5987, 96
        %v6946 = vpop.permute.xlu0 %6945
        %6947 = vrot.lane.b32.xlu0 %v5989, 96
        %v6948 = vpop.permute.xlu0 %6947
        %6949 = vrot.lane.b32.xlu0 %v5990, 96
        %v6950 = vpop.permute.xlu0 %6949
        %6983 = vst.msk [vmem:[#allocation3] sm:$0xff] %vm1577, %v6888
        %6984 = vst.msk [vmem:[#allocation3 + $0x10] sm:$0xff] %vm1577, %v6890
        %6985 = vst.msk [vmem:[#allocation3 + $0x20] sm:$0xff] %vm1577, %v6892
        %6986 = vst.msk [vmem:[#allocation3 + $0x30] sm:$0xff] %vm1577, %v6894
        %6987 = vst.msk [vmem:[#allocation3 + $0x40] sm:$0xff] %vm1577, %v6896
        %6988 = vst.msk [vmem:[#allocation3 + $0x50] sm:$0xff] %vm1577, %v6898
        %6989 = vst.msk [vmem:[#allocation3 + $0x60] sm:$0xff] %vm1577, %v6900
        %6990 = vst.msk [vmem:[#allocation3 + $0x70] sm:$0xff] %vm1577, %v6902
        %6991 = vst.msk [vmem:[#allocation3 + $0x80] sm:$0xff] %vm1577, %v6904
        %6992 = vst.msk [vmem:[#allocation3 + $0x90] sm:$0xff] %vm1577, %v6906
        %6993 = vst.msk [vmem:[#allocation3 + $0xa0] sm:$0xff] %vm1577, %v6908
        %6994 = vst.msk [vmem:[#allocation3 + $0xb0] sm:$0xff] %vm1577, %v6910
        %6995 = vst.msk [vmem:[#allocation3 + $0xc0] sm:$0xff] %vm1577, %v6912
        %6996 = vst.msk [vmem:[#allocation3 + $0xd0] sm:$0xff] %vm1577, %v6914
        %6997 = vst.msk [vmem:[#allocation3 + $0xe0] sm:$0xff] %vm1577, %v6916
        %6998 = vst.msk [vmem:[#allocation3 + $0xf0] sm:$0xff] %vm1577, %v6918
        %6999 = vst.msk [vmem:[#allocation3 + $0x100] sm:$0xff] %vm1577, %v6920
        %7000 = vst.msk [vmem:[#allocation3 + $0x110] sm:$0xff] %vm1577, %v6922
        %7001 = vst.msk [vmem:[#allocation3 + $0x120] sm:$0xff] %vm1577, %v6924
        %7002 = vst.msk [vmem:[#allocation3 + $0x130] sm:$0xff] %vm1577, %v6926
        %7003 = vst.msk [vmem:[#allocation3 + $0x140] sm:$0xff] %vm1577, %v6928
        %7004 = vst.msk [vmem:[#allocation3 + $0x150] sm:$0xff] %vm1577, %v6930
        %7005 = vst.msk [vmem:[#allocation3 + $0x160] sm:$0xff] %vm1577, %v6932
        %7006 = vst.msk [vmem:[#allocation3 + $0x170] sm:$0xff] %vm1577, %v6934
        %7007 = vst.msk [vmem:[#allocation3 + $0x180] sm:$0xff] %vm1577, %v6936
        %7008 = vst.msk [vmem:[#allocation3 + $0x190] sm:$0xff] %vm1577, %v6938
        %7009 = vst.msk [vmem:[#allocation3 + $0x1a0] sm:$0xff] %vm1577, %v6940
        %7010 = vst.msk [vmem:[#allocation3 + $0x1b0] sm:$0xff] %vm1577, %v6942
        %7011 = vst.msk [vmem:[#allocation3 + $0x1c0] sm:$0xff] %vm1577, %v6944
        %7012 = vst.msk [vmem:[#allocation3 + $0x1d0] sm:$0xff] %vm1577, %v6946
        %7013 = vst.msk [vmem:[#allocation3 + $0x1e0] sm:$0xff] %vm1577, %v6948
        %7014 = vst.msk [vmem:[#allocation3 + $0x1f0] sm:$0xff] %vm1577, %v6950
        %v7016 = vrot.slane %v5989, 1
        %v7017 = vrot.slane %v5990, 1
        %v7018 = vsel %vm659, %v7016, %v7017
        %v7019 = vrot.slane %v5991, 1
        %v7020 = vsel %vm659, %v7017, %v7019
        %7021 = vrot.lane.b32.xlu0 %v6084, 112
        %v7022 = vpop.permute.xlu0 %7021
        %7023 = vrot.lane.b32.xlu0 %v6086, 112
        %v7024 = vpop.permute.xlu0 %7023
        %7025 = vrot.lane.b32.xlu0 %v6089, 112
        %v7026 = vpop.permute.xlu0 %7025
        %7027 = vrot.lane.b32.xlu0 %v6091, 112
        %v7028 = vpop.permute.xlu0 %7027
        %7029 = vrot.lane.b32.xlu0 %v6094, 112
        %v7030 = vpop.permute.xlu0 %7029
        %7031 = vrot.lane.b32.xlu0 %v6096, 112
        %v7032 = vpop.permute.xlu0 %7031
        %7033 = vrot.lane.b32.xlu0 %v6099, 112
        %v7034 = vpop.permute.xlu0 %7033
        %7035 = vrot.lane.b32.xlu0 %v6101, 112
        %v7036 = vpop.permute.xlu0 %7035
        %7037 = vrot.lane.b32.xlu0 %v6104, 112
        %v7038 = vpop.permute.xlu0 %7037
        %7039 = vrot.lane.b32.xlu0 %v6106, 112
        %v7040 = vpop.permute.xlu0 %7039
        %7041 = vrot.lane.b32.xlu0 %v6109, 112
        %v7042 = vpop.permute.xlu0 %7041
        %7043 = vrot.lane.b32.xlu0 %v6111, 112
        %v7044 = vpop.permute.xlu0 %7043
        %7045 = vrot.lane.b32.xlu0 %v6114, 112
        %v7046 = vpop.permute.xlu0 %7045
        %7047 = vrot.lane.b32.xlu0 %v6116, 112
        %v7048 = vpop.permute.xlu0 %7047
        %7049 = vrot.lane.b32.xlu0 %v6119, 112
        %v7050 = vpop.permute.xlu0 %7049
        %7051 = vrot.lane.b32.xlu0 %v6121, 112
        %v7052 = vpop.permute.xlu0 %7051
        %7053 = vrot.lane.b32.xlu0 %v6124, 112
        %v7054 = vpop.permute.xlu0 %7053
        %7055 = vrot.lane.b32.xlu0 %v6126, 112
        %v7056 = vpop.permute.xlu0 %7055
        %7057 = vrot.lane.b32.xlu0 %v6129, 112
        %v7058 = vpop.permute.xlu0 %7057
        %7059 = vrot.lane.b32.xlu0 %v6131, 112
        %v7060 = vpop.permute.xlu0 %7059
        %7061 = vrot.lane.b32.xlu0 %v6134, 112
        %v7062 = vpop.permute.xlu0 %7061
        %7063 = vrot.lane.b32.xlu0 %v6136, 112
        %v7064 = vpop.permute.xlu0 %7063
        %7065 = vrot.lane.b32.xlu0 %v6139, 112
        %v7066 = vpop.permute.xlu0 %7065
        %7067 = vrot.lane.b32.xlu0 %v6141, 112
        %v7068 = vpop.permute.xlu0 %7067
        %7069 = vrot.lane.b32.xlu0 %v6144, 112
        %v7070 = vpop.permute.xlu0 %7069
        %7071 = vrot.lane.b32.xlu0 %v6146, 112
        %v7072 = vpop.permute.xlu0 %7071
        %7073 = vrot.lane.b32.xlu0 %v6149, 112
        %v7074 = vpop.permute.xlu0 %7073
        %7075 = vrot.lane.b32.xlu0 %v6151, 112
        %v7076 = vpop.permute.xlu0 %7075
        %7077 = vrot.lane.b32.xlu0 %v6621, 112
        %v7078 = vpop.permute.xlu0 %7077
        %7079 = vrot.lane.b32.xlu0 %v6623, 112
        %v7080 = vpop.permute.xlu0 %7079
        %7081 = vrot.lane.b32.xlu0 %v7018, 112
        %v7082 = vpop.permute.xlu0 %7081
        %7083 = vrot.lane.b32.xlu0 %v7020, 112
        %v7084 = vpop.permute.xlu0 %7083
        %7117 = vst.msk [vmem:[#allocation3] sm:$0xff] %vm1712, %v7022
        %7118 = vst.msk [vmem:[#allocation3 + $0x10] sm:$0xff] %vm1712, %v7024
        %7119 = vst.msk [vmem:[#allocation3 + $0x20] sm:$0xff] %vm1712, %v7026
        %7120 = vst.msk [vmem:[#allocation3 + $0x30] sm:$0xff] %vm1712, %v7028
        %7121 = vst.msk [vmem:[#allocation3 + $0x40] sm:$0xff] %vm1712, %v7030
        %7122 = vst.msk [vmem:[#allocation3 + $0x50] sm:$0xff] %vm1712, %v7032
        %7123 = vst.msk [vmem:[#allocation3 + $0x60] sm:$0xff] %vm1712, %v7034
        %7124 = vst.msk [vmem:[#allocation3 + $0x70] sm:$0xff] %vm1712, %v7036
        %7125 = vst.msk [vmem:[#allocation3 + $0x80] sm:$0xff] %vm1712, %v7038
        %7126 = vst.msk [vmem:[#allocation3 + $0x90] sm:$0xff] %vm1712, %v7040
        %7127 = vst.msk [vmem:[#allocation3 + $0xa0] sm:$0xff] %vm1712, %v7042
        %7128 = vst.msk [vmem:[#allocation3 + $0xb0] sm:$0xff] %vm1712, %v7044
        %7129 = vst.msk [vmem:[#allocation3 + $0xc0] sm:$0xff] %vm1712, %v7046
        %7130 = vst.msk [vmem:[#allocation3 + $0xd0] sm:$0xff] %vm1712, %v7048
        %7131 = vst.msk [vmem:[#allocation3 + $0xe0] sm:$0xff] %vm1712, %v7050
        %7132 = vst.msk [vmem:[#allocation3 + $0xf0] sm:$0xff] %vm1712, %v7052
        %7133 = vst.msk [vmem:[#allocation3 + $0x100] sm:$0xff] %vm1712, %v7054
        %7134 = vst.msk [vmem:[#allocation3 + $0x110] sm:$0xff] %vm1712, %v7056
        %7135 = vst.msk [vmem:[#allocation3 + $0x120] sm:$0xff] %vm1712, %v7058
        %7136 = vst.msk [vmem:[#allocation3 + $0x130] sm:$0xff] %vm1712, %v7060
        %7137 = vst.msk [vmem:[#allocation3 + $0x140] sm:$0xff] %vm1712, %v7062
        %7138 = vst.msk [vmem:[#allocation3 + $0x150] sm:$0xff] %vm1712, %v7064
        %7139 = vst.msk [vmem:[#allocation3 + $0x160] sm:$0xff] %vm1712, %v7066
        %7140 = vst.msk [vmem:[#allocation3 + $0x170] sm:$0xff] %vm1712, %v7068
        %7141 = vst.msk [vmem:[#allocation3 + $0x180] sm:$0xff] %vm1712, %v7070
        %7142 = vst.msk [vmem:[#allocation3 + $0x190] sm:$0xff] %vm1712, %v7072
        %7143 = vst.msk [vmem:[#allocation3 + $0x1a0] sm:$0xff] %vm1712, %v7074
        %7144 = vst.msk [vmem:[#allocation3 + $0x1b0] sm:$0xff] %vm1712, %v7076
        %7145 = vst.msk [vmem:[#allocation3 + $0x1c0] sm:$0xff] %vm1712, %v7078
        %7146 = vst.msk [vmem:[#allocation3 + $0x1d0] sm:$0xff] %vm1712, %v7080
        %7147 = vst.msk [vmem:[#allocation3 + $0x1e0] sm:$0xff] %vm1712, %v7082
        %7148 = vst.msk [vmem:[#allocation3 + $0x1f0] sm:$0xff] %vm1712, %v7084
        %v7149 = vrot.slane %v5989, 2
        %v7150 = vrot.slane %v5990, 2
        %v7151 = vsel %vm869, %v7149, %v7150
        %v7152 = vrot.slane %v5991, 2
        %v7153 = vsel %vm869, %v7150, %v7152
        %7186 = vst.msk [vmem:[#allocation3 + $0x8] sm:$0xff] %vm417, %v6292
        %7187 = vst.msk [vmem:[#allocation3 + $0x18] sm:$0xff] %vm417, %v6294
        %7188 = vst.msk [vmem:[#allocation3 + $0x28] sm:$0xff] %vm417, %v6297
        %7189 = vst.msk [vmem:[#allocation3 + $0x38] sm:$0xff] %vm417, %v6299
        %7190 = vst.msk [vmem:[#allocation3 + $0x48] sm:$0xff] %vm417, %v6302
        %7191 = vst.msk [vmem:[#allocation3 + $0x58] sm:$0xff] %vm417, %v6304
        %7192 = vst.msk [vmem:[#allocation3 + $0x68] sm:$0xff] %vm417, %v6307
        %7193 = vst.msk [vmem:[#allocation3 + $0x78] sm:$0xff] %vm417, %v6309
        %7194 = vst.msk [vmem:[#allocation3 + $0x88] sm:$0xff] %vm417, %v6312
        %7195 = vst.msk [vmem:[#allocation3 + $0x98] sm:$0xff] %vm417, %v6314
        %7196 = vst.msk [vmem:[#allocation3 + $0xa8] sm:$0xff] %vm417, %v6317
        %7197 = vst.msk [vmem:[#allocation3 + $0xb8] sm:$0xff] %vm417, %v6319
        %7198 = vst.msk [vmem:[#allocation3 + $0xc8] sm:$0xff] %vm417, %v6322
        %7199 = vst.msk [vmem:[#allocation3 + $0xd8] sm:$0xff] %vm417, %v6324
        %7200 = vst.msk [vmem:[#allocation3 + $0xe8] sm:$0xff] %vm417, %v6327
        %7201 = vst.msk [vmem:[#allocation3 + $0xf8] sm:$0xff] %vm417, %v6329
        %7202 = vst.msk [vmem:[#allocation3 + $0x108] sm:$0xff] %vm417, %v6332
        %7203 = vst.msk [vmem:[#allocation3 + $0x118] sm:$0xff] %vm417, %v6334
        %7204 = vst.msk [vmem:[#allocation3 + $0x128] sm:$0xff] %vm417, %v6337
        %7205 = vst.msk [vmem:[#allocation3 + $0x138] sm:$0xff] %vm417, %v6339
        %7206 = vst.msk [vmem:[#allocation3 + $0x148] sm:$0xff] %vm417, %v6342
        %7207 = vst.msk [vmem:[#allocation3 + $0x158] sm:$0xff] %vm417, %v6344
        %7208 = vst.msk [vmem:[#allocation3 + $0x168] sm:$0xff] %vm417, %v6347
        %7209 = vst.msk [vmem:[#allocation3 + $0x178] sm:$0xff] %vm417, %v6349
        %7210 = vst.msk [vmem:[#allocation3 + $0x188] sm:$0xff] %vm417, %v6352
        %7211 = vst.msk [vmem:[#allocation3 + $0x198] sm:$0xff] %vm417, %v6354
        %7212 = vst.msk [vmem:[#allocation3 + $0x1a8] sm:$0xff] %vm417, %v6357
        %7213 = vst.msk [vmem:[#allocation3 + $0x1b8] sm:$0xff] %vm417, %v6359
        %7214 = vst.msk [vmem:[#allocation3 + $0x1c8] sm:$0xff] %vm417, %v6754
        %7215 = vst.msk [vmem:[#allocation3 + $0x1d8] sm:$0xff] %vm417, %v6756
        %7216 = vst.msk [vmem:[#allocation3 + $0x1e8] sm:$0xff] %vm417, %v7151
        %7217 = vst.msk [vmem:[#allocation3 + $0x1f8] sm:$0xff] %vm417, %v7153
        %v7218 = vld [vmem:[#allocation3] sm:$0xff]
        %v7219 = vld [vmem:[#allocation3 + $0x8] sm:$0xff]
        %v7220 = vld [vmem:[#allocation3 + $0x10] sm:$0xff]
        %v7221 = vld [vmem:[#allocation3 + $0x18] sm:$0xff]
        %v7222 = vld [vmem:[#allocation3 + $0x20] sm:$0xff]
        %v7223 = vld [vmem:[#allocation3 + $0x28] sm:$0xff]
        %v7224 = vld [vmem:[#allocation3 + $0x30] sm:$0xff]
        %v7225 = vld [vmem:[#allocation3 + $0x38] sm:$0xff]
        %v7226 = vld [vmem:[#allocation3 + $0x40] sm:$0xff]
        %v7227 = vld [vmem:[#allocation3 + $0x48] sm:$0xff]
        %v7228 = vld [vmem:[#allocation3 + $0x50] sm:$0xff]
        %v7229 = vld [vmem:[#allocation3 + $0x58] sm:$0xff]
        %v7230 = vld [vmem:[#allocation3 + $0x60] sm:$0xff]
        %v7231 = vld [vmem:[#allocation3 + $0x68] sm:$0xff]
        %v7232 = vld [vmem:[#allocation3 + $0x70] sm:$0xff]
        %v7233 = vld [vmem:[#allocation3 + $0x78] sm:$0xff]
        %v7234 = vld [vmem:[#allocation3 + $0x80] sm:$0xff]
        %v7235 = vld [vmem:[#allocation3 + $0x88] sm:$0xff]
        %v7236 = vld [vmem:[#allocation3 + $0x90] sm:$0xff]
        %v7237 = vld [vmem:[#allocation3 + $0x98] sm:$0xff]
        %v7238 = vld [vmem:[#allocation3 + $0xa0] sm:$0xff]
        %v7239 = vld [vmem:[#allocation3 + $0xa8] sm:$0xff]
        %v7240 = vld [vmem:[#allocation3 + $0xb0] sm:$0xff]
        %v7241 = vld [vmem:[#allocation3 + $0xb8] sm:$0xff]
        %v7242 = vld [vmem:[#allocation3 + $0xc0] sm:$0xff]
        %v7243 = vld [vmem:[#allocation3 + $0xc8] sm:$0xff]
        %v7244 = vld [vmem:[#allocation3 + $0xd0] sm:$0xff]
        %v7245 = vld [vmem:[#allocation3 + $0xd8] sm:$0xff]
        %v7246 = vld [vmem:[#allocation3 + $0xe0] sm:$0xff]
        %v7247 = vld [vmem:[#allocation3 + $0xe8] sm:$0xff]
        %v7248 = vld [vmem:[#allocation3 + $0xf0] sm:$0xff]
        %v7249 = vld [vmem:[#allocation3 + $0xf8] sm:$0xff]
        %v7250 = vld [vmem:[#allocation3 + $0x100] sm:$0xff]
        %v7251 = vld [vmem:[#allocation3 + $0x108] sm:$0xff]
        %v7252 = vld [vmem:[#allocation3 + $0x110] sm:$0xff]
        %v7253 = vld [vmem:[#allocation3 + $0x118] sm:$0xff]
        %v7254 = vld [vmem:[#allocation3 + $0x120] sm:$0xff]
        %v7255 = vld [vmem:[#allocation3 + $0x128] sm:$0xff]
        %v7256 = vld [vmem:[#allocation3 + $0x130] sm:$0xff]
        %v7257 = vld [vmem:[#allocation3 + $0x138] sm:$0xff]
        %v7258 = vld [vmem:[#allocation3 + $0x140] sm:$0xff]
        %v7259 = vld [vmem:[#allocation3 + $0x148] sm:$0xff]
        %v7260 = vld [vmem:[#allocation3 + $0x150] sm:$0xff]
        %v7261 = vld [vmem:[#allocation3 + $0x158] sm:$0xff]
        %v7262 = vld [vmem:[#allocation3 + $0x160] sm:$0xff]
        %v7263 = vld [vmem:[#allocation3 + $0x168] sm:$0xff]
        %v7264 = vld [vmem:[#allocation3 + $0x170] sm:$0xff]
        %v7265 = vld [vmem:[#allocation3 + $0x178] sm:$0xff]
        %v7266 = vld [vmem:[#allocation3 + $0x180] sm:$0xff]
        %v7267 = vld [vmem:[#allocation3 + $0x188] sm:$0xff]
        %v7268 = vld [vmem:[#allocation3 + $0x190] sm:$0xff]
        %v7269 = vld [vmem:[#allocation3 + $0x198] sm:$0xff]
        %v7270 = vld [vmem:[#allocation3 + $0x1a0] sm:$0xff]
        %v7271 = vld [vmem:[#allocation3 + $0x1a8] sm:$0xff]
        %v7272 = vld [vmem:[#allocation3 + $0x1b0] sm:$0xff]
        %v7273 = vld [vmem:[#allocation3 + $0x1b8] sm:$0xff]
        %v7274 = vld [vmem:[#allocation3 + $0x1c0] sm:$0xff]
        %v7275 = vld [vmem:[#allocation3 + $0x1c8] sm:$0xff]
        %v7276 = vld [vmem:[#allocation3 + $0x1d0] sm:$0xff]
        %v7277 = vld [vmem:[#allocation3 + $0x1d8] sm:$0xff]
        %v7278 = vld [vmem:[#allocation3 + $0x1e0] sm:$0xff]
        %v7279 = vld [vmem:[#allocation3 + $0x1e8] sm:$0xff]
        %v7280 = vld [vmem:[#allocation3 + $0x1f0] sm:$0xff]
        %v7281 = vld [vmem:[#allocation3 + $0x1f8] sm:$0xff]
        %v7283 = vlaneseq
        %v7284 = vshrl.u32 %v7283, 7
        %v7285 = vsub.s32 0, %v7284
        %v7286 = vrot.slane %v5905, %v7285
        %v7289 = vsel %vm417, %v7219, 0
        %v7292 = vsel %vm417, %v7221, 0
        %v7295 = vsel %vm417, %v7223, 0
        %v7298 = vsel %vm417, %v7225, 0
        %v7301 = vsel %vm417, %v7227, 0
        %v7304 = vsel %vm417, %v7229, 0
        %v7307 = vsel %vm417, %v7231, 0
        %v7310 = vsel %vm417, %v7233, 0
        %v7313 = vsel %vm417, %v7235, 0
        %v7316 = vsel %vm417, %v7237, 0
        %v7319 = vsel %vm417, %v7239, 0
        %v7322 = vsel %vm417, %v7241, 0
        %v7325 = vsel %vm417, %v7243, 0
        %v7328 = vsel %vm417, %v7245, 0
        %v7331 = vsel %vm417, %v7247, 0
        %v7334 = vsel %vm417, %v7249, 0
        %v7337 = vsel %vm417, %v7251, 0
        %v7340 = vsel %vm417, %v7253, 0
        %v7343 = vsel %vm417, %v7255, 0
        %v7346 = vsel %vm417, %v7257, 0
        %v7349 = vsel %vm417, %v7259, 0
        %v7352 = vsel %vm417, %v7261, 0
        %v7355 = vsel %vm417, %v7263, 0
        %v7358 = vsel %vm417, %v7265, 0
        %v7361 = vsel %vm417, %v7267, 0
        %v7364 = vsel %vm417, %v7269, 0
        %v7367 = vsel %vm417, %v7271, 0
        %v7370 = vsel %vm417, %v7273, 0
        %v7373 = vsel %vm417, %v7275, 0
        %v7376 = vsel %vm417, %v7277, 0
        %v7379 = vsel %vm417, %v7279, 0
        %v7382 = vsel %vm417, %v7281, 0
        %7384 = vmatprep.subr.mxu0 0.0
        %7385 = vmatpush1.msra.mxu0 %v5886
        %7386 = vmatprep.subr.mxu0 0.0
        %7387 = vmatpush1.msra.mxu0 %v5887
        %7388 = vmatprep.subr.mxu0 0.0
        %7389 = vmatpush1.msra.mxu0 %v5888
        %7390 = vmatprep.subr.mxu0 0.0
        %7391 = vmatpush1.msra.mxu0 %v5889
        %7392 = vmatprep.subr.mxu0 0.0
        %7393 = vmatpush1.msra.mxu0 %v5890
        %7394 = vmatprep.subr.mxu0 0.0
        %7395 = vmatpush1.msra.mxu0 %v5891
        %7396 = vmatprep.subr.mxu0 0.0
        %7397 = vmatpush1.msra.mxu0 %v5892
        %7398 = vmatprep.subr.mxu0 0.0
        %7399 = vmatpush1.msra.mxu0 %v5893
        %7400 = vmatprep.subr.mxu0 0.0
        %7401 = vmatpush1.msra.mxu0 %v5894
        %7402 = vmatprep.subr.mxu0 0.0
        %7403 = vmatpush1.msra.mxu0 %v5895
        %7404 = vmatprep.subr.mxu0 0.0
        %7405 = vmatpush1.msra.mxu0 %v5896
        %7406 = vmatprep.subr.mxu0 0.0
        %7407 = vmatpush1.msra.mxu0 %v5897
        %7408 = vmatprep.subr.mxu0 0.0
        %7409 = vmatpush1.msra.mxu0 %v5898
        %7410 = vmatprep.subr.mxu0 0.0
        %7411 = vmatpush1.msra.mxu0 %v5899
        %7412 = vmatprep.subr.mxu0 0.0
        %7413 = vmatpush1.msra.mxu0 %v5900
        %7414 = vmatprep.subr.mxu0 0.0
        %7415 = vmatpush1.msra.mxu0 %v5901
        %7416 = vmatprep.subr.mxu0 0.0
        %7417 = vmatpush1.msra.mxu0 %v5902
        %7418 = vmatprep.subr.mxu0 0.0
        %7419 = vmatpush1.msra.mxu0 %v5903
        %7420 = vmatprep.subr.mxu0 0.0
        %7421 = vmatpush1.msra.mxu0 0.0
        %7422 = vmatprep.subr.mxu0 0.0
        %7423 = vmatpush1.msra.mxu0 0.0
        %7424 = vmatprep.subr.mxu0 0.0
        %7425 = vmatpush1.msra.mxu0 0.0
        %7426 = vmatprep.subr.mxu0 0.0
        %7427 = vmatpush1.msra.mxu0 0.0
        %7428 = vmatprep.subr.mxu0 0.0
        %7429 = vmatpush1.msra.mxu0 0.0
        %7430 = vmatprep.subr.mxu0 0.0
        %7431 = vmatpush1.msra.mxu0 0.0
        %7432 = vmatprep.subr.mxu0 0.0
        %7433 = vmatpush1.msra.mxu0 0.0
        %7434 = vmatprep.subr.mxu0 0.0
        %7435 = vmatpush1.msra.mxu0 0.0
        %7436 = vmatprep.subr.mxu0 0.0
        %7437 = vmatpush1.msra.mxu0 0.0
        %7438 = vmatprep.subr.mxu0 0.0
        %7439 = vmatpush1.msra.mxu0 0.0
        %7440 = vmatprep.subr.mxu0 0.0
        %7441 = vmatpush1.msra.mxu0 0.0
        %7442 = vmatprep.subr.mxu0 0.0
        %7443 = vmatpush1.msra.mxu0 0.0
        %7444 = vmatprep.subr.mxu0 0.0
        %7445 = vmatpush1.msra.mxu0 0.0
        %7446 = vmatprep.subr.mxu0 0.0
        %7447 = vmatpush1.msra.mxu0 0.0
        %7448 = vmatprep.mubr.f32.mxu0 %v7289
        %7449 = vmatmul.mubr.f32.gmra.mrb[0].mxu0 %v7218
        %v7450 = vpop.f32.mrb[0].mxu0
        %v7451 = vadd.f32 %v7286, %v7450
        %v7452 = vpop.f32.mrb[0].mxu0
        %7453 = vmatprep.mubr.f32.mxu0 %v7292
        %7454 = vmatmul.mubr.f32.gmra.mrb[0].mxu0 %v7220
        %v7455 = vpop.f32.mrb[0].mxu0
        %v7456 = vadd.f32 %v7286, %v7455
        %v7457 = vpop.f32.mrb[0].mxu0
        %7458 = vmatprep.mubr.f32.mxu0 %v7295
        %7459 = vmatmul.mubr.f32.gmra.mrb[0].mxu0 %v7222
        %v7460 = vpop.f32.mrb[0].mxu0
        %v7461 = vadd.f32 %v7286, %v7460
        %v7462 = vpop.f32.mrb[0].mxu0
        %7463 = vmatprep.mubr.f32.mxu0 %v7298
        %7464 = vmatmul.mubr.f32.gmra.mrb[0].mxu0 %v7224
        %v7465 = vpop.f32.mrb[0].mxu0
        %v7466 = vadd.f32 %v7286, %v7465
        %v7467 = vpop.f32.mrb[0].mxu0
        %7468 = vmatprep.mubr.f32.mxu0 %v7301
        %7469 = vmatmul.mubr.f32.gmra.mrb[0].mxu0 %v7226
        %v7470 = vpop.f32.mrb[0].mxu0
        %v7471 = vadd.f32 %v7286, %v7470
        %v7472 = vpop.f32.mrb[0].mxu0
        %7473 = vmatprep.mubr.f32.mxu0 %v7304
        %7474 = vmatmul.mubr.f32.gmra.mrb[0].mxu0 %v7228
        %v7475 = vpop.f32.mrb[0].mxu0
        %v7476 = vadd.f32 %v7286, %v7475
        %v7477 = vpop.f32.mrb[0].mxu0
        %7478 = vmatprep.mubr.f32.mxu0 %v7307
        %7479 = vmatmul.mubr.f32.gmra.mrb[0].mxu0 %v7230
        %v7480 = vpop.f32.mrb[0].mxu0
        %v7481 = vadd.f32 %v7286, %v7480
        %v7482 = vpop.f32.mrb[0].mxu0
        %7483 = vmatprep.mubr.f32.mxu0 %v7310
        %7484 = vmatmul.mubr.f32.gmra.mrb[0].mxu0 %v7232
        %v7485 = vpop.f32.mrb[0].mxu0
        %v7486 = vadd.f32 %v7286, %v7485
        %v7487 = vpop.f32.mrb[0].mxu0
        %7488 = vmatprep.mubr.f32.mxu0 %v7313
        %7489 = vmatmul.mubr.f32.gmra.mrb[0].mxu0 %v7234
        %v7490 = vpop.f32.mrb[0].mxu0
        %v7491 = vadd.f32 %v7286, %v7490
        %v7492 = vpop.f32.mrb[0].mxu0
        %7493 = vmatprep.mubr.f32.mxu0 %v7316
        %7494 = vmatmul.mubr.f32.gmra.mrb[0].mxu0 %v7236
        %v7495 = vpop.f32.mrb[0].mxu0
        %v7496 = vadd.f32 %v7286, %v7495
        %v7497 = vpop.f32.mrb[0].mxu0
        %7498 = vmatprep.mubr.f32.mxu0 %v7319
        %7499 = vmatmul.mubr.f32.gmra.mrb[0].mxu0 %v7238
        %v7500 = vpop.f32.mrb[0].mxu0
        %v7501 = vadd.f32 %v7286, %v7500
        %v7502 = vpop.f32.mrb[0].mxu0
        %7503 = vmatprep.mubr.f32.mxu0 %v7322
        %7504 = vmatmul.mubr.f32.gmra.mrb[0].mxu0 %v7240
        %v7505 = vpop.f32.mrb[0].mxu0
        %v7506 = vadd.f32 %v7286, %v7505
        %v7507 = vpop.f32.mrb[0].mxu0
        %7508 = vmatprep.mubr.f32.mxu0 %v7325
        %7509 = vmatmul.mubr.f32.gmra.mrb[0].mxu0 %v7242
        %v7510 = vpop.f32.mrb[0].mxu0
        %v7511 = vadd.f32 %v7286, %v7510
        %v7512 = vpop.f32.mrb[0].mxu0
        %7513 = vmatprep.mubr.f32.mxu0 %v7328
        %7514 = vmatmul.mubr.f32.gmra.mrb[0].mxu0 %v7244
        %v7515 = vpop.f32.mrb[0].mxu0
        %v7516 = vadd.f32 %v7286, %v7515
        %v7517 = vpop.f32.mrb[0].mxu0
        %7518 = vmatprep.mubr.f32.mxu0 %v7331
        %7519 = vmatmul.mubr.f32.gmra.mrb[0].mxu0 %v7246
        %v7520 = vpop.f32.mrb[0].mxu0
        %v7521 = vadd.f32 %v7286, %v7520
        %v7522 = vpop.f32.mrb[0].mxu0
        %7523 = vmatprep.mubr.f32.mxu0 %v7334
        %7524 = vmatmul.mubr.f32.gmra.mrb[0].mxu0 %v7248
        %v7525 = vpop.f32.mrb[0].mxu0
        %v7526 = vadd.f32 %v7286, %v7525
        %v7527 = vpop.f32.mrb[0].mxu0
        %7528 = vmatprep.mubr.f32.mxu0 %v7337
        %7529 = vmatmul.mubr.f32.gmra.mrb[0].mxu0 %v7250
        %v7530 = vpop.f32.mrb[0].mxu0
        %v7531 = vadd.f32 %v7286, %v7530
        %v7532 = vpop.f32.mrb[0].mxu0
        %7533 = vmatprep.mubr.f32.mxu0 %v7340
        %7534 = vmatmul.mubr.f32.gmra.mrb[0].mxu0 %v7252
        %v7535 = vpop.f32.mrb[0].mxu0
        %v7536 = vadd.f32 %v7286, %v7535
        %v7537 = vpop.f32.mrb[0].mxu0
        %7538 = vmatprep.mubr.f32.mxu0 %v7343
        %7539 = vmatmul.mubr.f32.gmra.mrb[0].mxu0 %v7254
        %v7540 = vpop.f32.mrb[0].mxu0
        %v7541 = vadd.f32 %v7286, %v7540
        %v7542 = vpop.f32.mrb[0].mxu0
        %7543 = vmatprep.mubr.f32.mxu0 %v7346
        %7544 = vmatmul.mubr.f32.gmra.mrb[0].mxu0 %v7256
        %v7545 = vpop.f32.mrb[0].mxu0
        %v7546 = vadd.f32 %v7286, %v7545
        %v7547 = vpop.f32.mrb[0].mxu0
        %7548 = vmatprep.mubr.f32.mxu0 %v7349
        %7549 = vmatmul.mubr.f32.gmra.mrb[0].mxu0 %v7258
        %v7550 = vpop.f32.mrb[0].mxu0
        %v7551 = vadd.f32 %v7286, %v7550
        %v7552 = vpop.f32.mrb[0].mxu0
        %7553 = vmatprep.mubr.f32.mxu0 %v7352
        %7554 = vmatmul.mubr.f32.gmra.mrb[0].mxu0 %v7260
        %v7555 = vpop.f32.mrb[0].mxu0
        %v7556 = vadd.f32 %v7286, %v7555
        %v7557 = vpop.f32.mrb[0].mxu0
        %7558 = vmatprep.mubr.f32.mxu0 %v7355
        %7559 = vmatmul.mubr.f32.gmra.mrb[0].mxu0 %v7262
        %v7560 = vpop.f32.mrb[0].mxu0
        %v7561 = vadd.f32 %v7286, %v7560
        %v7562 = vpop.f32.mrb[0].mxu0
        %7563 = vmatprep.mubr.f32.mxu0 %v7358
        %7564 = vmatmul.mubr.f32.gmra.mrb[0].mxu0 %v7264
        %v7565 = vpop.f32.mrb[0].mxu0
        %v7566 = vadd.f32 %v7286, %v7565
        %v7567 = vpop.f32.mrb[0].mxu0
        %7568 = vmatprep.mubr.f32.mxu0 %v7361
        %7569 = vmatmul.mubr.f32.gmra.mrb[0].mxu0 %v7266
        %v7570 = vpop.f32.mrb[0].mxu0
        %v7571 = vadd.f32 %v7286, %v7570
        %v7572 = vpop.f32.mrb[0].mxu0
        %7573 = vmatprep.mubr.f32.mxu0 %v7364
        %7574 = vmatmul.mubr.f32.gmra.mrb[0].mxu0 %v7268
        %v7575 = vpop.f32.mrb[0].mxu0
        %v7576 = vadd.f32 %v7286, %v7575
        %v7577 = vpop.f32.mrb[0].mxu0
        %7578 = vmatprep.mubr.f32.mxu0 %v7367
        %7579 = vmatmul.mubr.f32.gmra.mrb[0].mxu0 %v7270
        %v7580 = vpop.f32.mrb[0].mxu0
        %v7581 = vadd.f32 %v7286, %v7580
        %v7582 = vpop.f32.mrb[0].mxu0
        %7583 = vmatprep.mubr.f32.mxu0 %v7370
        %7584 = vmatmul.mubr.f32.gmra.mrb[0].mxu0 %v7272
        %v7585 = vpop.f32.mrb[0].mxu0
        %v7586 = vadd.f32 %v7286, %v7585
        %v7587 = vpop.f32.mrb[0].mxu0
        %7588 = vmatprep.mubr.f32.mxu0 %v7373
        %7589 = vmatmul.mubr.f32.gmra.mrb[0].mxu0 %v7274
        %v7590 = vpop.f32.mrb[0].mxu0
        %v7591 = vadd.f32 %v7286, %v7590
        %v7592 = vpop.f32.mrb[0].mxu0
        %7593 = vmatprep.mubr.f32.mxu0 %v7376
        %7594 = vmatmul.mubr.f32.gmra.mrb[0].mxu0 %v7276
        %v7595 = vpop.f32.mrb[0].mxu0
        %v7596 = vadd.f32 %v7286, %v7595
        %v7597 = vpop.f32.mrb[0].mxu0
        %7598 = vmatprep.mubr.f32.mxu0 %v7379
        %7599 = vmatmul.mubr.f32.gmra.mrb[0].mxu0 %v7278
        %v7600 = vpop.f32.mrb[0].mxu0
        %v7601 = vadd.f32 %v7286, %v7600
        %v7602 = vpop.f32.mrb[0].mxu0
        %7603 = vmatprep.mubr.f32.mxu0 %v7382
        %7604 = vmatmul.mubr.f32.gmra.mrb[0].mxu0 %v7280
        %v7605 = vpop.f32.mrb[0].mxu0
        %v7606 = vadd.f32 %v7286, %v7605
        %v7607 = vpop.f32.mrb[0].mxu0
        %7608 = vdwg.mxu0
        %v7609 = vsel %vm417, %v7451, 0.0
        %v7610 = vsel %vm417, %v7456, 0.0
        %v7611 = vadd.f32 %v7609, %v7610
        %v7612 = vsel %vm417, %v7461, 0.0
        %v7613 = vadd.f32 %v7611, %v7612
        %v7614 = vsel %vm417, %v7466, 0.0
        %v7615 = vadd.f32 %v7613, %v7614
        %v7616 = vsel %vm417, %v7471, 0.0
        %v7617 = vadd.f32 %v7615, %v7616
        %v7618 = vsel %vm417, %v7476, 0.0
        %v7619 = vadd.f32 %v7617, %v7618
        %v7620 = vsel %vm417, %v7481, 0.0
        %v7621 = vadd.f32 %v7619, %v7620
        %v7622 = vsel %vm417, %v7486, 0.0
        %v7623 = vadd.f32 %v7621, %v7622
        %v7624 = vsel %vm417, %v7491, 0.0
        %v7625 = vadd.f32 %v7623, %v7624
        %v7626 = vsel %vm417, %v7496, 0.0
        %v7627 = vadd.f32 %v7625, %v7626
        %v7628 = vsel %vm417, %v7501, 0.0
        %v7629 = vadd.f32 %v7627, %v7628
        %v7630 = vsel %vm417, %v7506, 0.0
        %v7631 = vadd.f32 %v7629, %v7630
        %v7632 = vsel %vm417, %v7511, 0.0
        %v7633 = vadd.f32 %v7631, %v7632
        %v7634 = vsel %vm417, %v7516, 0.0
        %v7635 = vadd.f32 %v7633, %v7634
        %v7636 = vsel %vm417, %v7521, 0.0
        %v7637 = vadd.f32 %v7635, %v7636
        %v7638 = vsel %vm417, %v7526, 0.0
        %v7639 = vadd.f32 %v7637, %v7638
        %v7640 = vsel %vm417, %v7531, 0.0
        %v7641 = vadd.f32 %v7639, %v7640
        %v7642 = vsel %vm417, %v7536, 0.0
        %v7643 = vadd.f32 %v7641, %v7642
        %v7644 = vsel %vm417, %v7541, 0.0
        %v7645 = vadd.f32 %v7643, %v7644
        %v7646 = vsel %vm417, %v7546, 0.0
        %v7647 = vadd.f32 %v7645, %v7646
        %v7648 = vsel %vm417, %v7551, 0.0
        %v7649 = vadd.f32 %v7647, %v7648
        %v7650 = vsel %vm417, %v7556, 0.0
        %v7651 = vadd.f32 %v7649, %v7650
        %v7652 = vsel %vm417, %v7561, 0.0
        %v7653 = vadd.f32 %v7651, %v7652
        %v7654 = vsel %vm417, %v7566, 0.0
        %v7655 = vadd.f32 %v7653, %v7654
        %v7656 = vsel %vm417, %v7571, 0.0
        %v7657 = vadd.f32 %v7655, %v7656
        %v7658 = vsel %vm417, %v7576, 0.0
        %v7659 = vadd.f32 %v7657, %v7658
        %v7660 = vsel %vm417, %v7581, 0.0
        %v7661 = vadd.f32 %v7659, %v7660
        %v7662 = vsel %vm417, %v7586, 0.0
        %v7663 = vadd.f32 %v7661, %v7662
        %v7664 = vsel %vm417, %v7591, 0.0
        %v7665 = vadd.f32 %v7663, %v7664
        %v7666 = vsel %vm417, %v7596, 0.0
        %v7667 = vadd.f32 %v7665, %v7666
        %v7668 = vsel %vm417, %v7601, 0.0
        %v7669 = vadd.f32 %v7667, %v7668
        %v7670 = vsel %vm417, %v7606, 0.0
        %v7671 = vadd.f32 %v7669, %v7670
        %v7672 = vrot.slane %v7671, 4
        %v7673 = vadd.f32 %v7671, %v7672
        %v7674 = vrot.slane %v7673, 2
        %v7675 = vadd.f32 %v7673, %v7674
        %v7676 = vrot.slane %v7675, 1
        %v7677 = vadd.f32 %v7675, %v7676
        %v7678 = vmul.f32 %v7677, %v4028
        %s7679 = scalar_lea.vmem %s5, 4
        %v7680 = vld [vmem:[%s7679] sm:$0xf]
        %v7681 = vmul.f32 %v7680, %v7678
        %v7682 = vsel %vm4032, %v7681, 0.0
        %7683 = vadd.xlane.f32.xlu0 %v7682
        %v7684 = vpop.xlane.xlu0 %7683
        %s7685 = scalar_lea.vmem %s6, 4
        %v7686 = vld [vmem:[%s7685] sm:$0xf]
        %v7687 = vadd.f32 %v7684, %v7686
        %v7688 = vmax.f32 %v7687, 0.0
        %s7689 = scalar_lea.vmem %s7, 4
        %v7690 = vld [vmem:[%s7689] sm:$0xf]
        %7692 = vset.pattern.permute.xlu0 0
        %7693 = vperm.xlu0 %7692, %v7688
        %v7694 = vpop.permute.xlu0 %7693
        %v7696 = vmul.f32 %v7690, %v7694
        %v7697 = vsel %vm4032, %v7696, 0.0
        %v7698 = vrot.slane %v7697, 4
        %v7699 = vadd.f32 %v7697, %v7698
        %v7700 = vrot.slane %v7699, 2
        %v7701 = vadd.f32 %v7699, %v7700
        %v7702 = vrot.slane %v7701, 1
        %v7703 = vadd.f32 %v7701, %v7702
        %s7704 = scalar_lea.vmem %s8, 1
        %v7705 = vld [vmem:[%s7704] sm:$0x1]
        %v7706 = vadd.f32 %v7703, %v7705
        %v7707 = vxor.u32 %v7706, 2147483648
        %v7708 = vmul.f32 %v7707, 1.442695
        %v7709 = vpow.pop %v7708
        %v7710 = vadd.f32 %v7709, 1.0
        %v7711 = vrcp.pop %v7710
        %v7712 = vmul.f32 1.0, %v7711
        %v7713 = vlaneseq
        %v7714 = vshrl.u32 %v7713, 7
        %v7715 = vsub.s32 0, %v7714
        %v7716 = vrot.slane %v7712, %v7715
        %v7717 = vmul.f32 %v7451, %v7716
        %v7718 = vmul.f32 %v7456, %v7716
        %v7719 = vmul.f32 %v7461, %v7716
        %v7720 = vmul.f32 %v7466, %v7716
        %v7721 = vmul.f32 %v7471, %v7716
        %v7722 = vmul.f32 %v7476, %v7716
        %v7723 = vmul.f32 %v7481, %v7716
        %v7724 = vmul.f32 %v7486, %v7716
        %v7725 = vmul.f32 %v7491, %v7716
        %v7726 = vmul.f32 %v7496, %v7716
        %v7727 = vmul.f32 %v7501, %v7716
        %v7728 = vmul.f32 %v7506, %v7716
        %v7729 = vmul.f32 %v7511, %v7716
        %v7730 = vmul.f32 %v7516, %v7716
        %v7731 = vmul.f32 %v7521, %v7716
        %v7732 = vmul.f32 %v7526, %v7716
        %v7733 = vmul.f32 %v7531, %v7716
        %v7734 = vmul.f32 %v7536, %v7716
        %v7735 = vmul.f32 %v7541, %v7716
        %v7736 = vmul.f32 %v7546, %v7716
        %v7737 = vmul.f32 %v7551, %v7716
        %v7738 = vmul.f32 %v7556, %v7716
        %v7739 = vmul.f32 %v7561, %v7716
        %v7740 = vmul.f32 %v7566, %v7716
        %v7741 = vmul.f32 %v7571, %v7716
        %v7742 = vmul.f32 %v7576, %v7716
        %v7743 = vmul.f32 %v7581, %v7716
        %v7744 = vmul.f32 %v7586, %v7716
        %v7745 = vmul.f32 %v7591, %v7716
        %v7746 = vmul.f32 %v7596, %v7716
        %v7747 = vmul.f32 %v7601, %v7716
        %v7748 = vmul.f32 %v7606, %v7716
        %v7749 = vadd.f32 %v7717, %v4097
        %v7750 = vadd.f32 %v7718, %v4098
        %v7751 = vadd.f32 %v7719, %v4099
        %v7752 = vadd.f32 %v7720, %v4100
        %v7753 = vadd.f32 %v7721, %v4101
        %v7754 = vadd.f32 %v7722, %v4102
        %v7755 = vadd.f32 %v7723, %v4103
        %v7756 = vadd.f32 %v7724, %v4104
        %v7757 = vadd.f32 %v7725, %v4105
        %v7758 = vadd.f32 %v7726, %v4106
        %v7759 = vadd.f32 %v7727, %v4107
        %v7760 = vadd.f32 %v7728, %v4108
        %v7761 = vadd.f32 %v7729, %v4109
        %v7762 = vadd.f32 %v7730, %v4110
        %v7763 = vadd.f32 %v7731, %v4111
        %v7764 = vadd.f32 %v7732, %v4112
        %v7765 = vadd.f32 %v7733, %v4113
        %v7766 = vadd.f32 %v7734, %v4114
        %v7767 = vadd.f32 %v7735, %v4115
        %v7768 = vadd.f32 %v7736, %v4116
        %v7769 = vadd.f32 %v7737, %v4117
        %v7770 = vadd.f32 %v7738, %v4118
        %v7771 = vadd.f32 %v7739, %v4119
        %v7772 = vadd.f32 %v7740, %v4120
        %v7773 = vadd.f32 %v7741, %v4121
        %v7774 = vadd.f32 %v7742, %v4122
        %v7775 = vadd.f32 %v7743, %v4123
        %v7776 = vadd.f32 %v7744, %v4124
        %v7777 = vadd.f32 %v7745, %v4125
        %v7778 = vadd.f32 %v7746, %v4126
        %v7779 = vadd.f32 %v7747, %v4127
        %v7780 = vadd.f32 %v7748, %v4128
        %v7781 = vld [vmem:[%s9] sm:$0xff]
        %v7782 = vld [vmem:[%s9 + $0x8] sm:$0xff]
        %v7783 = vld [vmem:[%s9 + $0x10] sm:$0xff]
        %v7784 = vld [vmem:[%s9 + $0x18] sm:$0xff]
        %v7785 = vld [vmem:[%s9 + $0x20] sm:$0xff]
        %v7786 = vld [vmem:[%s9 + $0x28] sm:$0xff]
        %v7787 = vld [vmem:[%s9 + $0x30] sm:$0xff]
        %v7788 = vld [vmem:[%s9 + $0x38] sm:$0xff]
        %v7789 = vld [vmem:[%s9 + $0x40] sm:$0xff]
        %v7790 = vld [vmem:[%s9 + $0x48] sm:$0xff]
        %v7791 = vld [vmem:[%s9 + $0x50] sm:$0xff]
        %v7792 = vld [vmem:[%s9 + $0x58] sm:$0xff]
        %v7793 = vld [vmem:[%s9 + $0x60] sm:$0xff]
        %v7794 = vld [vmem:[%s9 + $0x68] sm:$0xff]
        %v7795 = vld [vmem:[%s9 + $0x70] sm:$0xff]
        %v7796 = vld [vmem:[%s9 + $0x78] sm:$0xff]
        %v7797 = vld [vmem:[%s9 + $0x80] sm:$0xff]
        %v7798 = vld [vmem:[%s9 + $0x88] sm:$0xff]
        %v7799 = vld [vmem:[%s10] sm:$0x1]
        %7800 = vst.msk [vmem:[%s492 + $0x1] sm:$0xff] %vm417, %v7749
        %7801 = vst.msk [vmem:[%s492 + $0x9] sm:$0xff] %vm417, %v7750
        %7802 = vst.msk [vmem:[%s492 + $0x19] sm:$0xff] %vm417, %v7751
        %7803 = vst.msk [vmem:[%s492 + $0x21] sm:$0xff] %vm417, %v7752
        %7804 = vst.msk [vmem:[%s492 + $0x31] sm:$0xff] %vm417, %v7753
        %7805 = vst.msk [vmem:[%s492 + $0x39] sm:$0xff] %vm417, %v7754
        %7806 = vst.msk [vmem:[%s492 + $0x49] sm:$0xff] %vm417, %v7755
        %7807 = vst.msk [vmem:[%s492 + $0x51] sm:$0xff] %vm417, %v7756
        %7808 = vst.msk [vmem:[%s492 + $0x61] sm:$0xff] %vm417, %v7757
        %7809 = vst.msk [vmem:[%s492 + $0x69] sm:$0xff] %vm417, %v7758
        %7810 = vst.msk [vmem:[%s492 + $0x79] sm:$0xff] %vm417, %v7759
        %7811 = vst.msk [vmem:[%s492 + $0x81] sm:$0xff] %vm417, %v7760
        %7812 = vst.msk [vmem:[%s492 + $0x91] sm:$0xff] %vm417, %v7761
        %7813 = vst.msk [vmem:[%s492 + $0x99] sm:$0xff] %vm417, %v7762
        %7814 = vst.msk [vmem:[%s492 + $0xa9] sm:$0xff] %vm417, %v7763
        %7815 = vst.msk [vmem:[%s492 + $0xb1] sm:$0xff] %vm417, %v7764
        %7816 = vst.msk [vmem:[%s492 + $0xc1] sm:$0xff] %vm417, %v7765
        %7817 = vst.msk [vmem:[%s492 + $0xc9] sm:$0xff] %vm417, %v7766
        %7818 = vst.msk [vmem:[%s492 + $0xd9] sm:$0xff] %vm417, %v7767
        %7819 = vst.msk [vmem:[%s492 + $0xe1] sm:$0xff] %vm417, %v7768
        %7820 = vst.msk [vmem:[%s492 + $0xf1] sm:$0xff] %vm417, %v7769
        %7821 = vst.msk [vmem:[%s492 + $0xf9] sm:$0xff] %vm417, %v7770
        %7822 = vst.msk [vmem:[%s492 + $0x109] sm:$0xff] %vm417, %v7771
        %7823 = vst.msk [vmem:[%s492 + $0x111] sm:$0xff] %vm417, %v7772
        %7824 = vst.msk [vmem:[%s492 + $0x121] sm:$0xff] %vm417, %v7773
        %7825 = vst.msk [vmem:[%s492 + $0x129] sm:$0xff] %vm417, %v7774
        %7826 = vst.msk [vmem:[%s492 + $0x139] sm:$0xff] %vm417, %v7775
        %7827 = vst.msk [vmem:[%s492 + $0x141] sm:$0xff] %vm417, %v7776
        %7828 = vst.msk [vmem:[%s492 + $0x151] sm:$0xff] %vm417, %v7777
        %7829 = vst.msk [vmem:[%s492 + $0x159] sm:$0xff] %vm417, %v7778
        %7830 = vst.msk [vmem:[%s492 + $0x169] sm:$0xff] %vm417, %v7779
        %7831 = vst.msk [vmem:[%s492 + $0x171] sm:$0xff] %vm417, %v7780
        %v7832 = vld [vmem:[#allocation2] sm:$0xff]
        %v7833 = vld [vmem:[#allocation2 + $0x8] sm:$0xff]
        %v7834 = vld [vmem:[#allocation2 + $0x10] sm:$0x3]
        %v7835 = vld [vmem:[#allocation2 + $0x18] sm:$0xff]
        %v7836 = vld [vmem:[#allocation2 + $0x20] sm:$0xff]
        %v7837 = vld [vmem:[#allocation2 + $0x28] sm:$0x3]
        %v7838 = vld [vmem:[#allocation2 + $0x30] sm:$0xff]
        %v7839 = vld [vmem:[#allocation2 + $0x38] sm:$0xff]
        %v7840 = vld [vmem:[#allocation2 + $0x40] sm:$0x3]
        %v7841 = vld [vmem:[#allocation2 + $0x48] sm:$0xff]
        %v7842 = vld [vmem:[#allocation2 + $0x50] sm:$0xff]
        %v7843 = vld [vmem:[#allocation2 + $0x58] sm:$0x3]
        %v7844 = vld [vmem:[#allocation2 + $0x60] sm:$0xff]
        %v7845 = vld [vmem:[#allocation2 + $0x68] sm:$0xff]
        %v7846 = vld [vmem:[#allocation2 + $0x70] sm:$0x3]
        %v7847 = vld [vmem:[#allocation2 + $0x78] sm:$0xff]
        %v7848 = vld [vmem:[#allocation2 + $0x80] sm:$0xff]
        %v7849 = vld [vmem:[#allocation2 + $0x88] sm:$0x3]
        %v7850 = vld [vmem:[#allocation2 + $0x90] sm:$0xff]
        %v7851 = vld [vmem:[#allocation2 + $0x98] sm:$0xff]
        %v7852 = vld [vmem:[#allocation2 + $0xa0] sm:$0x3]
        %v7853 = vld [vmem:[#allocation2 + $0xa8] sm:$0xff]
        %v7854 = vld [vmem:[#allocation2 + $0xb0] sm:$0xff]
        %v7855 = vld [vmem:[#allocation2 + $0xb8] sm:$0x3]
        %v7856 = vld [vmem:[#allocation2 + $0xc0] sm:$0xff]
        %v7857 = vld [vmem:[#allocation2 + $0xc8] sm:$0xff]
        %v7858 = vld [vmem:[#allocation2 + $0xd0] sm:$0x3]
        %v7859 = vld [vmem:[#allocation2 + $0xd8] sm:$0xff]
        %v7860 = vld [vmem:[#allocation2 + $0xe0] sm:$0xff]
        %v7861 = vld [vmem:[#allocation2 + $0xe8] sm:$0x3]
        %v7862 = vld [vmem:[#allocation2 + $0xf0] sm:$0xff]
        %v7863 = vld [vmem:[#allocation2 + $0xf8] sm:$0xff]
        %v7864 = vld [vmem:[#allocation2 + $0x100] sm:$0x3]
        %v7865 = vld [vmem:[#allocation2 + $0x108] sm:$0xff]
        %v7866 = vld [vmem:[#allocation2 + $0x110] sm:$0xff]
        %v7867 = vld [vmem:[#allocation2 + $0x118] sm:$0x3]
        %v7868 = vld [vmem:[#allocation2 + $0x120] sm:$0xff]
        %v7869 = vld [vmem:[#allocation2 + $0x128] sm:$0xff]
        %v7870 = vld [vmem:[#allocation2 + $0x130] sm:$0x3]
        %v7871 = vld [vmem:[#allocation2 + $0x138] sm:$0xff]
        %v7872 = vld [vmem:[#allocation2 + $0x140] sm:$0xff]
        %v7873 = vld [vmem:[#allocation2 + $0x148] sm:$0x3]
        %v7874 = vld [vmem:[#allocation2 + $0x150] sm:$0xff]
        %v7875 = vld [vmem:[#allocation2 + $0x158] sm:$0xff]
        %v7876 = vld [vmem:[#allocation2 + $0x160] sm:$0x3]
        %v7877 = vld [vmem:[#allocation2 + $0x168] sm:$0xff]
        %v7878 = vld [vmem:[#allocation2 + $0x170] sm:$0xff]
        %v7879 = vld [vmem:[#allocation2 + $0x178] sm:$0x3]
        %v7880 = vld [vmem:[#allocation2 + $0x180] sm:$0xff]
        %v7881 = vld [vmem:[#allocation2 + $0x188] sm:$0xff]
        %v7882 = vld [vmem:[#allocation2 + $0x190] sm:$0x3]
        %v7883 = vld [vmem:[#allocation2 + $0x198] sm:$0xff]
        %v7884 = vld [vmem:[#allocation2 + $0x1a0] sm:$0xff]
        %v7885 = vld [vmem:[#allocation2 + $0x1a8] sm:$0x3]
        %7886 = vst.msk [vmem:[#allocation3] sm:$0xff] %vm417, %v7832
        %7887 = vst.msk [vmem:[#allocation3 + $0x10] sm:$0xff] %vm417, %v7833
        %7888 = vst.msk [vmem:[#allocation3 + $0x20] sm:$0xff] %vm417, %v7835
        %7889 = vst.msk [vmem:[#allocation3 + $0x30] sm:$0xff] %vm417, %v7836
        %7890 = vst.msk [vmem:[#allocation3 + $0x40] sm:$0xff] %vm417, %v7838
        %7891 = vst.msk [vmem:[#allocation3 + $0x50] sm:$0xff] %vm417, %v7839
        %7892 = vst.msk [vmem:[#allocation3 + $0x60] sm:$0xff] %vm417, %v7841
        %7893 = vst.msk [vmem:[#allocation3 + $0x70] sm:$0xff] %vm417, %v7842
        %7894 = vst.msk [vmem:[#allocation3 + $0x80] sm:$0xff] %vm417, %v7844
        %7895 = vst.msk [vmem:[#allocation3 + $0x90] sm:$0xff] %vm417, %v7845
        %7896 = vst.msk [vmem:[#allocation3 + $0xa0] sm:$0xff] %vm417, %v7847
        %7897 = vst.msk [vmem:[#allocation3 + $0xb0] sm:$0xff] %vm417, %v7848
        %7898 = vst.msk [vmem:[#allocation3 + $0xc0] sm:$0xff] %vm417, %v7850
        %7899 = vst.msk [vmem:[#allocation3 + $0xd0] sm:$0xff] %vm417, %v7851
        %7900 = vst.msk [vmem:[#allocation3 + $0xe0] sm:$0xff] %vm417, %v7853
        %7901 = vst.msk [vmem:[#allocation3 + $0xf0] sm:$0xff] %vm417, %v7854
        %7902 = vst.msk [vmem:[#allocation3 + $0x100] sm:$0xff] %vm417, %v7856
        %7903 = vst.msk [vmem:[#allocation3 + $0x110] sm:$0xff] %vm417, %v7857
        %7904 = vst.msk [vmem:[#allocation3 + $0x120] sm:$0xff] %vm417, %v7859
        %7905 = vst.msk [vmem:[#allocation3 + $0x130] sm:$0xff] %vm417, %v7860
        %7906 = vst.msk [vmem:[#allocation3 + $0x140] sm:$0xff] %vm417, %v7862
        %7907 = vst.msk [vmem:[#allocation3 + $0x150] sm:$0xff] %vm417, %v7863
        %7908 = vst.msk [vmem:[#allocation3 + $0x160] sm:$0xff] %vm417, %v7865
        %7909 = vst.msk [vmem:[#allocation3 + $0x170] sm:$0xff] %vm417, %v7866
        %7910 = vst.msk [vmem:[#allocation3 + $0x180] sm:$0xff] %vm417, %v7868
        %7911 = vst.msk [vmem:[#allocation3 + $0x190] sm:$0xff] %vm417, %v7869
        %7912 = vst.msk [vmem:[#allocation3 + $0x1a0] sm:$0xff] %vm417, %v7871
        %7913 = vst.msk [vmem:[#allocation3 + $0x1b0] sm:$0xff] %vm417, %v7872
        %7914 = vst.msk [vmem:[#allocation3 + $0x1c0] sm:$0xff] %vm417, %v7874
        %7915 = vst.msk [vmem:[#allocation3 + $0x1d0] sm:$0xff] %vm417, %v7875
        %7916 = vst.msk [vmem:[#allocation3 + $0x1e0] sm:$0xff] %vm417, %v7877
        %7917 = vst.msk [vmem:[#allocation3 + $0x1f0] sm:$0xff] %vm417, %v7878
        %v7966 = vrot.slane %v7832, 1
        %v7967 = vrot.slane %v7833, 1
        %v7968 = vsel %vm659, %v7966, %v7967
        %v7969 = vrot.slane %v7834, 1
        %v7970 = vsel %vm659, %v7967, %v7969
        %v7971 = vrot.slane %v7835, 1
        %v7972 = vrot.slane %v7836, 1
        %v7973 = vsel %vm659, %v7971, %v7972
        %v7974 = vrot.slane %v7837, 1
        %v7975 = vsel %vm659, %v7972, %v7974
        %v7976 = vrot.slane %v7838, 1
        %v7977 = vrot.slane %v7839, 1
        %v7978 = vsel %vm659, %v7976, %v7977
        %v7979 = vrot.slane %v7840, 1
        %v7980 = vsel %vm659, %v7977, %v7979
        %v7981 = vrot.slane %v7841, 1
        %v7982 = vrot.slane %v7842, 1
        %v7983 = vsel %vm659, %v7981, %v7982
        %v7984 = vrot.slane %v7843, 1
        %v7985 = vsel %vm659, %v7982, %v7984
        %v7986 = vrot.slane %v7844, 1
        %v7987 = vrot.slane %v7845, 1
        %v7988 = vsel %vm659, %v7986, %v7987
        %v7989 = vrot.slane %v7846, 1
        %v7990 = vsel %vm659, %v7987, %v7989
        %v7991 = vrot.slane %v7847, 1
        %v7992 = vrot.slane %v7848, 1
        %v7993 = vsel %vm659, %v7991, %v7992
        %v7994 = vrot.slane %v7849, 1
        %v7995 = vsel %vm659, %v7992, %v7994
        %v7996 = vrot.slane %v7850, 1
        %v7997 = vrot.slane %v7851, 1
        %v7998 = vsel %vm659, %v7996, %v7997
        %v7999 = vrot.slane %v7852, 1
        %v8000 = vsel %vm659, %v7997, %v7999
        %v8001 = vrot.slane %v7853, 1
        %v8002 = vrot.slane %v7854, 1
        %v8003 = vsel %vm659, %v8001, %v8002
        %v8004 = vrot.slane %v7855, 1
        %v8005 = vsel %vm659, %v8002, %v8004
        %v8006 = vrot.slane %v7856, 1
        %v8007 = vrot.slane %v7857, 1
        %v8008 = vsel %vm659, %v8006, %v8007
        %v8009 = vrot.slane %v7858, 1
        %v8010 = vsel %vm659, %v8007, %v8009
        %v8011 = vrot.slane %v7859, 1
        %v8012 = vrot.slane %v7860, 1
        %v8013 = vsel %vm659, %v8011, %v8012
        %v8014 = vrot.slane %v7861, 1
        %v8015 = vsel %vm659, %v8012, %v8014
        %v8016 = vrot.slane %v7862, 1
        %v8017 = vrot.slane %v7863, 1
        %v8018 = vsel %vm659, %v8016, %v8017
        %v8019 = vrot.slane %v7864, 1
        %v8020 = vsel %vm659, %v8017, %v8019
        %v8021 = vrot.slane %v7865, 1
        %v8022 = vrot.slane %v7866, 1
        %v8023 = vsel %vm659, %v8021, %v8022
        %v8024 = vrot.slane %v7867, 1
        %v8025 = vsel %vm659, %v8022, %v8024
        %v8026 = vrot.slane %v7868, 1
        %v8027 = vrot.slane %v7869, 1
        %v8028 = vsel %vm659, %v8026, %v8027
        %v8029 = vrot.slane %v7870, 1
        %v8030 = vsel %vm659, %v8027, %v8029
        %v8031 = vrot.slane %v7871, 1
        %v8032 = vrot.slane %v7872, 1
        %v8033 = vsel %vm659, %v8031, %v8032
        %v8034 = vrot.slane %v7873, 1
        %v8035 = vsel %vm659, %v8032, %v8034
        %v8036 = vrot.slane %v7874, 1
        %v8037 = vrot.slane %v7875, 1
        %v8038 = vsel %vm659, %v8036, %v8037
        %v8039 = vrot.slane %v7876, 1
        %v8040 = vsel %vm659, %v8037, %v8039
        %v8041 = vrot.slane %v7877, 1
        %v8042 = vrot.slane %v7878, 1
        %v8043 = vsel %vm659, %v8041, %v8042
        %v8044 = vrot.slane %v7879, 1
        %v8045 = vsel %vm659, %v8042, %v8044
        %8046 = vrot.lane.b32.xlu0 %v7968, 16
        %v8047 = vpop.permute.xlu0 %8046
        %8048 = vrot.lane.b32.xlu0 %v7970, 16
        %v8049 = vpop.permute.xlu0 %8048
        %8050 = vrot.lane.b32.xlu0 %v7973, 16
        %v8051 = vpop.permute.xlu0 %8050
        %8052 = vrot.lane.b32.xlu0 %v7975, 16
        %v8053 = vpop.permute.xlu0 %8052
        %8054 = vrot.lane.b32.xlu0 %v7978, 16
        %v8055 = vpop.permute.xlu0 %8054
        %8056 = vrot.lane.b32.xlu0 %v7980, 16
        %v8057 = vpop.permute.xlu0 %8056
        %8058 = vrot.lane.b32.xlu0 %v7983, 16
        %v8059 = vpop.permute.xlu0 %8058
        %8060 = vrot.lane.b32.xlu0 %v7985, 16
        %v8061 = vpop.permute.xlu0 %8060
        %8062 = vrot.lane.b32.xlu0 %v7988, 16
        %v8063 = vpop.permute.xlu0 %8062
        %8064 = vrot.lane.b32.xlu0 %v7990, 16
        %v8065 = vpop.permute.xlu0 %8064
        %8066 = vrot.lane.b32.xlu0 %v7993, 16
        %v8067 = vpop.permute.xlu0 %8066
        %8068 = vrot.lane.b32.xlu0 %v7995, 16
        %v8069 = vpop.permute.xlu0 %8068
        %8070 = vrot.lane.b32.xlu0 %v7998, 16
        %v8071 = vpop.permute.xlu0 %8070
        %8072 = vrot.lane.b32.xlu0 %v8000, 16
        %v8073 = vpop.permute.xlu0 %8072
        %8074 = vrot.lane.b32.xlu0 %v8003, 16
        %v8075 = vpop.permute.xlu0 %8074
        %8076 = vrot.lane.b32.xlu0 %v8005, 16
        %v8077 = vpop.permute.xlu0 %8076
        %8078 = vrot.lane.b32.xlu0 %v8008, 16
        %v8079 = vpop.permute.xlu0 %8078
        %8080 = vrot.lane.b32.xlu0 %v8010, 16
        %v8081 = vpop.permute.xlu0 %8080
        %8082 = vrot.lane.b32.xlu0 %v8013, 16
        %v8083 = vpop.permute.xlu0 %8082
        %8084 = vrot.lane.b32.xlu0 %v8015, 16
        %v8085 = vpop.permute.xlu0 %8084
        %8086 = vrot.lane.b32.xlu0 %v8018, 16
        %v8087 = vpop.permute.xlu0 %8086
        %8088 = vrot.lane.b32.xlu0 %v8020, 16
        %v8089 = vpop.permute.xlu0 %8088
        %8090 = vrot.lane.b32.xlu0 %v8023, 16
        %v8091 = vpop.permute.xlu0 %8090
        %8092 = vrot.lane.b32.xlu0 %v8025, 16
        %v8093 = vpop.permute.xlu0 %8092
        %8094 = vrot.lane.b32.xlu0 %v8028, 16
        %v8095 = vpop.permute.xlu0 %8094
        %8096 = vrot.lane.b32.xlu0 %v8030, 16
        %v8097 = vpop.permute.xlu0 %8096
        %8098 = vrot.lane.b32.xlu0 %v8033, 16
        %v8099 = vpop.permute.xlu0 %8098
        %8100 = vrot.lane.b32.xlu0 %v8035, 16
        %v8101 = vpop.permute.xlu0 %8100
        %8102 = vrot.lane.b32.xlu0 %v8038, 16
        %v8103 = vpop.permute.xlu0 %8102
        %8104 = vrot.lane.b32.xlu0 %v8040, 16
        %v8105 = vpop.permute.xlu0 %8104
        %8106 = vrot.lane.b32.xlu0 %v8043, 16
        %v8107 = vpop.permute.xlu0 %8106
        %8108 = vrot.lane.b32.xlu0 %v8045, 16
        %v8109 = vpop.permute.xlu0 %8108
        %8142 = vst.msk [vmem:[#allocation3] sm:$0xff] %vm836, %v8047
        %8143 = vst.msk [vmem:[#allocation3 + $0x10] sm:$0xff] %vm836, %v8049
        %8144 = vst.msk [vmem:[#allocation3 + $0x20] sm:$0xff] %vm836, %v8051
        %8145 = vst.msk [vmem:[#allocation3 + $0x30] sm:$0xff] %vm836, %v8053
        %8146 = vst.msk [vmem:[#allocation3 + $0x40] sm:$0xff] %vm836, %v8055
        %8147 = vst.msk [vmem:[#allocation3 + $0x50] sm:$0xff] %vm836, %v8057
        %8148 = vst.msk [vmem:[#allocation3 + $0x60] sm:$0xff] %vm836, %v8059
        %8149 = vst.msk [vmem:[#allocation3 + $0x70] sm:$0xff] %vm836, %v8061
        %8150 = vst.msk [vmem:[#allocation3 + $0x80] sm:$0xff] %vm836, %v8063
        %8151 = vst.msk [vmem:[#allocation3 + $0x90] sm:$0xff] %vm836, %v8065
        %8152 = vst.msk [vmem:[#allocation3 + $0xa0] sm:$0xff] %vm836, %v8067
        %8153 = vst.msk [vmem:[#allocation3 + $0xb0] sm:$0xff] %vm836, %v8069
        %8154 = vst.msk [vmem:[#allocation3 + $0xc0] sm:$0xff] %vm836, %v8071
        %8155 = vst.msk [vmem:[#allocation3 + $0xd0] sm:$0xff] %vm836, %v8073
        %8156 = vst.msk [vmem:[#allocation3 + $0xe0] sm:$0xff] %vm836, %v8075
        %8157 = vst.msk [vmem:[#allocation3 + $0xf0] sm:$0xff] %vm836, %v8077
        %8158 = vst.msk [vmem:[#allocation3 + $0x100] sm:$0xff] %vm836, %v8079
        %8159 = vst.msk [vmem:[#allocation3 + $0x110] sm:$0xff] %vm836, %v8081
        %8160 = vst.msk [vmem:[#allocation3 + $0x120] sm:$0xff] %vm836, %v8083
        %8161 = vst.msk [vmem:[#allocation3 + $0x130] sm:$0xff] %vm836, %v8085
        %8162 = vst.msk [vmem:[#allocation3 + $0x140] sm:$0xff] %vm836, %v8087
        %8163 = vst.msk [vmem:[#allocation3 + $0x150] sm:$0xff] %vm836, %v8089
        %8164 = vst.msk [vmem:[#allocation3 + $0x160] sm:$0xff] %vm836, %v8091
        %8165 = vst.msk [vmem:[#allocation3 + $0x170] sm:$0xff] %vm836, %v8093
        %8166 = vst.msk [vmem:[#allocation3 + $0x180] sm:$0xff] %vm836, %v8095
        %8167 = vst.msk [vmem:[#allocation3 + $0x190] sm:$0xff] %vm836, %v8097
        %8168 = vst.msk [vmem:[#allocation3 + $0x1a0] sm:$0xff] %vm836, %v8099
        %8169 = vst.msk [vmem:[#allocation3 + $0x1b0] sm:$0xff] %vm836, %v8101
        %8170 = vst.msk [vmem:[#allocation3 + $0x1c0] sm:$0xff] %vm836, %v8103
        %8171 = vst.msk [vmem:[#allocation3 + $0x1d0] sm:$0xff] %vm836, %v8105
        %8172 = vst.msk [vmem:[#allocation3 + $0x1e0] sm:$0xff] %vm836, %v8107
        %8173 = vst.msk [vmem:[#allocation3 + $0x1f0] sm:$0xff] %vm836, %v8109
        %v8174 = vrot.slane %v7832, 2
        %v8175 = vrot.slane %v7833, 2
        %v8176 = vsel %vm869, %v8174, %v8175
        %v8177 = vrot.slane %v7834, 2
        %v8178 = vsel %vm869, %v8175, %v8177
        %v8179 = vrot.slane %v7835, 2
        %v8180 = vrot.slane %v7836, 2
        %v8181 = vsel %vm869, %v8179, %v8180
        %v8182 = vrot.slane %v7837, 2
        %v8183 = vsel %vm869, %v8180, %v8182
        %v8184 = vrot.slane %v7838, 2
        %v8185 = vrot.slane %v7839, 2
        %v8186 = vsel %vm869, %v8184, %v8185
        %v8187 = vrot.slane %v7840, 2
        %v8188 = vsel %vm869, %v8185, %v8187
        %v8189 = vrot.slane %v7841, 2
        %v8190 = vrot.slane %v7842, 2
        %v8191 = vsel %vm869, %v8189, %v8190
        %v8192 = vrot.slane %v7843, 2
        %v8193 = vsel %vm869, %v8190, %v8192
        %v8194 = vrot.slane %v7844, 2
        %v8195 = vrot.slane %v7845, 2
        %v8196 = vsel %vm869, %v8194, %v8195
        %v8197 = vrot.slane %v7846, 2
        %v8198 = vsel %vm869, %v8195, %v8197
        %v8199 = vrot.slane %v7847, 2
        %v8200 = vrot.slane %v7848, 2
        %v8201 = vsel %vm869, %v8199, %v8200
        %v8202 = vrot.slane %v7849, 2
        %v8203 = vsel %vm869, %v8200, %v8202
        %v8204 = vrot.slane %v7850, 2
        %v8205 = vrot.slane %v7851, 2
        %v8206 = vsel %vm869, %v8204, %v8205
        %v8207 = vrot.slane %v7852, 2
        %v8208 = vsel %vm869, %v8205, %v8207
        %v8209 = vrot.slane %v7853, 2
        %v8210 = vrot.slane %v7854, 2
        %v8211 = vsel %vm869, %v8209, %v8210
        %v8212 = vrot.slane %v7855, 2
        %v8213 = vsel %vm869, %v8210, %v8212
        %v8214 = vrot.slane %v7856, 2
        %v8215 = vrot.slane %v7857, 2
        %v8216 = vsel %vm869, %v8214, %v8215
        %v8217 = vrot.slane %v7858, 2
        %v8218 = vsel %vm869, %v8215, %v8217
        %v8219 = vrot.slane %v7859, 2
        %v8220 = vrot.slane %v7860, 2
        %v8221 = vsel %vm869, %v8219, %v8220
        %v8222 = vrot.slane %v7861, 2
        %v8223 = vsel %vm869, %v8220, %v8222
        %v8224 = vrot.slane %v7862, 2
        %v8225 = vrot.slane %v7863, 2
        %v8226 = vsel %vm869, %v8224, %v8225
        %v8227 = vrot.slane %v7864, 2
        %v8228 = vsel %vm869, %v8225, %v8227
        %v8229 = vrot.slane %v7865, 2
        %v8230 = vrot.slane %v7866, 2
        %v8231 = vsel %vm869, %v8229, %v8230
        %v8232 = vrot.slane %v7867, 2
        %v8233 = vsel %vm869, %v8230, %v8232
        %v8234 = vrot.slane %v7868, 2
        %v8235 = vrot.slane %v7869, 2
        %v8236 = vsel %vm869, %v8234, %v8235
        %v8237 = vrot.slane %v7870, 2
        %v8238 = vsel %vm869, %v8235, %v8237
        %v8239 = vrot.slane %v7871, 2
        %v8240 = vrot.slane %v7872, 2
        %v8241 = vsel %vm869, %v8239, %v8240
        %v8242 = vrot.slane %v7873, 2
        %v8243 = vsel %vm869, %v8240, %v8242
        %v8244 = vrot.slane %v7874, 2
        %v8245 = vrot.slane %v7875, 2
        %v8246 = vsel %vm869, %v8244, %v8245
        %v8247 = vrot.slane %v7876, 2
        %v8248 = vsel %vm869, %v8245, %v8247
        %v8249 = vrot.slane %v7877, 2
        %v8250 = vrot.slane %v7878, 2
        %v8251 = vsel %vm869, %v8249, %v8250
        %v8252 = vrot.slane %v7879, 2
        %v8253 = vsel %vm869, %v8250, %v8252
        %8254 = vrot.lane.b32.xlu0 %v8176, 32
        %v8255 = vpop.permute.xlu0 %8254
        %8256 = vrot.lane.b32.xlu0 %v8178, 32
        %v8257 = vpop.permute.xlu0 %8256
        %8258 = vrot.lane.b32.xlu0 %v8181, 32
        %v8259 = vpop.permute.xlu0 %8258
        %8260 = vrot.lane.b32.xlu0 %v8183, 32
        %v8261 = vpop.permute.xlu0 %8260
        %8262 = vrot.lane.b32.xlu0 %v8186, 32
        %v8263 = vpop.permute.xlu0 %8262
        %8264 = vrot.lane.b32.xlu0 %v8188, 32
        %v8265 = vpop.permute.xlu0 %8264
        %8266 = vrot.lane.b32.xlu0 %v8191, 32
        %v8267 = vpop.permute.xlu0 %8266
        %8268 = vrot.lane.b32.xlu0 %v8193, 32
        %v8269 = vpop.permute.xlu0 %8268
        %8270 = vrot.lane.b32.xlu0 %v8196, 32
        %v8271 = vpop.permute.xlu0 %8270
        %8272 = vrot.lane.b32.xlu0 %v8198, 32
        %v8273 = vpop.permute.xlu0 %8272
        %8274 = vrot.lane.b32.xlu0 %v8201, 32
        %v8275 = vpop.permute.xlu0 %8274
        %8276 = vrot.lane.b32.xlu0 %v8203, 32
        %v8277 = vpop.permute.xlu0 %8276
        %8278 = vrot.lane.b32.xlu0 %v8206, 32
        %v8279 = vpop.permute.xlu0 %8278
        %8280 = vrot.lane.b32.xlu0 %v8208, 32
        %v8281 = vpop.permute.xlu0 %8280
        %8282 = vrot.lane.b32.xlu0 %v8211, 32
        %v8283 = vpop.permute.xlu0 %8282
        %8284 = vrot.lane.b32.xlu0 %v8213, 32
        %v8285 = vpop.permute.xlu0 %8284
        %8286 = vrot.lane.b32.xlu0 %v8216, 32
        %v8287 = vpop.permute.xlu0 %8286
        %8288 = vrot.lane.b32.xlu0 %v8218, 32
        %v8289 = vpop.permute.xlu0 %8288
        %8290 = vrot.lane.b32.xlu0 %v8221, 32
        %v8291 = vpop.permute.xlu0 %8290
        %8292 = vrot.lane.b32.xlu0 %v8223, 32
        %v8293 = vpop.permute.xlu0 %8292
        %8294 = vrot.lane.b32.xlu0 %v8226, 32
        %v8295 = vpop.permute.xlu0 %8294
        %8296 = vrot.lane.b32.xlu0 %v8228, 32
        %v8297 = vpop.permute.xlu0 %8296
        %8298 = vrot.lane.b32.xlu0 %v8231, 32
        %v8299 = vpop.permute.xlu0 %8298
        %8300 = vrot.lane.b32.xlu0 %v8233, 32
        %v8301 = vpop.permute.xlu0 %8300
        %8302 = vrot.lane.b32.xlu0 %v8236, 32
        %v8303 = vpop.permute.xlu0 %8302
        %8304 = vrot.lane.b32.xlu0 %v8238, 32
        %v8305 = vpop.permute.xlu0 %8304
        %8306 = vrot.lane.b32.xlu0 %v8241, 32
        %v8307 = vpop.permute.xlu0 %8306
        %8308 = vrot.lane.b32.xlu0 %v8243, 32
        %v8309 = vpop.permute.xlu0 %8308
        %8310 = vrot.lane.b32.xlu0 %v8246, 32
        %v8311 = vpop.permute.xlu0 %8310
        %8312 = vrot.lane.b32.xlu0 %v8248, 32
        %v8313 = vpop.permute.xlu0 %8312
        %8314 = vrot.lane.b32.xlu0 %v8251, 32
        %v8315 = vpop.permute.xlu0 %8314
        %8316 = vrot.lane.b32.xlu0 %v8253, 32
        %v8317 = vpop.permute.xlu0 %8316
        %8350 = vst.msk [vmem:[#allocation3] sm:$0xff] %vm1046, %v8255
        %8351 = vst.msk [vmem:[#allocation3 + $0x10] sm:$0xff] %vm1046, %v8257
        %8352 = vst.msk [vmem:[#allocation3 + $0x20] sm:$0xff] %vm1046, %v8259
        %8353 = vst.msk [vmem:[#allocation3 + $0x30] sm:$0xff] %vm1046, %v8261
        %8354 = vst.msk [vmem:[#allocation3 + $0x40] sm:$0xff] %vm1046, %v8263
        %8355 = vst.msk [vmem:[#allocation3 + $0x50] sm:$0xff] %vm1046, %v8265
        %8356 = vst.msk [vmem:[#allocation3 + $0x60] sm:$0xff] %vm1046, %v8267
        %8357 = vst.msk [vmem:[#allocation3 + $0x70] sm:$0xff] %vm1046, %v8269
        %8358 = vst.msk [vmem:[#allocation3 + $0x80] sm:$0xff] %vm1046, %v8271
        %8359 = vst.msk [vmem:[#allocation3 + $0x90] sm:$0xff] %vm1046, %v8273
        %8360 = vst.msk [vmem:[#allocation3 + $0xa0] sm:$0xff] %vm1046, %v8275
        %8361 = vst.msk [vmem:[#allocation3 + $0xb0] sm:$0xff] %vm1046, %v8277
        %8362 = vst.msk [vmem:[#allocation3 + $0xc0] sm:$0xff] %vm1046, %v8279
        %8363 = vst.msk [vmem:[#allocation3 + $0xd0] sm:$0xff] %vm1046, %v8281
        %8364 = vst.msk [vmem:[#allocation3 + $0xe0] sm:$0xff] %vm1046, %v8283
        %8365 = vst.msk [vmem:[#allocation3 + $0xf0] sm:$0xff] %vm1046, %v8285
        %8366 = vst.msk [vmem:[#allocation3 + $0x100] sm:$0xff] %vm1046, %v8287
        %8367 = vst.msk [vmem:[#allocation3 + $0x110] sm:$0xff] %vm1046, %v8289
        %8368 = vst.msk [vmem:[#allocation3 + $0x120] sm:$0xff] %vm1046, %v8291
        %8369 = vst.msk [vmem:[#allocation3 + $0x130] sm:$0xff] %vm1046, %v8293
        %8370 = vst.msk [vmem:[#allocation3 + $0x140] sm:$0xff] %vm1046, %v8295
        %8371 = vst.msk [vmem:[#allocation3 + $0x150] sm:$0xff] %vm1046, %v8297
        %8372 = vst.msk [vmem:[#allocation3 + $0x160] sm:$0xff] %vm1046, %v8299
        %8373 = vst.msk [vmem:[#allocation3 + $0x170] sm:$0xff] %vm1046, %v8301
        %8374 = vst.msk [vmem:[#allocation3 + $0x180] sm:$0xff] %vm1046, %v8303
        %8375 = vst.msk [vmem:[#allocation3 + $0x190] sm:$0xff] %vm1046, %v8305
        %8376 = vst.msk [vmem:[#allocation3 + $0x1a0] sm:$0xff] %vm1046, %v8307
        %8377 = vst.msk [vmem:[#allocation3 + $0x1b0] sm:$0xff] %vm1046, %v8309
        %8378 = vst.msk [vmem:[#allocation3 + $0x1c0] sm:$0xff] %vm1046, %v8311
        %8379 = vst.msk [vmem:[#allocation3 + $0x1d0] sm:$0xff] %vm1046, %v8313
        %8380 = vst.msk [vmem:[#allocation3 + $0x1e0] sm:$0xff] %vm1046, %v8315
        %8381 = vst.msk [vmem:[#allocation3 + $0x1f0] sm:$0xff] %vm1046, %v8317
        %8384 = vrot.lane.b32.xlu0 %v7835, 48
        %v8385 = vpop.permute.xlu0 %8384
        %8386 = vrot.lane.b32.xlu0 %v7836, 48
        %v8387 = vpop.permute.xlu0 %8386
        %8388 = vrot.lane.b32.xlu0 %v7838, 48
        %v8389 = vpop.permute.xlu0 %8388
        %8390 = vrot.lane.b32.xlu0 %v7839, 48
        %v8391 = vpop.permute.xlu0 %8390
        %8392 = vrot.lane.b32.xlu0 %v7841, 48
        %v8393 = vpop.permute.xlu0 %8392
        %8394 = vrot.lane.b32.xlu0 %v7842, 48
        %v8395 = vpop.permute.xlu0 %8394
        %8396 = vrot.lane.b32.xlu0 %v7844, 48
        %v8397 = vpop.permute.xlu0 %8396
        %8398 = vrot.lane.b32.xlu0 %v7845, 48
        %v8399 = vpop.permute.xlu0 %8398
        %8400 = vrot.lane.b32.xlu0 %v7847, 48
        %v8401 = vpop.permute.xlu0 %8400
        %8402 = vrot.lane.b32.xlu0 %v7848, 48
        %v8403 = vpop.permute.xlu0 %8402
        %8404 = vrot.lane.b32.xlu0 %v7850, 48
        %v8405 = vpop.permute.xlu0 %8404
        %8406 = vrot.lane.b32.xlu0 %v7851, 48
        %v8407 = vpop.permute.xlu0 %8406
        %8408 = vrot.lane.b32.xlu0 %v7853, 48
        %v8409 = vpop.permute.xlu0 %8408
        %8410 = vrot.lane.b32.xlu0 %v7854, 48
        %v8411 = vpop.permute.xlu0 %8410
        %8412 = vrot.lane.b32.xlu0 %v7856, 48
        %v8413 = vpop.permute.xlu0 %8412
        %8414 = vrot.lane.b32.xlu0 %v7857, 48
        %v8415 = vpop.permute.xlu0 %8414
        %8416 = vrot.lane.b32.xlu0 %v7859, 48
        %v8417 = vpop.permute.xlu0 %8416
        %8418 = vrot.lane.b32.xlu0 %v7860, 48
        %v8419 = vpop.permute.xlu0 %8418
        %8420 = vrot.lane.b32.xlu0 %v7862, 48
        %v8421 = vpop.permute.xlu0 %8420
        %8422 = vrot.lane.b32.xlu0 %v7863, 48
        %v8423 = vpop.permute.xlu0 %8422
        %8424 = vrot.lane.b32.xlu0 %v7865, 48
        %v8425 = vpop.permute.xlu0 %8424
        %8426 = vrot.lane.b32.xlu0 %v7866, 48
        %v8427 = vpop.permute.xlu0 %8426
        %8428 = vrot.lane.b32.xlu0 %v7868, 48
        %v8429 = vpop.permute.xlu0 %8428
        %8430 = vrot.lane.b32.xlu0 %v7869, 48
        %v8431 = vpop.permute.xlu0 %8430
        %8432 = vrot.lane.b32.xlu0 %v7871, 48
        %v8433 = vpop.permute.xlu0 %8432
        %8434 = vrot.lane.b32.xlu0 %v7872, 48
        %v8435 = vpop.permute.xlu0 %8434
        %8436 = vrot.lane.b32.xlu0 %v7874, 48
        %v8437 = vpop.permute.xlu0 %8436
        %8438 = vrot.lane.b32.xlu0 %v7875, 48
        %v8439 = vpop.permute.xlu0 %8438
        %8440 = vrot.lane.b32.xlu0 %v7877, 48
        %v8441 = vpop.permute.xlu0 %8440
        %8442 = vrot.lane.b32.xlu0 %v7878, 48
        %v8443 = vpop.permute.xlu0 %8442
        %8444 = vrot.lane.b32.xlu0 %v7880, 48
        %v8445 = vpop.permute.xlu0 %8444
        %8446 = vrot.lane.b32.xlu0 %v7881, 48
        %v8447 = vpop.permute.xlu0 %8446
        %8480 = vst.msk [vmem:[#allocation3] sm:$0xff] %vm1177, %v8385
        %8481 = vst.msk [vmem:[#allocation3 + $0x10] sm:$0xff] %vm1177, %v8387
        %8482 = vst.msk [vmem:[#allocation3 + $0x20] sm:$0xff] %vm1177, %v8389
        %8483 = vst.msk [vmem:[#allocation3 + $0x30] sm:$0xff] %vm1177, %v8391
        %8484 = vst.msk [vmem:[#allocation3 + $0x40] sm:$0xff] %vm1177, %v8393
        %8485 = vst.msk [vmem:[#allocation3 + $0x50] sm:$0xff] %vm1177, %v8395
        %8486 = vst.msk [vmem:[#allocation3 + $0x60] sm:$0xff] %vm1177, %v8397
        %8487 = vst.msk [vmem:[#allocation3 + $0x70] sm:$0xff] %vm1177, %v8399
        %8488 = vst.msk [vmem:[#allocation3 + $0x80] sm:$0xff] %vm1177, %v8401
        %8489 = vst.msk [vmem:[#allocation3 + $0x90] sm:$0xff] %vm1177, %v8403
        %8490 = vst.msk [vmem:[#allocation3 + $0xa0] sm:$0xff] %vm1177, %v8405
        %8491 = vst.msk [vmem:[#allocation3 + $0xb0] sm:$0xff] %vm1177, %v8407
        %8492 = vst.msk [vmem:[#allocation3 + $0xc0] sm:$0xff] %vm1177, %v8409
        %8493 = vst.msk [vmem:[#allocation3 + $0xd0] sm:$0xff] %vm1177, %v8411
        %8494 = vst.msk [vmem:[#allocation3 + $0xe0] sm:$0xff] %vm1177, %v8413
        %8495 = vst.msk [vmem:[#allocation3 + $0xf0] sm:$0xff] %vm1177, %v8415
        %8496 = vst.msk [vmem:[#allocation3 + $0x100] sm:$0xff] %vm1177, %v8417
        %8497 = vst.msk [vmem:[#allocation3 + $0x110] sm:$0xff] %vm1177, %v8419
        %8498 = vst.msk [vmem:[#allocation3 + $0x120] sm:$0xff] %vm1177, %v8421
        %8499 = vst.msk [vmem:[#allocation3 + $0x130] sm:$0xff] %vm1177, %v8423
        %8500 = vst.msk [vmem:[#allocation3 + $0x140] sm:$0xff] %vm1177, %v8425
        %8501 = vst.msk [vmem:[#allocation3 + $0x150] sm:$0xff] %vm1177, %v8427
        %8502 = vst.msk [vmem:[#allocation3 + $0x160] sm:$0xff] %vm1177, %v8429
        %8503 = vst.msk [vmem:[#allocation3 + $0x170] sm:$0xff] %vm1177, %v8431
        %8504 = vst.msk [vmem:[#allocation3 + $0x180] sm:$0xff] %vm1177, %v8433
        %8505 = vst.msk [vmem:[#allocation3 + $0x190] sm:$0xff] %vm1177, %v8435
        %8506 = vst.msk [vmem:[#allocation3 + $0x1a0] sm:$0xff] %vm1177, %v8437
        %8507 = vst.msk [vmem:[#allocation3 + $0x1b0] sm:$0xff] %vm1177, %v8439
        %8508 = vst.msk [vmem:[#allocation3 + $0x1c0] sm:$0xff] %vm1177, %v8441
        %8509 = vst.msk [vmem:[#allocation3 + $0x1d0] sm:$0xff] %vm1177, %v8443
        %8510 = vst.msk [vmem:[#allocation3 + $0x1e0] sm:$0xff] %vm1177, %v8445
        %8511 = vst.msk [vmem:[#allocation3 + $0x1f0] sm:$0xff] %vm1177, %v8447
        %v8513 = vrot.slane %v7880, 1
        %v8514 = vrot.slane %v7881, 1
        %v8515 = vsel %vm659, %v8513, %v8514
        %v8516 = vrot.slane %v7882, 1
        %v8517 = vsel %vm659, %v8514, %v8516
        %8518 = vrot.lane.b32.xlu0 %v7973, 64
        %v8519 = vpop.permute.xlu0 %8518
        %8520 = vrot.lane.b32.xlu0 %v7975, 64
        %v8521 = vpop.permute.xlu0 %8520
        %8522 = vrot.lane.b32.xlu0 %v7978, 64
        %v8523 = vpop.permute.xlu0 %8522
        %8524 = vrot.lane.b32.xlu0 %v7980, 64
        %v8525 = vpop.permute.xlu0 %8524
        %8526 = vrot.lane.b32.xlu0 %v7983, 64
        %v8527 = vpop.permute.xlu0 %8526
        %8528 = vrot.lane.b32.xlu0 %v7985, 64
        %v8529 = vpop.permute.xlu0 %8528
        %8530 = vrot.lane.b32.xlu0 %v7988, 64
        %v8531 = vpop.permute.xlu0 %8530
        %8532 = vrot.lane.b32.xlu0 %v7990, 64
        %v8533 = vpop.permute.xlu0 %8532
        %8534 = vrot.lane.b32.xlu0 %v7993, 64
        %v8535 = vpop.permute.xlu0 %8534
        %8536 = vrot.lane.b32.xlu0 %v7995, 64
        %v8537 = vpop.permute.xlu0 %8536
        %8538 = vrot.lane.b32.xlu0 %v7998, 64
        %v8539 = vpop.permute.xlu0 %8538
        %8540 = vrot.lane.b32.xlu0 %v8000, 64
        %v8541 = vpop.permute.xlu0 %8540
        %8542 = vrot.lane.b32.xlu0 %v8003, 64
        %v8543 = vpop.permute.xlu0 %8542
        %8544 = vrot.lane.b32.xlu0 %v8005, 64
        %v8545 = vpop.permute.xlu0 %8544
        %8546 = vrot.lane.b32.xlu0 %v8008, 64
        %v8547 = vpop.permute.xlu0 %8546
        %8548 = vrot.lane.b32.xlu0 %v8010, 64
        %v8549 = vpop.permute.xlu0 %8548
        %8550 = vrot.lane.b32.xlu0 %v8013, 64
        %v8551 = vpop.permute.xlu0 %8550
        %8552 = vrot.lane.b32.xlu0 %v8015, 64
        %v8553 = vpop.permute.xlu0 %8552
        %8554 = vrot.lane.b32.xlu0 %v8018, 64
        %v8555 = vpop.permute.xlu0 %8554
        %8556 = vrot.lane.b32.xlu0 %v8020, 64
        %v8557 = vpop.permute.xlu0 %8556
        %8558 = vrot.lane.b32.xlu0 %v8023, 64
        %v8559 = vpop.permute.xlu0 %8558
        %8560 = vrot.lane.b32.xlu0 %v8025, 64
        %v8561 = vpop.permute.xlu0 %8560
        %8562 = vrot.lane.b32.xlu0 %v8028, 64
        %v8563 = vpop.permute.xlu0 %8562
        %8564 = vrot.lane.b32.xlu0 %v8030, 64
        %v8565 = vpop.permute.xlu0 %8564
        %8566 = vrot.lane.b32.xlu0 %v8033, 64
        %v8567 = vpop.permute.xlu0 %8566
        %8568 = vrot.lane.b32.xlu0 %v8035, 64
        %v8569 = vpop.permute.xlu0 %8568
        %8570 = vrot.lane.b32.xlu0 %v8038, 64
        %v8571 = vpop.permute.xlu0 %8570
        %8572 = vrot.lane.b32.xlu0 %v8040, 64
        %v8573 = vpop.permute.xlu0 %8572
        %8574 = vrot.lane.b32.xlu0 %v8043, 64
        %v8575 = vpop.permute.xlu0 %8574
        %8576 = vrot.lane.b32.xlu0 %v8045, 64
        %v8577 = vpop.permute.xlu0 %8576
        %8578 = vrot.lane.b32.xlu0 %v8515, 64
        %v8579 = vpop.permute.xlu0 %8578
        %8580 = vrot.lane.b32.xlu0 %v8517, 64
        %v8581 = vpop.permute.xlu0 %8580
        %8614 = vst.msk [vmem:[#allocation3] sm:$0xff] %vm1312, %v8519
        %8615 = vst.msk [vmem:[#allocation3 + $0x10] sm:$0xff] %vm1312, %v8521
        %8616 = vst.msk [vmem:[#allocation3 + $0x20] sm:$0xff] %vm1312, %v8523
        %8617 = vst.msk [vmem:[#allocation3 + $0x30] sm:$0xff] %vm1312, %v8525
        %8618 = vst.msk [vmem:[#allocation3 + $0x40] sm:$0xff] %vm1312, %v8527
        %8619 = vst.msk [vmem:[#allocation3 + $0x50] sm:$0xff] %vm1312, %v8529
        %8620 = vst.msk [vmem:[#allocation3 + $0x60] sm:$0xff] %vm1312, %v8531
        %8621 = vst.msk [vmem:[#allocation3 + $0x70] sm:$0xff] %vm1312, %v8533
        %8622 = vst.msk [vmem:[#allocation3 + $0x80] sm:$0xff] %vm1312, %v8535
        %8623 = vst.msk [vmem:[#allocation3 + $0x90] sm:$0xff] %vm1312, %v8537
        %8624 = vst.msk [vmem:[#allocation3 + $0xa0] sm:$0xff] %vm1312, %v8539
        %8625 = vst.msk [vmem:[#allocation3 + $0xb0] sm:$0xff] %vm1312, %v8541
        %8626 = vst.msk [vmem:[#allocation3 + $0xc0] sm:$0xff] %vm1312, %v8543
        %8627 = vst.msk [vmem:[#allocation3 + $0xd0] sm:$0xff] %vm1312, %v8545
        %8628 = vst.msk [vmem:[#allocation3 + $0xe0] sm:$0xff] %vm1312, %v8547
        %8629 = vst.msk [vmem:[#allocation3 + $0xf0] sm:$0xff] %vm1312, %v8549
        %8630 = vst.msk [vmem:[#allocation3 + $0x100] sm:$0xff] %vm1312, %v8551
        %8631 = vst.msk [vmem:[#allocation3 + $0x110] sm:$0xff] %vm1312, %v8553
        %8632 = vst.msk [vmem:[#allocation3 + $0x120] sm:$0xff] %vm1312, %v8555
        %8633 = vst.msk [vmem:[#allocation3 + $0x130] sm:$0xff] %vm1312, %v8557
        %8634 = vst.msk [vmem:[#allocation3 + $0x140] sm:$0xff] %vm1312, %v8559
        %8635 = vst.msk [vmem:[#allocation3 + $0x150] sm:$0xff] %vm1312, %v8561
        %8636 = vst.msk [vmem:[#allocation3 + $0x160] sm:$0xff] %vm1312, %v8563
        %8637 = vst.msk [vmem:[#allocation3 + $0x170] sm:$0xff] %vm1312, %v8565
        %8638 = vst.msk [vmem:[#allocation3 + $0x180] sm:$0xff] %vm1312, %v8567
        %8639 = vst.msk [vmem:[#allocation3 + $0x190] sm:$0xff] %vm1312, %v8569
        %8640 = vst.msk [vmem:[#allocation3 + $0x1a0] sm:$0xff] %vm1312, %v8571
        %8641 = vst.msk [vmem:[#allocation3 + $0x1b0] sm:$0xff] %vm1312, %v8573
        %8642 = vst.msk [vmem:[#allocation3 + $0x1c0] sm:$0xff] %vm1312, %v8575
        %8643 = vst.msk [vmem:[#allocation3 + $0x1d0] sm:$0xff] %vm1312, %v8577
        %8644 = vst.msk [vmem:[#allocation3 + $0x1e0] sm:$0xff] %vm1312, %v8579
        %8645 = vst.msk [vmem:[#allocation3 + $0x1f0] sm:$0xff] %vm1312, %v8581
        %v8646 = vrot.slane %v7880, 2
        %v8647 = vrot.slane %v7881, 2
        %v8648 = vsel %vm869, %v8646, %v8647
        %v8649 = vrot.slane %v7882, 2
        %v8650 = vsel %vm869, %v8647, %v8649
        %8651 = vrot.lane.b32.xlu0 %v8181, 80
        %v8652 = vpop.permute.xlu0 %8651
        %8653 = vrot.lane.b32.xlu0 %v8183, 80
        %v8654 = vpop.permute.xlu0 %8653
        %8655 = vrot.lane.b32.xlu0 %v8186, 80
        %v8656 = vpop.permute.xlu0 %8655
        %8657 = vrot.lane.b32.xlu0 %v8188, 80
        %v8658 = vpop.permute.xlu0 %8657
        %8659 = vrot.lane.b32.xlu0 %v8191, 80
        %v8660 = vpop.permute.xlu0 %8659
        %8661 = vrot.lane.b32.xlu0 %v8193, 80
        %v8662 = vpop.permute.xlu0 %8661
        %8663 = vrot.lane.b32.xlu0 %v8196, 80
        %v8664 = vpop.permute.xlu0 %8663
        %8665 = vrot.lane.b32.xlu0 %v8198, 80
        %v8666 = vpop.permute.xlu0 %8665
        %8667 = vrot.lane.b32.xlu0 %v8201, 80
        %v8668 = vpop.permute.xlu0 %8667
        %8669 = vrot.lane.b32.xlu0 %v8203, 80
        %v8670 = vpop.permute.xlu0 %8669
        %8671 = vrot.lane.b32.xlu0 %v8206, 80
        %v8672 = vpop.permute.xlu0 %8671
        %8673 = vrot.lane.b32.xlu0 %v8208, 80
        %v8674 = vpop.permute.xlu0 %8673
        %8675 = vrot.lane.b32.xlu0 %v8211, 80
        %v8676 = vpop.permute.xlu0 %8675
        %8677 = vrot.lane.b32.xlu0 %v8213, 80
        %v8678 = vpop.permute.xlu0 %8677
        %8679 = vrot.lane.b32.xlu0 %v8216, 80
        %v8680 = vpop.permute.xlu0 %8679
        %8681 = vrot.lane.b32.xlu0 %v8218, 80
        %v8682 = vpop.permute.xlu0 %8681
        %8683 = vrot.lane.b32.xlu0 %v8221, 80
        %v8684 = vpop.permute.xlu0 %8683
        %8685 = vrot.lane.b32.xlu0 %v8223, 80
        %v8686 = vpop.permute.xlu0 %8685
        %8687 = vrot.lane.b32.xlu0 %v8226, 80
        %v8688 = vpop.permute.xlu0 %8687
        %8689 = vrot.lane.b32.xlu0 %v8228, 80
        %v8690 = vpop.permute.xlu0 %8689
        %8691 = vrot.lane.b32.xlu0 %v8231, 80
        %v8692 = vpop.permute.xlu0 %8691
        %8693 = vrot.lane.b32.xlu0 %v8233, 80
        %v8694 = vpop.permute.xlu0 %8693
        %8695 = vrot.lane.b32.xlu0 %v8236, 80
        %v8696 = vpop.permute.xlu0 %8695
        %8697 = vrot.lane.b32.xlu0 %v8238, 80
        %v8698 = vpop.permute.xlu0 %8697
        %8699 = vrot.lane.b32.xlu0 %v8241, 80
        %v8700 = vpop.permute.xlu0 %8699
        %8701 = vrot.lane.b32.xlu0 %v8243, 80
        %v8702 = vpop.permute.xlu0 %8701
        %8703 = vrot.lane.b32.xlu0 %v8246, 80
        %v8704 = vpop.permute.xlu0 %8703
        %8705 = vrot.lane.b32.xlu0 %v8248, 80
        %v8706 = vpop.permute.xlu0 %8705
        %8707 = vrot.lane.b32.xlu0 %v8251, 80
        %v8708 = vpop.permute.xlu0 %8707
        %8709 = vrot.lane.b32.xlu0 %v8253, 80
        %v8710 = vpop.permute.xlu0 %8709
        %8711 = vrot.lane.b32.xlu0 %v8648, 80
        %v8712 = vpop.permute.xlu0 %8711
        %8713 = vrot.lane.b32.xlu0 %v8650, 80
        %v8714 = vpop.permute.xlu0 %8713
        %8747 = vst.msk [vmem:[#allocation3] sm:$0xff] %vm1446, %v8652
        %8748 = vst.msk [vmem:[#allocation3 + $0x10] sm:$0xff] %vm1446, %v8654
        %8749 = vst.msk [vmem:[#allocation3 + $0x20] sm:$0xff] %vm1446, %v8656
        %8750 = vst.msk [vmem:[#allocation3 + $0x30] sm:$0xff] %vm1446, %v8658
        %8751 = vst.msk [vmem:[#allocation3 + $0x40] sm:$0xff] %vm1446, %v8660
        %8752 = vst.msk [vmem:[#allocation3 + $0x50] sm:$0xff] %vm1446, %v8662
        %8753 = vst.msk [vmem:[#allocation3 + $0x60] sm:$0xff] %vm1446, %v8664
        %8754 = vst.msk [vmem:[#allocation3 + $0x70] sm:$0xff] %vm1446, %v8666
        %8755 = vst.msk [vmem:[#allocation3 + $0x80] sm:$0xff] %vm1446, %v8668
        %8756 = vst.msk [vmem:[#allocation3 + $0x90] sm:$0xff] %vm1446, %v8670
        %8757 = vst.msk [vmem:[#allocation3 + $0xa0] sm:$0xff] %vm1446, %v8672
        %8758 = vst.msk [vmem:[#allocation3 + $0xb0] sm:$0xff] %vm1446, %v8674
        %8759 = vst.msk [vmem:[#allocation3 + $0xc0] sm:$0xff] %vm1446, %v8676
        %8760 = vst.msk [vmem:[#allocation3 + $0xd0] sm:$0xff] %vm1446, %v8678
        %8761 = vst.msk [vmem:[#allocation3 + $0xe0] sm:$0xff] %vm1446, %v8680
        %8762 = vst.msk [vmem:[#allocation3 + $0xf0] sm:$0xff] %vm1446, %v8682
        %8763 = vst.msk [vmem:[#allocation3 + $0x100] sm:$0xff] %vm1446, %v8684
        %8764 = vst.msk [vmem:[#allocation3 + $0x110] sm:$0xff] %vm1446, %v8686
        %8765 = vst.msk [vmem:[#allocation3 + $0x120] sm:$0xff] %vm1446, %v8688
        %8766 = vst.msk [vmem:[#allocation3 + $0x130] sm:$0xff] %vm1446, %v8690
        %8767 = vst.msk [vmem:[#allocation3 + $0x140] sm:$0xff] %vm1446, %v8692
        %8768 = vst.msk [vmem:[#allocation3 + $0x150] sm:$0xff] %vm1446, %v8694
        %8769 = vst.msk [vmem:[#allocation3 + $0x160] sm:$0xff] %vm1446, %v8696
        %8770 = vst.msk [vmem:[#allocation3 + $0x170] sm:$0xff] %vm1446, %v8698
        %8771 = vst.msk [vmem:[#allocation3 + $0x180] sm:$0xff] %vm1446, %v8700
        %8772 = vst.msk [vmem:[#allocation3 + $0x190] sm:$0xff] %vm1446, %v8702
        %8773 = vst.msk [vmem:[#allocation3 + $0x1a0] sm:$0xff] %vm1446, %v8704
        %8774 = vst.msk [vmem:[#allocation3 + $0x1b0] sm:$0xff] %vm1446, %v8706
        %8775 = vst.msk [vmem:[#allocation3 + $0x1c0] sm:$0xff] %vm1446, %v8708
        %8776 = vst.msk [vmem:[#allocation3 + $0x1d0] sm:$0xff] %vm1446, %v8710
        %8777 = vst.msk [vmem:[#allocation3 + $0x1e0] sm:$0xff] %vm1446, %v8712
        %8778 = vst.msk [vmem:[#allocation3 + $0x1f0] sm:$0xff] %vm1446, %v8714
        %8781 = vrot.lane.b32.xlu0 %v7838, 96
        %v8782 = vpop.permute.xlu0 %8781
        %8783 = vrot.lane.b32.xlu0 %v7839, 96
        %v8784 = vpop.permute.xlu0 %8783
        %8785 = vrot.lane.b32.xlu0 %v7841, 96
        %v8786 = vpop.permute.xlu0 %8785
        %8787 = vrot.lane.b32.xlu0 %v7842, 96
        %v8788 = vpop.permute.xlu0 %8787
        %8789 = vrot.lane.b32.xlu0 %v7844, 96
        %v8790 = vpop.permute.xlu0 %8789
        %8791 = vrot.lane.b32.xlu0 %v7845, 96
        %v8792 = vpop.permute.xlu0 %8791
        %8793 = vrot.lane.b32.xlu0 %v7847, 96
        %v8794 = vpop.permute.xlu0 %8793
        %8795 = vrot.lane.b32.xlu0 %v7848, 96
        %v8796 = vpop.permute.xlu0 %8795
        %8797 = vrot.lane.b32.xlu0 %v7850, 96
        %v8798 = vpop.permute.xlu0 %8797
        %8799 = vrot.lane.b32.xlu0 %v7851, 96
        %v8800 = vpop.permute.xlu0 %8799
        %8801 = vrot.lane.b32.xlu0 %v7853, 96
        %v8802 = vpop.permute.xlu0 %8801
        %8803 = vrot.lane.b32.xlu0 %v7854, 96
        %v8804 = vpop.permute.xlu0 %8803
        %8805 = vrot.lane.b32.xlu0 %v7856, 96
        %v8806 = vpop.permute.xlu0 %8805
        %8807 = vrot.lane.b32.xlu0 %v7857, 96
        %v8808 = vpop.permute.xlu0 %8807
        %8809 = vrot.lane.b32.xlu0 %v7859, 96
        %v8810 = vpop.permute.xlu0 %8809
        %8811 = vrot.lane.b32.xlu0 %v7860, 96
        %v8812 = vpop.permute.xlu0 %8811
        %8813 = vrot.lane.b32.xlu0 %v7862, 96
        %v8814 = vpop.permute.xlu0 %8813
        %8815 = vrot.lane.b32.xlu0 %v7863, 96
        %v8816 = vpop.permute.xlu0 %8815
        %8817 = vrot.lane.b32.xlu0 %v7865, 96
        %v8818 = vpop.permute.xlu0 %8817
        %8819 = vrot.lane.b32.xlu0 %v7866, 96
        %v8820 = vpop.permute.xlu0 %8819
        %8821 = vrot.lane.b32.xlu0 %v7868, 96
        %v8822 = vpop.permute.xlu0 %8821
        %8823 = vrot.lane.b32.xlu0 %v7869, 96
        %v8824 = vpop.permute.xlu0 %8823
        %8825 = vrot.lane.b32.xlu0 %v7871, 96
        %v8826 = vpop.permute.xlu0 %8825
        %8827 = vrot.lane.b32.xlu0 %v7872, 96
        %v8828 = vpop.permute.xlu0 %8827
        %8829 = vrot.lane.b32.xlu0 %v7874, 96
        %v8830 = vpop.permute.xlu0 %8829
        %8831 = vrot.lane.b32.xlu0 %v7875, 96
        %v8832 = vpop.permute.xlu0 %8831
        %8833 = vrot.lane.b32.xlu0 %v7877, 96
        %v8834 = vpop.permute.xlu0 %8833
        %8835 = vrot.lane.b32.xlu0 %v7878, 96
        %v8836 = vpop.permute.xlu0 %8835
        %8837 = vrot.lane.b32.xlu0 %v7880, 96
        %v8838 = vpop.permute.xlu0 %8837
        %8839 = vrot.lane.b32.xlu0 %v7881, 96
        %v8840 = vpop.permute.xlu0 %8839
        %8841 = vrot.lane.b32.xlu0 %v7883, 96
        %v8842 = vpop.permute.xlu0 %8841
        %8843 = vrot.lane.b32.xlu0 %v7884, 96
        %v8844 = vpop.permute.xlu0 %8843
        %8877 = vst.msk [vmem:[#allocation3] sm:$0xff] %vm1577, %v8782
        %8878 = vst.msk [vmem:[#allocation3 + $0x10] sm:$0xff] %vm1577, %v8784
        %8879 = vst.msk [vmem:[#allocation3 + $0x20] sm:$0xff] %vm1577, %v8786
        %8880 = vst.msk [vmem:[#allocation3 + $0x30] sm:$0xff] %vm1577, %v8788
        %8881 = vst.msk [vmem:[#allocation3 + $0x40] sm:$0xff] %vm1577, %v8790
        %8882 = vst.msk [vmem:[#allocation3 + $0x50] sm:$0xff] %vm1577, %v8792
        %8883 = vst.msk [vmem:[#allocation3 + $0x60] sm:$0xff] %vm1577, %v8794
        %8884 = vst.msk [vmem:[#allocation3 + $0x70] sm:$0xff] %vm1577, %v8796
        %8885 = vst.msk [vmem:[#allocation3 + $0x80] sm:$0xff] %vm1577, %v8798
        %8886 = vst.msk [vmem:[#allocation3 + $0x90] sm:$0xff] %vm1577, %v8800
        %8887 = vst.msk [vmem:[#allocation3 + $0xa0] sm:$0xff] %vm1577, %v8802
        %8888 = vst.msk [vmem:[#allocation3 + $0xb0] sm:$0xff] %vm1577, %v8804
        %8889 = vst.msk [vmem:[#allocation3 + $0xc0] sm:$0xff] %vm1577, %v8806
        %8890 = vst.msk [vmem:[#allocation3 + $0xd0] sm:$0xff] %vm1577, %v8808
        %8891 = vst.msk [vmem:[#allocation3 + $0xe0] sm:$0xff] %vm1577, %v8810
        %8892 = vst.msk [vmem:[#allocation3 + $0xf0] sm:$0xff] %vm1577, %v8812
        %8893 = vst.msk [vmem:[#allocation3 + $0x100] sm:$0xff] %vm1577, %v8814
        %8894 = vst.msk [vmem:[#allocation3 + $0x110] sm:$0xff] %vm1577, %v8816
        %8895 = vst.msk [vmem:[#allocation3 + $0x120] sm:$0xff] %vm1577, %v8818
        %8896 = vst.msk [vmem:[#allocation3 + $0x130] sm:$0xff] %vm1577, %v8820
        %8897 = vst.msk [vmem:[#allocation3 + $0x140] sm:$0xff] %vm1577, %v8822
        %8898 = vst.msk [vmem:[#allocation3 + $0x150] sm:$0xff] %vm1577, %v8824
        %8899 = vst.msk [vmem:[#allocation3 + $0x160] sm:$0xff] %vm1577, %v8826
        %8900 = vst.msk [vmem:[#allocation3 + $0x170] sm:$0xff] %vm1577, %v8828
        %8901 = vst.msk [vmem:[#allocation3 + $0x180] sm:$0xff] %vm1577, %v8830
        %8902 = vst.msk [vmem:[#allocation3 + $0x190] sm:$0xff] %vm1577, %v8832
        %8903 = vst.msk [vmem:[#allocation3 + $0x1a0] sm:$0xff] %vm1577, %v8834
        %8904 = vst.msk [vmem:[#allocation3 + $0x1b0] sm:$0xff] %vm1577, %v8836
        %8905 = vst.msk [vmem:[#allocation3 + $0x1c0] sm:$0xff] %vm1577, %v8838
        %8906 = vst.msk [vmem:[#allocation3 + $0x1d0] sm:$0xff] %vm1577, %v8840
        %8907 = vst.msk [vmem:[#allocation3 + $0x1e0] sm:$0xff] %vm1577, %v8842
        %8908 = vst.msk [vmem:[#allocation3 + $0x1f0] sm:$0xff] %vm1577, %v8844
        %v8910 = vrot.slane %v7883, 1
        %v8911 = vrot.slane %v7884, 1
        %v8912 = vsel %vm659, %v8910, %v8911
        %v8913 = vrot.slane %v7885, 1
        %v8914 = vsel %vm659, %v8911, %v8913
        %8915 = vrot.lane.b32.xlu0 %v7978, 112
        %v8916 = vpop.permute.xlu0 %8915
        %8917 = vrot.lane.b32.xlu0 %v7980, 112
        %v8918 = vpop.permute.xlu0 %8917
        %8919 = vrot.lane.b32.xlu0 %v7983, 112
        %v8920 = vpop.permute.xlu0 %8919
        %8921 = vrot.lane.b32.xlu0 %v7985, 112
        %v8922 = vpop.permute.xlu0 %8921
        %8923 = vrot.lane.b32.xlu0 %v7988, 112
        %v8924 = vpop.permute.xlu0 %8923
        %8925 = vrot.lane.b32.xlu0 %v7990, 112
        %v8926 = vpop.permute.xlu0 %8925
        %8927 = vrot.lane.b32.xlu0 %v7993, 112
        %v8928 = vpop.permute.xlu0 %8927
        %8929 = vrot.lane.b32.xlu0 %v7995, 112
        %v8930 = vpop.permute.xlu0 %8929
        %8931 = vrot.lane.b32.xlu0 %v7998, 112
        %v8932 = vpop.permute.xlu0 %8931
        %8933 = vrot.lane.b32.xlu0 %v8000, 112
        %v8934 = vpop.permute.xlu0 %8933
        %8935 = vrot.lane.b32.xlu0 %v8003, 112
        %v8936 = vpop.permute.xlu0 %8935
        %8937 = vrot.lane.b32.xlu0 %v8005, 112
        %v8938 = vpop.permute.xlu0 %8937
        %8939 = vrot.lane.b32.xlu0 %v8008, 112
        %v8940 = vpop.permute.xlu0 %8939
        %8941 = vrot.lane.b32.xlu0 %v8010, 112
        %v8942 = vpop.permute.xlu0 %8941
        %8943 = vrot.lane.b32.xlu0 %v8013, 112
        %v8944 = vpop.permute.xlu0 %8943
        %8945 = vrot.lane.b32.xlu0 %v8015, 112
        %v8946 = vpop.permute.xlu0 %8945
        %8947 = vrot.lane.b32.xlu0 %v8018, 112
        %v8948 = vpop.permute.xlu0 %8947
        %8949 = vrot.lane.b32.xlu0 %v8020, 112
        %v8950 = vpop.permute.xlu0 %8949
        %8951 = vrot.lane.b32.xlu0 %v8023, 112
        %v8952 = vpop.permute.xlu0 %8951
        %8953 = vrot.lane.b32.xlu0 %v8025, 112
        %v8954 = vpop.permute.xlu0 %8953
        %8955 = vrot.lane.b32.xlu0 %v8028, 112
        %v8956 = vpop.permute.xlu0 %8955
        %8957 = vrot.lane.b32.xlu0 %v8030, 112
        %v8958 = vpop.permute.xlu0 %8957
        %8959 = vrot.lane.b32.xlu0 %v8033, 112
        %v8960 = vpop.permute.xlu0 %8959
        %8961 = vrot.lane.b32.xlu0 %v8035, 112
        %v8962 = vpop.permute.xlu0 %8961
        %8963 = vrot.lane.b32.xlu0 %v8038, 112
        %v8964 = vpop.permute.xlu0 %8963
        %8965 = vrot.lane.b32.xlu0 %v8040, 112
        %v8966 = vpop.permute.xlu0 %8965
        %8967 = vrot.lane.b32.xlu0 %v8043, 112
        %v8968 = vpop.permute.xlu0 %8967
        %8969 = vrot.lane.b32.xlu0 %v8045, 112
        %v8970 = vpop.permute.xlu0 %8969
        %8971 = vrot.lane.b32.xlu0 %v8515, 112
        %v8972 = vpop.permute.xlu0 %8971
        %8973 = vrot.lane.b32.xlu0 %v8517, 112
        %v8974 = vpop.permute.xlu0 %8973
        %8975 = vrot.lane.b32.xlu0 %v8912, 112
        %v8976 = vpop.permute.xlu0 %8975
        %8977 = vrot.lane.b32.xlu0 %v8914, 112
        %v8978 = vpop.permute.xlu0 %8977
        %9011 = vst.msk [vmem:[#allocation3] sm:$0xff] %vm1712, %v8916
        %9012 = vst.msk [vmem:[#allocation3 + $0x10] sm:$0xff] %vm1712, %v8918
        %9013 = vst.msk [vmem:[#allocation3 + $0x20] sm:$0xff] %vm1712, %v8920
        %9014 = vst.msk [vmem:[#allocation3 + $0x30] sm:$0xff] %vm1712, %v8922
        %9015 = vst.msk [vmem:[#allocation3 + $0x40] sm:$0xff] %vm1712, %v8924
        %9016 = vst.msk [vmem:[#allocation3 + $0x50] sm:$0xff] %vm1712, %v8926
        %9017 = vst.msk [vmem:[#allocation3 + $0x60] sm:$0xff] %vm1712, %v8928
        %9018 = vst.msk [vmem:[#allocation3 + $0x70] sm:$0xff] %vm1712, %v8930
        %9019 = vst.msk [vmem:[#allocation3 + $0x80] sm:$0xff] %vm1712, %v8932
        %9020 = vst.msk [vmem:[#allocation3 + $0x90] sm:$0xff] %vm1712, %v8934
        %9021 = vst.msk [vmem:[#allocation3 + $0xa0] sm:$0xff] %vm1712, %v8936
        %9022 = vst.msk [vmem:[#allocation3 + $0xb0] sm:$0xff] %vm1712, %v8938
        %9023 = vst.msk [vmem:[#allocation3 + $0xc0] sm:$0xff] %vm1712, %v8940
        %9024 = vst.msk [vmem:[#allocation3 + $0xd0] sm:$0xff] %vm1712, %v8942
        %9025 = vst.msk [vmem:[#allocation3 + $0xe0] sm:$0xff] %vm1712, %v8944
        %9026 = vst.msk [vmem:[#allocation3 + $0xf0] sm:$0xff] %vm1712, %v8946
        %9027 = vst.msk [vmem:[#allocation3 + $0x100] sm:$0xff] %vm1712, %v8948
        %9028 = vst.msk [vmem:[#allocation3 + $0x110] sm:$0xff] %vm1712, %v8950
        %9029 = vst.msk [vmem:[#allocation3 + $0x120] sm:$0xff] %vm1712, %v8952
        %9030 = vst.msk [vmem:[#allocation3 + $0x130] sm:$0xff] %vm1712, %v8954
        %9031 = vst.msk [vmem:[#allocation3 + $0x140] sm:$0xff] %vm1712, %v8956
        %9032 = vst.msk [vmem:[#allocation3 + $0x150] sm:$0xff] %vm1712, %v8958
        %9033 = vst.msk [vmem:[#allocation3 + $0x160] sm:$0xff] %vm1712, %v8960
        %9034 = vst.msk [vmem:[#allocation3 + $0x170] sm:$0xff] %vm1712, %v8962
        %9035 = vst.msk [vmem:[#allocation3 + $0x180] sm:$0xff] %vm1712, %v8964
        %9036 = vst.msk [vmem:[#allocation3 + $0x190] sm:$0xff] %vm1712, %v8966
        %9037 = vst.msk [vmem:[#allocation3 + $0x1a0] sm:$0xff] %vm1712, %v8968
        %9038 = vst.msk [vmem:[#allocation3 + $0x1b0] sm:$0xff] %vm1712, %v8970
        %9039 = vst.msk [vmem:[#allocation3 + $0x1c0] sm:$0xff] %vm1712, %v8972
        %9040 = vst.msk [vmem:[#allocation3 + $0x1d0] sm:$0xff] %vm1712, %v8974
        %9041 = vst.msk [vmem:[#allocation3 + $0x1e0] sm:$0xff] %vm1712, %v8976
        %9042 = vst.msk [vmem:[#allocation3 + $0x1f0] sm:$0xff] %vm1712, %v8978
        %v9043 = vrot.slane %v7883, 2
        %v9044 = vrot.slane %v7884, 2
        %v9045 = vsel %vm869, %v9043, %v9044
        %v9046 = vrot.slane %v7885, 2
        %v9047 = vsel %vm869, %v9044, %v9046
        %9080 = vst.msk [vmem:[#allocation3 + $0x8] sm:$0xff] %vm417, %v8186
        %9081 = vst.msk [vmem:[#allocation3 + $0x18] sm:$0xff] %vm417, %v8188
        %9082 = vst.msk [vmem:[#allocation3 + $0x28] sm:$0xff] %vm417, %v8191
        %9083 = vst.msk [vmem:[#allocation3 + $0x38] sm:$0xff] %vm417, %v8193
        %9084 = vst.msk [vmem:[#allocation3 + $0x48] sm:$0xff] %vm417, %v8196
        %9085 = vst.msk [vmem:[#allocation3 + $0x58] sm:$0xff] %vm417, %v8198
        %9086 = vst.msk [vmem:[#allocation3 + $0x68] sm:$0xff] %vm417, %v8201
        %9087 = vst.msk [vmem:[#allocation3 + $0x78] sm:$0xff] %vm417, %v8203
        %9088 = vst.msk [vmem:[#allocation3 + $0x88] sm:$0xff] %vm417, %v8206
        %9089 = vst.msk [vmem:[#allocation3 + $0x98] sm:$0xff] %vm417, %v8208
        %9090 = vst.msk [vmem:[#allocation3 + $0xa8] sm:$0xff] %vm417, %v8211
        %9091 = vst.msk [vmem:[#allocation3 + $0xb8] sm:$0xff] %vm417, %v8213
        %9092 = vst.msk [vmem:[#allocation3 + $0xc8] sm:$0xff] %vm417, %v8216
        %9093 = vst.msk [vmem:[#allocation3 + $0xd8] sm:$0xff] %vm417, %v8218
        %9094 = vst.msk [vmem:[#allocation3 + $0xe8] sm:$0xff] %vm417, %v8221
        %9095 = vst.msk [vmem:[#allocation3 + $0xf8] sm:$0xff] %vm417, %v8223
        %9096 = vst.msk [vmem:[#allocation3 + $0x108] sm:$0xff] %vm417, %v8226
        %9097 = vst.msk [vmem:[#allocation3 + $0x118] sm:$0xff] %vm417, %v8228
        %9098 = vst.msk [vmem:[#allocation3 + $0x128] sm:$0xff] %vm417, %v8231
        %9099 = vst.msk [vmem:[#allocation3 + $0x138] sm:$0xff] %vm417, %v8233
        %9100 = vst.msk [vmem:[#allocation3 + $0x148] sm:$0xff] %vm417, %v8236
        %9101 = vst.msk [vmem:[#allocation3 + $0x158] sm:$0xff] %vm417, %v8238
        %9102 = vst.msk [vmem:[#allocation3 + $0x168] sm:$0xff] %vm417, %v8241
        %9103 = vst.msk [vmem:[#allocation3 + $0x178] sm:$0xff] %vm417, %v8243
        %9104 = vst.msk [vmem:[#allocation3 + $0x188] sm:$0xff] %vm417, %v8246
        %9105 = vst.msk [vmem:[#allocation3 + $0x198] sm:$0xff] %vm417, %v8248
        %9106 = vst.msk [vmem:[#allocation3 + $0x1a8] sm:$0xff] %vm417, %v8251
        %9107 = vst.msk [vmem:[#allocation3 + $0x1b8] sm:$0xff] %vm417, %v8253
        %9108 = vst.msk [vmem:[#allocation3 + $0x1c8] sm:$0xff] %vm417, %v8648
        %9109 = vst.msk [vmem:[#allocation3 + $0x1d8] sm:$0xff] %vm417, %v8650
        %9110 = vst.msk [vmem:[#allocation3 + $0x1e8] sm:$0xff] %vm417, %v9045
        %9111 = vst.msk [vmem:[#allocation3 + $0x1f8] sm:$0xff] %vm417, %v9047
        %v9112 = vld [vmem:[#allocation3] sm:$0xff]
        %v9113 = vld [vmem:[#allocation3 + $0x8] sm:$0xff]
        %v9114 = vld [vmem:[#allocation3 + $0x10] sm:$0xff]
        %v9115 = vld [vmem:[#allocation3 + $0x18] sm:$0xff]
        %v9116 = vld [vmem:[#allocation3 + $0x20] sm:$0xff]
        %v9117 = vld [vmem:[#allocation3 + $0x28] sm:$0xff]
        %v9118 = vld [vmem:[#allocation3 + $0x30] sm:$0xff]
        %v9119 = vld [vmem:[#allocation3 + $0x38] sm:$0xff]
        %v9120 = vld [vmem:[#allocation3 + $0x40] sm:$0xff]
        %v9121 = vld [vmem:[#allocation3 + $0x48] sm:$0xff]
        %v9122 = vld [vmem:[#allocation3 + $0x50] sm:$0xff]
        %v9123 = vld [vmem:[#allocation3 + $0x58] sm:$0xff]
        %v9124 = vld [vmem:[#allocation3 + $0x60] sm:$0xff]
        %v9125 = vld [vmem:[#allocation3 + $0x68] sm:$0xff]
        %v9126 = vld [vmem:[#allocation3 + $0x70] sm:$0xff]
        %v9127 = vld [vmem:[#allocation3 + $0x78] sm:$0xff]
        %v9128 = vld [vmem:[#allocation3 + $0x80] sm:$0xff]
        %v9129 = vld [vmem:[#allocation3 + $0x88] sm:$0xff]
        %v9130 = vld [vmem:[#allocation3 + $0x90] sm:$0xff]
        %v9131 = vld [vmem:[#allocation3 + $0x98] sm:$0xff]
        %v9132 = vld [vmem:[#allocation3 + $0xa0] sm:$0xff]
        %v9133 = vld [vmem:[#allocation3 + $0xa8] sm:$0xff]
        %v9134 = vld [vmem:[#allocation3 + $0xb0] sm:$0xff]
        %v9135 = vld [vmem:[#allocation3 + $0xb8] sm:$0xff]
        %v9136 = vld [vmem:[#allocation3 + $0xc0] sm:$0xff]
        %v9137 = vld [vmem:[#allocation3 + $0xc8] sm:$0xff]
        %v9138 = vld [vmem:[#allocation3 + $0xd0] sm:$0xff]
        %v9139 = vld [vmem:[#allocation3 + $0xd8] sm:$0xff]
        %v9140 = vld [vmem:[#allocation3 + $0xe0] sm:$0xff]
        %v9141 = vld [vmem:[#allocation3 + $0xe8] sm:$0xff]
        %v9142 = vld [vmem:[#allocation3 + $0xf0] sm:$0xff]
        %v9143 = vld [vmem:[#allocation3 + $0xf8] sm:$0xff]
        %v9144 = vld [vmem:[#allocation3 + $0x100] sm:$0xff]
        %v9145 = vld [vmem:[#allocation3 + $0x108] sm:$0xff]
        %v9146 = vld [vmem:[#allocation3 + $0x110] sm:$0xff]
        %v9147 = vld [vmem:[#allocation3 + $0x118] sm:$0xff]
        %v9148 = vld [vmem:[#allocation3 + $0x120] sm:$0xff]
        %v9149 = vld [vmem:[#allocation3 + $0x128] sm:$0xff]
        %v9150 = vld [vmem:[#allocation3 + $0x130] sm:$0xff]
        %v9151 = vld [vmem:[#allocation3 + $0x138] sm:$0xff]
        %v9152 = vld [vmem:[#allocation3 + $0x140] sm:$0xff]
        %v9153 = vld [vmem:[#allocation3 + $0x148] sm:$0xff]
        %v9154 = vld [vmem:[#allocation3 + $0x150] sm:$0xff]
        %v9155 = vld [vmem:[#allocation3 + $0x158] sm:$0xff]
        %v9156 = vld [vmem:[#allocation3 + $0x160] sm:$0xff]
        %v9157 = vld [vmem:[#allocation3 + $0x168] sm:$0xff]
        %v9158 = vld [vmem:[#allocation3 + $0x170] sm:$0xff]
        %v9159 = vld [vmem:[#allocation3 + $0x178] sm:$0xff]
        %v9160 = vld [vmem:[#allocation3 + $0x180] sm:$0xff]
        %v9161 = vld [vmem:[#allocation3 + $0x188] sm:$0xff]
        %v9162 = vld [vmem:[#allocation3 + $0x190] sm:$0xff]
        %v9163 = vld [vmem:[#allocation3 + $0x198] sm:$0xff]
        %v9164 = vld [vmem:[#allocation3 + $0x1a0] sm:$0xff]
        %v9165 = vld [vmem:[#allocation3 + $0x1a8] sm:$0xff]
        %v9166 = vld [vmem:[#allocation3 + $0x1b0] sm:$0xff]
        %v9167 = vld [vmem:[#allocation3 + $0x1b8] sm:$0xff]
        %v9168 = vld [vmem:[#allocation3 + $0x1c0] sm:$0xff]
        %v9169 = vld [vmem:[#allocation3 + $0x1c8] sm:$0xff]
        %v9170 = vld [vmem:[#allocation3 + $0x1d0] sm:$0xff]
        %v9171 = vld [vmem:[#allocation3 + $0x1d8] sm:$0xff]
        %v9172 = vld [vmem:[#allocation3 + $0x1e0] sm:$0xff]
        %v9173 = vld [vmem:[#allocation3 + $0x1e8] sm:$0xff]
        %v9174 = vld [vmem:[#allocation3 + $0x1f0] sm:$0xff]
        %v9175 = vld [vmem:[#allocation3 + $0x1f8] sm:$0xff]
        %v9177 = vlaneseq
        %v9178 = vshrl.u32 %v9177, 7
        %v9179 = vsub.s32 0, %v9178
        %v9180 = vrot.slane %v7799, %v9179
        %v9183 = vsel %vm417, %v9113, 0
        %v9186 = vsel %vm417, %v9115, 0
        %v9189 = vsel %vm417, %v9117, 0
        %v9192 = vsel %vm417, %v9119, 0
        %v9195 = vsel %vm417, %v9121, 0
        %v9198 = vsel %vm417, %v9123, 0
        %v9201 = vsel %vm417, %v9125, 0
        %v9204 = vsel %vm417, %v9127, 0
        %v9207 = vsel %vm417, %v9129, 0
        %v9210 = vsel %vm417, %v9131, 0
        %v9213 = vsel %vm417, %v9133, 0
        %v9216 = vsel %vm417, %v9135, 0
        %v9219 = vsel %vm417, %v9137, 0
        %v9222 = vsel %vm417, %v9139, 0
        %v9225 = vsel %vm417, %v9141, 0
        %v9228 = vsel %vm417, %v9143, 0
        %v9231 = vsel %vm417, %v9145, 0
        %v9234 = vsel %vm417, %v9147, 0
        %v9237 = vsel %vm417, %v9149, 0
        %v9240 = vsel %vm417, %v9151, 0
        %v9243 = vsel %vm417, %v9153, 0
        %v9246 = vsel %vm417, %v9155, 0
        %v9249 = vsel %vm417, %v9157, 0
        %v9252 = vsel %vm417, %v9159, 0
        %v9255 = vsel %vm417, %v9161, 0
        %v9258 = vsel %vm417, %v9163, 0
        %v9261 = vsel %vm417, %v9165, 0
        %v9264 = vsel %vm417, %v9167, 0
        %v9267 = vsel %vm417, %v9169, 0
        %v9270 = vsel %vm417, %v9171, 0
        %v9273 = vsel %vm417, %v9173, 0
        %v9276 = vsel %vm417, %v9175, 0
        %9278 = vmatprep.subr.mxu0 0.0
        %9279 = vmatpush1.msra.mxu0 %v7781
        %9280 = vmatprep.subr.mxu0 0.0
        %9281 = vmatpush1.msra.mxu0 %v7782
        %9282 = vmatprep.subr.mxu0 0.0
        %9283 = vmatpush1.msra.mxu0 %v7783
        %9284 = vmatprep.subr.mxu0 0.0
        %9285 = vmatpush1.msra.mxu0 %v7784
        %9286 = vmatprep.subr.mxu0 0.0
        %9287 = vmatpush1.msra.mxu0 %v7785
        %9288 = vmatprep.subr.mxu0 0.0
        %9289 = vmatpush1.msra.mxu0 %v7786
        %9290 = vmatprep.subr.mxu0 0.0
        %9291 = vmatpush1.msra.mxu0 %v7787
        %9292 = vmatprep.subr.mxu0 0.0
        %9293 = vmatpush1.msra.mxu0 %v7788
        %9294 = vmatprep.subr.mxu0 0.0
        %9295 = vmatpush1.msra.mxu0 %v7789
        %9296 = vmatprep.subr.mxu0 0.0
        %9297 = vmatpush1.msra.mxu0 %v7790
        %9298 = vmatprep.subr.mxu0 0.0
        %9299 = vmatpush1.msra.mxu0 %v7791
        %9300 = vmatprep.subr.mxu0 0.0
        %9301 = vmatpush1.msra.mxu0 %v7792
        %9302 = vmatprep.subr.mxu0 0.0
        %9303 = vmatpush1.msra.mxu0 %v7793
        %9304 = vmatprep.subr.mxu0 0.0
        %9305 = vmatpush1.msra.mxu0 %v7794
        %9306 = vmatprep.subr.mxu0 0.0
        %9307 = vmatpush1.msra.mxu0 %v7795
        %9308 = vmatprep.subr.mxu0 0.0
        %9309 = vmatpush1.msra.mxu0 %v7796
        %9310 = vmatprep.subr.mxu0 0.0
        %9311 = vmatpush1.msra.mxu0 %v7797
        %9312 = vmatprep.subr.mxu0 0.0
        %9313 = vmatpush1.msra.mxu0 %v7798
        %9314 = vmatprep.subr.mxu0 0.0
        %9315 = vmatpush1.msra.mxu0 0.0
        %9316 = vmatprep.subr.mxu0 0.0
        %9317 = vmatpush1.msra.mxu0 0.0
        %9318 = vmatprep.subr.mxu0 0.0
        %9319 = vmatpush1.msra.mxu0 0.0
        %9320 = vmatprep.subr.mxu0 0.0
        %9321 = vmatpush1.msra.mxu0 0.0
        %9322 = vmatprep.subr.mxu0 0.0
        %9323 = vmatpush1.msra.mxu0 0.0
        %9324 = vmatprep.subr.mxu0 0.0
        %9325 = vmatpush1.msra.mxu0 0.0
        %9326 = vmatprep.subr.mxu0 0.0
        %9327 = vmatpush1.msra.mxu0 0.0
        %9328 = vmatprep.subr.mxu0 0.0
        %9329 = vmatpush1.msra.mxu0 0.0
        %9330 = vmatprep.subr.mxu0 0.0
        %9331 = vmatpush1.msra.mxu0 0.0
        %9332 = vmatprep.subr.mxu0 0.0
        %9333 = vmatpush1.msra.mxu0 0.0
        %9334 = vmatprep.subr.mxu0 0.0
        %9335 = vmatpush1.msra.mxu0 0.0
        %9336 = vmatprep.subr.mxu0 0.0
        %9337 = vmatpush1.msra.mxu0 0.0
        %9338 = vmatprep.subr.mxu0 0.0
        %9339 = vmatpush1.msra.mxu0 0.0
        %9340 = vmatprep.subr.mxu0 0.0
        %9341 = vmatpush1.msra.mxu0 0.0
        %9342 = vmatprep.mubr.f32.mxu0 %v9183
        %9343 = vmatmul.mubr.f32.gmra.mrb[0].mxu0 %v9112
        %v9344 = vpop.f32.mrb[0].mxu0
        %v9345 = vadd.f32 %v9180, %v9344
        %v9346 = vpop.f32.mrb[0].mxu0
        %9347 = vmatprep.mubr.f32.mxu0 %v9186
        %9348 = vmatmul.mubr.f32.gmra.mrb[0].mxu0 %v9114
        %v9349 = vpop.f32.mrb[0].mxu0
        %v9350 = vadd.f32 %v9180, %v9349
        %v9351 = vpop.f32.mrb[0].mxu0
        %9352 = vmatprep.mubr.f32.mxu0 %v9189
        %9353 = vmatmul.mubr.f32.gmra.mrb[0].mxu0 %v9116
        %v9354 = vpop.f32.mrb[0].mxu0
        %v9355 = vadd.f32 %v9180, %v9354
        %v9356 = vpop.f32.mrb[0].mxu0
        %9357 = vmatprep.mubr.f32.mxu0 %v9192
        %9358 = vmatmul.mubr.f32.gmra.mrb[0].mxu0 %v9118
        %v9359 = vpop.f32.mrb[0].mxu0
        %v9360 = vadd.f32 %v9180, %v9359
        %v9361 = vpop.f32.mrb[0].mxu0
        %9362 = vmatprep.mubr.f32.mxu0 %v9195
        %9363 = vmatmul.mubr.f32.gmra.mrb[0].mxu0 %v9120
        %v9364 = vpop.f32.mrb[0].mxu0
        %v9365 = vadd.f32 %v9180, %v9364
        %v9366 = vpop.f32.mrb[0].mxu0
        %9367 = vmatprep.mubr.f32.mxu0 %v9198
        %9368 = vmatmul.mubr.f32.gmra.mrb[0].mxu0 %v9122
        %v9369 = vpop.f32.mrb[0].mxu0
        %v9370 = vadd.f32 %v9180, %v9369
        %v9371 = vpop.f32.mrb[0].mxu0
        %9372 = vmatprep.mubr.f32.mxu0 %v9201
        %9373 = vmatmul.mubr.f32.gmra.mrb[0].mxu0 %v9124
        %v9374 = vpop.f32.mrb[0].mxu0
        %v9375 = vadd.f32 %v9180, %v9374
        %v9376 = vpop.f32.mrb[0].mxu0
        %9377 = vmatprep.mubr.f32.mxu0 %v9204
        %9378 = vmatmul.mubr.f32.gmra.mrb[0].mxu0 %v9126
        %v9379 = vpop.f32.mrb[0].mxu0
        %v9380 = vadd.f32 %v9180, %v9379
        %v9381 = vpop.f32.mrb[0].mxu0
        %9382 = vmatprep.mubr.f32.mxu0 %v9207
        %9383 = vmatmul.mubr.f32.gmra.mrb[0].mxu0 %v9128
        %v9384 = vpop.f32.mrb[0].mxu0
        %v9385 = vadd.f32 %v9180, %v9384
        %v9386 = vpop.f32.mrb[0].mxu0
        %9387 = vmatprep.mubr.f32.mxu0 %v9210
        %9388 = vmatmul.mubr.f32.gmra.mrb[0].mxu0 %v9130
        %v9389 = vpop.f32.mrb[0].mxu0
        %v9390 = vadd.f32 %v9180, %v9389
        %v9391 = vpop.f32.mrb[0].mxu0
        %9392 = vmatprep.mubr.f32.mxu0 %v9213
        %9393 = vmatmul.mubr.f32.gmra.mrb[0].mxu0 %v9132
        %v9394 = vpop.f32.mrb[0].mxu0
        %v9395 = vadd.f32 %v9180, %v9394
        %v9396 = vpop.f32.mrb[0].mxu0
        %9397 = vmatprep.mubr.f32.mxu0 %v9216
        %9398 = vmatmul.mubr.f32.gmra.mrb[0].mxu0 %v9134
        %v9399 = vpop.f32.mrb[0].mxu0
        %v9400 = vadd.f32 %v9180, %v9399
        %v9401 = vpop.f32.mrb[0].mxu0
        %9402 = vmatprep.mubr.f32.mxu0 %v9219
        %9403 = vmatmul.mubr.f32.gmra.mrb[0].mxu0 %v9136
        %v9404 = vpop.f32.mrb[0].mxu0
        %v9405 = vadd.f32 %v9180, %v9404
        %v9406 = vpop.f32.mrb[0].mxu0
        %9407 = vmatprep.mubr.f32.mxu0 %v9222
        %9408 = vmatmul.mubr.f32.gmra.mrb[0].mxu0 %v9138
        %v9409 = vpop.f32.mrb[0].mxu0
        %v9410 = vadd.f32 %v9180, %v9409
        %v9411 = vpop.f32.mrb[0].mxu0
        %9412 = vmatprep.mubr.f32.mxu0 %v9225
        %9413 = vmatmul.mubr.f32.gmra.mrb[0].mxu0 %v9140
        %v9414 = vpop.f32.mrb[0].mxu0
        %v9415 = vadd.f32 %v9180, %v9414
        %v9416 = vpop.f32.mrb[0].mxu0
        %9417 = vmatprep.mubr.f32.mxu0 %v9228
        %9418 = vmatmul.mubr.f32.gmra.mrb[0].mxu0 %v9142
        %v9419 = vpop.f32.mrb[0].mxu0
        %v9420 = vadd.f32 %v9180, %v9419
        %v9421 = vpop.f32.mrb[0].mxu0
        %9422 = vmatprep.mubr.f32.mxu0 %v9231
        %9423 = vmatmul.mubr.f32.gmra.mrb[0].mxu0 %v9144
        %v9424 = vpop.f32.mrb[0].mxu0
        %v9425 = vadd.f32 %v9180, %v9424
        %v9426 = vpop.f32.mrb[0].mxu0
        %9427 = vmatprep.mubr.f32.mxu0 %v9234
        %9428 = vmatmul.mubr.f32.gmra.mrb[0].mxu0 %v9146
        %v9429 = vpop.f32.mrb[0].mxu0
        %v9430 = vadd.f32 %v9180, %v9429
        %v9431 = vpop.f32.mrb[0].mxu0
        %9432 = vmatprep.mubr.f32.mxu0 %v9237
        %9433 = vmatmul.mubr.f32.gmra.mrb[0].mxu0 %v9148
        %v9434 = vpop.f32.mrb[0].mxu0
        %v9435 = vadd.f32 %v9180, %v9434
        %v9436 = vpop.f32.mrb[0].mxu0
        %9437 = vmatprep.mubr.f32.mxu0 %v9240
        %9438 = vmatmul.mubr.f32.gmra.mrb[0].mxu0 %v9150
        %v9439 = vpop.f32.mrb[0].mxu0
        %v9440 = vadd.f32 %v9180, %v9439
        %v9441 = vpop.f32.mrb[0].mxu0
        %9442 = vmatprep.mubr.f32.mxu0 %v9243
        %9443 = vmatmul.mubr.f32.gmra.mrb[0].mxu0 %v9152
        %v9444 = vpop.f32.mrb[0].mxu0
        %v9445 = vadd.f32 %v9180, %v9444
        %v9446 = vpop.f32.mrb[0].mxu0
        %9447 = vmatprep.mubr.f32.mxu0 %v9246
        %9448 = vmatmul.mubr.f32.gmra.mrb[0].mxu0 %v9154
        %v9449 = vpop.f32.mrb[0].mxu0
        %v9450 = vadd.f32 %v9180, %v9449
        %v9451 = vpop.f32.mrb[0].mxu0
        %9452 = vmatprep.mubr.f32.mxu0 %v9249
        %9453 = vmatmul.mubr.f32.gmra.mrb[0].mxu0 %v9156
        %v9454 = vpop.f32.mrb[0].mxu0
        %v9455 = vadd.f32 %v9180, %v9454
        %v9456 = vpop.f32.mrb[0].mxu0
        %9457 = vmatprep.mubr.f32.mxu0 %v9252
        %9458 = vmatmul.mubr.f32.gmra.mrb[0].mxu0 %v9158
        %v9459 = vpop.f32.mrb[0].mxu0
        %v9460 = vadd.f32 %v9180, %v9459
        %v9461 = vpop.f32.mrb[0].mxu0
        %9462 = vmatprep.mubr.f32.mxu0 %v9255
        %9463 = vmatmul.mubr.f32.gmra.mrb[0].mxu0 %v9160
        %v9464 = vpop.f32.mrb[0].mxu0
        %v9465 = vadd.f32 %v9180, %v9464
        %v9466 = vpop.f32.mrb[0].mxu0
        %9467 = vmatprep.mubr.f32.mxu0 %v9258
        %9468 = vmatmul.mubr.f32.gmra.mrb[0].mxu0 %v9162
        %v9469 = vpop.f32.mrb[0].mxu0
        %v9470 = vadd.f32 %v9180, %v9469
        %v9471 = vpop.f32.mrb[0].mxu0
        %9472 = vmatprep.mubr.f32.mxu0 %v9261
        %9473 = vmatmul.mubr.f32.gmra.mrb[0].mxu0 %v9164
        %v9474 = vpop.f32.mrb[0].mxu0
        %v9475 = vadd.f32 %v9180, %v9474
        %v9476 = vpop.f32.mrb[0].mxu0
        %9477 = vmatprep.mubr.f32.mxu0 %v9264
        %9478 = vmatmul.mubr.f32.gmra.mrb[0].mxu0 %v9166
        %v9479 = vpop.f32.mrb[0].mxu0
        %v9480 = vadd.f32 %v9180, %v9479
        %v9481 = vpop.f32.mrb[0].mxu0
        %9482 = vmatprep.mubr.f32.mxu0 %v9267
        %9483 = vmatmul.mubr.f32.gmra.mrb[0].mxu0 %v9168
        %v9484 = vpop.f32.mrb[0].mxu0
        %v9485 = vadd.f32 %v9180, %v9484
        %v9486 = vpop.f32.mrb[0].mxu0
        %9487 = vmatprep.mubr.f32.mxu0 %v9270
        %9488 = vmatmul.mubr.f32.gmra.mrb[0].mxu0 %v9170
        %v9489 = vpop.f32.mrb[0].mxu0
        %v9490 = vadd.f32 %v9180, %v9489
        %v9491 = vpop.f32.mrb[0].mxu0
        %9492 = vmatprep.mubr.f32.mxu0 %v9273
        %9493 = vmatmul.mubr.f32.gmra.mrb[0].mxu0 %v9172
        %v9494 = vpop.f32.mrb[0].mxu0
        %v9495 = vadd.f32 %v9180, %v9494
        %v9496 = vpop.f32.mrb[0].mxu0
        %9497 = vmatprep.mubr.f32.mxu0 %v9276
        %9498 = vmatmul.mubr.f32.gmra.mrb[0].mxu0 %v9174
        %v9499 = vpop.f32.mrb[0].mxu0
        %v9500 = vadd.f32 %v9180, %v9499
        %v9501 = vpop.f32.mrb[0].mxu0
        %9502 = vdwg.mxu0
        %v9503 = vadd.f32 %v9345, %v385
        %v9504 = vadd.f32 %v9350, %v386
        %v9505 = vadd.f32 %v9355, %v387
        %v9506 = vadd.f32 %v9360, %v388
        %v9507 = vadd.f32 %v9365, %v389
        %v9508 = vadd.f32 %v9370, %v390
        %v9509 = vadd.f32 %v9375, %v391
        %v9510 = vadd.f32 %v9380, %v392
        %v9511 = vadd.f32 %v9385, %v393
        %v9512 = vadd.f32 %v9390, %v394
        %v9513 = vadd.f32 %v9395, %v395
        %v9514 = vadd.f32 %v9400, %v396
        %v9515 = vadd.f32 %v9405, %v397
        %v9516 = vadd.f32 %v9410, %v398
        %v9517 = vadd.f32 %v9415, %v399
        %v9518 = vadd.f32 %v9420, %v400
        %v9519 = vadd.f32 %v9425, %v401
        %v9520 = vadd.f32 %v9430, %v402
        %v9521 = vadd.f32 %v9435, %v403
        %v9522 = vadd.f32 %v9440, %v404
        %v9523 = vadd.f32 %v9445, %v405
        %v9524 = vadd.f32 %v9450, %v406
        %v9525 = vadd.f32 %v9455, %v407
        %v9526 = vadd.f32 %v9460, %v408
        %v9527 = vadd.f32 %v9465, %v409
        %v9528 = vadd.f32 %v9470, %v410
        %v9529 = vadd.f32 %v9475, %v411
        %v9530 = vadd.f32 %v9480, %v412
        %v9531 = vadd.f32 %v9485, %v413
        %v9532 = vadd.f32 %v9490, %v414
        %v9533 = vadd.f32 %v9495, %v415
        %v9534 = vadd.f32 %v9500, %v416
        %9535 = vst.msk [vmem:[%s379] sm:$0xff] %vm417, %v9503
        %9536 = vst.msk [vmem:[%s379 + $0x8] sm:$0xff] %vm417, %v9504
        %9537 = vst.msk [vmem:[%s379 + $0x10] sm:$0xff] %vm417, %v9505
        %9538 = vst.msk [vmem:[%s379 + $0x18] sm:$0xff] %vm417, %v9506
        %9539 = vst.msk [vmem:[%s379 + $0x20] sm:$0xff] %vm417, %v9507
        %9540 = vst.msk [vmem:[%s379 + $0x28] sm:$0xff] %vm417, %v9508
        %9541 = vst.msk [vmem:[%s379 + $0x30] sm:$0xff] %vm417, %v9509
        %9542 = vst.msk [vmem:[%s379 + $0x38] sm:$0xff] %vm417, %v9510
        %9543 = vst.msk [vmem:[%s379 + $0x40] sm:$0xff] %vm417, %v9511
        %9544 = vst.msk [vmem:[%s379 + $0x48] sm:$0xff] %vm417, %v9512
        %9545 = vst.msk [vmem:[%s379 + $0x50] sm:$0xff] %vm417, %v9513
        %9546 = vst.msk [vmem:[%s379 + $0x58] sm:$0xff] %vm417, %v9514
        %9547 = vst.msk [vmem:[%s379 + $0x60] sm:$0xff] %vm417, %v9515
        %9548 = vst.msk [vmem:[%s379 + $0x68] sm:$0xff] %vm417, %v9516
        %9549 = vst.msk [vmem:[%s379 + $0x70] sm:$0xff] %vm417, %v9517
        %9550 = vst.msk [vmem:[%s379 + $0x78] sm:$0xff] %vm417, %v9518
        %9551 = vst.msk [vmem:[%s379 + $0x80] sm:$0xff] %vm417, %v9519
        %9552 = vst.msk [vmem:[%s379 + $0x88] sm:$0xff] %vm417, %v9520
        %9553 = vst.msk [vmem:[%s379 + $0x90] sm:$0xff] %vm417, %v9521
        %9554 = vst.msk [vmem:[%s379 + $0x98] sm:$0xff] %vm417, %v9522
        %9555 = vst.msk [vmem:[%s379 + $0xa0] sm:$0xff] %vm417, %v9523
        %9556 = vst.msk [vmem:[%s379 + $0xa8] sm:$0xff] %vm417, %v9524
        %9557 = vst.msk [vmem:[%s379 + $0xb0] sm:$0xff] %vm417, %v9525
        %9558 = vst.msk [vmem:[%s379 + $0xb8] sm:$0xff] %vm417, %v9526
        %9559 = vst.msk [vmem:[%s379 + $0xc0] sm:$0xff] %vm417, %v9527
        %9560 = vst.msk [vmem:[%s379 + $0xc8] sm:$0xff] %vm417, %v9528
        %9561 = vst.msk [vmem:[%s379 + $0xd0] sm:$0xff] %vm417, %v9529
        %9562 = vst.msk [vmem:[%s379 + $0xd8] sm:$0xff] %vm417, %v9530
        %9563 = vst.msk [vmem:[%s379 + $0xe0] sm:$0xff] %vm417, %v9531
        %9564 = vst.msk [vmem:[%s379 + $0xe8] sm:$0xff] %vm417, %v9532
        %9565 = vst.msk [vmem:[%s379 + $0xf0] sm:$0xff] %vm417, %v9533
        %9566 = vst.msk [vmem:[%s379 + $0xf8] sm:$0xff] %vm417, %v9534
        %s9567 = sand.u32 %s269, 1
        %s9568 = scalar_lea.sflag [#allocation5], %s9567
        %s9569 = sand.u32 %s269, 1
        %s9570 = smul.addr %s9569, 256
        %s9571 = scalar_lea.vmem [#allocation4], %s9570
        // Predicated region
        $region65: #{residual_group_forward.1} parent=63 // pred_check
          %p9572 = pneg %p279
        $region66: #{residual_group_forward.1} parent=63 // pred_check_branch
          %9574 = sbr.rel (%p9572) target = $region68
        $region67: #{residual_group_forward.1} parent=63 // pred_region
          %s9576 = ssub.s32 4096, 4096
          %9577 = vsyncadd %s9568, %s9576
          %s9578 = smul.addr %s25, 32
          %s9579 = smul.addr %s9578, 128
          %s9580 = scalar_lea.hbm %s11, %s9579
          %s9581 = sshll.u32 %s9571, 4
          %s9582 = int_to_ptr.vmem [resolvable:$true] %s9581
          %9587 = dma.vmem_to_hbm [thread:$0]  %s9582, 4096, %s9580, %s9568, 128, 128, 8
        $region68: #{residual_group_forward.1} parent=63 // pred_fallthru
          _
      $region64: #{residual_group_forward.1} parent=5 // pred_fallthru
        _
      %p9588 = scmp.le.s32.totalorder 2, %s20
      // Predicated region
      $region69: #{residual_group_forward.1} parent=5 // pred_check
        %p9589 = pneg %p9588
      $region70: #{residual_group_forward.1} parent=5 // pred_check_branch
        %9591 = sbr.rel (%p9589) target = $region72
      $region71: #{residual_group_forward.1} parent=5 // pred_region
        %s9592 = ssub.s32 %s20, 2
        // Predicated region
        $region73: #{residual_group_forward.1} parent=71 // pred_check
          %p9593 = pneg %p285
        $region74: #{residual_group_forward.1} parent=71 // pred_check_branch
          %9595 = sbr.rel (%p9593) target = $region76
        $region75: #{residual_group_forward.1} parent=71 // pred_region
          %s9596 = sand.u32 %s270, 1
          %s9597 = scalar_lea.sflag [#allocation5], %s9596
          %s9598 = sand.u32 %s270, 1
          %s9599 = smul.addr %s9598, 256
          %s9600 = scalar_lea.vmem [#allocation4], %s9599
          %9601 = dma.done %s9597, 4096
        $region76: #{residual_group_forward.1} parent=71 // pred_fallthru
          _
      $region72: #{residual_group_forward.1} parent=5 // pred_fallthru
        _
    $region6: #{residual_group_forward.1} parent=1 // loop_footer
      %s24 = sadd.s32 1, %s20
    $region7: #{residual_group_forward.1} parent=1 // loop_footer_branch
      %19 = sbr.rel target = $region3
    $region8: #{residual_group_forward.1} parent=1 // loop_exit
      _
    %9602 = vsyncpa [#allocation5], 1
    %s9603 = scalar_lea.sflag [#allocation5], 1
    %9604 = vsyncpa %s9603, 1

</llo_original>
